<compile_context>
chip_gen: v7x
topology: tpu7x:2x2x1
jax: 0.10.0
libtpu: 0.0.40
codegen_flags: <defaults>
</compile_context>

<pallas_src>
import functools

import jax
import jax.numpy as jnp
from jax import lax
from jax.experimental import pallas as pl
from jax.experimental.pallas import tpu as pltpu

EPS = 1e-5
_HI = jax.lax.Precision.HIGHEST  # reference only


# ---------------------------------------------------------------------------
# Kernels
# ---------------------------------------------------------------------------
def _write_stats(st_ref, h):
    # st_ref block: (1, 2, C).  Row 0 = per-channel sum, row 1 = per-channel
    # sum of squares over this tile, both from the f32 accumulator `h`.
    s = jnp.sum(h, axis=0, keepdims=True)
    sq = jnp.sum(h * h, axis=0, keepdims=True)
    st_ref[...] = jnp.concatenate([s, sq], axis=0)[None, :, :]


def _conv1_stats_kernel(x_ref, w1_ref, h1_ref, st_ref):
    # conv1 (1x1, no bias) == per-pixel matmul; also emit bn1 partial stats.
    # x arrives f32 (it is also the residual source); cast to bf16 on the VPU.
    h = jnp.dot(x_ref[...].astype(jnp.bfloat16), w1_ref[...],
                preferred_element_type=jnp.float32)
    h1_ref[...] = h.astype(h1_ref.dtype)
    _write_stats(st_ref, h)


def _bn1_relu_conv2_stats_kernel(h1_ref, sc1_ref, sh1_ref, w2_ref,
                                 h2_ref, st_ref, pad_ref):
    # Fused: bn1-apply + ReLU, zero-pad in VMEM, 3x3 conv (stride 1, pad 1) as
    # 9 accumulated K=P matmuls over shifted VMEM windows, bn2 partial stats.
    _, H, W, P = h1_ref.shape

    a1 = jnp.maximum(
        h1_ref[0].astype(jnp.float32) * sc1_ref[...] + sh1_ref[...], 0.0)

    # Zero-padded image lives only in VMEM (never written to HBM).
    pad_ref[...] = jnp.zeros(pad_ref.shape, pad_ref.dtype)
    pad_ref[1:H + 1, 1:W + 1, :] = a1.astype(pad_ref.dtype)

    acc = jnp.zeros((H * W, P), jnp.float32)
    for t in range(9):                      # static unroll: 9 taps
        dy, dx = t // 3, t % 3
        tap = pad_ref[dy:dy + H, dx:dx + W, :].reshape(H * W, P)
        acc = acc + jnp.dot(tap, w2_ref[t], preferred_element_type=jnp.float32)

    h2_ref[...] = acc.reshape(1, H, W, P).astype(h2_ref.dtype)
    _write_stats(st_ref, acc)


def _bn2_relu_conv3_stats_kernel(h2_ref, sc2_ref, sh2_ref, w3_ref,
                                 h3_ref, st_ref):
    # Fused: bn2-apply + ReLU, conv3 (1x1), bn3 partial stats.
    a2 = jnp.maximum(
        h2_ref[...].astype(jnp.float32) * sc2_ref[...] + sh2_ref[...], 0.0)
    h3 = jnp.dot(a2.astype(jnp.bfloat16), w3_ref[...],
                 preferred_element_type=jnp.float32)
    h3_ref[...] = h3.astype(h3_ref.dtype)
    _write_stats(st_ref, h3)


def _bn3_residual_relu_kernel(h3_ref, sc3_ref, sh3_ref, x_ref, out_ref):
    # bn3-apply + identity residual (downsample=None) + final ReLU, all in f32.
    h3 = h3_ref[...].astype(jnp.float32)
    out_ref[...] = jnp.maximum(h3 * sc3_ref[...] + sh3_ref[...] + x_ref[...], 0.0)


# ---------------------------------------------------------------------------
# Spec / budget helpers
# ---------------------------------------------------------------------------
def _row_spec(tm, c):
    return pl.BlockSpec((tm, c), lambda i: (i, 0))


def _rep_spec(shape):
    nd = len(shape)
    return pl.BlockSpec(shape, lambda i, _nd=nd: (0,) * _nd)


def _stat_spec(c):
    return pl.BlockSpec((1, 2, c), lambda i: (i, 0, 0))


def _cparams(vmem_limit_bytes):
    return pltpu.CompilerParams(
        dimension_semantics=("parallel",),
        vmem_limit_bytes=int(vmem_limit_bytes))


def _vmem_budget():
    """(vmem_limit_bytes, per-stage tile budget, max row tile) per generation."""
    try:
        cap = int(pltpu.get_tpu_info().vmem_capacity_bytes)
    except Exception:
        cap = 64 * 1024 * 1024  # conservative fallback (v7x-sized)
    if cap >= 100 * 1024 * 1024:          # v5e / v6e: 128 MiB physical VMEM
        return 80 * 1024 * 1024, 64 * 1024 * 1024, 1024
    else:                                  # v7x: 64 MiB per TensorCore
        return 32 * 1024 * 1024, 24 * 1024 * 1024, 512


def _pick_row_tile(nhw, row_bytes, budget, max_tm):
    """Largest power-of-two row tile dividing nhw whose double-buffered
    working set (2 * tm * row_bytes) fits the VMEM budget."""
    budget = max(budget, 1 << 20)
    cand = max_tm
    while cand >= 8:
        if cand <= nhw and nhw % cand == 0 and 2 * cand * row_bytes <= budget:
            return cand
        cand //= 2
    return nhw  # fallback: single tile


def _finalize_bn(stats, gamma, beta, count):
    # stats: (T, 2, C) per-tile partials -> training-mode BN scale/shift (1, C).
    # NOTE: E[x^2]-E[x]^2 in f32; fine here (near-zero channel means).  For
    # channels with |mean| >> std, switch to a shifted / Welford-style combine.
    tot = jnp.sum(stats, axis=0)                      # (2, C)
    mean = tot[0:1, :] / count
    var = jnp.maximum(tot[1:2, :] / count - mean * mean, 0.0)
    scale = gamma * lax.rsqrt(var + EPS)
    shift = beta - mean * scale
    return scale, shift


# ---------------------------------------------------------------------------
# Bottleneck forward (Pallas pipeline), NHWC in -> NHWC out
# ---------------------------------------------------------------------------
def bottleneck_forward(x_nhwc, params, *, planes, tm=None):
    N, H, W, C_in = x_nhwc.shape
    P = planes
    assert C_in == 4 * P, "downsample=None requires inplanes == planes * 4"
    NHW = N * H * W

    vmem_limit, tile_budget, max_tm = _vmem_budget()
    cp = _cparams(vmem_limit)

    # Flat (NHW, C) view -- free reshape, channels on the 128-lane axis.
    x2d = x_nhwc.reshape(NHW, C_in).astype(jnp.float32)
    w1 = params["w1"].astype(jnp.bfloat16)                    # (4P, P)
    w2 = params["w2"].reshape(9, P, P).astype(jnp.bfloat16)   # HWIO -> (9, P, P)
    w3 = params["w3"].astype(jnp.bfloat16)                    # (P, 4P)

    # Budget-driven row tiles (double-buffered inputs+outputs per row).
    if tm is not None:
        tm1 = tm4 = tm5 = tm
    else:
        tm1 = _pick_row_tile(NHW, C_in * 4 + P * 2,
                             tile_budget - 2 * C_in * P * 2, max_tm)
        tm4 = _pick_row_tile(NHW, P * 2 + 4 * P * 2,
                             tile_budget - 2 * P * 4 * P * 2, max_tm)
        tm5 = _pick_row_tile(NHW, 4 * P * 2 + 4 * P * 8, tile_budget, max_tm)
    T1, T4, T5 = NHW // tm1, NHW // tm4, NHW // tm5

    # --- stage 1: conv1 (1x1) + bn1 partial stats ---------------------------
    h1, st1 = pl.pallas_call(
        _conv1_stats_kernel,
        out_shape=(jax.ShapeDtypeStruct((NHW, P), jnp.bfloat16),
                   jax.ShapeDtypeStruct((T1, 2, P), jnp.float32)),
        grid=(T1,),
        in_specs=[_row_spec(tm1, C_in), _rep_spec((C_in, P))],
        out_specs=(_row_spec(tm1, P), _stat_spec(P)),
        compiler_params=cp,
    )(x2d, w1)
    sc1, sh1 = _finalize_bn(st1, params["g1"], params["b1"], float(NHW))

    # --- stage 2: fused bn1+ReLU, 3x3 conv (in-VMEM halo), bn2 stats --------
    conv2_bytes = (2 * 2 * H * W * P * 2          # h1 in + h2 out, double-buffered
                   + (H + 2) * (W + 2) * P * 2    # padded VMEM image scratch
                   + 2 * 9 * P * P * 2            # w2, double-buffered
                   + 2 * H * W * P * 4)           # f32 accumulator / tap slack
    # TODO(synk): row-tile conv2 with a manual halo DMA (memory_space=pl.ANY)
    # when a single padded image no longer fits VMEM (very large H*W).
    assert conv2_bytes < vmem_limit, (
        f"conv2 per-image VMEM footprint {conv2_bytes} exceeds limit {vmem_limit}")

    h1_img = h1.reshape(N, H, W, P)               # free: same layout
    img_in_spec = pl.BlockSpec((1, H, W, P), lambda n: (n, 0, 0, 0))
    img_out_spec = pl.BlockSpec((1, H, W, P), lambda n: (n, 0, 0, 0))
    h2_img, st2 = pl.pallas_call(
        _bn1_relu_conv2_stats_kernel,
        out_shape=(jax.ShapeDtypeStruct((N, H, W, P), jnp.bfloat16),
                   jax.ShapeDtypeStruct((N, 2, P), jnp.float32)),
        grid=(N,),
        in_specs=[img_in_spec, _rep_spec((1, P)), _rep_spec((1, P)),
                  _rep_spec((9, P, P))],
        out_specs=(img_out_spec, _stat_spec(P)),
        scratch_shapes=[pltpu.VMEM((H + 2, W + 2, P), jnp.bfloat16)],
        compiler_params=cp,
    )(h1_img, sc1, sh1, w2)
    sc2, sh2 = _finalize_bn(st2, params["g2"], params["b2"], float(NHW))
    h2 = h2_img.reshape(NHW, P)                   # free: same layout

    # --- stage 3: fused bn2+ReLU, conv3 (1x1), bn3 partial stats ------------
    h3, st3 = pl.pallas_call(
        _bn2_relu_conv3_stats_kernel,
        out_shape=(jax.ShapeDtypeStruct((NHW, 4 * P), jnp.bfloat16),
                   jax.ShapeDtypeStruct((T4, 2, 4 * P), jnp.float32)),
        grid=(T4,),
        in_specs=[_row_spec(tm4, P), _rep_spec((1, P)), _rep_spec((1, P)),
                  _rep_spec((P, 4 * P))],
        out_specs=(_row_spec(tm4, 4 * P), _stat_spec(4 * P)),
        compiler_params=cp,
    )(h2, sc2, sh2, w3)
    sc3, sh3 = _finalize_bn(st3, params["g3"], params["b3"], float(NHW))

    # --- stage 4: bn3-apply + identity residual (f32) + final ReLU ----------
    out2d = pl.pallas_call(
        _bn3_residual_relu_kernel,
        out_shape=jax.ShapeDtypeStruct((NHW, 4 * P), jnp.float32),
        grid=(T5,),
        in_specs=[_row_spec(tm5, 4 * P), _rep_spec((1, 4 * P)),
                  _rep_spec((1, 4 * P)), _row_spec(tm5, 4 * P)],
        out_specs=_row_spec(tm5, 4 * P),
        compiler_params=cp,
    )(h3, sc3, sh3, x2d)

    return out2d.reshape(N, H, W, 4 * P)          # NHWC


# ---------------------------------------------------------------------------
# Synthetic params + pure-JAX reference
# ---------------------------------------------------------------------------
def init_params(key, inplanes, planes):
    P = planes
    ks = jax.random.split(key, 9)
    s = 0.3
    return {
        "w1": s * jax.random.normal(ks[0], (inplanes, P), jnp.float32),   # 1x1
        "w2": s * jax.random.normal(ks[1], (3, 3, P, P), jnp.float32),    # 3x3 HWIO
        "w3": s * jax.random.normal(ks[2], (P, 4 * P), jnp.float32),      # 1x1
        "g1": 1.0 + 0.1 * jax.random.normal(ks[3], (1, P), jnp.float32),
        "b1": 0.1 * jax.random.normal(ks[4], (1, P), jnp.float32),
        "g2": 1.0 + 0.1 * jax.random.normal(ks[5], (1, P), jnp.float32),
        "b2": 0.1 * jax.random.normal(ks[6], (1, P), jnp.float32),
        "g3": 1.0 + 0.1 * jax.random.normal(ks[7], (1, 4 * P), jnp.float32),
        "b3": 0.1 * jax.random.normal(ks[8], (1, 4 * P), jnp.float32),
    }


def _bn_ref(x2d, gamma, beta, relu):
    mean = jnp.mean(x2d, axis=0, keepdims=True)
    var = jnp.mean(jnp.square(x2d - mean), axis=0, keepdims=True)
    y = (x2d - mean) * lax.rsqrt(var + EPS) * gamma + beta
    return jnp.maximum(y, 0.0) if relu else y


def ref_forward(x_nhwc, params, *, planes):
    N, H, W, C_in = x_nhwc.shape
    P = planes
    x = x_nhwc.astype(jnp.float32)
    dn = ("NHWC", "HWIO", "NHWC")

    def bn4(t, g, b, relu):
        return _bn_ref(t.reshape(-1, t.shape[-1]), g, b, relu).reshape(t.shape)

    h = lax.conv_general_dilated(x, params["w1"].reshape(1, 1, C_in, P), (1, 1),
                                 "VALID", dimension_numbers=dn, precision=_HI)
    h = bn4(h, params["g1"], params["b1"], True)
    h = lax.conv_general_dilated(h, params["w2"], (1, 1), [(1, 1), (1, 1)],
                                 dimension_numbers=dn, precision=_HI)
    h = bn4(h, params["g2"], params["b2"], True)
    h = lax.conv_general_dilated(h, params["w3"].reshape(1, 1, P, 4 * P), (1, 1),
                                 "VALID", dimension_numbers=dn, precision=_HI)
    h = bn4(h, params["g3"], params["b3"], False)
    return jnp.maximum(h + x, 0.0)


if __name__ == "__main__":
    key = jax.random.PRNGKey(0)
    kx, kp = jax.random.split(key)
    N, planes = 2, 64
    inplanes = 4 * planes          # 256 -> identity residual valid (downsample=None)
    H = W = 16                     # NHW = 512

    x_nchw = jax.random.normal(kx, (N, inplanes, H, W), jnp.float32)  # NCHW
    params = init_params(kp, inplanes, planes)

    # Layout conversion hoisted out of the block path: the block itself works
    # on NHWC / flat (NHW, C); a surrounding model would carry NHWC and skip it.
    x_nhwc = jnp.transpose(x_nchw, (0, 2, 3, 1))

    # tm=128 -> multiple row tiles so the pipelined path is exercised at this
    # small demo size; leave tm=None for the budget-driven choice on real shapes.
    fwd = jax.jit(functools.partial(bottleneck_forward, planes=planes, tm=128))
    out = jax.block_until_ready(fwd(x_nhwc, params))
    assert out.shape == (N, H, W, 4 * planes)

    ref = jax.block_until_ready(ref_forward(x_nhwc, params, planes=planes))
    err = float(jnp.max(jnp.abs(out - ref)))
    scale = max(1.0, float(jnp.max(jnp.abs(ref))))
    # bf16 intermediate storage (per perf review) adds ~1e-3..1e-2 relative
    # error on top of bf16-input matmuls; BN stats are still taken in f32.
    assert err < 3e-2 * scale, f"max abs error {err} (ref scale {scale})"

    print("KERNEL_OK")
</pallas_src>

<mosaic_0001>
module attributes {stable_mosaic.version = 11 : i64} {
  func.func @_conv1_stats_kernel(%arg0: i32, %arg1: memref<128x256xf32, #tpu.memory_space<vmem>>, %arg2: memref<256x64xbf16, #tpu.memory_space<vmem>>, %arg3: memref<128x64xbf16, #tpu.memory_space<vmem>>, %arg4: memref<1x2x64xf32, #tpu.memory_space<vmem>>) attributes {dimension_semantics = [#tpu.dimension_semantics<parallel>], iteration_bounds = array<i64: 4>, scalar_prefetch = 0 : i64, scratch_operands = 0 : i64, tpu.core_type = #tpu.core_type<tc>, window_params = [{transform_indices = @transform_0, window_bounds = array<i64: 128, 256>}, {pipeline_mode = #tpu.pipeline_mode<synchronous>, transform_indices = @transform_1, window_bounds = array<i64: 256, 64>}, {transform_indices = @transform_2, window_bounds = array<i64: 128, 64>}, {transform_indices = @transform_3, window_bounds = array<i64: 1, 2, 64>}]} {
    %c0 = arith.constant 0 : index
    %c0_0 = arith.constant 0 : index
    %0 = vector.load %arg1[%c0, %c0_0] : memref<128x256xf32, #tpu.memory_space<vmem>>, vector<128x256xf32>
    %1 = arith.truncf %0 : vector<128x256xf32> to vector<128x256xbf16>
    %c0_1 = arith.constant 0 : index
    %c0_2 = arith.constant 0 : index
    %2 = vector.load %arg2[%c0_1, %c0_2] : memref<256x64xbf16, #tpu.memory_space<vmem>>, vector<256x64xbf16>
    %cst = arith.constant dense<0.000000e+00> : vector<128x64xf32>
    %3 = tpu.matmul %1, %2, %cst {dimension_numbers = #tpu.dot_dimension_numbers<[1], [0], [0], [1], [0, 0, 1, 1], [], []>} : vector<128x256xbf16>, vector<256x64xbf16>, vector<128x64xf32> -> vector<128x64xf32>
    %4 = arith.truncf %3 : vector<128x64xf32> to vector<128x64xbf16>
    %c0_3 = arith.constant 0 : index
    %c0_4 = arith.constant 0 : index
    %5 = vector.load %arg3[%c0_3, %c0_4] : memref<128x64xbf16, #tpu.memory_space<vmem>>, vector<128x64xbf16>
    tpu.vector_store %arg3[%c0_3, %c0_4], %4 {strides = array<i32>} : memref<128x64xbf16, #tpu.memory_space<vmem>>, vector<128x64xbf16>,
    %cst_5 = arith.constant dense<0.000000e+00> : vector<64xf32>
    %6 = vector.multi_reduction <add>, %3, %cst_5 [0] : vector<128x64xf32> to vector<64xf32>
    %7 = vector.shape_cast %6 : vector<64xf32> to vector<1x64xf32>
    %8 = arith.mulf %3, %3 : vector<128x64xf32>
    %cst_6 = arith.constant dense<0.000000e+00> : vector<64xf32>
    %9 = vector.multi_reduction <add>, %8, %cst_6 [0] : vector<128x64xf32> to vector<64xf32>
    %10 = vector.shape_cast %9 : vector<64xf32> to vector<1x64xf32>
    %11 = tpu.concatenate %7, %10 in 0 : vector<1x64xf32>, vector<1x64xf32> -> vector<2x64xf32>
    %12 = vector.shape_cast %11 : vector<2x64xf32> to vector<1x2x64xf32>
    %c0_7 = arith.constant 0 : index
    %c0_8 = arith.constant 0 : index
    %c0_9 = arith.constant 0 : index
    %13 = vector.load %arg4[%c0_7, %c0_8, %c0_9] : memref<1x2x64xf32, #tpu.memory_space<vmem>>, vector<1x2x64xf32>
    tpu.vector_store %arg4[%c0_7, %c0_8, %c0_9], %12 {strides = array<i32>} : memref<1x2x64xf32, #tpu.memory_space<vmem>>, vector<1x2x64xf32>,
    return
  }
  func.func @transform_0(%arg0: i32) -> (i32, i32) {
    %c0_i32 = arith.constant 0 : i32
    %c0_i32_0 = arith.constant 0 : i32
    return %arg0, %c0_i32 : i32, i32
  }
  func.func @transform_1(%arg0: i32) -> (i32, i32) {
    %c0_i32 = arith.constant 0 : i32
    %c0_i32_0 = arith.constant 0 : i32
    %c0_i32_1 = arith.constant 0 : i32
    return %c0_i32, %c0_i32_0 : i32, i32
  }
  func.func @transform_2(%arg0: i32) -> (i32, i32) {
    %c0_i32 = arith.constant 0 : i32
    %c0_i32_0 = arith.constant 0 : i32
    return %arg0, %c0_i32 : i32, i32
  }
  func.func @transform_3(%arg0: i32) -> (i32, i32, i32) {
    %c0_i32 = arith.constant 0 : i32
    %c0_i32_0 = arith.constant 0 : i32
    %c0_i32_1 = arith.constant 0 : i32
    return %arg0, %c0_i32, %c0_i32_0 : i32, i32, i32
  }
}

module attributes {stable_mosaic.version = 11 : i64} {
  func.func @_bn3_residual_relu_kernel(%arg0: i32, %arg1: memref<128x256xbf16, #tpu.memory_space<vmem>>, %arg2: memref<1x256xf32, #tpu.memory_space<vmem>>, %arg3: memref<1x256xf32, #tpu.memory_space<vmem>>, %arg4: memref<128x256xf32, #tpu.memory_space<vmem>>, %arg5: memref<128x256xf32, #tpu.memory_space<vmem>>) attributes {dimension_semantics = [#tpu.dimension_semantics<parallel>], iteration_bounds = array<i64: 4>, scalar_prefetch = 0 : i64, scratch_operands = 0 : i64, tpu.core_type = #tpu.core_type<tc>, window_params = [{transform_indices = @transform_0, window_bounds = array<i64: 128, 256>}, {pipeline_mode = #tpu.pipeline_mode<synchronous>, transform_indices = @transform_1, window_bounds = array<i64: 1, 256>}, {pipeline_mode = #tpu.pipeline_mode<synchronous>, transform_indices = @transform_2, window_bounds = array<i64: 1, 256>}, {transform_indices = @transform_3, window_bounds = array<i64: 128, 256>}, {transform_indices = @transform_4, window_bounds = array<i64: 128, 256>}]} {
    %c0 = arith.constant 0 : index
    %c0_0 = arith.constant 0 : index
    %0 = vector.load %arg1[%c0, %c0_0] : memref<128x256xbf16, #tpu.memory_space<vmem>>, vector<128x256xbf16>
    %1 = arith.extf %0 : vector<128x256xbf16> to vector<128x256xf32>
    %c0_1 = arith.constant 0 : index
    %c0_2 = arith.constant 0 : index
    %2 = vector.load %arg2[%c0_1, %c0_2] : memref<1x256xf32, #tpu.memory_space<vmem>>, vector<1x256xf32>
    %3 = vector.broadcast %2 : vector<1x256xf32> to vector<128x256xf32>
    %4 = arith.mulf %1, %3 : vector<128x256xf32>
    %c0_3 = arith.constant 0 : index
    %c0_4 = arith.constant 0 : index
    %5 = vector.load %arg3[%c0_3, %c0_4] : memref<1x256xf32, #tpu.memory_space<vmem>>, vector<1x256xf32>
    %6 = vector.broadcast %5 : vector<1x256xf32> to vector<128x256xf32>
    %7 = arith.addf %4, %6 : vector<128x256xf32>
    %c0_5 = arith.constant 0 : index
    %c0_6 = arith.constant 0 : index
    %8 = vector.load %arg4[%c0_5, %c0_6] : memref<128x256xf32, #tpu.memory_space<vmem>>, vector<128x256xf32>
    %9 = arith.addf %7, %8 : vector<128x256xf32>
    %cst = arith.constant 0.000000e+00 : f32
    %10 = vector.broadcast %cst : f32 to vector<128x256xf32>
    %11 = arith.maximumf %9, %10 : vector<128x256xf32>
    %c0_7 = arith.constant 0 : index
    %c0_8 = arith.constant 0 : index
    %12 = vector.load %arg5[%c0_7, %c0_8] : memref<128x256xf32, #tpu.memory_space<vmem>>, vector<128x256xf32>
    tpu.vector_store %arg5[%c0_7, %c0_8], %11 {strides = array<i32>} : memref<128x256xf32, #tpu.memory_space<vmem>>, vector<128x256xf32>,
    return
  }
  func.func @transform_0(%arg0: i32) -> (i32, i32) {
    %c0_i32 = arith.constant 0 : i32
    %c0_i32_0 = arith.constant 0 : i32
    return %arg0, %c0_i32 : i32, i32
  }
  func.func @transform_1(%arg0: i32) -> (i32, i32) {
    %c0_i32 = arith.constant 0 : i32
    %c0_i32_0 = arith.constant 0 : i32
    %c0_i32_1 = arith.constant 0 : i32
    return %c0_i32, %c0_i32_0 : i32, i32
  }
  func.func @transform_2(%arg0: i32) -> (i32, i32) {
    %c0_i32 = arith.constant 0 : i32
    %c0_i32_0 = arith.constant 0 : i32
    %c0_i32_1 = arith.constant 0 : i32
    return %c0_i32, %c0_i32_0 : i32, i32
  }
  func.func @transform_3(%arg0: i32) -> (i32, i32) {
    %c0_i32 = arith.constant 0 : i32
    %c0_i32_0 = arith.constant 0 : i32
    return %arg0, %c0_i32 : i32, i32
  }
  func.func @transform_4(%arg0: i32) -> (i32, i32) {
    %c0_i32 = arith.constant 0 : i32
    %c0_i32_0 = arith.constant 0 : i32
    return %arg0, %c0_i32 : i32, i32
  }
}

module attributes {stable_mosaic.version = 11 : i64} {
  func.func @_bn1_relu_conv2_stats_kernel(%arg0: i32, %arg1: memref<1x16x16x64xbf16, #tpu.memory_space<vmem>>, %arg2: memref<1x64xf32, #tpu.memory_space<vmem>>, %arg3: memref<1x64xf32, #tpu.memory_space<vmem>>, %arg4: memref<9x64x64xbf16, #tpu.memory_space<vmem>>, %arg5: memref<1x16x16x64xbf16, #tpu.memory_space<vmem>>, %arg6: memref<1x2x64xf32, #tpu.memory_space<vmem>>, %arg7: memref<18x18x64xbf16, #tpu.memory_space<vmem>>) attributes {dimension_semantics = [#tpu.dimension_semantics<parallel>], iteration_bounds = array<i64: 2>, scalar_prefetch = 0 : i64, scratch_operands = 1 : i64, tpu.core_type = #tpu.core_type<tc>, window_params = [{transform_indices = @transform_0, window_bounds = array<i64: 1, 16, 16, 64>}, {pipeline_mode = #tpu.pipeline_mode<synchronous>, transform_indices = @transform_1, window_bounds = array<i64: 1, 64>}, {pipeline_mode = #tpu.pipeline_mode<synchronous>, transform_indices = @transform_2, window_bounds = array<i64: 1, 64>}, {pipeline_mode = #tpu.pipeline_mode<synchronous>, transform_indices = @transform_3, window_bounds = array<i64: 9, 64, 64>}, {transform_indices = @transform_4, window_bounds = array<i64: 1, 16, 16, 64>}, {transform_indices = @transform_5, window_bounds = array<i64: 1, 2, 64>}]} {
    %c0 = arith.constant 0 : index
    %c0_0 = arith.constant 0 : index
    %c0_1 = arith.constant 0 : index
    %c0_2 = arith.constant 0 : index
    %0 = vector.load %arg1[%c0, %c0_0, %c0_1, %c0_2] : memref<1x16x16x64xbf16, #tpu.memory_space<vmem>>, vector<1x16x16x64xbf16>
    %1 = vector.shape_cast %0 : vector<1x16x16x64xbf16> to vector<16x16x64xbf16>
    %2 = arith.extf %1 : vector<16x16x64xbf16> to vector<16x16x64xf32>
    %c0_3 = arith.constant 0 : index
    %c0_4 = arith.constant 0 : index
    %3 = vector.load %arg2[%c0_3, %c0_4] : memref<1x64xf32, #tpu.memory_space<vmem>>, vector<1x64xf32>
    %4 = vector.shape_cast %3 : vector<1x64xf32> to vector<1x1x64xf32>
    %5 = vector.broadcast %4 : vector<1x1x64xf32> to vector<16x16x64xf32>
    %6 = arith.mulf %2, %5 : vector<16x16x64xf32>
    %c0_5 = arith.constant 0 : index
    %c0_6 = arith.constant 0 : index
    %7 = vector.load %arg3[%c0_5, %c0_6] : memref<1x64xf32, #tpu.memory_space<vmem>>, vector<1x64xf32>
    %8 = vector.shape_cast %7 : vector<1x64xf32> to vector<1x1x64xf32>
    %9 = vector.broadcast %8 : vector<1x1x64xf32> to vector<16x16x64xf32>
    %10 = arith.addf %6, %9 : vector<16x16x64xf32>
    %cst = arith.constant 0.000000e+00 : f32
    %11 = vector.broadcast %cst : f32 to vector<16x16x64xf32>
    %12 = arith.maximumf %10, %11 : vector<16x16x64xf32>
    %cst_7 = arith.constant 0.000000e+00 : bf16
    %13 = vector.broadcast %cst_7 : bf16 to vector<18x18x64xbf16>
    %c0_8 = arith.constant 0 : index
    %c0_9 = arith.constant 0 : index
    %c0_10 = arith.constant 0 : index
    %14 = vector.load %arg7[%c0_8, %c0_9, %c0_10] : memref<18x18x64xbf16, #tpu.memory_space<vmem>>, vector<18x18x64xbf16>
    tpu.vector_store %arg7[%c0_8, %c0_9, %c0_10], %13 {strides = array<i32>} : memref<18x18x64xbf16, #tpu.memory_space<vmem>>, vector<18x18x64xbf16>,
    %15 = arith.truncf %12 : vector<16x16x64xf32> to vector<16x16x64xbf16>
    %c1 = arith.constant 1 : index
    %c1_11 = arith.constant 1 : index
    %c0_12 = arith.constant 0 : index
    %16 = vector.load %arg7[%c1, %c1_11, %c0_12] : memref<18x18x64xbf16, #tpu.memory_space<vmem>>, vector<16x16x64xbf16>
    tpu.vector_store %arg7[%c1, %c1_11, %c0_12], %15 {strides = array<i32>} : memref<18x18x64xbf16, #tpu.memory_space<vmem>>, vector<16x16x64xbf16>,
    %cst_13 = arith.constant 0.000000e+00 : f32
    %17 = vector.broadcast %cst_13 : f32 to vector<256x64xf32>
    %c0_14 = arith.constant 0 : index
    %c0_15 = arith.constant 0 : index
    %c0_16 = arith.constant 0 : index
    %18 = vector.load %arg7[%c0_14, %c0_15, %c0_16] : memref<18x18x64xbf16, #tpu.memory_space<vmem>>, vector<16x16x64xbf16>
    %19 = vector.shape_cast %18 : vector<16x16x64xbf16> to vector<256x64xbf16>
    %c0_17 = arith.constant 0 : index
    %c0_18 = arith.constant 0 : index
    %c0_19 = arith.constant 0 : index
    %20 = vector.load %arg4[%c0_17, %c0_18, %c0_19] : memref<9x64x64xbf16, #tpu.memory_space<vmem>>, vector<1x64x64xbf16>
    %21 = vector.shape_cast %20 : vector<1x64x64xbf16> to vector<64x64xbf16>
    %cst_20 = arith.constant dense<0.000000e+00> : vector<256x64xf32>
    %22 = tpu.matmul %19, %21, %cst_20 {dimension_numbers = #tpu.dot_dimension_numbers<[1], [0], [0], [1], [0, 0, 1, 1], [], []>} : vector<256x64xbf16>, vector<64x64xbf16>, vector<256x64xf32> -> vector<256x64xf32>
    %23 = arith.addf %17, %22 : vector<256x64xf32>
    %c0_21 = arith.constant 0 : index
    %c1_22 = arith.constant 1 : index
    %c0_23 = arith.constant 0 : index
    %24 = vector.load %arg7[%c0_21, %c1_22, %c0_23] : memref<18x18x64xbf16, #tpu.memory_space<vmem>>, vector<16x16x64xbf16>
    %25 = vector.shape_cast %24 : vector<16x16x64xbf16> to vector<256x64xbf16>
    %c1_24 = arith.constant 1 : index
    %c0_25 = arith.constant 0 : index
    %c0_26 = arith.constant 0 : index
    %26 = vector.load %arg4[%c1_24, %c0_25, %c0_26] : memref<9x64x64xbf16, #tpu.memory_space<vmem>>, vector<1x64x64xbf16>
    %27 = vector.shape_cast %26 : vector<1x64x64xbf16> to vector<64x64xbf16>
    %cst_27 = arith.constant dense<0.000000e+00> : vector<256x64xf32>
    %28 = tpu.matmul %25, %27, %cst_27 {dimension_numbers = #tpu.dot_dimension_numbers<[1], [0], [0], [1], [0, 0, 1, 1], [], []>} : vector<256x64xbf16>, vector<64x64xbf16>, vector<256x64xf32> -> vector<256x64xf32>
    %29 = arith.addf %23, %28 : vector<256x64xf32>
    %c0_28 = arith.constant 0 : index
    %c2 = arith.constant 2 : index
    %c0_29 = arith.constant 0 : index
    %30 = vector.load %arg7[%c0_28, %c2, %c0_29] : memref<18x18x64xbf16, #tpu.memory_space<vmem>>, vector<16x16x64xbf16>
    %31 = vector.shape_cast %30 : vector<16x16x64xbf16> to vector<256x64xbf16>
    %c2_30 = arith.constant 2 : index
    %c0_31 = arith.constant 0 : index
    %c0_32 = arith.constant 0 : index
    %32 = vector.load %arg4[%c2_30, %c0_31, %c0_32] : memref<9x64x64xbf16, #tpu.memory_space<vmem>>, vector<1x64x64xbf16>
    %33 = vector.shape_cast %32 : vector<1x64x64xbf16> to vector<64x64xbf16>
    %cst_33 = arith.constant dense<0.000000e+00> : vector<256x64xf32>
    %34 = tpu.matmul %31, %33, %cst_33 {dimension_numbers = #tpu.dot_dimension_numbers<[1], [0], [0], [1], [0, 0, 1, 1], [], []>} : vector<256x64xbf16>, vector<64x64xbf16>, vector<256x64xf32> -> vector<256x64xf32>
    %35 = arith.addf %29, %34 : vector<256x64xf32>
    %c1_34 = arith.constant 1 : index
    %c0_35 = arith.constant 0 : index
    %c0_36 = arith.constant 0 : index
    %36 = vector.load %arg7[%c1_34, %c0_35, %c0_36] : memref<18x18x64xbf16, #tpu.memory_space<vmem>>, vector<16x16x64xbf16>
    %37 = vector.shape_cast %36 : vector<16x16x64xbf16> to vector<256x64xbf16>
    %c3 = arith.constant 3 : index
    %c0_37 = arith.constant 0 : index
    %c0_38 = arith.constant 0 : index
    %38 = vector.load %arg4[%c3, %c0_37, %c0_38] : memref<9x64x64xbf16, #tpu.memory_space<vmem>>, vector<1x64x64xbf16>
    %39 = vector.shape_cast %38 : vector<1x64x64xbf16> to vector<64x64xbf16>
    %cst_39 = arith.constant dense<0.000000e+00> : vector<256x64xf32>
    %40 = tpu.matmul %37, %39, %cst_39 {dimension_numbers = #tpu.dot_dimension_numbers<[1], [0], [0], [1], [0, 0, 1, 1], [], []>} : vector<256x64xbf16>, vector<64x64xbf16>, vector<256x64xf32> -> vector<256x64xf32>
    %41 = arith.addf %35, %40 : vector<256x64xf32>
    %c1_40 = arith.constant 1 : index
    %c1_41 = arith.constant 1 : index
    %c0_42 = arith.constant 0 : index
    %42 = vector.load %arg7[%c1_40, %c1_41, %c0_42] : memref<18x18x64xbf16, #tpu.memory_space<vmem>>, vector<16x16x64xbf16>
    %43 = vector.shape_cast %42 : vector<16x16x64xbf16> to vector<256x64xbf16>
    %c4 = arith.constant 4 : index
    %c0_43 = arith.constant 0 : index
    %c0_44 = arith.constant 0 : index
    %44 = vector.load %arg4[%c4, %c0_43, %c0_44] : memref<9x64x64xbf16, #tpu.memory_space<vmem>>, vector<1x64x64xbf16>
    %45 = vector.shape_cast %44 : vector<1x64x64xbf16> to vector<64x64xbf16>
    %cst_45 = arith.constant dense<0.000000e+00> : vector<256x64xf32>
    %46 = tpu.matmul %43, %45, %cst_45 {dimension_numbers = #tpu.dot_dimension_numbers<[1], [0], [0], [1], [0, 0, 1, 1], [], []>} : vector<256x64xbf16>, vector<64x64xbf16>, vector<256x64xf32> -> vector<256x64xf32>
    %47 = arith.addf %41, %46 : vector<256x64xf32>
    %c1_46 = arith.constant 1 : index
    %c2_47 = arith.constant 2 : index
    %c0_48 = arith.constant 0 : index
    %48 = vector.load %arg7[%c1_46, %c2_47, %c0_48] : memref<18x18x64xbf16, #tpu.memory_space<vmem>>, vector<16x16x64xbf16>
    %49 = vector.shape_cast %48 : vector<16x16x64xbf16> to vector<256x64xbf16>
    %c5 = arith.constant 5 : index
    %c0_49 = arith.constant 0 : index
    %c0_50 = arith.constant 0 : index
    %50 = vector.load %arg4[%c5, %c0_49, %c0_50] : memref<9x64x64xbf16, #tpu.memory_space<vmem>>, vector<1x64x64xbf16>
    %51 = vector.shape_cast %50 : vector<1x64x64xbf16> to vector<64x64xbf16>
    %cst_51 = arith.constant dense<0.000000e+00> : vector<256x64xf32>
    %52 = tpu.matmul %49, %51, %cst_51 {dimension_numbers = #tpu.dot_dimension_numbers<[1], [0], [0], [1], [0, 0, 1, 1], [], []>} : vector<256x64xbf16>, vector<64x64xbf16>, vector<256x64xf32> -> vector<256x64xf32>
    %53 = arith.addf %47, %52 : vector<256x64xf32>
    %c2_52 = arith.constant 2 : index
    %c0_53 = arith.constant 0 : index
    %c0_54 = arith.constant 0 : index
    %54 = vector.load %arg7[%c2_52, %c0_53, %c0_54] : memref<18x18x64xbf16, #tpu.memory_space<vmem>>, vector<16x16x64xbf16>
    %55 = vector.shape_cast %54 : vector<16x16x64xbf16> to vector<256x64xbf16>
    %c6 = arith.constant 6 : index
    %c0_55 = arith.constant 0 : index
    %c0_56 = arith.constant 0 : index
    %56 = vector.load %arg4[%c6, %c0_55, %c0_56] : memref<9x64x64xbf16, #tpu.memory_space<vmem>>, vector<1x64x64xbf16>
    %57 = vector.shape_cast %56 : vector<1x64x64xbf16> to vector<64x64xbf16>
    %cst_57 = arith.constant dense<0.000000e+00> : vector<256x64xf32>
    %58 = tpu.matmul %55, %57, %cst_57 {dimension_numbers = #tpu.dot_dimension_numbers<[1], [0], [0], [1], [0, 0, 1, 1], [], []>} : vector<256x64xbf16>, vector<64x64xbf16>, vector<256x64xf32> -> vector<256x64xf32>
    %59 = arith.addf %53, %58 : vector<256x64xf32>
    %c2_58 = arith.constant 2 : index
    %c1_59 = arith.constant 1 : index
    %c0_60 = arith.constant 0 : index
    %60 = vector.load %arg7[%c2_58, %c1_59, %c0_60] : memref<18x18x64xbf16, #tpu.memory_space<vmem>>, vector<16x16x64xbf16>
    %61 = vector.shape_cast %60 : vector<16x16x64xbf16> to vector<256x64xbf16>
    %c7 = arith.constant 7 : index
    %c0_61 = arith.constant 0 : index
    %c0_62 = arith.constant 0 : index
    %62 = vector.load %arg4[%c7, %c0_61, %c0_62] : memref<9x64x64xbf16, #tpu.memory_space<vmem>>, vector<1x64x64xbf16>
    %63 = vector.shape_cast %62 : vector<1x64x64xbf16> to vector<64x64xbf16>
    %cst_63 = arith.constant dense<0.000000e+00> : vector<256x64xf32>
    %64 = tpu.matmul %61, %63, %cst_63 {dimension_numbers = #tpu.dot_dimension_numbers<[1], [0], [0], [1], [0, 0, 1, 1], [], []>} : vector<256x64xbf16>, vector<64x64xbf16>, vector<256x64xf32> -> vector<256x64xf32>
    %65 = arith.addf %59, %64 : vector<256x64xf32>
    %c2_64 = arith.constant 2 : index
    %c2_65 = arith.constant 2 : index
    %c0_66 = arith.constant 0 : index
    %66 = vector.load %arg7[%c2_64, %c2_65, %c0_66] : memref<18x18x64xbf16, #tpu.memory_space<vmem>>, vector<16x16x64xbf16>
    %67 = vector.shape_cast %66 : vector<16x16x64xbf16> to vector<256x64xbf16>
    %c8 = arith.constant 8 : index
    %c0_67 = arith.constant 0 : index
    %c0_68 = arith.constant 0 : index
    %68 = vector.load %arg4[%c8, %c0_67, %c0_68] : memref<9x64x64xbf16, #tpu.memory_space<vmem>>, vector<1x64x64xbf16>
    %69 = vector.shape_cast %68 : vector<1x64x64xbf16> to vector<64x64xbf16>
    %cst_69 = arith.constant dense<0.000000e+00> : vector<256x64xf32>
    %70 = tpu.matmul %67, %69, %cst_69 {dimension_numbers = #tpu.dot_dimension_numbers<[1], [0], [0], [1], [0, 0, 1, 1], [], []>} : vector<256x64xbf16>, vector<64x64xbf16>, vector<256x64xf32> -> vector<256x64xf32>
    %71 = arith.addf %65, %70 : vector<256x64xf32>
    %72 = vector.shape_cast %71 : vector<256x64xf32> to vector<1x16x16x64xf32>
    %73 = arith.truncf %72 : vector<1x16x16x64xf32> to vector<1x16x16x64xbf16>
    %c0_70 = arith.constant 0 : index
    %c0_71 = arith.constant 0 : index
    %c0_72 = arith.constant 0 : index
    %c0_73 = arith.constant 0 : index
    %74 = vector.load %arg5[%c0_70, %c0_71, %c0_72, %c0_73] : memref<1x16x16x64xbf16, #tpu.memory_space<vmem>>, vector<1x16x16x64xbf16>
    tpu.vector_store %arg5[%c0_70, %c0_71, %c0_72, %c0_73], %73 {strides = array<i32>} : memref<1x16x16x64xbf16, #tpu.memory_space<vmem>>, vector<1x16x16x64xbf16>,
    %cst_74 = arith.constant dense<0.000000e+00> : vector<64xf32>
    %75 = vector.multi_reduction <add>, %71, %cst_74 [0] : vector<256x64xf32> to vector<64xf32>
    %76 = vector.shape_cast %75 : vector<64xf32> to vector<1x64xf32>
    %77 = arith.mulf %71, %71 : vector<256x64xf32>
    %cst_75 = arith.constant dense<0.000000e+00> : vector<64xf32>
    %78 = vector.multi_reduction <add>, %77, %cst_75 [0] : vector<256x64xf32> to vector<64xf32>
    %79 = vector.shape_cast %78 : vector<64xf32> to vector<1x64xf32>
    %80 = tpu.concatenate %76, %79 in 0 : vector<1x64xf32>, vector<1x64xf32> -> vector<2x64xf32>
    %81 = vector.shape_cast %80 : vector<2x64xf32> to vector<1x2x64xf32>
    %c0_76 = arith.constant 0 : index
    %c0_77 = arith.constant 0 : index
    %c0_78 = arith.constant 0 : index
    %82 = vector.load %arg6[%c0_76, %c0_77, %c0_78] : memref<1x2x64xf32, #tpu.memory_space<vmem>>, vector<1x2x64xf32>
    tpu.vector_store %arg6[%c0_76, %c0_77, %c0_78], %81 {strides = array<i32>} : memref<1x2x64xf32, #tpu.memory_space<vmem>>, vector<1x2x64xf32>,
    return
  }
  func.func @transform_0(%arg0: i32) -> (i32, i32, i32, i32) {
    %c0_i32 = arith.constant 0 : i32
    %c0_i32_0 = arith.constant 0 : i32
    %c0_i32_1 = arith.constant 0 : i32
    %c0_i32_2 = arith.constant 0 : i32
    return %arg0, %c0_i32, %c0_i32_0, %c0_i32_1 : i32, i32, i32, i32
  }
  func.func @transform_1(%arg0: i32) -> (i32, i32) {
    %c0_i32 = arith.constant 0 : i32
    %c0_i32_0 = arith.constant 0 : i32
    %c0_i32_1 = arith.constant 0 : i32
    return %c0_i32, %c0_i32_0 : i32, i32
  }
  func.func @transform_2(%arg0: i32) -> (i32, i32) {
    %c0_i32 = arith.constant 0 : i32
    %c0_i32_0 = arith.constant 0 : i32
    %c0_i32_1 = arith.constant 0 : i32
    return %c0_i32, %c0_i32_0 : i32, i32
  }
  func.func @transform_3(%arg0: i32) -> (i32, i32, i32) {
    %c0_i32 = arith.constant 0 : i32
    %c0_i32_0 = arith.constant 0 : i32
    %c0_i32_1 = arith.constant 0 : i32
    %c0_i32_2 = arith.constant 0 : i32
    return %c0_i32, %c0_i32_0, %c0_i32_1 : i32, i32, i32
  }
  func.func @transform_4(%arg0: i32) -> (i32, i32, i32, i32) {
    %c0_i32 = arith.constant 0 : i32
    %c0_i32_0 = arith.constant 0 : i32
    %c0_i32_1 = arith.constant 0 : i32
    %c0_i32_2 = arith.constant 0 : i32
    return %arg0, %c0_i32, %c0_i32_0, %c0_i32_1 : i32, i32, i32, i32
  }
  func.func @transform_5(%arg0: i32) -> (i32, i32, i32) {
    %c0_i32 = arith.constant 0 : i32
    %c0_i32_0 = arith.constant 0 : i32
    %c0_i32_1 = arith.constant 0 : i32
    return %arg0, %c0_i32, %c0_i32_0 : i32, i32, i32
  }
}

module attributes {stable_mosaic.version = 11 : i64} {
  func.func @_bn2_relu_conv3_stats_kernel(%arg0: i32, %arg1: memref<128x64xbf16, #tpu.memory_space<vmem>>, %arg2: memref<1x64xf32, #tpu.memory_space<vmem>>, %arg3: memref<1x64xf32, #tpu.memory_space<vmem>>, %arg4: memref<64x256xbf16, #tpu.memory_space<vmem>>, %arg5: memref<128x256xbf16, #tpu.memory_space<vmem>>, %arg6: memref<1x2x256xf32, #tpu.memory_space<vmem>>) attributes {dimension_semantics = [#tpu.dimension_semantics<parallel>], iteration_bounds = array<i64: 4>, scalar_prefetch = 0 : i64, scratch_operands = 0 : i64, tpu.core_type = #tpu.core_type<tc>, window_params = [{transform_indices = @transform_0, window_bounds = array<i64: 128, 64>}, {pipeline_mode = #tpu.pipeline_mode<synchronous>, transform_indices = @transform_1, window_bounds = array<i64: 1, 64>}, {pipeline_mode = #tpu.pipeline_mode<synchronous>, transform_indices = @transform_2, window_bounds = array<i64: 1, 64>}, {pipeline_mode = #tpu.pipeline_mode<synchronous>, transform_indices = @transform_3, window_bounds = array<i64: 64, 256>}, {transform_indices = @transform_4, window_bounds = array<i64: 128, 256>}, {transform_indices = @transform_5, window_bounds = array<i64: 1, 2, 256>}]} {
    %c0 = arith.constant 0 : index
    %c0_0 = arith.constant 0 : index
    %0 = vector.load %arg1[%c0, %c0_0] : memref<128x64xbf16, #tpu.memory_space<vmem>>, vector<128x64xbf16>
    %1 = arith.extf %0 : vector<128x64xbf16> to vector<128x64xf32>
    %c0_1 = arith.constant 0 : index
    %c0_2 = arith.constant 0 : index
    %2 = vector.load %arg2[%c0_1, %c0_2] : memref<1x64xf32, #tpu.memory_space<vmem>>, vector<1x64xf32>
    %3 = vector.broadcast %2 : vector<1x64xf32> to vector<128x64xf32>
    %4 = arith.mulf %1, %3 : vector<128x64xf32>
    %c0_3 = arith.constant 0 : index
    %c0_4 = arith.constant 0 : index
    %5 = vector.load %arg3[%c0_3, %c0_4] : memref<1x64xf32, #tpu.memory_space<vmem>>, vector<1x64xf32>
    %6 = vector.broadcast %5 : vector<1x64xf32> to vector<128x64xf32>
    %7 = arith.addf %4, %6 : vector<128x64xf32>
    %cst = arith.constant 0.000000e+00 : f32
    %8 = vector.broadcast %cst : f32 to vector<128x64xf32>
    %9 = arith.maximumf %7, %8 : vector<128x64xf32>
    %10 = arith.truncf %9 : vector<128x64xf32> to vector<128x64xbf16>
    %c0_5 = arith.constant 0 : index
    %c0_6 = arith.constant 0 : index
    %11 = vector.load %arg4[%c0_5, %c0_6] : memref<64x256xbf16, #tpu.memory_space<vmem>>, vector<64x256xbf16>
    %cst_7 = arith.constant dense<0.000000e+00> : vector<128x256xf32>
    %12 = tpu.matmul %10, %11, %cst_7 {dimension_numbers = #tpu.dot_dimension_numbers<[1], [0], [0], [1], [0, 0, 1, 1], [], []>} : vector<128x64xbf16>, vector<64x256xbf16>, vector<128x256xf32> -> vector<128x256xf32>
    %13 = arith.truncf %12 : vector<128x256xf32> to vector<128x256xbf16>
    %c0_8 = arith.constant 0 : index
    %c0_9 = arith.constant 0 : index
    %14 = vector.load %arg5[%c0_8, %c0_9] : memref<128x256xbf16, #tpu.memory_space<vmem>>, vector<128x256xbf16>
    tpu.vector_store %arg5[%c0_8, %c0_9], %13 {strides = array<i32>} : memref<128x256xbf16, #tpu.memory_space<vmem>>, vector<128x256xbf16>,
    %cst_10 = arith.constant dense<0.000000e+00> : vector<256xf32>
    %15 = vector.multi_reduction <add>, %12, %cst_10 [0] : vector<128x256xf32> to vector<256xf32>
    %16 = vector.shape_cast %15 : vector<256xf32> to vector<1x256xf32>
    %17 = arith.mulf %12, %12 : vector<128x256xf32>
    %cst_11 = arith.constant dense<0.000000e+00> : vector<256xf32>
    %18 = vector.multi_reduction <add>, %17, %cst_11 [0] : vector<128x256xf32> to vector<256xf32>
    %19 = vector.shape_cast %18 : vector<256xf32> to vector<1x256xf32>
    %20 = tpu.concatenate %16, %19 in 0 : vector<1x256xf32>, vector<1x256xf32> -> vector<2x256xf32>
    %21 = vector.shape_cast %20 : vector<2x256xf32> to vector<1x2x256xf32>
    %c0_12 = arith.constant 0 : index
    %c0_13 = arith.constant 0 : index
    %c0_14 = arith.constant 0 : index
    %22 = vector.load %arg6[%c0_12, %c0_13, %c0_14] : memref<1x2x256xf32, #tpu.memory_space<vmem>>, vector<1x2x256xf32>
    tpu.vector_store %arg6[%c0_12, %c0_13, %c0_14], %21 {strides = array<i32>} : memref<1x2x256xf32, #tpu.memory_space<vmem>>, vector<1x2x256xf32>,
    return
  }
  func.func @transform_0(%arg0: i32) -> (i32, i32) {
    %c0_i32 = arith.constant 0 : i32
    %c0_i32_0 = arith.constant 0 : i32
    return %arg0, %c0_i32 : i32, i32
  }
  func.func @transform_1(%arg0: i32) -> (i32, i32) {
    %c0_i32 = arith.constant 0 : i32
    %c0_i32_0 = arith.constant 0 : i32
    %c0_i32_1 = arith.constant 0 : i32
    return %c0_i32, %c0_i32_0 : i32, i32
  }
  func.func @transform_2(%arg0: i32) -> (i32, i32) {
    %c0_i32 = arith.constant 0 : i32
    %c0_i32_0 = arith.constant 0 : i32
    %c0_i32_1 = arith.constant 0 : i32
    return %c0_i32, %c0_i32_0 : i32, i32
  }
  func.func @transform_3(%arg0: i32) -> (i32, i32) {
    %c0_i32 = arith.constant 0 : i32
    %c0_i32_0 = arith.constant 0 : i32
    %c0_i32_1 = arith.constant 0 : i32
    return %c0_i32, %c0_i32_0 : i32, i32
  }
  func.func @transform_4(%arg0: i32) -> (i32, i32) {
    %c0_i32 = arith.constant 0 : i32
    %c0_i32_0 = arith.constant 0 : i32
    return %arg0, %c0_i32 : i32, i32
  }
  func.func @transform_5(%arg0: i32) -> (i32, i32, i32) {
    %c0_i32 = arith.constant 0 : i32
    %c0_i32_0 = arith.constant 0 : i32
    %c0_i32_1 = arith.constant 0 : i32
    return %arg0, %c0_i32, %c0_i32_0 : i32, i32, i32
  }
}

</mosaic_0001>

<llo_original>
// kernel: bottleneck_forward.7
$region0: #{bottleneck_forward.7}
  #allocation0 [shape = 'u32[]', space=smem, size = 0x4, offset = 0x4, fixed_abs, tag = 'smem constant byte address 0x4 - core index']
  #allocation1 [shape = 'u32[144,128]{1,0:T(1,128)}', space=vmem, size = 0x12000, scoped, tag = 'internal scratch']
  %s0 = inlined_call_operand.vmem [shape: bf16[512,256], index: 0, kind: input, shape index: {}]
  %s1 = inlined_call_operand.vmem [shape: f32[1,256], index: 1, kind: input, shape index: {}]
  %s2 = inlined_call_operand.vmem [shape: f32[1,256], index: 2, kind: input, shape index: {}]
  %s3 = inlined_call_operand.vmem [shape: f32[512,256], index: 3, kind: input, shape index: {}]
  %s4 = inlined_call_operand.hbm [shape: f32[512,256], index: 4, kind: output, shape index: {}]
  %s5 = sld [smem:[#allocation0]]
  $region49: #{bottleneck_forward.7} parent=0
    _
  %s7 = ssub.s32 1, %s5
  %s8 = scalar_select 0, %s7, %s5
  $region1: #{bottleneck_forward.7} parent=0
    #allocation2 [shape = 'u8[262144]{0}', space=vmem, size = 0x40000, scoped, tag = 'output window, operand 0']
    #allocation3 [shape = 's32[2]{0}', space=sflag, size = 0x8, scoped, tag = 'scoped memory for bottleneck_forward.7']
    %9 = vsyncpa [#allocation3], 0
    %s10 = scalar_lea.sflag [#allocation3], 1
    %11 = vsyncpa %s10, 0
    loop: start=0, step=1, limit=6
    $region2: #{bottleneck_forward.7} parent=1 // loop_pre_header
      _
    $region3: #{bottleneck_forward.7} parent=1 // loop_header
      %s13 = sphi 0, %s17
      %p14 = scmp.ge.s32.totalorder %s13, 6
      %s23 = sphi 0, %s25
      %s26 = sphi 0, %s23
      %s27 = sphi 0, %s26
      %s43 = sphi 0, %s27
      %s47 = sphi 0, %s47
      %s49 = sphi 0, %s47
      %s50 = sphi 0, %s49
      %s64 = sphi 0, %s50
      %s68 = sphi 0, %s68
      %s70 = sphi 0, %s68
      %s71 = sphi 0, %s70
      %s85 = sphi 0, %s71
      %s91 = sphi 0, %s93
      %s94 = sphi 0, %s91
      %s95 = sphi 0, %s94
      %s111 = sphi 0, %s95
      %s117 = sphi 0, %s119
      %s120 = sphi 0, %s117
      %s121 = sphi 0, %s120
      %s137 = sphi 0, %s121
    $region4: #{bottleneck_forward.7} parent=1 // loop_header_branch
      %16 = sbr.rel (%p14) target = $region8
    $region5: #{bottleneck_forward.7} parent=1 // loop_body
      %s18 = ssub.s32 %s13, 1
      %s19 = ssub.s32 %s13, 2
      %s20 = sadd.s32 %s13, 1
      %s21 = ssub.s32 %s13, %s20
      %p22 = scmp.eq.s32.totalorder %s21, 0
      %s24 = sadd.s32 %s23, 1
      %s25 = scalar_select %p22, %s23, %s24
      %p28 = pneg %p22
      %p29 = scmp.eq.s32.totalorder %s13, 3
      %p30 = por %p28, %p29
      %p31 = scmp.ne.s32.totalorder %s23, %s26
      %p32 = scmp.eq.s32.totalorder %s13, 0
      %p33 = por %p31, %p32
      %p34 = scmp.ne.s32.totalorder %s23, %s26
      %p35 = scmp.eq.s32.totalorder %s18, 3
      %p36 = por %p34, %p35
      %p37 = scmp.ne.s32.totalorder %s26, %s27
      %p38 = scmp.eq.s32.totalorder %s18, 0
      %p39 = por %p37, %p38
      %p40 = scmp.ne.s32.totalorder %s26, %s27
      %p41 = scmp.eq.s32.totalorder %s19, 3
      %p42 = por %p40, %p41
      %p44 = scmp.ne.s32.totalorder %s27, %s43
      %p45 = scmp.eq.s32.totalorder %s19, 0
      %p46 = por %p44, %p45
      %s48 = sadd.s32 %s47, 1
      %p51 = scmp.eq.s32.totalorder %s13, 3
      %p52 = scmp.ne.s32.totalorder %s47, %s49
      %p53 = scmp.eq.s32.totalorder %s13, 0
      %p54 = por %p52, %p53
      %p55 = scmp.ne.s32.totalorder %s47, %s49
      %p56 = scmp.eq.s32.totalorder %s18, 3
      %p57 = por %p55, %p56
      %p58 = scmp.ne.s32.totalorder %s49, %s50
      %p59 = scmp.eq.s32.totalorder %s18, 0
      %p60 = por %p58, %p59
      %p61 = scmp.ne.s32.totalorder %s49, %s50
      %p62 = scmp.eq.s32.totalorder %s19, 3
      %p63 = por %p61, %p62
      %p65 = scmp.ne.s32.totalorder %s50, %s64
      %p66 = scmp.eq.s32.totalorder %s19, 0
      %p67 = por %p65, %p66
      %s69 = sadd.s32 %s68, 1
      %p72 = scmp.eq.s32.totalorder %s13, 3
      %p73 = scmp.ne.s32.totalorder %s68, %s70
      %p74 = scmp.eq.s32.totalorder %s13, 0
      %p75 = por %p73, %p74
      %p76 = scmp.ne.s32.totalorder %s68, %s70
      %p77 = scmp.eq.s32.totalorder %s18, 3
      %p78 = por %p76, %p77
      %p79 = scmp.ne.s32.totalorder %s70, %s71
      %p80 = scmp.eq.s32.totalorder %s18, 0
      %p81 = por %p79, %p80
      %p82 = scmp.ne.s32.totalorder %s70, %s71
      %p83 = scmp.eq.s32.totalorder %s19, 3
      %p84 = por %p82, %p83
      %p86 = scmp.ne.s32.totalorder %s71, %s85
      %p87 = scmp.eq.s32.totalorder %s19, 0
      %p88 = por %p86, %p87
      %s89 = ssub.s32 %s13, %s20
      %p90 = scmp.eq.s32.totalorder %s89, 0
      %s92 = sadd.s32 %s91, 1
      %s93 = scalar_select %p90, %s91, %s92
      %p96 = pneg %p90
      %p97 = scmp.eq.s32.totalorder %s13, 3
      %p98 = por %p96, %p97
      %p99 = scmp.ne.s32.totalorder %s91, %s94
      %p100 = scmp.eq.s32.totalorder %s13, 0
      %p101 = por %p99, %p100
      %p102 = scmp.ne.s32.totalorder %s91, %s94
      %p103 = scmp.eq.s32.totalorder %s18, 3
      %p104 = por %p102, %p103
      %p105 = scmp.ne.s32.totalorder %s94, %s95
      %p106 = scmp.eq.s32.totalorder %s18, 0
      %p107 = por %p105, %p106
      %p108 = scmp.ne.s32.totalorder %s94, %s95
      %p109 = scmp.eq.s32.totalorder %s19, 3
      %p110 = por %p108, %p109
      %p112 = scmp.ne.s32.totalorder %s95, %s111
      %p113 = scmp.eq.s32.totalorder %s19, 0
      %p114 = por %p112, %p113
      %s115 = ssub.s32 %s13, %s20
      %p116 = scmp.eq.s32.totalorder %s115, 0
      %s118 = sadd.s32 %s117, 1
      %s119 = scalar_select %p116, %s117, %s118
      %p122 = pneg %p116
      %p123 = scmp.eq.s32.totalorder %s13, 3
      %p124 = por %p122, %p123
      %p125 = scmp.ne.s32.totalorder %s117, %s120
      %p126 = scmp.eq.s32.totalorder %s13, 0
      %p127 = por %p125, %p126
      %p128 = scmp.ne.s32.totalorder %s117, %s120
      %p129 = scmp.eq.s32.totalorder %s18, 3
      %p130 = por %p128, %p129
      %p131 = scmp.ne.s32.totalorder %s120, %s121
      %p132 = scmp.eq.s32.totalorder %s18, 0
      %p133 = por %p131, %p132
      %p134 = scmp.ne.s32.totalorder %s120, %s121
      %p135 = scmp.eq.s32.totalorder %s19, 3
      %p136 = por %p134, %p135
      %p138 = scmp.ne.s32.totalorder %s121, %s137
      %p139 = scmp.eq.s32.totalorder %s19, 0
      %p140 = por %p138, %p139
      %p141 = scmp.le.s32.totalorder 1, %s13
      %p142 = scmp.lt.s32.totalorder %s13, 5
      %p143 = pnand %p141, %p142
      %p144 = pneg %p143
      // Predicated region
      $region9: #{bottleneck_forward.7} parent=5 // pred_check
        _
      $region10: #{bottleneck_forward.7} parent=5 // pred_check_branch
        %146 = sbr.rel (%p143) target = $region12
      $region11: #{bottleneck_forward.7} parent=5 // pred_region
        %s147 = ssub.s32 %s13, 1
        // Predicated region
        $region13: #{bottleneck_forward.7} parent=11 // pred_check
          %p148 = pneg %p60
        $region14: #{bottleneck_forward.7} parent=11 // pred_check_branch
          %150 = sbr.rel (%p148) target = $region16
        $region15: #{bottleneck_forward.7} parent=11 // pred_region
          _
        $region16: #{bottleneck_forward.7} parent=11 // pred_fallthru
          _
        // Predicated region
        $region17: #{bottleneck_forward.7} parent=11 // pred_check
          %p151 = pneg %p81
        $region18: #{bottleneck_forward.7} parent=11 // pred_check_branch
          %153 = sbr.rel (%p151) target = $region20
        $region19: #{bottleneck_forward.7} parent=11 // pred_region
          _
        $region20: #{bottleneck_forward.7} parent=11 // pred_fallthru
          _
      $region12: #{bottleneck_forward.7} parent=5 // pred_fallthru
        _
      %p154 = scmp.lt.s32.totalorder %s13, 4
      // Predicated region
      $region21: #{bottleneck_forward.7} parent=5 // pred_check
        %p155 = pneg %p154
      $region22: #{bottleneck_forward.7} parent=5 // pred_check_branch
        %157 = sbr.rel (%p155) target = $region24
      $region23: #{bottleneck_forward.7} parent=5 // pred_region
        // Predicated region
        $region25: #{bottleneck_forward.7} parent=23 // pred_check
          %p158 = pneg %p33
        $region26: #{bottleneck_forward.7} parent=23 // pred_check_branch
          %160 = sbr.rel (%p158) target = $region28
        $region27: #{bottleneck_forward.7} parent=23 // pred_region
          %s161 = smul.u32 16, %s13
          %p162 = scmp.lt.s32.totalorder %s161, 63
          %s163 = scalar_select %p162, %s161, 63
          %s164 = smul.addr %s163, 2
          %s165 = smul.addr %s164, 4
          %s166 = scalar_lea.vmem %s0, %s165
          %s167 = smul.u32 16, %s13
        $region28: #{bottleneck_forward.7} parent=23 // pred_fallthru
          _
        // Predicated region
        $region29: #{bottleneck_forward.7} parent=23 // pred_check
          %p168 = pneg %p101
        $region30: #{bottleneck_forward.7} parent=23 // pred_check_branch
          %170 = sbr.rel (%p168) target = $region32
        $region31: #{bottleneck_forward.7} parent=23 // pred_region
          %s171 = smul.u32 16, %s13
          %p172 = scmp.lt.s32.totalorder %s171, 63
          %s173 = scalar_select %p172, %s171, 63
          %s174 = smul.addr %s173, 2
          %s175 = smul.addr %s174, 8
          %s176 = scalar_lea.vmem %s3, %s175
          %s177 = smul.u32 16, %s13
        $region32: #{bottleneck_forward.7} parent=23 // pred_fallthru
          _
      $region24: #{bottleneck_forward.7} parent=5 // pred_fallthru
        _
      %p178 = scmp.le.s32.totalorder 1, %s13
      %p179 = scmp.lt.s32.totalorder %s13, 5
      %p180 = pnand %p178, %p179
      %p181 = pneg %p180
      // Predicated region
      $region33: #{bottleneck_forward.7} parent=5 // pred_check
        _
      $region34: #{bottleneck_forward.7} parent=5 // pred_check_branch
        %183 = sbr.rel (%p180) target = $region36
      $region35: #{bottleneck_forward.7} parent=5 // pred_region
        %s184 = ssub.s32 %s13, 1
        %s185 = smul.u32 16, %s18
        %p186 = scmp.lt.s32.totalorder %s185, 63
        %s187 = scalar_select %p186, %s185, 63
        %s188 = smul.addr %s187, 2
        %s189 = smul.addr %s188, 4
        %s190 = scalar_lea.vmem %s0, %s189
        %p191 = pneg %p39
        %p192 = pneg %p36
        %p193 = pneg %p60
        %p194 = pneg %p57
        %p195 = pneg %p81
        %p196 = pneg %p78
        %s197 = smul.u32 16, %s18
        %p198 = scmp.lt.s32.totalorder %s197, 63
        %s199 = scalar_select %p198, %s197, 63
        %s200 = smul.addr %s199, 2
        %s201 = smul.addr %s200, 8
        %s202 = scalar_lea.vmem %s3, %s201
        %p203 = pneg %p107
        %p204 = pneg %p104
        %p205 = pneg %p133
        %p206 = pneg %p130
        %s207 = sand.u32 %s120, 1
        %s208 = scalar_lea.sflag [#allocation3], %s207
        %s209 = sand.u32 %s120, 1
        %s210 = smul.addr %s209, 256
        %s211 = scalar_lea.vmem [#allocation2], %s210
        %s212 = smul.u32 16, %s18
        %p213 = scmp.lt.s32.totalorder %s212, 63
        %s214 = scalar_select %p213, %s212, 63
        %s215 = smul.addr %s214, 2
        %s216 = smul.addr %s215, 4
        %s217 = scalar_lea.vmem %s0, %s216
        %s218 = smul.u32 16, %s18
        %s219 = smul.u32 16, %s18
        %p220 = scmp.lt.s32.totalorder %s219, 63
        %s221 = scalar_select %p220, %s219, 63
        %s222 = smul.addr %s221, 2
        %s223 = smul.addr %s222, 8
        %s224 = scalar_lea.vmem %s3, %s223
        %s225 = smul.u32 16, %s18
        %s226 = smul.u32 16, %s18
        %v227 = vld [vmem:[%s217] sm:$0xff]
        %v228 = vld [vmem:[%s217 + $0x8] sm:$0xff]
        %v229 = vld [vmem:[%s217 + $0x10] sm:$0xff]
        %v230 = vld [vmem:[%s217 + $0x18] sm:$0xff]
        %v231 = vld [vmem:[%s217 + $0x20] sm:$0xff]
        %v232 = vld [vmem:[%s217 + $0x28] sm:$0xff]
        %v233 = vld [vmem:[%s217 + $0x30] sm:$0xff]
        %v234 = vld [vmem:[%s217 + $0x38] sm:$0xff]
        %v235 = vld [vmem:[%s217 + $0x40] sm:$0xff]
        %v236 = vld [vmem:[%s217 + $0x48] sm:$0xff]
        %v237 = vld [vmem:[%s217 + $0x50] sm:$0xff]
        %v238 = vld [vmem:[%s217 + $0x58] sm:$0xff]
        %v239 = vld [vmem:[%s217 + $0x60] sm:$0xff]
        %v240 = vld [vmem:[%s217 + $0x68] sm:$0xff]
        %v241 = vld [vmem:[%s217 + $0x70] sm:$0xff]
        %v242 = vld [vmem:[%s217 + $0x78] sm:$0xff]
        %v243 = vunpack.c.l.bf16 %v227
        %v244 = vunpack.c.h.bf16 %v227
        %v245 = vunpack.c.l.bf16 %v228
        %v246 = vunpack.c.h.bf16 %v228
        %v247 = vunpack.c.l.bf16 %v229
        %v248 = vunpack.c.h.bf16 %v229
        %v249 = vunpack.c.l.bf16 %v230
        %v250 = vunpack.c.h.bf16 %v230
        %v251 = vunpack.c.l.bf16 %v231
        %v252 = vunpack.c.h.bf16 %v231
        %v253 = vunpack.c.l.bf16 %v232
        %v254 = vunpack.c.h.bf16 %v232
        %v255 = vunpack.c.l.bf16 %v233
        %v256 = vunpack.c.h.bf16 %v233
        %v257 = vunpack.c.l.bf16 %v234
        %v258 = vunpack.c.h.bf16 %v234
        %v259 = vunpack.c.l.bf16 %v235
        %v260 = vunpack.c.h.bf16 %v235
        %v261 = vunpack.c.l.bf16 %v236
        %v262 = vunpack.c.h.bf16 %v236
        %v263 = vunpack.c.l.bf16 %v237
        %v264 = vunpack.c.h.bf16 %v237
        %v265 = vunpack.c.l.bf16 %v238
        %v266 = vunpack.c.h.bf16 %v238
        %v267 = vunpack.c.l.bf16 %v239
        %v268 = vunpack.c.h.bf16 %v239
        %v269 = vunpack.c.l.bf16 %v240
        %v270 = vunpack.c.h.bf16 %v240
        %v271 = vunpack.c.l.bf16 %v241
        %v272 = vunpack.c.h.bf16 %v241
        %v273 = vunpack.c.l.bf16 %v242
        %v274 = vunpack.c.h.bf16 %v242
        %v275 = vld [vmem:[%s1] sm:$0x3]
        %v277 = vlaneseq
        %v278 = vshrl.u32 %v277, 7
        %v279 = vsub.s32 0, %v278
        %v280 = vrot.slane %v275, %v279
        %v281 = vlaneseq
        %v282 = vshrl.u32 %v281, 7
        %v283 = vsub.s32 1, %v282
        %v284 = vrot.slane %v275, %v283
        %v287 = vmul.f32 %v243, %v280
        %v288 = vmul.f32 %v244, %v284
        %v289 = vmul.f32 %v245, %v280
        %v290 = vmul.f32 %v246, %v284
        %v291 = vmul.f32 %v247, %v280
        %v292 = vmul.f32 %v248, %v284
        %v293 = vmul.f32 %v249, %v280
        %v294 = vmul.f32 %v250, %v284
        %v295 = vmul.f32 %v251, %v280
        %v296 = vmul.f32 %v252, %v284
        %v297 = vmul.f32 %v253, %v280
        %v298 = vmul.f32 %v254, %v284
        %v299 = vmul.f32 %v255, %v280
        %v300 = vmul.f32 %v256, %v284
        %v301 = vmul.f32 %v257, %v280
        %v302 = vmul.f32 %v258, %v284
        %v303 = vmul.f32 %v259, %v280
        %v304 = vmul.f32 %v260, %v284
        %v305 = vmul.f32 %v261, %v280
        %v306 = vmul.f32 %v262, %v284
        %v307 = vmul.f32 %v263, %v280
        %v308 = vmul.f32 %v264, %v284
        %v309 = vmul.f32 %v265, %v280
        %v310 = vmul.f32 %v266, %v284
        %v311 = vmul.f32 %v267, %v280
        %v312 = vmul.f32 %v268, %v284
        %v313 = vmul.f32 %v269, %v280
        %v314 = vmul.f32 %v270, %v284
        %v315 = vmul.f32 %v271, %v280
        %v316 = vmul.f32 %v272, %v284
        %v317 = vmul.f32 %v273, %v280
        %v318 = vmul.f32 %v274, %v284
        %v319 = vld [vmem:[%s2] sm:$0x3]
        %v321 = vlaneseq
        %v322 = vshrl.u32 %v321, 7
        %v323 = vsub.s32 0, %v322
        %v324 = vrot.slane %v319, %v323
        %v325 = vlaneseq
        %v326 = vshrl.u32 %v325, 7
        %v327 = vsub.s32 1, %v326
        %v328 = vrot.slane %v319, %v327
        %v331 = vadd.f32 %v287, %v324
        %v332 = vadd.f32 %v288, %v328
        %v333 = vadd.f32 %v289, %v324
        %v334 = vadd.f32 %v290, %v328
        %v335 = vadd.f32 %v291, %v324
        %v336 = vadd.f32 %v292, %v328
        %v337 = vadd.f32 %v293, %v324
        %v338 = vadd.f32 %v294, %v328
        %v339 = vadd.f32 %v295, %v324
        %v340 = vadd.f32 %v296, %v328
        %v341 = vadd.f32 %v297, %v324
        %v342 = vadd.f32 %v298, %v328
        %v343 = vadd.f32 %v299, %v324
        %v344 = vadd.f32 %v300, %v328
        %v345 = vadd.f32 %v301, %v324
        %v346 = vadd.f32 %v302, %v328
        %v347 = vadd.f32 %v303, %v324
        %v348 = vadd.f32 %v304, %v328
        %v349 = vadd.f32 %v305, %v324
        %v350 = vadd.f32 %v306, %v328
        %v351 = vadd.f32 %v307, %v324
        %v352 = vadd.f32 %v308, %v328
        %v353 = vadd.f32 %v309, %v324
        %v354 = vadd.f32 %v310, %v328
        %v355 = vadd.f32 %v311, %v324
        %v356 = vadd.f32 %v312, %v328
        %v357 = vadd.f32 %v313, %v324
        %v358 = vadd.f32 %v314, %v328
        %v359 = vadd.f32 %v315, %v324
        %v360 = vadd.f32 %v316, %v328
        %v361 = vadd.f32 %v317, %v324
        %v362 = vadd.f32 %v318, %v328
        %v363 = vld [vmem:[%s224] sm:$0xff]
        %v364 = vld [vmem:[%s224 + $0x8] sm:$0xff]
        %v365 = vld [vmem:[%s224 + $0x10] sm:$0xff]
        %v366 = vld [vmem:[%s224 + $0x18] sm:$0xff]
        %v367 = vld [vmem:[%s224 + $0x20] sm:$0xff]
        %v368 = vld [vmem:[%s224 + $0x28] sm:$0xff]
        %v369 = vld [vmem:[%s224 + $0x30] sm:$0xff]
        %v370 = vld [vmem:[%s224 + $0x38] sm:$0xff]
        %v371 = vld [vmem:[%s224 + $0x40] sm:$0xff]
        %v372 = vld [vmem:[%s224 + $0x48] sm:$0xff]
        %v373 = vld [vmem:[%s224 + $0x50] sm:$0xff]
        %v374 = vld [vmem:[%s224 + $0x58] sm:$0xff]
        %v375 = vld [vmem:[%s224 + $0x60] sm:$0xff]
        %v376 = vld [vmem:[%s224 + $0x68] sm:$0xff]
        %v377 = vld [vmem:[%s224 + $0x70] sm:$0xff]
        %v378 = vld [vmem:[%s224 + $0x78] sm:$0xff]
        %v379 = vld [vmem:[%s224 + $0x80] sm:$0xff]
        %v380 = vld [vmem:[%s224 + $0x88] sm:$0xff]
        %v381 = vld [vmem:[%s224 + $0x90] sm:$0xff]
        %v382 = vld [vmem:[%s224 + $0x98] sm:$0xff]
        %v383 = vld [vmem:[%s224 + $0xa0] sm:$0xff]
        %v384 = vld [vmem:[%s224 + $0xa8] sm:$0xff]
        %v385 = vld [vmem:[%s224 + $0xb0] sm:$0xff]
        %v386 = vld [vmem:[%s224 + $0xb8] sm:$0xff]
        %v387 = vld [vmem:[%s224 + $0xc0] sm:$0xff]
        %v388 = vld [vmem:[%s224 + $0xc8] sm:$0xff]
        %v389 = vld [vmem:[%s224 + $0xd0] sm:$0xff]
        %v390 = vld [vmem:[%s224 + $0xd8] sm:$0xff]
        %v391 = vld [vmem:[%s224 + $0xe0] sm:$0xff]
        %v392 = vld [vmem:[%s224 + $0xe8] sm:$0xff]
        %v393 = vld [vmem:[%s224 + $0xf0] sm:$0xff]
        %v394 = vld [vmem:[%s224 + $0xf8] sm:$0xff]
        %v395 = vadd.f32 %v331, %v363
        %v396 = vadd.f32 %v332, %v364
        %v397 = vadd.f32 %v333, %v365
        %v398 = vadd.f32 %v334, %v366
        %v399 = vadd.f32 %v335, %v367
        %v400 = vadd.f32 %v336, %v368
        %v401 = vadd.f32 %v337, %v369
        %v402 = vadd.f32 %v338, %v370
        %v403 = vadd.f32 %v339, %v371
        %v404 = vadd.f32 %v340, %v372
        %v405 = vadd.f32 %v341, %v373
        %v406 = vadd.f32 %v342, %v374
        %v407 = vadd.f32 %v343, %v375
        %v408 = vadd.f32 %v344, %v376
        %v409 = vadd.f32 %v345, %v377
        %v410 = vadd.f32 %v346, %v378
        %v411 = vadd.f32 %v347, %v379
        %v412 = vadd.f32 %v348, %v380
        %v413 = vadd.f32 %v349, %v381
        %v414 = vadd.f32 %v350, %v382
        %v415 = vadd.f32 %v351, %v383
        %v416 = vadd.f32 %v352, %v384
        %v417 = vadd.f32 %v353, %v385
        %v418 = vadd.f32 %v354, %v386
        %v419 = vadd.f32 %v355, %v387
        %v420 = vadd.f32 %v356, %v388
        %v421 = vadd.f32 %v357, %v389
        %v422 = vadd.f32 %v358, %v390
        %v423 = vadd.f32 %v359, %v391
        %v424 = vadd.f32 %v360, %v392
        %v425 = vadd.f32 %v361, %v393
        %v426 = vadd.f32 %v362, %v394
        %v427 = vmax.f32 %v395, 0.0
        %v428 = vmax.f32 %v396, 0.0
        %v429 = vmax.f32 %v397, 0.0
        %v430 = vmax.f32 %v398, 0.0
        %v431 = vmax.f32 %v399, 0.0
        %v432 = vmax.f32 %v400, 0.0
        %v433 = vmax.f32 %v401, 0.0
        %v434 = vmax.f32 %v402, 0.0
        %v435 = vmax.f32 %v403, 0.0
        %v436 = vmax.f32 %v404, 0.0
        %v437 = vmax.f32 %v405, 0.0
        %v438 = vmax.f32 %v406, 0.0
        %v439 = vmax.f32 %v407, 0.0
        %v440 = vmax.f32 %v408, 0.0
        %v441 = vmax.f32 %v409, 0.0
        %v442 = vmax.f32 %v410, 0.0
        %v443 = vmax.f32 %v411, 0.0
        %v444 = vmax.f32 %v412, 0.0
        %v445 = vmax.f32 %v413, 0.0
        %v446 = vmax.f32 %v414, 0.0
        %v447 = vmax.f32 %v415, 0.0
        %v448 = vmax.f32 %v416, 0.0
        %v449 = vmax.f32 %v417, 0.0
        %v450 = vmax.f32 %v418, 0.0
        %v451 = vmax.f32 %v419, 0.0
        %v452 = vmax.f32 %v420, 0.0
        %v453 = vmax.f32 %v421, 0.0
        %v454 = vmax.f32 %v422, 0.0
        %v455 = vmax.f32 %v423, 0.0
        %v456 = vmax.f32 %v424, 0.0
        %v457 = vmax.f32 %v425, 0.0
        %v458 = vmax.f32 %v426, 0.0
        %459 = vst [vmem:[%s211] sm:$0xff] %v427
        %460 = vst [vmem:[%s211 + $0x8] sm:$0xff] %v428
        %461 = vst [vmem:[%s211 + $0x10] sm:$0xff] %v429
        %462 = vst [vmem:[%s211 + $0x18] sm:$0xff] %v430
        %463 = vst [vmem:[%s211 + $0x20] sm:$0xff] %v431
        %464 = vst [vmem:[%s211 + $0x28] sm:$0xff] %v432
        %465 = vst [vmem:[%s211 + $0x30] sm:$0xff] %v433
        %466 = vst [vmem:[%s211 + $0x38] sm:$0xff] %v434
        %467 = vst [vmem:[%s211 + $0x40] sm:$0xff] %v435
        %468 = vst [vmem:[%s211 + $0x48] sm:$0xff] %v436
        %469 = vst [vmem:[%s211 + $0x50] sm:$0xff] %v437
        %470 = vst [vmem:[%s211 + $0x58] sm:$0xff] %v438
        %471 = vst [vmem:[%s211 + $0x60] sm:$0xff] %v439
        %472 = vst [vmem:[%s211 + $0x68] sm:$0xff] %v440
        %473 = vst [vmem:[%s211 + $0x70] sm:$0xff] %v441
        %474 = vst [vmem:[%s211 + $0x78] sm:$0xff] %v442
        %475 = vst [vmem:[%s211 + $0x80] sm:$0xff] %v443
        %476 = vst [vmem:[%s211 + $0x88] sm:$0xff] %v444
        %477 = vst [vmem:[%s211 + $0x90] sm:$0xff] %v445
        %478 = vst [vmem:[%s211 + $0x98] sm:$0xff] %v446
        %479 = vst [vmem:[%s211 + $0xa0] sm:$0xff] %v447
        %480 = vst [vmem:[%s211 + $0xa8] sm:$0xff] %v448
        %481 = vst [vmem:[%s211 + $0xb0] sm:$0xff] %v449
        %482 = vst [vmem:[%s211 + $0xb8] sm:$0xff] %v450
        %483 = vst [vmem:[%s211 + $0xc0] sm:$0xff] %v451
        %484 = vst [vmem:[%s211 + $0xc8] sm:$0xff] %v452
        %485 = vst [vmem:[%s211 + $0xd0] sm:$0xff] %v453
        %486 = vst [vmem:[%s211 + $0xd8] sm:$0xff] %v454
        %487 = vst [vmem:[%s211 + $0xe0] sm:$0xff] %v455
        %488 = vst [vmem:[%s211 + $0xe8] sm:$0xff] %v456
        %489 = vst [vmem:[%s211 + $0xf0] sm:$0xff] %v457
        %490 = vst [vmem:[%s211 + $0xf8] sm:$0xff] %v458
        %s491 = sand.u32 %s120, 1
        %s492 = scalar_lea.sflag [#allocation3], %s491
        %s493 = sand.u32 %s120, 1
        %s494 = smul.addr %s493, 256
        %s495 = scalar_lea.vmem [#allocation2], %s494
        // Predicated region
        $region37: #{bottleneck_forward.7} parent=35 // pred_check
          %p496 = pneg %p130
        $region38: #{bottleneck_forward.7} parent=35 // pred_check_branch
          %498 = sbr.rel (%p496) target = $region40
        $region39: #{bottleneck_forward.7} parent=35 // pred_region
          %s499 = smul.u32 16, %s18
          %s501 = ssub.s32 4096, 4096
          %502 = vsyncadd %s492, %s501
          %s503 = smul.addr %s499, 2
          %s504 = smul.addr %s503, 128
          %s505 = scalar_lea.hbm %s4, %s504
          %s506 = sshll.u32 %s495, 4
          %s507 = int_to_ptr.vmem [resolvable:$true] %s506
          %512 = dma.vmem_to_hbm [thread:$0]  %s507, 4096, %s505, %s492, 256, 256, 16
        $region40: #{bottleneck_forward.7} parent=35 // pred_fallthru
          _
      $region36: #{bottleneck_forward.7} parent=5 // pred_fallthru
        _
      %p513 = scmp.le.s32.totalorder 2, %s13
      // Predicated region
      $region41: #{bottleneck_forward.7} parent=5 // pred_check
        %p514 = pneg %p513
      $region42: #{bottleneck_forward.7} parent=5 // pred_check_branch
        %516 = sbr.rel (%p514) target = $region44
      $region43: #{bottleneck_forward.7} parent=5 // pred_region
        %s517 = ssub.s32 %s13, 2
        // Predicated region
        $region45: #{bottleneck_forward.7} parent=43 // pred_check
          %p518 = pneg %p136
        $region46: #{bottleneck_forward.7} parent=43 // pred_check_branch
          %520 = sbr.rel (%p518) target = $region48
        $region47: #{bottleneck_forward.7} parent=43 // pred_region
          %s521 = sand.u32 %s121, 1
          %s522 = scalar_lea.sflag [#allocation3], %s521
          %s523 = sand.u32 %s121, 1
          %s524 = smul.addr %s523, 256
          %s525 = scalar_lea.vmem [#allocation2], %s524
          %526 = dma.done %s522, 4096
        $region48: #{bottleneck_forward.7} parent=43 // pred_fallthru
          _
      $region44: #{bottleneck_forward.7} parent=5 // pred_fallthru
        _
    $region6: #{bottleneck_forward.7} parent=1 // loop_footer
      %s17 = sadd.s32 1, %s13
    $region7: #{bottleneck_forward.7} parent=1 // loop_footer_branch
      %12 = sbr.rel target = $region3
    $region8: #{bottleneck_forward.7} parent=1 // loop_exit
      _
    %527 = vsyncpa [#allocation3], 1
    %s528 = scalar_lea.sflag [#allocation3], 1
    %529 = vsyncpa %s528, 1

// kernel: bottleneck_forward.4
$region0: #{bottleneck_forward.4}
  #allocation0 [shape = 'u32[]', space=smem, size = 0x4, offset = 0x4, fixed_abs, tag = 'smem constant byte address 0x4 - core index']
  #allocation1 [shape = 'u32[144,128]{1,0:T(1,128)}', space=vmem, size = 0x12000, scoped, tag = 'internal scratch']
  %s0 = inlined_call_operand.hbm [shape: f32[512,256], index: 0, kind: input, shape index: {}]
  %s1 = inlined_call_operand.vmem [shape: bf16[256,64], index: 1, kind: input, shape index: {}]
  %s2 = inlined_call_operand.vmem [shape: bf16[512,64], index: 2, kind: output, shape index: {0}]
  %s3 = inlined_call_operand.vmem [shape: f32[4,2,64], index: 3, kind: output, shape index: {1}]
  %4 = xla_tuple %s2, %s3
  %s5 = sld [smem:[#allocation0]]
  $region53: #{bottleneck_forward.4} parent=0
    _
  %s7 = ssub.s32 1, %s5
  %s8 = scalar_select 0, %s7, %s5
  $region1: #{bottleneck_forward.4} parent=0
    #allocation2 [shape = 'u8[262144]{0}', space=vmem, size = 0x40000, scoped, tag = 'input window, operand 0']
    #allocation3 [shape = 's32[2]{0}', space=sflag, size = 0x8, scoped, tag = 'scoped memory for bottleneck_forward.4']
    %9 = vsyncpa [#allocation3], 0
    %s10 = scalar_lea.sflag [#allocation3], 1
    %11 = vsyncpa %s10, 0
    loop: start=0, step=1, limit=6
    $region2: #{bottleneck_forward.4} parent=1 // loop_pre_header
      _
    $region3: #{bottleneck_forward.4} parent=1 // loop_header
      %s13 = sphi 0, %s17
      %p14 = scmp.ge.s32.totalorder %s13, 6
      %s23 = sphi 0, %s25
      %s26 = sphi 0, %s23
      %s27 = sphi 0, %s26
      %s43 = sphi 0, %s27
      %s47 = sphi 0, %s47
      %s49 = sphi 0, %s47
      %s50 = sphi 0, %s49
      %s64 = sphi 0, %s50
      %s70 = sphi 0, %s72
      %s73 = sphi 0, %s70
      %s74 = sphi 0, %s73
      %s90 = sphi 0, %s74
      %s96 = sphi 0, %s98
      %s99 = sphi 0, %s96
      %s100 = sphi 0, %s99
      %s116 = sphi 0, %s100
    $region4: #{bottleneck_forward.4} parent=1 // loop_header_branch
      %16 = sbr.rel (%p14) target = $region8
    $region5: #{bottleneck_forward.4} parent=1 // loop_body
      %s18 = ssub.s32 %s13, 1
      %s19 = ssub.s32 %s13, 2
      %s20 = sadd.s32 %s13, 1
      %s21 = ssub.s32 %s13, %s20
      %p22 = scmp.eq.s32.totalorder %s21, 0
      %s24 = sadd.s32 %s23, 1
      %s25 = scalar_select %p22, %s23, %s24
      %p28 = pneg %p22
      %p29 = scmp.eq.s32.totalorder %s13, 3
      %p30 = por %p28, %p29
      %p31 = scmp.ne.s32.totalorder %s23, %s26
      %p32 = scmp.eq.s32.totalorder %s13, 0
      %p33 = por %p31, %p32
      %p34 = scmp.ne.s32.totalorder %s23, %s26
      %p35 = scmp.eq.s32.totalorder %s18, 3
      %p36 = por %p34, %p35
      %p37 = scmp.ne.s32.totalorder %s26, %s27
      %p38 = scmp.eq.s32.totalorder %s18, 0
      %p39 = por %p37, %p38
      %p40 = scmp.ne.s32.totalorder %s26, %s27
      %p41 = scmp.eq.s32.totalorder %s19, 3
      %p42 = por %p40, %p41
      %p44 = scmp.ne.s32.totalorder %s27, %s43
      %p45 = scmp.eq.s32.totalorder %s19, 0
      %p46 = por %p44, %p45
      %s48 = sadd.s32 %s47, 1
      %p51 = scmp.eq.s32.totalorder %s13, 3
      %p52 = scmp.ne.s32.totalorder %s47, %s49
      %p53 = scmp.eq.s32.totalorder %s13, 0
      %p54 = por %p52, %p53
      %p55 = scmp.ne.s32.totalorder %s47, %s49
      %p56 = scmp.eq.s32.totalorder %s18, 3
      %p57 = por %p55, %p56
      %p58 = scmp.ne.s32.totalorder %s49, %s50
      %p59 = scmp.eq.s32.totalorder %s18, 0
      %p60 = por %p58, %p59
      %p61 = scmp.ne.s32.totalorder %s49, %s50
      %p62 = scmp.eq.s32.totalorder %s19, 3
      %p63 = por %p61, %p62
      %p65 = scmp.ne.s32.totalorder %s50, %s64
      %p66 = scmp.eq.s32.totalorder %s19, 0
      %p67 = por %p65, %p66
      %s68 = ssub.s32 %s13, %s20
      %p69 = scmp.eq.s32.totalorder %s68, 0
      %s71 = sadd.s32 %s70, 1
      %s72 = scalar_select %p69, %s70, %s71
      %p75 = pneg %p69
      %p76 = scmp.eq.s32.totalorder %s13, 3
      %p77 = por %p75, %p76
      %p78 = scmp.ne.s32.totalorder %s70, %s73
      %p79 = scmp.eq.s32.totalorder %s13, 0
      %p80 = por %p78, %p79
      %p81 = scmp.ne.s32.totalorder %s70, %s73
      %p82 = scmp.eq.s32.totalorder %s18, 3
      %p83 = por %p81, %p82
      %p84 = scmp.ne.s32.totalorder %s73, %s74
      %p85 = scmp.eq.s32.totalorder %s18, 0
      %p86 = por %p84, %p85
      %p87 = scmp.ne.s32.totalorder %s73, %s74
      %p88 = scmp.eq.s32.totalorder %s19, 3
      %p89 = por %p87, %p88
      %p91 = scmp.ne.s32.totalorder %s74, %s90
      %p92 = scmp.eq.s32.totalorder %s19, 0
      %p93 = por %p91, %p92
      %s94 = ssub.s32 %s13, %s20
      %p95 = scmp.eq.s32.totalorder %s94, 0
      %s97 = sadd.s32 %s96, 1
      %s98 = scalar_select %p95, %s96, %s97
      %p101 = pneg %p95
      %p102 = scmp.eq.s32.totalorder %s13, 3
      %p103 = por %p101, %p102
      %p104 = scmp.ne.s32.totalorder %s96, %s99
      %p105 = scmp.eq.s32.totalorder %s13, 0
      %p106 = por %p104, %p105
      %p107 = scmp.ne.s32.totalorder %s96, %s99
      %p108 = scmp.eq.s32.totalorder %s18, 3
      %p109 = por %p107, %p108
      %p110 = scmp.ne.s32.totalorder %s99, %s100
      %p111 = scmp.eq.s32.totalorder %s18, 0
      %p112 = por %p110, %p111
      %p113 = scmp.ne.s32.totalorder %s99, %s100
      %p114 = scmp.eq.s32.totalorder %s19, 3
      %p115 = por %p113, %p114
      %p117 = scmp.ne.s32.totalorder %s100, %s116
      %p118 = scmp.eq.s32.totalorder %s19, 0
      %p119 = por %p117, %p118
      %p120 = scmp.le.s32.totalorder 1, %s13
      %p121 = scmp.lt.s32.totalorder %s13, 5
      %p122 = pnand %p120, %p121
      %p123 = pneg %p122
      // Predicated region
      $region9: #{bottleneck_forward.4} parent=5 // pred_check
        _
      $region10: #{bottleneck_forward.4} parent=5 // pred_check_branch
        %125 = sbr.rel (%p122) target = $region12
      $region11: #{bottleneck_forward.4} parent=5 // pred_region
        %s126 = ssub.s32 %s13, 1
        // Predicated region
        $region13: #{bottleneck_forward.4} parent=11 // pred_check
          %p127 = pneg %p60
        $region14: #{bottleneck_forward.4} parent=11 // pred_check_branch
          %129 = sbr.rel (%p127) target = $region16
        $region15: #{bottleneck_forward.4} parent=11 // pred_region
          _
        $region16: #{bottleneck_forward.4} parent=11 // pred_fallthru
          _
      $region12: #{bottleneck_forward.4} parent=5 // pred_fallthru
        _
      %p130 = scmp.lt.s32.totalorder %s13, 4
      // Predicated region
      $region17: #{bottleneck_forward.4} parent=5 // pred_check
        %p131 = pneg %p130
      $region18: #{bottleneck_forward.4} parent=5 // pred_check_branch
        %133 = sbr.rel (%p131) target = $region20
      $region19: #{bottleneck_forward.4} parent=5 // pred_region
        // Predicated region
        $region21: #{bottleneck_forward.4} parent=19 // pred_check
          %p134 = pneg %p33
        $region22: #{bottleneck_forward.4} parent=19 // pred_check_branch
          %136 = sbr.rel (%p134) target = $region24
        $region23: #{bottleneck_forward.4} parent=19 // pred_region
          %s137 = sand.u32 %s23, 1
          %s138 = scalar_lea.sflag [#allocation3], %s137
          %s139 = sand.u32 %s23, 1
          %s140 = smul.addr %s139, 256
          %s141 = scalar_lea.vmem [#allocation2], %s140
          %s142 = smul.u32 16, %s13
          %s144 = ssub.s32 4096, 4096
          %145 = vsyncadd %s138, %s144
          %s146 = smul.addr %s142, 2
          %s147 = smul.addr %s146, 128
          %s148 = scalar_lea.hbm %s0, %s147
          %s149 = sshll.u32 %s141, 4
          %s150 = int_to_ptr.vmem [resolvable:$true] %s149
          %155 = dma.hbm_to_vmem [thread:$0]  %s148, 4096, %s150, %s138, 256, 256, 16
        $region24: #{bottleneck_forward.4} parent=19 // pred_fallthru
          _
      $region20: #{bottleneck_forward.4} parent=5 // pred_fallthru
        _
      %p156 = scmp.le.s32.totalorder 1, %s13
      %p157 = scmp.lt.s32.totalorder %s13, 5
      %p158 = pnand %p156, %p157
      %p159 = pneg %p158
      // Predicated region
      $region25: #{bottleneck_forward.4} parent=5 // pred_check
        _
      $region26: #{bottleneck_forward.4} parent=5 // pred_check_branch
        %161 = sbr.rel (%p158) target = $region28
      $region27: #{bottleneck_forward.4} parent=5 // pred_region
        %s162 = ssub.s32 %s13, 1
        %s163 = sand.u32 %s26, 1
        %s164 = scalar_lea.sflag [#allocation3], %s163
        %s165 = sand.u32 %s26, 1
        %s166 = smul.addr %s165, 256
        %s167 = scalar_lea.vmem [#allocation2], %s166
        // Predicated region
        $region29: #{bottleneck_forward.4} parent=27 // pred_check
          %p168 = pneg %p39
        $region30: #{bottleneck_forward.4} parent=27 // pred_check_branch
          %170 = sbr.rel (%p168) target = $region32
        $region31: #{bottleneck_forward.4} parent=27 // pred_region
          %171 = dma.done %s164, 4096
        $region32: #{bottleneck_forward.4} parent=27 // pred_fallthru
          _
        %s172 = sand.u32 %s26, 1
        %s173 = scalar_lea.sflag [#allocation3], %s172
        %s174 = sand.u32 %s26, 1
        %s175 = smul.addr %s174, 256
        %s176 = scalar_lea.vmem [#allocation2], %s175
        %p177 = pneg %p39
        %p178 = pneg %p36
        %p179 = pneg %p60
        %p180 = pneg %p57
        %p181 = pneg %p86
        %p182 = pneg %p83
        %s183 = smul.u32 16, %s18
        %p184 = scmp.lt.s32.totalorder %s183, 63
        %s185 = scalar_select %p184, %s183, 63
        %s186 = smul.addr %s185, 4
        %s187 = scalar_lea.vmem %s2, %s186
        %p188 = pneg %p112
        %p189 = pneg %p109
        %p190 = scmp.lt.s32.totalorder %s18, 3
        %s191 = scalar_select %p190, %s18, 3
        %s192 = smul.addr %s191, 2
        %s193 = scalar_lea.vmem %s3, %s192
        %s194 = smul.u32 16, %s18
        %s195 = smul.u32 16, %s18
        %p196 = scmp.lt.s32.totalorder %s195, 63
        %s197 = scalar_select %p196, %s195, 63
        %s198 = smul.addr %s197, 4
        %s199 = scalar_lea.vmem %s2, %s198
        %s200 = smul.u32 16, %s18
        %p201 = scmp.lt.s32.totalorder %s18, 3
        %s202 = scalar_select %p201, %s18, 3
        %s203 = smul.addr %s202, 2
        %s204 = scalar_lea.vmem %s3, %s203
        %v206 = vld [vmem:[%s167] sm:$0xff]
        %v207 = vld [vmem:[%s167 + $0x8] sm:$0xff]
        %v208 = vld [vmem:[%s167 + $0x10] sm:$0xff]
        %v209 = vld [vmem:[%s167 + $0x18] sm:$0xff]
        %v210 = vld [vmem:[%s167 + $0x20] sm:$0xff]
        %v211 = vld [vmem:[%s167 + $0x28] sm:$0xff]
        %v212 = vld [vmem:[%s167 + $0x30] sm:$0xff]
        %v213 = vld [vmem:[%s167 + $0x38] sm:$0xff]
        %v214 = vld [vmem:[%s167 + $0x40] sm:$0xff]
        %v215 = vld [vmem:[%s167 + $0x48] sm:$0xff]
        %v216 = vld [vmem:[%s167 + $0x50] sm:$0xff]
        %v217 = vld [vmem:[%s167 + $0x58] sm:$0xff]
        %v218 = vld [vmem:[%s167 + $0x60] sm:$0xff]
        %v219 = vld [vmem:[%s167 + $0x68] sm:$0xff]
        %v220 = vld [vmem:[%s167 + $0x70] sm:$0xff]
        %v221 = vld [vmem:[%s167 + $0x78] sm:$0xff]
        %v222 = vld [vmem:[%s167 + $0x80] sm:$0xff]
        %v223 = vld [vmem:[%s167 + $0x88] sm:$0xff]
        %v224 = vld [vmem:[%s167 + $0x90] sm:$0xff]
        %v225 = vld [vmem:[%s167 + $0x98] sm:$0xff]
        %v226 = vld [vmem:[%s167 + $0xa0] sm:$0xff]
        %v227 = vld [vmem:[%s167 + $0xa8] sm:$0xff]
        %v228 = vld [vmem:[%s167 + $0xb0] sm:$0xff]
        %v229 = vld [vmem:[%s167 + $0xb8] sm:$0xff]
        %v230 = vld [vmem:[%s167 + $0xc0] sm:$0xff]
        %v231 = vld [vmem:[%s167 + $0xc8] sm:$0xff]
        %v232 = vld [vmem:[%s167 + $0xd0] sm:$0xff]
        %v233 = vld [vmem:[%s167 + $0xd8] sm:$0xff]
        %v234 = vld [vmem:[%s167 + $0xe0] sm:$0xff]
        %v235 = vld [vmem:[%s167 + $0xe8] sm:$0xff]
        %v236 = vld [vmem:[%s167 + $0xf0] sm:$0xff]
        %v237 = vld [vmem:[%s167 + $0xf8] sm:$0xff]
        %v238 = vpack.c.bf16 %v208, %v206
        %v239 = vpack.c.bf16 %v209, %v207
        %v240 = vpack.c.bf16 %v212, %v210
        %v241 = vpack.c.bf16 %v213, %v211
        %v242 = vpack.c.bf16 %v216, %v214
        %v243 = vpack.c.bf16 %v217, %v215
        %v244 = vpack.c.bf16 %v220, %v218
        %v245 = vpack.c.bf16 %v221, %v219
        %v246 = vpack.c.bf16 %v224, %v222
        %v247 = vpack.c.bf16 %v225, %v223
        %v248 = vpack.c.bf16 %v228, %v226
        %v249 = vpack.c.bf16 %v229, %v227
        %v250 = vpack.c.bf16 %v232, %v230
        %v251 = vpack.c.bf16 %v233, %v231
        %v252 = vpack.c.bf16 %v236, %v234
        %v253 = vpack.c.bf16 %v237, %v235
        %v254 = vld [vmem:[%s1] sm:$0xf]
        %v255 = vld [vmem:[%s1 + $0x4] sm:$0xf]
        %v256 = vld [vmem:[%s1 + $0x8] sm:$0xf]
        %v257 = vld [vmem:[%s1 + $0xc] sm:$0xf]
        %v258 = vld [vmem:[%s1 + $0x10] sm:$0xf]
        %v259 = vld [vmem:[%s1 + $0x14] sm:$0xf]
        %v260 = vld [vmem:[%s1 + $0x18] sm:$0xf]
        %v261 = vld [vmem:[%s1 + $0x1c] sm:$0xf]
        %v262 = vld [vmem:[%s1 + $0x20] sm:$0xf]
        %v263 = vld [vmem:[%s1 + $0x24] sm:$0xf]
        %v264 = vld [vmem:[%s1 + $0x28] sm:$0xf]
        %v265 = vld [vmem:[%s1 + $0x2c] sm:$0xf]
        %v266 = vld [vmem:[%s1 + $0x30] sm:$0xf]
        %v267 = vld [vmem:[%s1 + $0x34] sm:$0xf]
        %v268 = vld [vmem:[%s1 + $0x38] sm:$0xf]
        %v269 = vld [vmem:[%s1 + $0x3c] sm:$0xf]
        %v270 = vld [vmem:[%s1 + $0x40] sm:$0xf]
        %v271 = vld [vmem:[%s1 + $0x44] sm:$0xf]
        %v272 = vld [vmem:[%s1 + $0x48] sm:$0xf]
        %v273 = vld [vmem:[%s1 + $0x4c] sm:$0xf]
        %v274 = vld [vmem:[%s1 + $0x50] sm:$0xf]
        %v275 = vld [vmem:[%s1 + $0x54] sm:$0xf]
        %v276 = vld [vmem:[%s1 + $0x58] sm:$0xf]
        %v277 = vld [vmem:[%s1 + $0x5c] sm:$0xf]
        %v278 = vld [vmem:[%s1 + $0x60] sm:$0xf]
        %v279 = vld [vmem:[%s1 + $0x64] sm:$0xf]
        %v280 = vld [vmem:[%s1 + $0x68] sm:$0xf]
        %v281 = vld [vmem:[%s1 + $0x6c] sm:$0xf]
        %v282 = vld [vmem:[%s1 + $0x70] sm:$0xf]
        %v283 = vld [vmem:[%s1 + $0x74] sm:$0xf]
        %v284 = vld [vmem:[%s1 + $0x78] sm:$0xf]
        %v285 = vld [vmem:[%s1 + $0x7c] sm:$0xf]
        %v318 = vunpack.c.l.b16 %v254
        %v319 = vunpack.c.l.b16 %v255
        %v320 = vunpack.c.l.b16 %v256
        %v321 = vunpack.c.l.b16 %v257
        %v322 = vunpack.c.l.b16 %v258
        %v323 = vunpack.c.l.b16 %v259
        %v324 = vunpack.c.l.b16 %v260
        %v325 = vunpack.c.l.b16 %v261
        %v326 = vunpack.c.l.b16 %v262
        %v327 = vunpack.c.l.b16 %v263
        %v328 = vunpack.c.l.b16 %v264
        %v329 = vunpack.c.l.b16 %v265
        %v330 = vunpack.c.l.b16 %v266
        %v331 = vunpack.c.l.b16 %v267
        %v332 = vunpack.c.l.b16 %v268
        %v333 = vunpack.c.l.b16 %v269
        %v334 = vunpack.c.l.b16 %v270
        %v335 = vunpack.c.l.b16 %v271
        %v336 = vunpack.c.l.b16 %v272
        %v337 = vunpack.c.l.b16 %v273
        %v338 = vunpack.c.l.b16 %v274
        %v339 = vunpack.c.l.b16 %v275
        %v340 = vunpack.c.l.b16 %v276
        %v341 = vunpack.c.l.b16 %v277
        %v342 = vunpack.c.l.b16 %v278
        %v343 = vunpack.c.l.b16 %v279
        %v344 = vunpack.c.l.b16 %v280
        %v345 = vunpack.c.l.b16 %v281
        %v346 = vunpack.c.l.b16 %v282
        %v347 = vunpack.c.l.b16 %v283
        %v348 = vunpack.c.l.b16 %v284
        %v349 = vunpack.c.l.b16 %v285
        %v350 = vpack.c.b16 %v319, %v318
        %v351 = vpack.c.b16 %v321, %v320
        %v352 = vpack.c.b16 %v323, %v322
        %v353 = vpack.c.b16 %v325, %v324
        %v354 = vpack.c.b16 %v327, %v326
        %v355 = vpack.c.b16 %v329, %v328
        %v356 = vpack.c.b16 %v331, %v330
        %v357 = vpack.c.b16 %v333, %v332
        %v358 = vpack.c.b16 %v335, %v334
        %v359 = vpack.c.b16 %v337, %v336
        %v360 = vpack.c.b16 %v339, %v338
        %v361 = vpack.c.b16 %v341, %v340
        %v362 = vpack.c.b16 %v343, %v342
        %v363 = vpack.c.b16 %v345, %v344
        %v364 = vpack.c.b16 %v347, %v346
        %v365 = vpack.c.b16 %v349, %v348
        %382 = vmatprep.subr.bf16.mxu0 0
        %383 = vmatpush1.bf16.msra.mxu0 %v350
        %384 = vmatprep.subr.bf16.mxu0 0
        %385 = vmatpush1.bf16.msra.mxu0 %v351
        %386 = vmatprep.subr.bf16.mxu0 0
        %387 = vmatpush1.bf16.msra.mxu0 %v352
        %388 = vmatprep.subr.bf16.mxu0 0
        %389 = vmatpush1.bf16.msra.mxu0 %v353
        %390 = vmatprep.subr.bf16.mxu0 0
        %391 = vmatpush1.bf16.msra.mxu0 %v354
        %392 = vmatprep.subr.bf16.mxu0 0
        %393 = vmatpush1.bf16.msra.mxu0 %v355
        %394 = vmatprep.subr.bf16.mxu0 0
        %395 = vmatpush1.bf16.msra.mxu0 %v356
        %396 = vmatprep.subr.bf16.mxu0 0
        %397 = vmatpush1.bf16.msra.mxu0 %v357
        %398 = vmatprep.subr.bf16.mxu0 0
        %399 = vmatpush1.bf16.msra.mxu0 %v358
        %400 = vmatprep.subr.bf16.mxu0 0
        %401 = vmatpush1.bf16.msra.mxu0 %v359
        %402 = vmatprep.subr.bf16.mxu0 0
        %403 = vmatpush1.bf16.msra.mxu0 %v360
        %404 = vmatprep.subr.bf16.mxu0 0
        %405 = vmatpush1.bf16.msra.mxu0 %v361
        %406 = vmatprep.subr.bf16.mxu0 0
        %407 = vmatpush1.bf16.msra.mxu0 %v362
        %408 = vmatprep.subr.bf16.mxu0 0
        %409 = vmatpush1.bf16.msra.mxu0 %v363
        %410 = vmatprep.subr.bf16.mxu0 0
        %411 = vmatpush1.bf16.msra.mxu0 %v364
        %412 = vmatprep.subr.bf16.mxu0 0
        %413 = vmatpush1.bf16.msra.mxu0 %v365
        %414 = vmatprep.mubr.bf16.mxu0 %v239
        %415 = vmatmul.mubr.bf16.gmra.mrb[0].mxu0 %v238
        %v416 = vpop.f32.mrb[0].mxu0
        %v417 = vadd.f32 0.0, %v416
        %v418 = vpop.f32.mrb[0].mxu0
        %v419 = vpop.f32.mrb[0].mxu0
        %v420 = vadd.f32 0.0, %v419
        %v421 = vpop.f32.mrb[0].mxu0
        %422 = vmatprep.mubr.bf16.mxu0 %v241
        %423 = vmatmul.mubr.bf16.gmra.mrb[0].mxu0 %v240
        %v424 = vpop.f32.mrb[0].mxu0
        %v425 = vadd.f32 0.0, %v424
        %v426 = vpop.f32.mrb[0].mxu0
        %v427 = vpop.f32.mrb[0].mxu0
        %v428 = vadd.f32 0.0, %v427
        %v429 = vpop.f32.mrb[0].mxu0
        %430 = vmatprep.mubr.bf16.mxu0 %v243
        %431 = vmatmul.mubr.bf16.gmra.mrb[0].mxu0 %v242
        %v432 = vpop.f32.mrb[0].mxu0
        %v433 = vadd.f32 0.0, %v432
        %v434 = vpop.f32.mrb[0].mxu0
        %v435 = vpop.f32.mrb[0].mxu0
        %v436 = vadd.f32 0.0, %v435
        %v437 = vpop.f32.mrb[0].mxu0
        %438 = vmatprep.mubr.bf16.mxu0 %v245
        %439 = vmatmul.mubr.bf16.gmra.mrb[0].mxu0 %v244
        %v440 = vpop.f32.mrb[0].mxu0
        %v441 = vadd.f32 0.0, %v440
        %v442 = vpop.f32.mrb[0].mxu0
        %v443 = vpop.f32.mrb[0].mxu0
        %v444 = vadd.f32 0.0, %v443
        %v445 = vpop.f32.mrb[0].mxu0
        %446 = vmatprep.mubr.bf16.mxu0 %v247
        %447 = vmatmul.mubr.bf16.gmra.mrb[0].mxu0 %v246
        %v448 = vpop.f32.mrb[0].mxu0
        %v449 = vadd.f32 0.0, %v448
        %v450 = vpop.f32.mrb[0].mxu0
        %v451 = vpop.f32.mrb[0].mxu0
        %v452 = vadd.f32 0.0, %v451
        %v453 = vpop.f32.mrb[0].mxu0
        %454 = vmatprep.mubr.bf16.mxu0 %v249
        %455 = vmatmul.mubr.bf16.gmra.mrb[0].mxu0 %v248
        %v456 = vpop.f32.mrb[0].mxu0
        %v457 = vadd.f32 0.0, %v456
        %v458 = vpop.f32.mrb[0].mxu0
        %v459 = vpop.f32.mrb[0].mxu0
        %v460 = vadd.f32 0.0, %v459
        %v461 = vpop.f32.mrb[0].mxu0
        %462 = vmatprep.mubr.bf16.mxu0 %v251
        %463 = vmatmul.mubr.bf16.gmra.mrb[0].mxu0 %v250
        %v464 = vpop.f32.mrb[0].mxu0
        %v465 = vadd.f32 0.0, %v464
        %v466 = vpop.f32.mrb[0].mxu0
        %v467 = vpop.f32.mrb[0].mxu0
        %v468 = vadd.f32 0.0, %v467
        %v469 = vpop.f32.mrb[0].mxu0
        %470 = vmatprep.mubr.bf16.mxu0 %v253
        %471 = vmatmul.mubr.bf16.gmra.mrb[0].mxu0 %v252
        %v472 = vpop.f32.mrb[0].mxu0
        %v473 = vadd.f32 0.0, %v472
        %v474 = vpop.f32.mrb[0].mxu0
        %v475 = vpop.f32.mrb[0].mxu0
        %v476 = vadd.f32 0.0, %v475
        %v477 = vpop.f32.mrb[0].mxu0
        %478 = vdwg.mxu0
        %v479 = vpack.c.bf16 %v420, %v417
        %v480 = vpack.c.bf16 %v428, %v425
        %v481 = vpack.c.bf16 %v436, %v433
        %v482 = vpack.c.bf16 %v444, %v441
        %v483 = vpack.c.bf16 %v452, %v449
        %v484 = vpack.c.bf16 %v460, %v457
        %v485 = vpack.c.bf16 %v468, %v465
        %v486 = vpack.c.bf16 %v476, %v473
        %v495 = vunpack.c.l.b16 %v479
        %v496 = vunpack.c.h.b16 %v479
        %v497 = vunpack.c.l.b16 %v480
        %v498 = vunpack.c.h.b16 %v480
        %v499 = vunpack.c.l.b16 %v481
        %v500 = vunpack.c.h.b16 %v481
        %v501 = vunpack.c.l.b16 %v482
        %v502 = vunpack.c.h.b16 %v482
        %v503 = vunpack.c.l.b16 %v483
        %v504 = vunpack.c.h.b16 %v483
        %v505 = vunpack.c.l.b16 %v484
        %v506 = vunpack.c.h.b16 %v484
        %v507 = vunpack.c.l.b16 %v485
        %v508 = vunpack.c.h.b16 %v485
        %v509 = vunpack.c.l.b16 %v486
        %v510 = vunpack.c.h.b16 %v486
        %v511 = vpack.c.b16 %v495, %v495
        %v512 = vpack.c.b16 %v496, %v496
        %v513 = vpack.c.b16 %v497, %v497
        %v514 = vpack.c.b16 %v498, %v498
        %v515 = vpack.c.b16 %v499, %v499
        %v516 = vpack.c.b16 %v500, %v500
        %v517 = vpack.c.b16 %v501, %v501
        %v518 = vpack.c.b16 %v502, %v502
        %v519 = vpack.c.b16 %v503, %v503
        %v520 = vpack.c.b16 %v504, %v504
        %v521 = vpack.c.b16 %v505, %v505
        %v522 = vpack.c.b16 %v506, %v506
        %v523 = vpack.c.b16 %v507, %v507
        %v524 = vpack.c.b16 %v508, %v508
        %v525 = vpack.c.b16 %v509, %v509
        %v526 = vpack.c.b16 %v510, %v510
        %vm543 = vcmask 519168
        %544 = vst.msk [vmem:[%s199] sm:$0xf] %vm543, %v511
        %545 = vst.msk [vmem:[%s199 + $0x4] sm:$0xf] %vm543, %v512
        %546 = vst.msk [vmem:[%s199 + $0x8] sm:$0xf] %vm543, %v513
        %547 = vst.msk [vmem:[%s199 + $0xc] sm:$0xf] %vm543, %v514
        %548 = vst.msk [vmem:[%s199 + $0x10] sm:$0xf] %vm543, %v515
        %549 = vst.msk [vmem:[%s199 + $0x14] sm:$0xf] %vm543, %v516
        %550 = vst.msk [vmem:[%s199 + $0x18] sm:$0xf] %vm543, %v517
        %551 = vst.msk [vmem:[%s199 + $0x1c] sm:$0xf] %vm543, %v518
        %552 = vst.msk [vmem:[%s199 + $0x20] sm:$0xf] %vm543, %v519
        %553 = vst.msk [vmem:[%s199 + $0x24] sm:$0xf] %vm543, %v520
        %554 = vst.msk [vmem:[%s199 + $0x28] sm:$0xf] %vm543, %v521
        %555 = vst.msk [vmem:[%s199 + $0x2c] sm:$0xf] %vm543, %v522
        %556 = vst.msk [vmem:[%s199 + $0x30] sm:$0xf] %vm543, %v523
        %557 = vst.msk [vmem:[%s199 + $0x34] sm:$0xf] %vm543, %v524
        %558 = vst.msk [vmem:[%s199 + $0x38] sm:$0xf] %vm543, %v525
        %559 = vst.msk [vmem:[%s199 + $0x3c] sm:$0xf] %vm543, %v526
        %vm560 = vcmask 523264
        %v561 = vsel %vm560, %v417, 0.0
        %v562 = vsel %vm560, %v420, 0.0
        %v563 = vadd.f32 %v561, %v562
        %v564 = vsel %vm560, %v425, 0.0
        %v565 = vadd.f32 %v563, %v564
        %v566 = vsel %vm560, %v428, 0.0
        %v567 = vadd.f32 %v565, %v566
        %v568 = vsel %vm560, %v433, 0.0
        %v569 = vadd.f32 %v567, %v568
        %v570 = vsel %vm560, %v436, 0.0
        %v571 = vadd.f32 %v569, %v570
        %v572 = vsel %vm560, %v441, 0.0
        %v573 = vadd.f32 %v571, %v572
        %v574 = vsel %vm560, %v444, 0.0
        %v575 = vadd.f32 %v573, %v574
        %v576 = vsel %vm560, %v449, 0.0
        %v577 = vadd.f32 %v575, %v576
        %v578 = vsel %vm560, %v452, 0.0
        %v579 = vadd.f32 %v577, %v578
        %v580 = vsel %vm560, %v457, 0.0
        %v581 = vadd.f32 %v579, %v580
        %v582 = vsel %vm560, %v460, 0.0
        %v583 = vadd.f32 %v581, %v582
        %v584 = vsel %vm560, %v465, 0.0
        %v585 = vadd.f32 %v583, %v584
        %v586 = vsel %vm560, %v468, 0.0
        %v587 = vadd.f32 %v585, %v586
        %v588 = vsel %vm560, %v473, 0.0
        %v589 = vadd.f32 %v587, %v588
        %v590 = vsel %vm560, %v476, 0.0
        %v591 = vadd.f32 %v589, %v590
        %v592 = vrot.slane %v591, 4
        %v593 = vadd.f32 %v591, %v592
        %v594 = vrot.slane %v593, 2
        %v595 = vadd.f32 %v593, %v594
        %v596 = vrot.slane %v595, 1
        %v597 = vadd.f32 %v595, %v596
        %v598 = vmul.f32 %v417, %v417
        %v599 = vmul.f32 %v420, %v420
        %v600 = vmul.f32 %v425, %v425
        %v601 = vmul.f32 %v428, %v428
        %v602 = vmul.f32 %v433, %v433
        %v603 = vmul.f32 %v436, %v436
        %v604 = vmul.f32 %v441, %v441
        %v605 = vmul.f32 %v444, %v444
        %v606 = vmul.f32 %v449, %v449
        %v607 = vmul.f32 %v452, %v452
        %v608 = vmul.f32 %v457, %v457
        %v609 = vmul.f32 %v460, %v460
        %v610 = vmul.f32 %v465, %v465
        %v611 = vmul.f32 %v468, %v468
        %v612 = vmul.f32 %v473, %v473
        %v613 = vmul.f32 %v476, %v476
        %v614 = vsel %vm560, %v598, 0.0
        %v615 = vsel %vm560, %v599, 0.0
        %v616 = vadd.f32 %v614, %v615
        %v617 = vsel %vm560, %v600, 0.0
        %v618 = vadd.f32 %v616, %v617
        %v619 = vsel %vm560, %v601, 0.0
        %v620 = vadd.f32 %v618, %v619
        %v621 = vsel %vm560, %v602, 0.0
        %v622 = vadd.f32 %v620, %v621
        %v623 = vsel %vm560, %v603, 0.0
        %v624 = vadd.f32 %v622, %v623
        %v625 = vsel %vm560, %v604, 0.0
        %v626 = vadd.f32 %v624, %v625
        %v627 = vsel %vm560, %v605, 0.0
        %v628 = vadd.f32 %v626, %v627
        %v629 = vsel %vm560, %v606, 0.0
        %v630 = vadd.f32 %v628, %v629
        %v631 = vsel %vm560, %v607, 0.0
        %v632 = vadd.f32 %v630, %v631
        %v633 = vsel %vm560, %v608, 0.0
        %v634 = vadd.f32 %v632, %v633
        %v635 = vsel %vm560, %v609, 0.0
        %v636 = vadd.f32 %v634, %v635
        %v637 = vsel %vm560, %v610, 0.0
        %v638 = vadd.f32 %v636, %v637
        %v639 = vsel %vm560, %v611, 0.0
        %v640 = vadd.f32 %v638, %v639
        %v641 = vsel %vm560, %v612, 0.0
        %v642 = vadd.f32 %v640, %v641
        %v643 = vsel %vm560, %v613, 0.0
        %v644 = vadd.f32 %v642, %v643
        %v645 = vrot.slane %v644, 4
        %v646 = vadd.f32 %v644, %v645
        %v647 = vrot.slane %v646, 2
        %v648 = vadd.f32 %v646, %v647
        %v649 = vrot.slane %v648, 1
        %v650 = vadd.f32 %v648, %v649
        %vm651 = vcmask 1040384
        %v652 = vsel %vm651, %v597, %v650
        %vm653 = vcmask 517120
        %654 = vst.msk [vmem:[%s204] sm:$0x3] %vm653, %v652
        %s655 = smul.u32 16, %s18
        %p656 = scmp.lt.s32.totalorder %s655, 63
        %s657 = scalar_select %p656, %s655, 63
        %s658 = smul.addr %s657, 4
        %s659 = scalar_lea.vmem %s2, %s658
        %p660 = scmp.lt.s32.totalorder %s18, 3
        %s661 = scalar_select %p660, %s18, 3
        %s662 = smul.addr %s661, 2
        %s663 = scalar_lea.vmem %s3, %s662
        // Predicated region
        $region33: #{bottleneck_forward.4} parent=27 // pred_check
          %p664 = pneg %p83
        $region34: #{bottleneck_forward.4} parent=27 // pred_check_branch
          %666 = sbr.rel (%p664) target = $region36
        $region35: #{bottleneck_forward.4} parent=27 // pred_region
          %s667 = smul.u32 16, %s18
        $region36: #{bottleneck_forward.4} parent=27 // pred_fallthru
          _
        // Predicated region
        $region37: #{bottleneck_forward.4} parent=27 // pred_check
          %p668 = pneg %p109
        $region38: #{bottleneck_forward.4} parent=27 // pred_check_branch
          %670 = sbr.rel (%p668) target = $region40
        $region39: #{bottleneck_forward.4} parent=27 // pred_region
          _
        $region40: #{bottleneck_forward.4} parent=27 // pred_fallthru
          _
      $region28: #{bottleneck_forward.4} parent=5 // pred_fallthru
        _
      %p671 = scmp.le.s32.totalorder 2, %s13
      // Predicated region
      $region41: #{bottleneck_forward.4} parent=5 // pred_check
        %p672 = pneg %p671
      $region42: #{bottleneck_forward.4} parent=5 // pred_check_branch
        %674 = sbr.rel (%p672) target = $region44
      $region43: #{bottleneck_forward.4} parent=5 // pred_region
        %s675 = ssub.s32 %s13, 2
        // Predicated region
        $region45: #{bottleneck_forward.4} parent=43 // pred_check
          %p676 = pneg %p89
        $region46: #{bottleneck_forward.4} parent=43 // pred_check_branch
          %678 = sbr.rel (%p676) target = $region48
        $region47: #{bottleneck_forward.4} parent=43 // pred_region
          %s679 = smul.u32 16, %s19
          %p680 = scmp.lt.s32.totalorder %s679, 63
          %s681 = scalar_select %p680, %s679, 63
          %s682 = smul.addr %s681, 4
          %s683 = scalar_lea.vmem %s2, %s682
        $region48: #{bottleneck_forward.4} parent=43 // pred_fallthru
          _
        // Predicated region
        $region49: #{bottleneck_forward.4} parent=43 // pred_check
          %p684 = pneg %p115
        $region50: #{bottleneck_forward.4} parent=43 // pred_check_branch
          %686 = sbr.rel (%p684) target = $region52
        $region51: #{bottleneck_forward.4} parent=43 // pred_region
          %p687 = scmp.lt.s32.totalorder %s19, 3
          %s688 = scalar_select %p687, %s19, 3
          %s689 = smul.addr %s688, 2
          %s690 = scalar_lea.vmem %s3, %s689
        $region52: #{bottleneck_forward.4} parent=43 // pred_fallthru
          _
      $region44: #{bottleneck_forward.4} parent=5 // pred_fallthru
        _
    $region6: #{bottleneck_forward.4} parent=1 // loop_footer
      %s17 = sadd.s32 1, %s13
    $region7: #{bottleneck_forward.4} parent=1 // loop_footer_branch
      %12 = sbr.rel target = $region3
    $region8: #{bottleneck_forward.4} parent=1 // loop_exit
      _
    %691 = vsyncpa [#allocation3], 1
    %s692 = scalar_lea.sflag [#allocation3], 1
    %693 = vsyncpa %s692, 1

// kernel: bottleneck_forward.6
$region0: #{bottleneck_forward.6}
  #allocation0 [shape = 'u32[]', space=smem, size = 0x4, offset = 0x4, fixed_abs, tag = 'smem constant byte address 0x4 - core index']
  #allocation1 [shape = 'u32[144,128]{1,0:T(1,128)}', space=vmem, size = 0x12000, scoped, tag = 'internal scratch']
  %s0 = inlined_call_operand.vmem [shape: bf16[512,64], index: 0, kind: input, shape index: {}]
  %s1 = inlined_call_operand.vmem [shape: f32[1,64], index: 1, kind: input, shape index: {}]
  %s2 = inlined_call_operand.vmem [shape: f32[1,64], index: 2, kind: input, shape index: {}]
  %s3 = inlined_call_operand.vmem [shape: bf16[64,256], index: 3, kind: input, shape index: {}]
  %s4 = inlined_call_operand.vmem [shape: bf16[512,256], index: 4, kind: output, shape index: {0}]
  %s5 = inlined_call_operand.vmem [shape: f32[4,2,256], index: 5, kind: output, shape index: {1}]
  %6 = xla_tuple %s4, %s5
  %s7 = sld [smem:[#allocation0]]
  $region57: #{bottleneck_forward.6} parent=0
    _
  %s9 = ssub.s32 1, %s7
  %s10 = scalar_select 0, %s9, %s7
  loop: start=0, step=1, limit=6
  $region2: #{bottleneck_forward.6} parent=0 // loop_pre_header
    _
  $region3: #{bottleneck_forward.6} parent=0 // loop_header
    %s12 = sphi 0, %s16
    %p13 = scmp.ge.s32.totalorder %s12, 6
    %s22 = sphi 0, %s24
    %s25 = sphi 0, %s22
    %s26 = sphi 0, %s25
    %s42 = sphi 0, %s26
    %s46 = sphi 0, %s46
    %s48 = sphi 0, %s46
    %s49 = sphi 0, %s48
    %s63 = sphi 0, %s49
    %s67 = sphi 0, %s67
    %s69 = sphi 0, %s67
    %s70 = sphi 0, %s69
    %s84 = sphi 0, %s70
    %s88 = sphi 0, %s88
    %s90 = sphi 0, %s88
    %s91 = sphi 0, %s90
    %s105 = sphi 0, %s91
    %s111 = sphi 0, %s113
    %s114 = sphi 0, %s111
    %s115 = sphi 0, %s114
    %s131 = sphi 0, %s115
    %s137 = sphi 0, %s139
    %s140 = sphi 0, %s137
    %s141 = sphi 0, %s140
    %s157 = sphi 0, %s141
  $region4: #{bottleneck_forward.6} parent=0 // loop_header_branch
    %15 = sbr.rel (%p13) target = $region8
  $region5: #{bottleneck_forward.6} parent=0 // loop_body
    %s17 = ssub.s32 %s12, 1
    %s18 = ssub.s32 %s12, 2
    %s19 = sadd.s32 %s12, 1
    %s20 = ssub.s32 %s12, %s19
    %p21 = scmp.eq.s32.totalorder %s20, 0
    %s23 = sadd.s32 %s22, 1
    %s24 = scalar_select %p21, %s22, %s23
    %p27 = pneg %p21
    %p28 = scmp.eq.s32.totalorder %s12, 3
    %p29 = por %p27, %p28
    %p30 = scmp.ne.s32.totalorder %s22, %s25
    %p31 = scmp.eq.s32.totalorder %s12, 0
    %p32 = por %p30, %p31
    %p33 = scmp.ne.s32.totalorder %s22, %s25
    %p34 = scmp.eq.s32.totalorder %s17, 3
    %p35 = por %p33, %p34
    %p36 = scmp.ne.s32.totalorder %s25, %s26
    %p37 = scmp.eq.s32.totalorder %s17, 0
    %p38 = por %p36, %p37
    %p39 = scmp.ne.s32.totalorder %s25, %s26
    %p40 = scmp.eq.s32.totalorder %s18, 3
    %p41 = por %p39, %p40
    %p43 = scmp.ne.s32.totalorder %s26, %s42
    %p44 = scmp.eq.s32.totalorder %s18, 0
    %p45 = por %p43, %p44
    %s47 = sadd.s32 %s46, 1
    %p50 = scmp.eq.s32.totalorder %s12, 3
    %p51 = scmp.ne.s32.totalorder %s46, %s48
    %p52 = scmp.eq.s32.totalorder %s12, 0
    %p53 = por %p51, %p52
    %p54 = scmp.ne.s32.totalorder %s46, %s48
    %p55 = scmp.eq.s32.totalorder %s17, 3
    %p56 = por %p54, %p55
    %p57 = scmp.ne.s32.totalorder %s48, %s49
    %p58 = scmp.eq.s32.totalorder %s17, 0
    %p59 = por %p57, %p58
    %p60 = scmp.ne.s32.totalorder %s48, %s49
    %p61 = scmp.eq.s32.totalorder %s18, 3
    %p62 = por %p60, %p61
    %p64 = scmp.ne.s32.totalorder %s49, %s63
    %p65 = scmp.eq.s32.totalorder %s18, 0
    %p66 = por %p64, %p65
    %s68 = sadd.s32 %s67, 1
    %p71 = scmp.eq.s32.totalorder %s12, 3
    %p72 = scmp.ne.s32.totalorder %s67, %s69
    %p73 = scmp.eq.s32.totalorder %s12, 0
    %p74 = por %p72, %p73
    %p75 = scmp.ne.s32.totalorder %s67, %s69
    %p76 = scmp.eq.s32.totalorder %s17, 3
    %p77 = por %p75, %p76
    %p78 = scmp.ne.s32.totalorder %s69, %s70
    %p79 = scmp.eq.s32.totalorder %s17, 0
    %p80 = por %p78, %p79
    %p81 = scmp.ne.s32.totalorder %s69, %s70
    %p82 = scmp.eq.s32.totalorder %s18, 3
    %p83 = por %p81, %p82
    %p85 = scmp.ne.s32.totalorder %s70, %s84
    %p86 = scmp.eq.s32.totalorder %s18, 0
    %p87 = por %p85, %p86
    %s89 = sadd.s32 %s88, 1
    %p92 = scmp.eq.s32.totalorder %s12, 3
    %p93 = scmp.ne.s32.totalorder %s88, %s90
    %p94 = scmp.eq.s32.totalorder %s12, 0
    %p95 = por %p93, %p94
    %p96 = scmp.ne.s32.totalorder %s88, %s90
    %p97 = scmp.eq.s32.totalorder %s17, 3
    %p98 = por %p96, %p97
    %p99 = scmp.ne.s32.totalorder %s90, %s91
    %p100 = scmp.eq.s32.totalorder %s17, 0
    %p101 = por %p99, %p100
    %p102 = scmp.ne.s32.totalorder %s90, %s91
    %p103 = scmp.eq.s32.totalorder %s18, 3
    %p104 = por %p102, %p103
    %p106 = scmp.ne.s32.totalorder %s91, %s105
    %p107 = scmp.eq.s32.totalorder %s18, 0
    %p108 = por %p106, %p107
    %s109 = ssub.s32 %s12, %s19
    %p110 = scmp.eq.s32.totalorder %s109, 0
    %s112 = sadd.s32 %s111, 1
    %s113 = scalar_select %p110, %s111, %s112
    %p116 = pneg %p110
    %p117 = scmp.eq.s32.totalorder %s12, 3
    %p118 = por %p116, %p117
    %p119 = scmp.ne.s32.totalorder %s111, %s114
    %p120 = scmp.eq.s32.totalorder %s12, 0
    %p121 = por %p119, %p120
    %p122 = scmp.ne.s32.totalorder %s111, %s114
    %p123 = scmp.eq.s32.totalorder %s17, 3
    %p124 = por %p122, %p123
    %p125 = scmp.ne.s32.totalorder %s114, %s115
    %p126 = scmp.eq.s32.totalorder %s17, 0
    %p127 = por %p125, %p126
    %p128 = scmp.ne.s32.totalorder %s114, %s115
    %p129 = scmp.eq.s32.totalorder %s18, 3
    %p130 = por %p128, %p129
    %p132 = scmp.ne.s32.totalorder %s115, %s131
    %p133 = scmp.eq.s32.totalorder %s18, 0
    %p134 = por %p132, %p133
    %s135 = ssub.s32 %s12, %s19
    %p136 = scmp.eq.s32.totalorder %s135, 0
    %s138 = sadd.s32 %s137, 1
    %s139 = scalar_select %p136, %s137, %s138
    %p142 = pneg %p136
    %p143 = scmp.eq.s32.totalorder %s12, 3
    %p144 = por %p142, %p143
    %p145 = scmp.ne.s32.totalorder %s137, %s140
    %p146 = scmp.eq.s32.totalorder %s12, 0
    %p147 = por %p145, %p146
    %p148 = scmp.ne.s32.totalorder %s137, %s140
    %p149 = scmp.eq.s32.totalorder %s17, 3
    %p150 = por %p148, %p149
    %p151 = scmp.ne.s32.totalorder %s140, %s141
    %p152 = scmp.eq.s32.totalorder %s17, 0
    %p153 = por %p151, %p152
    %p154 = scmp.ne.s32.totalorder %s140, %s141
    %p155 = scmp.eq.s32.totalorder %s18, 3
    %p156 = por %p154, %p155
    %p158 = scmp.ne.s32.totalorder %s141, %s157
    %p159 = scmp.eq.s32.totalorder %s18, 0
    %p160 = por %p158, %p159
    %p161 = scmp.le.s32.totalorder 1, %s12
    %p162 = scmp.lt.s32.totalorder %s12, 5
    %p163 = pnand %p161, %p162
    %p164 = pneg %p163
    // Predicated region
    $region9: #{bottleneck_forward.6} parent=5 // pred_check
      _
    $region10: #{bottleneck_forward.6} parent=5 // pred_check_branch
      %166 = sbr.rel (%p163) target = $region12
    $region11: #{bottleneck_forward.6} parent=5 // pred_region
      %s167 = ssub.s32 %s12, 1
      // Predicated region
      $region13: #{bottleneck_forward.6} parent=11 // pred_check
        %p168 = pneg %p59
      $region14: #{bottleneck_forward.6} parent=11 // pred_check_branch
        %170 = sbr.rel (%p168) target = $region16
      $region15: #{bottleneck_forward.6} parent=11 // pred_region
        _
      $region16: #{bottleneck_forward.6} parent=11 // pred_fallthru
        _
      // Predicated region
      $region17: #{bottleneck_forward.6} parent=11 // pred_check
        %p171 = pneg %p80
      $region18: #{bottleneck_forward.6} parent=11 // pred_check_branch
        %173 = sbr.rel (%p171) target = $region20
      $region19: #{bottleneck_forward.6} parent=11 // pred_region
        _
      $region20: #{bottleneck_forward.6} parent=11 // pred_fallthru
        _
      // Predicated region
      $region21: #{bottleneck_forward.6} parent=11 // pred_check
        %p174 = pneg %p101
      $region22: #{bottleneck_forward.6} parent=11 // pred_check_branch
        %176 = sbr.rel (%p174) target = $region24
      $region23: #{bottleneck_forward.6} parent=11 // pred_region
        _
      $region24: #{bottleneck_forward.6} parent=11 // pred_fallthru
        _
    $region12: #{bottleneck_forward.6} parent=5 // pred_fallthru
      _
    %p177 = scmp.lt.s32.totalorder %s12, 4
    // Predicated region
    $region25: #{bottleneck_forward.6} parent=5 // pred_check
      %p178 = pneg %p177
    $region26: #{bottleneck_forward.6} parent=5 // pred_check_branch
      %180 = sbr.rel (%p178) target = $region28
    $region27: #{bottleneck_forward.6} parent=5 // pred_region
      // Predicated region
      $region29: #{bottleneck_forward.6} parent=27 // pred_check
        %p181 = pneg %p32
      $region30: #{bottleneck_forward.6} parent=27 // pred_check_branch
        %183 = sbr.rel (%p181) target = $region32
      $region31: #{bottleneck_forward.6} parent=27 // pred_region
        %s184 = smul.u32 16, %s12
        %p185 = scmp.lt.s32.totalorder %s184, 63
        %s186 = scalar_select %p185, %s184, 63
        %s187 = smul.addr %s186, 4
        %s188 = scalar_lea.vmem %s0, %s187
        %s189 = smul.u32 16, %s12
      $region32: #{bottleneck_forward.6} parent=27 // pred_fallthru
        _
    $region28: #{bottleneck_forward.6} parent=5 // pred_fallthru
      _
    %p190 = scmp.le.s32.totalorder 1, %s12
    %p191 = scmp.lt.s32.totalorder %s12, 5
    %p192 = pnand %p190, %p191
    %p193 = pneg %p192
    // Predicated region
    $region33: #{bottleneck_forward.6} parent=5 // pred_check
      _
    $region34: #{bottleneck_forward.6} parent=5 // pred_check_branch
      %195 = sbr.rel (%p192) target = $region36
    $region35: #{bottleneck_forward.6} parent=5 // pred_region
      %s196 = ssub.s32 %s12, 1
      %s197 = smul.u32 16, %s17
      %p198 = scmp.lt.s32.totalorder %s197, 63
      %s199 = scalar_select %p198, %s197, 63
      %s200 = smul.addr %s199, 4
      %s201 = scalar_lea.vmem %s0, %s200
      %p202 = pneg %p38
      %p203 = pneg %p35
      %p204 = pneg %p59
      %p205 = pneg %p56
      %p206 = pneg %p80
      %p207 = pneg %p77
      %p208 = pneg %p101
      %p209 = pneg %p98
      %p210 = pneg %p127
      %p211 = pneg %p124
      %s212 = smul.u32 16, %s17
      %p213 = scmp.lt.s32.totalorder %s212, 63
      %s214 = scalar_select %p213, %s212, 63
      %s215 = smul.addr %s214, 2
      %s216 = smul.addr %s215, 4
      %s217 = scalar_lea.vmem %s4, %s216
      %p218 = pneg %p153
      %p219 = pneg %p150
      %p220 = scmp.lt.s32.totalorder %s17, 3
      %s221 = scalar_select %p220, %s17, 3
      %s222 = smul.addr %s221, 2
      %s223 = smul.addr %s222, 2
      %s224 = scalar_lea.vmem %s5, %s223
      %s225 = smul.u32 16, %s17
      %p226 = scmp.lt.s32.totalorder %s225, 63
      %s227 = scalar_select %p226, %s225, 63
      %s228 = smul.addr %s227, 4
      %s229 = scalar_lea.vmem %s0, %s228
      %s230 = smul.u32 16, %s17
      %s231 = smul.u32 16, %s17
      %p232 = scmp.lt.s32.totalorder %s231, 63
      %s233 = scalar_select %p232, %s231, 63
      %s234 = smul.addr %s233, 2
      %s235 = smul.addr %s234, 4
      %s236 = scalar_lea.vmem %s4, %s235
      %s237 = smul.u32 16, %s17
      %p238 = scmp.lt.s32.totalorder %s17, 3
      %s239 = scalar_select %p238, %s17, 3
      %s240 = smul.addr %s239, 2
      %s241 = smul.addr %s240, 2
      %s242 = scalar_lea.vmem %s5, %s241
      %v244 = vld [vmem:[%s229] sm:$0xf]
      %v245 = vld [vmem:[%s229 + $0x4] sm:$0xf]
      %v246 = vld [vmem:[%s229 + $0x8] sm:$0xf]
      %v247 = vld [vmem:[%s229 + $0xc] sm:$0xf]
      %v248 = vld [vmem:[%s229 + $0x10] sm:$0xf]
      %v249 = vld [vmem:[%s229 + $0x14] sm:$0xf]
      %v250 = vld [vmem:[%s229 + $0x18] sm:$0xf]
      %v251 = vld [vmem:[%s229 + $0x1c] sm:$0xf]
      %v252 = vld [vmem:[%s229 + $0x20] sm:$0xf]
      %v253 = vld [vmem:[%s229 + $0x24] sm:$0xf]
      %v254 = vld [vmem:[%s229 + $0x28] sm:$0xf]
      %v255 = vld [vmem:[%s229 + $0x2c] sm:$0xf]
      %v256 = vld [vmem:[%s229 + $0x30] sm:$0xf]
      %v257 = vld [vmem:[%s229 + $0x34] sm:$0xf]
      %v258 = vld [vmem:[%s229 + $0x38] sm:$0xf]
      %v259 = vld [vmem:[%s229 + $0x3c] sm:$0xf]
      %v260 = vunpack.c.l.bf16 %v244
      %v261 = vunpack.c.l.bf16 %v245
      %v262 = vunpack.c.l.bf16 %v246
      %v263 = vunpack.c.l.bf16 %v247
      %v264 = vunpack.c.l.bf16 %v248
      %v265 = vunpack.c.l.bf16 %v249
      %v266 = vunpack.c.l.bf16 %v250
      %v267 = vunpack.c.l.bf16 %v251
      %v268 = vunpack.c.l.bf16 %v252
      %v269 = vunpack.c.l.bf16 %v253
      %v270 = vunpack.c.l.bf16 %v254
      %v271 = vunpack.c.l.bf16 %v255
      %v272 = vunpack.c.l.bf16 %v256
      %v273 = vunpack.c.l.bf16 %v257
      %v274 = vunpack.c.l.bf16 %v258
      %v275 = vunpack.c.l.bf16 %v259
      %v276 = vld [vmem:[%s1] sm:$0x1]
      %v278 = vlaneseq
      %v279 = vshrl.u32 %v278, 7
      %v280 = vsub.s32 0, %v279
      %v281 = vrot.slane %v276, %v280
      %v283 = vmul.f32 %v260, %v281
      %v284 = vmul.f32 %v261, %v281
      %v285 = vmul.f32 %v262, %v281
      %v286 = vmul.f32 %v263, %v281
      %v287 = vmul.f32 %v264, %v281
      %v288 = vmul.f32 %v265, %v281
      %v289 = vmul.f32 %v266, %v281
      %v290 = vmul.f32 %v267, %v281
      %v291 = vmul.f32 %v268, %v281
      %v292 = vmul.f32 %v269, %v281
      %v293 = vmul.f32 %v270, %v281
      %v294 = vmul.f32 %v271, %v281
      %v295 = vmul.f32 %v272, %v281
      %v296 = vmul.f32 %v273, %v281
      %v297 = vmul.f32 %v274, %v281
      %v298 = vmul.f32 %v275, %v281
      %v299 = vld [vmem:[%s2] sm:$0x1]
      %v301 = vlaneseq
      %v302 = vshrl.u32 %v301, 7
      %v303 = vsub.s32 0, %v302
      %v304 = vrot.slane %v299, %v303
      %v306 = vadd.f32 %v283, %v304
      %v307 = vadd.f32 %v284, %v304
      %v308 = vadd.f32 %v285, %v304
      %v309 = vadd.f32 %v286, %v304
      %v310 = vadd.f32 %v287, %v304
      %v311 = vadd.f32 %v288, %v304
      %v312 = vadd.f32 %v289, %v304
      %v313 = vadd.f32 %v290, %v304
      %v314 = vadd.f32 %v291, %v304
      %v315 = vadd.f32 %v292, %v304
      %v316 = vadd.f32 %v293, %v304
      %v317 = vadd.f32 %v294, %v304
      %v318 = vadd.f32 %v295, %v304
      %v319 = vadd.f32 %v296, %v304
      %v320 = vadd.f32 %v297, %v304
      %v321 = vadd.f32 %v298, %v304
      %v322 = vmax.f32 %v306, 0.0
      %v323 = vmax.f32 %v307, 0.0
      %v324 = vmax.f32 %v308, 0.0
      %v325 = vmax.f32 %v309, 0.0
      %v326 = vmax.f32 %v310, 0.0
      %v327 = vmax.f32 %v311, 0.0
      %v328 = vmax.f32 %v312, 0.0
      %v329 = vmax.f32 %v313, 0.0
      %v330 = vmax.f32 %v314, 0.0
      %v331 = vmax.f32 %v315, 0.0
      %v332 = vmax.f32 %v316, 0.0
      %v333 = vmax.f32 %v317, 0.0
      %v334 = vmax.f32 %v318, 0.0
      %v335 = vmax.f32 %v319, 0.0
      %v336 = vmax.f32 %v320, 0.0
      %v337 = vmax.f32 %v321, 0.0
      %v338 = vpack.c.bf16 %v323, %v322
      %v339 = vpack.c.bf16 %v325, %v324
      %v340 = vpack.c.bf16 %v327, %v326
      %v341 = vpack.c.bf16 %v329, %v328
      %v342 = vpack.c.bf16 %v331, %v330
      %v343 = vpack.c.bf16 %v333, %v332
      %v344 = vpack.c.bf16 %v335, %v334
      %v345 = vpack.c.bf16 %v337, %v336
      %v346 = vld [vmem:[%s3] sm:$0xff]
      %v347 = vld [vmem:[%s3 + $0x8] sm:$0xff]
      %v348 = vld [vmem:[%s3 + $0x10] sm:$0xff]
      %v349 = vld [vmem:[%s3 + $0x18] sm:$0xff]
      %v350 = vld [vmem:[%s3 + $0x20] sm:$0xff]
      %v351 = vld [vmem:[%s3 + $0x28] sm:$0xff]
      %v352 = vld [vmem:[%s3 + $0x30] sm:$0xff]
      %v353 = vld [vmem:[%s3 + $0x38] sm:$0xff]
      %v362 = vunpack.c.l.b16 %v346
      %v363 = vunpack.c.h.b16 %v346
      %v364 = vunpack.c.l.b16 %v347
      %v365 = vunpack.c.h.b16 %v347
      %v366 = vunpack.c.l.b16 %v348
      %v367 = vunpack.c.h.b16 %v348
      %v368 = vunpack.c.l.b16 %v349
      %v369 = vunpack.c.h.b16 %v349
      %v370 = vunpack.c.l.b16 %v350
      %v371 = vunpack.c.h.b16 %v350
      %v372 = vunpack.c.l.b16 %v351
      %v373 = vunpack.c.h.b16 %v351
      %v374 = vunpack.c.l.b16 %v352
      %v375 = vunpack.c.h.b16 %v352
      %v376 = vunpack.c.l.b16 %v353
      %v377 = vunpack.c.h.b16 %v353
      %v378 = vpack.c.b16 %v364, %v362
      %v379 = vpack.c.b16 %v365, %v363
      %v380 = vpack.c.b16 %v368, %v366
      %v381 = vpack.c.b16 %v369, %v367
      %v382 = vpack.c.b16 %v372, %v370
      %v383 = vpack.c.b16 %v373, %v371
      %v384 = vpack.c.b16 %v376, %v374
      %v385 = vpack.c.b16 %v377, %v375
      %vm394 = vcmask 523264
      %v396 = vsel %vm394, %v338, 0
      %v399 = vsel %vm394, %v339, 0
      %v402 = vsel %vm394, %v340, 0
      %v405 = vsel %vm394, %v341, 0
      %v408 = vsel %vm394, %v342, 0
      %v411 = vsel %vm394, %v343, 0
      %v414 = vsel %vm394, %v344, 0
      %v417 = vsel %vm394, %v345, 0
      %419 = vmatprep.subr.bf16.mxu0 %v379
      %420 = vmatpush1.bf16.msra.mxu0 %v378
      %421 = vmatprep.subr.bf16.mxu0 %v381
      %422 = vmatpush1.bf16.msra.mxu0 %v380
      %423 = vmatprep.subr.bf16.mxu0 %v383
      %424 = vmatpush1.bf16.msra.mxu0 %v382
      %425 = vmatprep.subr.bf16.mxu0 %v385
      %426 = vmatpush1.bf16.msra.mxu0 %v384
      %427 = vmatprep.subr.bf16.mxu0 0
      %428 = vmatpush1.bf16.msra.mxu0 0
      %429 = vmatprep.subr.bf16.mxu0 0
      %430 = vmatpush1.bf16.msra.mxu0 0
      %431 = vmatprep.subr.bf16.mxu0 0
      %432 = vmatpush1.bf16.msra.mxu0 0
      %433 = vmatprep.subr.bf16.mxu0 0
      %434 = vmatpush1.bf16.msra.mxu0 0
      %435 = vmatprep.subr.bf16.mxu0 0
      %436 = vmatpush1.bf16.msra.mxu0 0
      %437 = vmatprep.subr.bf16.mxu0 0
      %438 = vmatpush1.bf16.msra.mxu0 0
      %439 = vmatprep.subr.bf16.mxu0 0
      %440 = vmatpush1.bf16.msra.mxu0 0
      %441 = vmatprep.subr.bf16.mxu0 0
      %442 = vmatpush1.bf16.msra.mxu0 0
      %443 = vmatprep.subr.bf16.mxu0 0
      %444 = vmatpush1.bf16.msra.mxu0 0
      %445 = vmatprep.subr.bf16.mxu0 0
      %446 = vmatpush1.bf16.msra.mxu0 0
      %447 = vmatprep.subr.bf16.mxu0 0
      %448 = vmatpush1.bf16.msra.mxu0 0
      %449 = vmatprep.subr.bf16.mxu0 0
      %450 = vmatpush1.bf16.msra.mxu0 0
      %451 = vmatprep.mubr.bf16.mxu0 0
      %452 = vmatmul.mubr.bf16.gmra.mrb[0].mxu0 %v396
      %v453 = vpop.f32.mrb[0].mxu0
      %v454 = vadd.f32 0.0, %v453
      %v455 = vpop.f32.mrb[0].mxu0
      %v456 = vadd.f32 0.0, %v455
      %v457 = vpop.f32.mrb[0].mxu0
      %v458 = vadd.f32 0.0, %v457
      %v459 = vpop.f32.mrb[0].mxu0
      %v460 = vadd.f32 0.0, %v459
      %461 = vmatprep.mubr.bf16.mxu0 0
      %462 = vmatmul.mubr.bf16.gmra.mrb[0].mxu0 %v399
      %v463 = vpop.f32.mrb[0].mxu0
      %v464 = vadd.f32 0.0, %v463
      %v465 = vpop.f32.mrb[0].mxu0
      %v466 = vadd.f32 0.0, %v465
      %v467 = vpop.f32.mrb[0].mxu0
      %v468 = vadd.f32 0.0, %v467
      %v469 = vpop.f32.mrb[0].mxu0
      %v470 = vadd.f32 0.0, %v469
      %471 = vmatprep.mubr.bf16.mxu0 0
      %472 = vmatmul.mubr.bf16.gmra.mrb[0].mxu0 %v402
      %v473 = vpop.f32.mrb[0].mxu0
      %v474 = vadd.f32 0.0, %v473
      %v475 = vpop.f32.mrb[0].mxu0
      %v476 = vadd.f32 0.0, %v475
      %v477 = vpop.f32.mrb[0].mxu0
      %v478 = vadd.f32 0.0, %v477
      %v479 = vpop.f32.mrb[0].mxu0
      %v480 = vadd.f32 0.0, %v479
      %481 = vmatprep.mubr.bf16.mxu0 0
      %482 = vmatmul.mubr.bf16.gmra.mrb[0].mxu0 %v405
      %v483 = vpop.f32.mrb[0].mxu0
      %v484 = vadd.f32 0.0, %v483
      %v485 = vpop.f32.mrb[0].mxu0
      %v486 = vadd.f32 0.0, %v485
      %v487 = vpop.f32.mrb[0].mxu0
      %v488 = vadd.f32 0.0, %v487
      %v489 = vpop.f32.mrb[0].mxu0
      %v490 = vadd.f32 0.0, %v489
      %491 = vmatprep.mubr.bf16.mxu0 0
      %492 = vmatmul.mubr.bf16.gmra.mrb[0].mxu0 %v408
      %v493 = vpop.f32.mrb[0].mxu0
      %v494 = vadd.f32 0.0, %v493
      %v495 = vpop.f32.mrb[0].mxu0
      %v496 = vadd.f32 0.0, %v495
      %v497 = vpop.f32.mrb[0].mxu0
      %v498 = vadd.f32 0.0, %v497
      %v499 = vpop.f32.mrb[0].mxu0
      %v500 = vadd.f32 0.0, %v499
      %501 = vmatprep.mubr.bf16.mxu0 0
      %502 = vmatmul.mubr.bf16.gmra.mrb[0].mxu0 %v411
      %v503 = vpop.f32.mrb[0].mxu0
      %v504 = vadd.f32 0.0, %v503
      %v505 = vpop.f32.mrb[0].mxu0
      %v506 = vadd.f32 0.0, %v505
      %v507 = vpop.f32.mrb[0].mxu0
      %v508 = vadd.f32 0.0, %v507
      %v509 = vpop.f32.mrb[0].mxu0
      %v510 = vadd.f32 0.0, %v509
      %511 = vmatprep.mubr.bf16.mxu0 0
      %512 = vmatmul.mubr.bf16.gmra.mrb[0].mxu0 %v414
      %v513 = vpop.f32.mrb[0].mxu0
      %v514 = vadd.f32 0.0, %v513
      %v515 = vpop.f32.mrb[0].mxu0
      %v516 = vadd.f32 0.0, %v515
      %v517 = vpop.f32.mrb[0].mxu0
      %v518 = vadd.f32 0.0, %v517
      %v519 = vpop.f32.mrb[0].mxu0
      %v520 = vadd.f32 0.0, %v519
      %521 = vmatprep.mubr.bf16.mxu0 0
      %522 = vmatmul.mubr.bf16.gmra.mrb[0].mxu0 %v417
      %v523 = vpop.f32.mrb[0].mxu0
      %v524 = vadd.f32 0.0, %v523
      %v525 = vpop.f32.mrb[0].mxu0
      %v526 = vadd.f32 0.0, %v525
      %v527 = vpop.f32.mrb[0].mxu0
      %v528 = vadd.f32 0.0, %v527
      %v529 = vpop.f32.mrb[0].mxu0
      %v530 = vadd.f32 0.0, %v529
      %531 = vdwg.mxu0
      %v532 = vpack.c.bf16 %v458, %v454
      %v533 = vpack.c.bf16 %v460, %v456
      %v534 = vpack.c.bf16 %v468, %v464
      %v535 = vpack.c.bf16 %v470, %v466
      %v536 = vpack.c.bf16 %v478, %v474
      %v537 = vpack.c.bf16 %v480, %v476
      %v538 = vpack.c.bf16 %v488, %v484
      %v539 = vpack.c.bf16 %v490, %v486
      %v540 = vpack.c.bf16 %v498, %v494
      %v541 = vpack.c.bf16 %v500, %v496
      %v542 = vpack.c.bf16 %v508, %v504
      %v543 = vpack.c.bf16 %v510, %v506
      %v544 = vpack.c.bf16 %v518, %v514
      %v545 = vpack.c.bf16 %v520, %v516
      %v546 = vpack.c.bf16 %v528, %v524
      %v547 = vpack.c.bf16 %v530, %v526
      %v564 = vunpack.c.l.b16 %v532
      %v565 = vunpack.c.l.b16 %v533
      %v566 = vunpack.c.h.b16 %v532
      %v567 = vunpack.c.h.b16 %v533
      %v568 = vunpack.c.l.b16 %v534
      %v569 = vunpack.c.l.b16 %v535
      %v570 = vunpack.c.h.b16 %v534
      %v571 = vunpack.c.h.b16 %v535
      %v572 = vunpack.c.l.b16 %v536
      %v573 = vunpack.c.l.b16 %v537
      %v574 = vunpack.c.h.b16 %v536
      %v575 = vunpack.c.h.b16 %v537
      %v576 = vunpack.c.l.b16 %v538
      %v577 = vunpack.c.l.b16 %v539
      %v578 = vunpack.c.h.b16 %v538
      %v579 = vunpack.c.h.b16 %v539
      %v580 = vunpack.c.l.b16 %v540
      %v581 = vunpack.c.l.b16 %v541
      %v582 = vunpack.c.h.b16 %v540
      %v583 = vunpack.c.h.b16 %v541
      %v584 = vunpack.c.l.b16 %v542
      %v585 = vunpack.c.l.b16 %v543
      %v586 = vunpack.c.h.b16 %v542
      %v587 = vunpack.c.h.b16 %v543
      %v588 = vunpack.c.l.b16 %v544
      %v589 = vunpack.c.l.b16 %v545
      %v590 = vunpack.c.h.b16 %v544
      %v591 = vunpack.c.h.b16 %v545
      %v592 = vunpack.c.l.b16 %v546
      %v593 = vunpack.c.l.b16 %v547
      %v594 = vunpack.c.h.b16 %v546
      %v595 = vunpack.c.h.b16 %v547
      %v596 = vpack.c.b16 %v565, %v564
      %v597 = vpack.c.b16 %v567, %v566
      %v598 = vpack.c.b16 %v569, %v568
      %v599 = vpack.c.b16 %v571, %v570
      %v600 = vpack.c.b16 %v573, %v572
      %v601 = vpack.c.b16 %v575, %v574
      %v602 = vpack.c.b16 %v577, %v576
      %v603 = vpack.c.b16 %v579, %v578
      %v604 = vpack.c.b16 %v581, %v580
      %v605 = vpack.c.b16 %v583, %v582
      %v606 = vpack.c.b16 %v585, %v584
      %v607 = vpack.c.b16 %v587, %v586
      %v608 = vpack.c.b16 %v589, %v588
      %v609 = vpack.c.b16 %v591, %v590
      %v610 = vpack.c.b16 %v593, %v592
      %v611 = vpack.c.b16 %v595, %v594
      %628 = vst [vmem:[%s236] sm:$0xff] %v596
      %629 = vst [vmem:[%s236 + $0x8] sm:$0xff] %v597
      %630 = vst [vmem:[%s236 + $0x10] sm:$0xff] %v598
      %631 = vst [vmem:[%s236 + $0x18] sm:$0xff] %v599
      %632 = vst [vmem:[%s236 + $0x20] sm:$0xff] %v600
      %633 = vst [vmem:[%s236 + $0x28] sm:$0xff] %v601
      %634 = vst [vmem:[%s236 + $0x30] sm:$0xff] %v602
      %635 = vst [vmem:[%s236 + $0x38] sm:$0xff] %v603
      %636 = vst [vmem:[%s236 + $0x40] sm:$0xff] %v604
      %637 = vst [vmem:[%s236 + $0x48] sm:$0xff] %v605
      %638 = vst [vmem:[%s236 + $0x50] sm:$0xff] %v606
      %639 = vst [vmem:[%s236 + $0x58] sm:$0xff] %v607
      %640 = vst [vmem:[%s236 + $0x60] sm:$0xff] %v608
      %641 = vst [vmem:[%s236 + $0x68] sm:$0xff] %v609
      %642 = vst [vmem:[%s236 + $0x70] sm:$0xff] %v610
      %643 = vst [vmem:[%s236 + $0x78] sm:$0xff] %v611
      %v644 = vadd.f32 %v454, %v458
      %v645 = vadd.f32 %v644, %v464
      %v646 = vadd.f32 %v645, %v468
      %v647 = vadd.f32 %v646, %v474
      %v648 = vadd.f32 %v647, %v478
      %v649 = vadd.f32 %v648, %v484
      %v650 = vadd.f32 %v649, %v488
      %v651 = vadd.f32 %v650, %v494
      %v652 = vadd.f32 %v651, %v498
      %v653 = vadd.f32 %v652, %v504
      %v654 = vadd.f32 %v653, %v508
      %v655 = vadd.f32 %v654, %v514
      %v656 = vadd.f32 %v655, %v518
      %v657 = vadd.f32 %v656, %v524
      %v658 = vadd.f32 %v657, %v528
      %v659 = vrot.slane %v658, 4
      %v660 = vadd.f32 %v658, %v659
      %v661 = vrot.slane %v660, 2
      %v662 = vadd.f32 %v660, %v661
      %v663 = vrot.slane %v662, 1
      %v664 = vadd.f32 %v662, %v663
      %v665 = vadd.f32 %v456, %v460
      %v666 = vadd.f32 %v665, %v466
      %v667 = vadd.f32 %v666, %v470
      %v668 = vadd.f32 %v667, %v476
      %v669 = vadd.f32 %v668, %v480
      %v670 = vadd.f32 %v669, %v486
      %v671 = vadd.f32 %v670, %v490
      %v672 = vadd.f32 %v671, %v496
      %v673 = vadd.f32 %v672, %v500
      %v674 = vadd.f32 %v673, %v506
      %v675 = vadd.f32 %v674, %v510
      %v676 = vadd.f32 %v675, %v516
      %v677 = vadd.f32 %v676, %v520
      %v678 = vadd.f32 %v677, %v526
      %v679 = vadd.f32 %v678, %v530
      %v680 = vrot.slane %v679, 4
      %v681 = vadd.f32 %v679, %v680
      %v682 = vrot.slane %v681, 2
      %v683 = vadd.f32 %v681, %v682
      %v684 = vrot.slane %v683, 1
      %v685 = vadd.f32 %v683, %v684
      %v686 = vmul.f32 %v454, %v454
      %v687 = vmul.f32 %v456, %v456
      %v688 = vmul.f32 %v458, %v458
      %v689 = vmul.f32 %v460, %v460
      %v690 = vmul.f32 %v464, %v464
      %v691 = vmul.f32 %v466, %v466
      %v692 = vmul.f32 %v468, %v468
      %v693 = vmul.f32 %v470, %v470
      %v694 = vmul.f32 %v474, %v474
      %v695 = vmul.f32 %v476, %v476
      %v696 = vmul.f32 %v478, %v478
      %v697 = vmul.f32 %v480, %v480
      %v698 = vmul.f32 %v484, %v484
      %v699 = vmul.f32 %v486, %v486
      %v700 = vmul.f32 %v488, %v488
      %v701 = vmul.f32 %v490, %v490
      %v702 = vmul.f32 %v494, %v494
      %v703 = vmul.f32 %v496, %v496
      %v704 = vmul.f32 %v498, %v498
      %v705 = vmul.f32 %v500, %v500
      %v706 = vmul.f32 %v504, %v504
      %v707 = vmul.f32 %v506, %v506
      %v708 = vmul.f32 %v508, %v508
      %v709 = vmul.f32 %v510, %v510
      %v710 = vmul.f32 %v514, %v514
      %v711 = vmul.f32 %v516, %v516
      %v712 = vmul.f32 %v518, %v518
      %v713 = vmul.f32 %v520, %v520
      %v714 = vmul.f32 %v524, %v524
      %v715 = vmul.f32 %v526, %v526
      %v716 = vmul.f32 %v528, %v528
      %v717 = vmul.f32 %v530, %v530
      %v718 = vadd.f32 %v686, %v688
      %v719 = vadd.f32 %v718, %v690
      %v720 = vadd.f32 %v719, %v692
      %v721 = vadd.f32 %v720, %v694
      %v722 = vadd.f32 %v721, %v696
      %v723 = vadd.f32 %v722, %v698
      %v724 = vadd.f32 %v723, %v700
      %v725 = vadd.f32 %v724, %v702
      %v726 = vadd.f32 %v725, %v704
      %v727 = vadd.f32 %v726, %v706
      %v728 = vadd.f32 %v727, %v708
      %v729 = vadd.f32 %v728, %v710
      %v730 = vadd.f32 %v729, %v712
      %v731 = vadd.f32 %v730, %v714
      %v732 = vadd.f32 %v731, %v716
      %v733 = vrot.slane %v732, 4
      %v734 = vadd.f32 %v732, %v733
      %v735 = vrot.slane %v734, 2
      %v736 = vadd.f32 %v734, %v735
      %v737 = vrot.slane %v736, 1
      %v738 = vadd.f32 %v736, %v737
      %v739 = vadd.f32 %v687, %v689
      %v740 = vadd.f32 %v739, %v691
      %v741 = vadd.f32 %v740, %v693
      %v742 = vadd.f32 %v741, %v695
      %v743 = vadd.f32 %v742, %v697
      %v744 = vadd.f32 %v743, %v699
      %v745 = vadd.f32 %v744, %v701
      %v746 = vadd.f32 %v745, %v703
      %v747 = vadd.f32 %v746, %v705
      %v748 = vadd.f32 %v747, %v707
      %v749 = vadd.f32 %v748, %v709
      %v750 = vadd.f32 %v749, %v711
      %v751 = vadd.f32 %v750, %v713
      %v752 = vadd.f32 %v751, %v715
      %v753 = vadd.f32 %v752, %v717
      %v754 = vrot.slane %v753, 4
      %v755 = vadd.f32 %v753, %v754
      %v756 = vrot.slane %v755, 2
      %v757 = vadd.f32 %v755, %v756
      %v758 = vrot.slane %v757, 1
      %v759 = vadd.f32 %v757, %v758
      %vm760 = vcmask 1040384
      %v761 = vsel %vm760, %v664, %v738
      %v762 = vsel %vm760, %v685, %v759
      %v765 = vcombine.low %v761, %v762
      %v767 = vunpack.c.l.s4 1983009808
      %v768 = vunpack.c.0.s8 %v767
      %v769 = vlaneseq
      %v770 = vshrl.u32 %v769, 7
      %v771 = vsub.s32 %v768, %v770
      %v772 = vrot.slane %v765, %v771
      %774 = vst [vmem:[%s242] sm:$0xf] %v772
      %s775 = smul.u32 16, %s17
      %p776 = scmp.lt.s32.totalorder %s775, 63
      %s777 = scalar_select %p776, %s775, 63
      %s778 = smul.addr %s777, 2
      %s779 = smul.addr %s778, 4
      %s780 = scalar_lea.vmem %s4, %s779
      %p781 = scmp.lt.s32.totalorder %s17, 3
      %s782 = scalar_select %p781, %s17, 3
      %s783 = smul.addr %s782, 2
      %s784 = smul.addr %s783, 2
      %s785 = scalar_lea.vmem %s5, %s784
      // Predicated region
      $region37: #{bottleneck_forward.6} parent=35 // pred_check
        %p786 = pneg %p124
      $region38: #{bottleneck_forward.6} parent=35 // pred_check_branch
        %788 = sbr.rel (%p786) target = $region40
      $region39: #{bottleneck_forward.6} parent=35 // pred_region
        %s789 = smul.u32 16, %s17
      $region40: #{bottleneck_forward.6} parent=35 // pred_fallthru
        _
      // Predicated region
      $region41: #{bottleneck_forward.6} parent=35 // pred_check
        %p790 = pneg %p150
      $region42: #{bottleneck_forward.6} parent=35 // pred_check_branch
        %792 = sbr.rel (%p790) target = $region44
      $region43: #{bottleneck_forward.6} parent=35 // pred_region
        _
      $region44: #{bottleneck_forward.6} parent=35 // pred_fallthru
        _
    $region36: #{bottleneck_forward.6} parent=5 // pred_fallthru
      _
    %p793 = scmp.le.s32.totalorder 2, %s12
    // Predicated region
    $region45: #{bottleneck_forward.6} parent=5 // pred_check
      %p794 = pneg %p793
    $region46: #{bottleneck_forward.6} parent=5 // pred_check_branch
      %796 = sbr.rel (%p794) target = $region48
    $region47: #{bottleneck_forward.6} parent=5 // pred_region
      %s797 = ssub.s32 %s12, 2
      // Predicated region
      $region49: #{bottleneck_forward.6} parent=47 // pred_check
        %p798 = pneg %p130
      $region50: #{bottleneck_forward.6} parent=47 // pred_check_branch
        %800 = sbr.rel (%p798) target = $region52
      $region51: #{bottleneck_forward.6} parent=47 // pred_region
        %s801 = smul.u32 16, %s18
        %p802 = scmp.lt.s32.totalorder %s801, 63
        %s803 = scalar_select %p802, %s801, 63
        %s804 = smul.addr %s803, 2
        %s805 = smul.addr %s804, 4
        %s806 = scalar_lea.vmem %s4, %s805
      $region52: #{bottleneck_forward.6} parent=47 // pred_fallthru
        _
      // Predicated region
      $region53: #{bottleneck_forward.6} parent=47 // pred_check
        %p807 = pneg %p156
      $region54: #{bottleneck_forward.6} parent=47 // pred_check_branch
        %809 = sbr.rel (%p807) target = $region56
      $region55: #{bottleneck_forward.6} parent=47 // pred_region
        %p810 = scmp.lt.s32.totalorder %s18, 3
        %s811 = scalar_select %p810, %s18, 3
        %s812 = smul.addr %s811, 2
        %s813 = smul.addr %s812, 2
        %s814 = scalar_lea.vmem %s5, %s813
      $region56: #{bottleneck_forward.6} parent=47 // pred_fallthru
        _
    $region48: #{bottleneck_forward.6} parent=5 // pred_fallthru
      _
  $region6: #{bottleneck_forward.6} parent=0 // loop_footer
    %s16 = sadd.s32 1, %s12
  $region7: #{bottleneck_forward.6} parent=0 // loop_footer_branch
    %11 = sbr.rel target = $region3
  $region8: #{bottleneck_forward.6} parent=0 // loop_exit
    _

// kernel: bottleneck_forward.5
$region0: #{bottleneck_forward.5}
  #allocation0 [shape = 'u32[]', space=smem, size = 0x4, offset = 0x4, fixed_abs, tag = 'smem constant byte address 0x4 - core index']
  #allocation1 [shape = 'u32[144,128]{1,0:T(1,128)}', space=vmem, size = 0x12000, scoped, tag = 'internal scratch']
  #allocation2 [shape = 'bf16[18,18,64]{2,1,0:T(8,128)(2,1)}', space=vmem, size = 0x1b000, scoped, tag = 'scratch operand']
  %s0 = inlined_call_operand.vmem [shape: bf16[2,16,16,64], index: 0, kind: input, shape index: {}]
  %s1 = inlined_call_operand.vmem [shape: f32[1,64], index: 1, kind: input, shape index: {}]
  %s2 = inlined_call_operand.vmem [shape: f32[1,64], index: 2, kind: input, shape index: {}]
  %s3 = inlined_call_operand.vmem [shape: bf16[9,64,64], index: 3, kind: input, shape index: {}]
  %s4 = inlined_call_operand.vmem [shape: bf16[2,16,16,64], index: 4, kind: output, shape index: {0}]
  %s5 = inlined_call_operand.vmem [shape: f32[2,2,64], index: 5, kind: output, shape index: {1}]
  %6 = xla_tuple %s4, %s5
  %s7 = sld [smem:[#allocation0]]
  $region57: #{bottleneck_forward.5} parent=0
    _
  %s9 = ssub.s32 1, %s7
  %s10 = scalar_select 0, %s9, %s7
  loop: start=0, step=1, limit=4
  $region2: #{bottleneck_forward.5} parent=0 // loop_pre_header
    _
  $region3: #{bottleneck_forward.5} parent=0 // loop_header
    %s12 = sphi 0, %s16
    %p13 = scmp.ge.s32.totalorder %s12, 4
    %s22 = sphi 0, %s24
    %s25 = sphi 0, %s22
    %s26 = sphi 0, %s25
    %s42 = sphi 0, %s26
    %s46 = sphi 0, %s46
    %s48 = sphi 0, %s46
    %s49 = sphi 0, %s48
    %s63 = sphi 0, %s49
    %s67 = sphi 0, %s67
    %s69 = sphi 0, %s67
    %s70 = sphi 0, %s69
    %s84 = sphi 0, %s70
    %s88 = sphi 0, %s88
    %s90 = sphi 0, %s88
    %s91 = sphi 0, %s90
    %s105 = sphi 0, %s91
    %s111 = sphi 0, %s113
    %s114 = sphi 0, %s111
    %s115 = sphi 0, %s114
    %s131 = sphi 0, %s115
    %s137 = sphi 0, %s139
    %s140 = sphi 0, %s137
    %s141 = sphi 0, %s140
    %s157 = sphi 0, %s141
  $region4: #{bottleneck_forward.5} parent=0 // loop_header_branch
    %15 = sbr.rel (%p13) target = $region8
  $region5: #{bottleneck_forward.5} parent=0 // loop_body
    %s17 = ssub.s32 %s12, 1
    %s18 = ssub.s32 %s12, 2
    %s19 = sadd.s32 %s12, 1
    %s20 = ssub.s32 %s12, %s19
    %p21 = scmp.eq.s32.totalorder %s20, 0
    %s23 = sadd.s32 %s22, 1
    %s24 = scalar_select %p21, %s22, %s23
    %p27 = pneg %p21
    %p28 = scmp.eq.s32.totalorder %s12, 1
    %p29 = por %p27, %p28
    %p30 = scmp.ne.s32.totalorder %s22, %s25
    %p31 = scmp.eq.s32.totalorder %s12, 0
    %p32 = por %p30, %p31
    %p33 = scmp.ne.s32.totalorder %s22, %s25
    %p34 = scmp.eq.s32.totalorder %s17, 1
    %p35 = por %p33, %p34
    %p36 = scmp.ne.s32.totalorder %s25, %s26
    %p37 = scmp.eq.s32.totalorder %s17, 0
    %p38 = por %p36, %p37
    %p39 = scmp.ne.s32.totalorder %s25, %s26
    %p40 = scmp.eq.s32.totalorder %s18, 1
    %p41 = por %p39, %p40
    %p43 = scmp.ne.s32.totalorder %s26, %s42
    %p44 = scmp.eq.s32.totalorder %s18, 0
    %p45 = por %p43, %p44
    %s47 = sadd.s32 %s46, 1
    %p50 = scmp.eq.s32.totalorder %s12, 1
    %p51 = scmp.ne.s32.totalorder %s46, %s48
    %p52 = scmp.eq.s32.totalorder %s12, 0
    %p53 = por %p51, %p52
    %p54 = scmp.ne.s32.totalorder %s46, %s48
    %p55 = scmp.eq.s32.totalorder %s17, 1
    %p56 = por %p54, %p55
    %p57 = scmp.ne.s32.totalorder %s48, %s49
    %p58 = scmp.eq.s32.totalorder %s17, 0
    %p59 = por %p57, %p58
    %p60 = scmp.ne.s32.totalorder %s48, %s49
    %p61 = scmp.eq.s32.totalorder %s18, 1
    %p62 = por %p60, %p61
    %p64 = scmp.ne.s32.totalorder %s49, %s63
    %p65 = scmp.eq.s32.totalorder %s18, 0
    %p66 = por %p64, %p65
    %s68 = sadd.s32 %s67, 1
    %p71 = scmp.eq.s32.totalorder %s12, 1
    %p72 = scmp.ne.s32.totalorder %s67, %s69
    %p73 = scmp.eq.s32.totalorder %s12, 0
    %p74 = por %p72, %p73
    %p75 = scmp.ne.s32.totalorder %s67, %s69
    %p76 = scmp.eq.s32.totalorder %s17, 1
    %p77 = por %p75, %p76
    %p78 = scmp.ne.s32.totalorder %s69, %s70
    %p79 = scmp.eq.s32.totalorder %s17, 0
    %p80 = por %p78, %p79
    %p81 = scmp.ne.s32.totalorder %s69, %s70
    %p82 = scmp.eq.s32.totalorder %s18, 1
    %p83 = por %p81, %p82
    %p85 = scmp.ne.s32.totalorder %s70, %s84
    %p86 = scmp.eq.s32.totalorder %s18, 0
    %p87 = por %p85, %p86
    %s89 = sadd.s32 %s88, 1
    %p92 = scmp.eq.s32.totalorder %s12, 1
    %p93 = scmp.ne.s32.totalorder %s88, %s90
    %p94 = scmp.eq.s32.totalorder %s12, 0
    %p95 = por %p93, %p94
    %p96 = scmp.ne.s32.totalorder %s88, %s90
    %p97 = scmp.eq.s32.totalorder %s17, 1
    %p98 = por %p96, %p97
    %p99 = scmp.ne.s32.totalorder %s90, %s91
    %p100 = scmp.eq.s32.totalorder %s17, 0
    %p101 = por %p99, %p100
    %p102 = scmp.ne.s32.totalorder %s90, %s91
    %p103 = scmp.eq.s32.totalorder %s18, 1
    %p104 = por %p102, %p103
    %p106 = scmp.ne.s32.totalorder %s91, %s105
    %p107 = scmp.eq.s32.totalorder %s18, 0
    %p108 = por %p106, %p107
    %s109 = ssub.s32 %s12, %s19
    %p110 = scmp.eq.s32.totalorder %s109, 0
    %s112 = sadd.s32 %s111, 1
    %s113 = scalar_select %p110, %s111, %s112
    %p116 = pneg %p110
    %p117 = scmp.eq.s32.totalorder %s12, 1
    %p118 = por %p116, %p117
    %p119 = scmp.ne.s32.totalorder %s111, %s114
    %p120 = scmp.eq.s32.totalorder %s12, 0
    %p121 = por %p119, %p120
    %p122 = scmp.ne.s32.totalorder %s111, %s114
    %p123 = scmp.eq.s32.totalorder %s17, 1
    %p124 = por %p122, %p123
    %p125 = scmp.ne.s32.totalorder %s114, %s115
    %p126 = scmp.eq.s32.totalorder %s17, 0
    %p127 = por %p125, %p126
    %p128 = scmp.ne.s32.totalorder %s114, %s115
    %p129 = scmp.eq.s32.totalorder %s18, 1
    %p130 = por %p128, %p129
    %p132 = scmp.ne.s32.totalorder %s115, %s131
    %p133 = scmp.eq.s32.totalorder %s18, 0
    %p134 = por %p132, %p133
    %s135 = ssub.s32 %s12, %s19
    %p136 = scmp.eq.s32.totalorder %s135, 0
    %s138 = sadd.s32 %s137, 1
    %s139 = scalar_select %p136, %s137, %s138
    %p142 = pneg %p136
    %p143 = scmp.eq.s32.totalorder %s12, 1
    %p144 = por %p142, %p143
    %p145 = scmp.ne.s32.totalorder %s137, %s140
    %p146 = scmp.eq.s32.totalorder %s12, 0
    %p147 = por %p145, %p146
    %p148 = scmp.ne.s32.totalorder %s137, %s140
    %p149 = scmp.eq.s32.totalorder %s17, 1
    %p150 = por %p148, %p149
    %p151 = scmp.ne.s32.totalorder %s140, %s141
    %p152 = scmp.eq.s32.totalorder %s17, 0
    %p153 = por %p151, %p152
    %p154 = scmp.ne.s32.totalorder %s140, %s141
    %p155 = scmp.eq.s32.totalorder %s18, 1
    %p156 = por %p154, %p155
    %p158 = scmp.ne.s32.totalorder %s141, %s157
    %p159 = scmp.eq.s32.totalorder %s18, 0
    %p160 = por %p158, %p159
    %p161 = scmp.le.s32.totalorder 1, %s12
    %p162 = scmp.lt.s32.totalorder %s12, 3
    %p163 = pnand %p161, %p162
    %p164 = pneg %p163
    // Predicated region
    $region9: #{bottleneck_forward.5} parent=5 // pred_check
      _
    $region10: #{bottleneck_forward.5} parent=5 // pred_check_branch
      %166 = sbr.rel (%p163) target = $region12
    $region11: #{bottleneck_forward.5} parent=5 // pred_region
      %s167 = ssub.s32 %s12, 1
      // Predicated region
      $region13: #{bottleneck_forward.5} parent=11 // pred_check
        %p168 = pneg %p59
      $region14: #{bottleneck_forward.5} parent=11 // pred_check_branch
        %170 = sbr.rel (%p168) target = $region16
      $region15: #{bottleneck_forward.5} parent=11 // pred_region
        _
      $region16: #{bottleneck_forward.5} parent=11 // pred_fallthru
        _
      // Predicated region
      $region17: #{bottleneck_forward.5} parent=11 // pred_check
        %p171 = pneg %p80
      $region18: #{bottleneck_forward.5} parent=11 // pred_check_branch
        %173 = sbr.rel (%p171) target = $region20
      $region19: #{bottleneck_forward.5} parent=11 // pred_region
        _
      $region20: #{bottleneck_forward.5} parent=11 // pred_fallthru
        _
      // Predicated region
      $region21: #{bottleneck_forward.5} parent=11 // pred_check
        %p174 = pneg %p101
      $region22: #{bottleneck_forward.5} parent=11 // pred_check_branch
        %176 = sbr.rel (%p174) target = $region24
      $region23: #{bottleneck_forward.5} parent=11 // pred_region
        _
      $region24: #{bottleneck_forward.5} parent=11 // pred_fallthru
        _
    $region12: #{bottleneck_forward.5} parent=5 // pred_fallthru
      _
    %p177 = scmp.lt.s32.totalorder %s12, 2
    // Predicated region
    $region25: #{bottleneck_forward.5} parent=5 // pred_check
      %p178 = pneg %p177
    $region26: #{bottleneck_forward.5} parent=5 // pred_check_branch
      %180 = sbr.rel (%p178) target = $region28
    $region27: #{bottleneck_forward.5} parent=5 // pred_region
      // Predicated region
      $region29: #{bottleneck_forward.5} parent=27 // pred_check
        %p181 = pneg %p32
      $region30: #{bottleneck_forward.5} parent=27 // pred_check_branch
        %183 = sbr.rel (%p181) target = $region32
      $region31: #{bottleneck_forward.5} parent=27 // pred_region
        %p184 = scmp.lt.s32.totalorder %s12, 1
        %s185 = scalar_select %p184, %s12, 1
        %s186 = smul.addr %s185, 32
        %s187 = smul.addr %s186, 4
        %s188 = scalar_lea.vmem %s0, %s187
      $region32: #{bottleneck_forward.5} parent=27 // pred_fallthru
        _
    $region28: #{bottleneck_forward.5} parent=5 // pred_fallthru
      _
    %p189 = scmp.le.s32.totalorder 1, %s12
    %p190 = scmp.lt.s32.totalorder %s12, 3
    %p191 = pnand %p189, %p190
    %p192 = pneg %p191
    // Predicated region
    $region33: #{bottleneck_forward.5} parent=5 // pred_check
      _
    $region34: #{bottleneck_forward.5} parent=5 // pred_check_branch
      %194 = sbr.rel (%p191) target = $region36
    $region35: #{bottleneck_forward.5} parent=5 // pred_region
      %s195 = ssub.s32 %s12, 1
      %p196 = scmp.lt.s32.totalorder %s17, 1
      %s197 = scalar_select %p196, %s17, 1
      %s198 = smul.addr %s197, 32
      %s199 = smul.addr %s198, 4
      %s200 = scalar_lea.vmem %s0, %s199
      %p201 = pneg %p38
      %p202 = pneg %p35
      %p203 = pneg %p59
      %p204 = pneg %p56
      %p205 = pneg %p80
      %p206 = pneg %p77
      %p207 = pneg %p101
      %p208 = pneg %p98
      %p209 = pneg %p127
      %p210 = pneg %p124
      %p211 = scmp.lt.s32.totalorder %s17, 1
      %s212 = scalar_select %p211, %s17, 1
      %s213 = smul.addr %s212, 32
      %s214 = smul.addr %s213, 4
      %s215 = scalar_lea.vmem %s4, %s214
      %p216 = pneg %p153
      %p217 = pneg %p150
      %p218 = scmp.lt.s32.totalorder %s17, 1
      %s219 = scalar_select %p218, %s17, 1
      %s220 = smul.addr %s219, 2
      %s221 = scalar_lea.vmem %s5, %s220
      %p222 = scmp.lt.s32.totalorder %s17, 1
      %s223 = scalar_select %p222, %s17, 1
      %s224 = smul.addr %s223, 32
      %s225 = smul.addr %s224, 4
      %s226 = scalar_lea.vmem %s0, %s225
      %p227 = scmp.lt.s32.totalorder %s17, 1
      %s228 = scalar_select %p227, %s17, 1
      %s229 = smul.addr %s228, 32
      %s230 = smul.addr %s229, 4
      %s231 = scalar_lea.vmem %s4, %s230
      %p232 = scmp.lt.s32.totalorder %s17, 1
      %s233 = scalar_select %p232, %s17, 1
      %s234 = smul.addr %s233, 2
      %s235 = scalar_lea.vmem %s5, %s234
      %v237 = vld [vmem:[%s226] sm:$0xf]
      %v238 = vld [vmem:[%s226 + $0x4] sm:$0xf]
      %v239 = vld [vmem:[%s226 + $0x8] sm:$0xf]
      %v240 = vld [vmem:[%s226 + $0xc] sm:$0xf]
      %v241 = vld [vmem:[%s226 + $0x10] sm:$0xf]
      %v242 = vld [vmem:[%s226 + $0x14] sm:$0xf]
      %v243 = vld [vmem:[%s226 + $0x18] sm:$0xf]
      %v244 = vld [vmem:[%s226 + $0x1c] sm:$0xf]
      %v245 = vld [vmem:[%s226 + $0x20] sm:$0xf]
      %v246 = vld [vmem:[%s226 + $0x24] sm:$0xf]
      %v247 = vld [vmem:[%s226 + $0x28] sm:$0xf]
      %v248 = vld [vmem:[%s226 + $0x2c] sm:$0xf]
      %v249 = vld [vmem:[%s226 + $0x30] sm:$0xf]
      %v250 = vld [vmem:[%s226 + $0x34] sm:$0xf]
      %v251 = vld [vmem:[%s226 + $0x38] sm:$0xf]
      %v252 = vld [vmem:[%s226 + $0x3c] sm:$0xf]
      %v253 = vld [vmem:[%s226 + $0x40] sm:$0xf]
      %v254 = vld [vmem:[%s226 + $0x44] sm:$0xf]
      %v255 = vld [vmem:[%s226 + $0x48] sm:$0xf]
      %v256 = vld [vmem:[%s226 + $0x4c] sm:$0xf]
      %v257 = vld [vmem:[%s226 + $0x50] sm:$0xf]
      %v258 = vld [vmem:[%s226 + $0x54] sm:$0xf]
      %v259 = vld [vmem:[%s226 + $0x58] sm:$0xf]
      %v260 = vld [vmem:[%s226 + $0x5c] sm:$0xf]
      %v261 = vld [vmem:[%s226 + $0x60] sm:$0xf]
      %v262 = vld [vmem:[%s226 + $0x64] sm:$0xf]
      %v263 = vld [vmem:[%s226 + $0x68] sm:$0xf]
      %v264 = vld [vmem:[%s226 + $0x6c] sm:$0xf]
      %v265 = vld [vmem:[%s226 + $0x70] sm:$0xf]
      %v266 = vld [vmem:[%s226 + $0x74] sm:$0xf]
      %v267 = vld [vmem:[%s226 + $0x78] sm:$0xf]
      %v268 = vld [vmem:[%s226 + $0x7c] sm:$0xf]
      %v269 = vunpack.c.l.bf16 %v237
      %v270 = vunpack.c.l.bf16 %v238
      %v271 = vunpack.c.l.bf16 %v239
      %v272 = vunpack.c.l.bf16 %v240
      %v273 = vunpack.c.l.bf16 %v241
      %v274 = vunpack.c.l.bf16 %v242
      %v275 = vunpack.c.l.bf16 %v243
      %v276 = vunpack.c.l.bf16 %v244
      %v277 = vunpack.c.l.bf16 %v245
      %v278 = vunpack.c.l.bf16 %v246
      %v279 = vunpack.c.l.bf16 %v247
      %v280 = vunpack.c.l.bf16 %v248
      %v281 = vunpack.c.l.bf16 %v249
      %v282 = vunpack.c.l.bf16 %v250
      %v283 = vunpack.c.l.bf16 %v251
      %v284 = vunpack.c.l.bf16 %v252
      %v285 = vunpack.c.l.bf16 %v253
      %v286 = vunpack.c.l.bf16 %v254
      %v287 = vunpack.c.l.bf16 %v255
      %v288 = vunpack.c.l.bf16 %v256
      %v289 = vunpack.c.l.bf16 %v257
      %v290 = vunpack.c.l.bf16 %v258
      %v291 = vunpack.c.l.bf16 %v259
      %v292 = vunpack.c.l.bf16 %v260
      %v293 = vunpack.c.l.bf16 %v261
      %v294 = vunpack.c.l.bf16 %v262
      %v295 = vunpack.c.l.bf16 %v263
      %v296 = vunpack.c.l.bf16 %v264
      %v297 = vunpack.c.l.bf16 %v265
      %v298 = vunpack.c.l.bf16 %v266
      %v299 = vunpack.c.l.bf16 %v267
      %v300 = vunpack.c.l.bf16 %v268
      %v301 = vld [vmem:[%s1] sm:$0x1]
      %v303 = vlaneseq
      %v304 = vshrl.u32 %v303, 7
      %v305 = vsub.s32 0, %v304
      %v306 = vrot.slane %v301, %v305
      %v308 = vmul.f32 %v269, %v306
      %v309 = vmul.f32 %v270, %v306
      %v310 = vmul.f32 %v271, %v306
      %v311 = vmul.f32 %v272, %v306
      %v312 = vmul.f32 %v273, %v306
      %v313 = vmul.f32 %v274, %v306
      %v314 = vmul.f32 %v275, %v306
      %v315 = vmul.f32 %v276, %v306
      %v316 = vmul.f32 %v277, %v306
      %v317 = vmul.f32 %v278, %v306
      %v318 = vmul.f32 %v279, %v306
      %v319 = vmul.f32 %v280, %v306
      %v320 = vmul.f32 %v281, %v306
      %v321 = vmul.f32 %v282, %v306
      %v322 = vmul.f32 %v283, %v306
      %v323 = vmul.f32 %v284, %v306
      %v324 = vmul.f32 %v285, %v306
      %v325 = vmul.f32 %v286, %v306
      %v326 = vmul.f32 %v287, %v306
      %v327 = vmul.f32 %v288, %v306
      %v328 = vmul.f32 %v289, %v306
      %v329 = vmul.f32 %v290, %v306
      %v330 = vmul.f32 %v291, %v306
      %v331 = vmul.f32 %v292, %v306
      %v332 = vmul.f32 %v293, %v306
      %v333 = vmul.f32 %v294, %v306
      %v334 = vmul.f32 %v295, %v306
      %v335 = vmul.f32 %v296, %v306
      %v336 = vmul.f32 %v297, %v306
      %v337 = vmul.f32 %v298, %v306
      %v338 = vmul.f32 %v299, %v306
      %v339 = vmul.f32 %v300, %v306
      %v340 = vld [vmem:[%s2] sm:$0x1]
      %v342 = vlaneseq
      %v343 = vshrl.u32 %v342, 7
      %v344 = vsub.s32 0, %v343
      %v345 = vrot.slane %v340, %v344
      %v347 = vadd.f32 %v308, %v345
      %v348 = vadd.f32 %v309, %v345
      %v349 = vadd.f32 %v310, %v345
      %v350 = vadd.f32 %v311, %v345
      %v351 = vadd.f32 %v312, %v345
      %v352 = vadd.f32 %v313, %v345
      %v353 = vadd.f32 %v314, %v345
      %v354 = vadd.f32 %v315, %v345
      %v355 = vadd.f32 %v316, %v345
      %v356 = vadd.f32 %v317, %v345
      %v357 = vadd.f32 %v318, %v345
      %v358 = vadd.f32 %v319, %v345
      %v359 = vadd.f32 %v320, %v345
      %v360 = vadd.f32 %v321, %v345
      %v361 = vadd.f32 %v322, %v345
      %v362 = vadd.f32 %v323, %v345
      %v363 = vadd.f32 %v324, %v345
      %v364 = vadd.f32 %v325, %v345
      %v365 = vadd.f32 %v326, %v345
      %v366 = vadd.f32 %v327, %v345
      %v367 = vadd.f32 %v328, %v345
      %v368 = vadd.f32 %v329, %v345
      %v369 = vadd.f32 %v330, %v345
      %v370 = vadd.f32 %v331, %v345
      %v371 = vadd.f32 %v332, %v345
      %v372 = vadd.f32 %v333, %v345
      %v373 = vadd.f32 %v334, %v345
      %v374 = vadd.f32 %v335, %v345
      %v375 = vadd.f32 %v336, %v345
      %v376 = vadd.f32 %v337, %v345
      %v377 = vadd.f32 %v338, %v345
      %v378 = vadd.f32 %v339, %v345
      %v379 = vmax.f32 %v347, 0.0
      %v380 = vmax.f32 %v348, 0.0
      %v381 = vmax.f32 %v349, 0.0
      %v382 = vmax.f32 %v350, 0.0
      %v383 = vmax.f32 %v351, 0.0
      %v384 = vmax.f32 %v352, 0.0
      %v385 = vmax.f32 %v353, 0.0
      %v386 = vmax.f32 %v354, 0.0
      %v387 = vmax.f32 %v355, 0.0
      %v388 = vmax.f32 %v356, 0.0
      %v389 = vmax.f32 %v357, 0.0
      %v390 = vmax.f32 %v358, 0.0
      %v391 = vmax.f32 %v359, 0.0
      %v392 = vmax.f32 %v360, 0.0
      %v393 = vmax.f32 %v361, 0.0
      %v394 = vmax.f32 %v362, 0.0
      %v395 = vmax.f32 %v363, 0.0
      %v396 = vmax.f32 %v364, 0.0
      %v397 = vmax.f32 %v365, 0.0
      %v398 = vmax.f32 %v366, 0.0
      %v399 = vmax.f32 %v367, 0.0
      %v400 = vmax.f32 %v368, 0.0
      %v401 = vmax.f32 %v369, 0.0
      %v402 = vmax.f32 %v370, 0.0
      %v403 = vmax.f32 %v371, 0.0
      %v404 = vmax.f32 %v372, 0.0
      %v405 = vmax.f32 %v373, 0.0
      %v406 = vmax.f32 %v374, 0.0
      %v407 = vmax.f32 %v375, 0.0
      %v408 = vmax.f32 %v376, 0.0
      %v409 = vmax.f32 %v377, 0.0
      %v410 = vmax.f32 %v378, 0.0
      %vm411 = vcmask 519168
      %412 = vst.msk [vmem:[#allocation2] sm:$0xf] %vm411, 0
      %413 = vst.msk [vmem:[#allocation2 + $0x4] sm:$0xf] %vm411, 0
      %vm414 = vcmask 516096
      %415 = vst.msk [vmem:[#allocation2 + $0x8] sm:$0x1] %vm414, 0
      %416 = vst.msk [vmem:[#allocation2 + $0xc] sm:$0xf] %vm411, 0
      %417 = vst.msk [vmem:[#allocation2 + $0x10] sm:$0xf] %vm411, 0
      %418 = vst.msk [vmem:[#allocation2 + $0x14] sm:$0x1] %vm414, 0
      %419 = vst.msk [vmem:[#allocation2 + $0x18] sm:$0xf] %vm411, 0
      %420 = vst.msk [vmem:[#allocation2 + $0x1c] sm:$0xf] %vm411, 0
      %421 = vst.msk [vmem:[#allocation2 + $0x20] sm:$0x1] %vm414, 0
      %422 = vst.msk [vmem:[#allocation2 + $0x24] sm:$0xf] %vm411, 0
      %423 = vst.msk [vmem:[#allocation2 + $0x28] sm:$0xf] %vm411, 0
      %424 = vst.msk [vmem:[#allocation2 + $0x2c] sm:$0x1] %vm414, 0
      %425 = vst.msk [vmem:[#allocation2 + $0x30] sm:$0xf] %vm411, 0
      %426 = vst.msk [vmem:[#allocation2 + $0x34] sm:$0xf] %vm411, 0
      %427 = vst.msk [vmem:[#allocation2 + $0x38] sm:$0x1] %vm414, 0
      %428 = vst.msk [vmem:[#allocation2 + $0x3c] sm:$0xf] %vm411, 0
      %429 = vst.msk [vmem:[#allocation2 + $0x40] sm:$0xf] %vm411, 0
      %430 = vst.msk [vmem:[#allocation2 + $0x44] sm:$0x1] %vm414, 0
      %431 = vst.msk [vmem:[#allocation2 + $0x48] sm:$0xf] %vm411, 0
      %432 = vst.msk [vmem:[#allocation2 + $0x4c] sm:$0xf] %vm411, 0
      %433 = vst.msk [vmem:[#allocation2 + $0x50] sm:$0x1] %vm414, 0
      %434 = vst.msk [vmem:[#allocation2 + $0x54] sm:$0xf] %vm411, 0
      %435 = vst.msk [vmem:[#allocation2 + $0x58] sm:$0xf] %vm411, 0
      %436 = vst.msk [vmem:[#allocation2 + $0x5c] sm:$0x1] %vm414, 0
      %437 = vst.msk [vmem:[#allocation2 + $0x60] sm:$0xf] %vm411, 0
      %438 = vst.msk [vmem:[#allocation2 + $0x64] sm:$0xf] %vm411, 0
      %439 = vst.msk [vmem:[#allocation2 + $0x68] sm:$0x1] %vm414, 0
      %440 = vst.msk [vmem:[#allocation2 + $0x6c] sm:$0xf] %vm411, 0
      %441 = vst.msk [vmem:[#allocation2 + $0x70] sm:$0xf] %vm411, 0
      %442 = vst.msk [vmem:[#allocation2 + $0x74] sm:$0x1] %vm414, 0
      %443 = vst.msk [vmem:[#allocation2 + $0x78] sm:$0xf] %vm411, 0
      %444 = vst.msk [vmem:[#allocation2 + $0x7c] sm:$0xf] %vm411, 0
      %445 = vst.msk [vmem:[#allocation2 + $0x80] sm:$0x1] %vm414, 0
      %446 = vst.msk [vmem:[#allocation2 + $0x84] sm:$0xf] %vm411, 0
      %447 = vst.msk [vmem:[#allocation2 + $0x88] sm:$0xf] %vm411, 0
      %448 = vst.msk [vmem:[#allocation2 + $0x8c] sm:$0x1] %vm414, 0
      %449 = vst.msk [vmem:[#allocation2 + $0x90] sm:$0xf] %vm411, 0
      %450 = vst.msk [vmem:[#allocation2 + $0x94] sm:$0xf] %vm411, 0
      %451 = vst.msk [vmem:[#allocation2 + $0x98] sm:$0x1] %vm414, 0
      %452 = vst.msk [vmem:[#allocation2 + $0x9c] sm:$0xf] %vm411, 0
      %453 = vst.msk [vmem:[#allocation2 + $0xa0] sm:$0xf] %vm411, 0
      %454 = vst.msk [vmem:[#allocation2 + $0xa4] sm:$0x1] %vm414, 0
      %455 = vst.msk [vmem:[#allocation2 + $0xa8] sm:$0xf] %vm411, 0
      %456 = vst.msk [vmem:[#allocation2 + $0xac] sm:$0xf] %vm411, 0
      %457 = vst.msk [vmem:[#allocation2 + $0xb0] sm:$0x1] %vm414, 0
      %458 = vst.msk [vmem:[#allocation2 + $0xb4] sm:$0xf] %vm411, 0
      %459 = vst.msk [vmem:[#allocation2 + $0xb8] sm:$0xf] %vm411, 0
      %460 = vst.msk [vmem:[#allocation2 + $0xbc] sm:$0x1] %vm414, 0
      %461 = vst.msk [vmem:[#allocation2 + $0xc0] sm:$0xf] %vm411, 0
      %462 = vst.msk [vmem:[#allocation2 + $0xc4] sm:$0xf] %vm411, 0
      %463 = vst.msk [vmem:[#allocation2 + $0xc8] sm:$0x1] %vm414, 0
      %464 = vst.msk [vmem:[#allocation2 + $0xcc] sm:$0xf] %vm411, 0
      %465 = vst.msk [vmem:[#allocation2 + $0xd0] sm:$0xf] %vm411, 0
      %466 = vst.msk [vmem:[#allocation2 + $0xd4] sm:$0x1] %vm414, 0
      %v467 = vpack.c.bf16 %v380, %v379
      %v468 = vpack.c.bf16 %v382, %v381
      %v469 = vpack.c.bf16 %v384, %v383
      %v470 = vpack.c.bf16 %v386, %v385
      %v471 = vpack.c.bf16 %v388, %v387
      %v472 = vpack.c.bf16 %v390, %v389
      %v473 = vpack.c.bf16 %v392, %v391
      %v474 = vpack.c.bf16 %v394, %v393
      %v475 = vpack.c.bf16 %v396, %v395
      %v476 = vpack.c.bf16 %v398, %v397
      %v477 = vpack.c.bf16 %v400, %v399
      %v478 = vpack.c.bf16 %v402, %v401
      %v479 = vpack.c.bf16 %v404, %v403
      %v480 = vpack.c.bf16 %v406, %v405
      %v481 = vpack.c.bf16 %v408, %v407
      %v482 = vpack.c.bf16 %v410, %v409
      %v499 = vunpack.c.l.b16 %v467
      %v500 = vunpack.c.h.b16 %v467
      %v501 = vunpack.c.l.b16 %v468
      %v502 = vunpack.c.h.b16 %v468
      %v503 = vunpack.c.l.b16 %v469
      %v504 = vunpack.c.h.b16 %v469
      %v505 = vunpack.c.l.b16 %v470
      %v506 = vunpack.c.h.b16 %v470
      %v507 = vunpack.c.l.b16 %v471
      %v508 = vunpack.c.h.b16 %v471
      %v509 = vunpack.c.l.b16 %v472
      %v510 = vunpack.c.h.b16 %v472
      %v511 = vunpack.c.l.b16 %v473
      %v512 = vunpack.c.h.b16 %v473
      %v513 = vunpack.c.l.b16 %v474
      %v514 = vunpack.c.h.b16 %v474
      %v515 = vunpack.c.l.b16 %v475
      %v516 = vunpack.c.h.b16 %v475
      %v517 = vunpack.c.l.b16 %v476
      %v518 = vunpack.c.h.b16 %v476
      %v519 = vunpack.c.l.b16 %v477
      %v520 = vunpack.c.h.b16 %v477
      %v521 = vunpack.c.l.b16 %v478
      %v522 = vunpack.c.h.b16 %v478
      %v523 = vunpack.c.l.b16 %v479
      %v524 = vunpack.c.h.b16 %v479
      %v525 = vunpack.c.l.b16 %v480
      %v526 = vunpack.c.h.b16 %v480
      %v527 = vunpack.c.l.b16 %v481
      %v528 = vunpack.c.h.b16 %v481
      %v529 = vunpack.c.l.b16 %v482
      %v530 = vunpack.c.h.b16 %v482
      %v531 = vpack.c.b16 %v499, %v499
      %v532 = vpack.c.b16 %v500, %v500
      %v533 = vpack.c.b16 %v501, %v501
      %v534 = vpack.c.b16 %v502, %v502
      %v535 = vpack.c.b16 %v503, %v503
      %v536 = vpack.c.b16 %v504, %v504
      %v537 = vpack.c.b16 %v505, %v505
      %v538 = vpack.c.b16 %v506, %v506
      %v539 = vpack.c.b16 %v507, %v507
      %v540 = vpack.c.b16 %v508, %v508
      %v541 = vpack.c.b16 %v509, %v509
      %v542 = vpack.c.b16 %v510, %v510
      %v543 = vpack.c.b16 %v511, %v511
      %v544 = vpack.c.b16 %v512, %v512
      %v545 = vpack.c.b16 %v513, %v513
      %v546 = vpack.c.b16 %v514, %v514
      %v547 = vpack.c.b16 %v515, %v515
      %v548 = vpack.c.b16 %v516, %v516
      %v549 = vpack.c.b16 %v517, %v517
      %v550 = vpack.c.b16 %v518, %v518
      %v551 = vpack.c.b16 %v519, %v519
      %v552 = vpack.c.b16 %v520, %v520
      %v553 = vpack.c.b16 %v521, %v521
      %v554 = vpack.c.b16 %v522, %v522
      %v555 = vpack.c.b16 %v523, %v523
      %v556 = vpack.c.b16 %v524, %v524
      %v557 = vpack.c.b16 %v525, %v525
      %v558 = vpack.c.b16 %v526, %v526
      %v559 = vpack.c.b16 %v527, %v527
      %v560 = vpack.c.b16 %v528, %v528
      %v561 = vpack.c.b16 %v529, %v529
      %v562 = vpack.c.b16 %v530, %v530
      %vm563 = vsmask.f32 256
      %vm564 = vsmask.f32 4368
      %vm565 = vmor %vm563, %vm564
      %v567 = vshrl.u32 %v531, 16
      %v569 = vrot.slane %v567, 7
      %v570 = vshll.u32 %v531, 16
      %v572 = vor.u32 %v569, %v570
      %v573 = vrot.slane %v569, 4
      %v575 = vshrl.u32 %v532, 16
      %v577 = vrot.slane %v575, 7
      %v578 = vshll.u32 %v532, 16
      %v580 = vor.u32 %v577, %v578
      %v581 = vsel %vm565, %v573, %v580
      %v582 = vrot.slane %v577, 4
      %v584 = vshrl.u32 %v533, 16
      %v586 = vrot.slane %v584, 7
      %v587 = vshll.u32 %v533, 16
      %v589 = vor.u32 %v586, %v587
      %v590 = vrot.slane %v586, 4
      %v592 = vshrl.u32 %v534, 16
      %v594 = vrot.slane %v592, 7
      %v595 = vshll.u32 %v534, 16
      %v597 = vor.u32 %v594, %v595
      %v598 = vsel %vm565, %v590, %v597
      %v599 = vrot.slane %v594, 4
      %v601 = vshrl.u32 %v535, 16
      %v603 = vrot.slane %v601, 7
      %v604 = vshll.u32 %v535, 16
      %v606 = vor.u32 %v603, %v604
      %v607 = vrot.slane %v603, 4
      %v609 = vshrl.u32 %v536, 16
      %v611 = vrot.slane %v609, 7
      %v612 = vshll.u32 %v536, 16
      %v614 = vor.u32 %v611, %v612
      %v615 = vsel %vm565, %v607, %v614
      %v616 = vrot.slane %v611, 4
      %v618 = vshrl.u32 %v537, 16
      %v620 = vrot.slane %v618, 7
      %v621 = vshll.u32 %v537, 16
      %v623 = vor.u32 %v620, %v621
      %v624 = vrot.slane %v620, 4
      %v626 = vshrl.u32 %v538, 16
      %v628 = vrot.slane %v626, 7
      %v629 = vshll.u32 %v538, 16
      %v631 = vor.u32 %v628, %v629
      %v632 = vsel %vm565, %v624, %v631
      %v633 = vrot.slane %v628, 4
      %v635 = vshrl.u32 %v539, 16
      %v637 = vrot.slane %v635, 7
      %v638 = vshll.u32 %v539, 16
      %v640 = vor.u32 %v637, %v638
      %v641 = vrot.slane %v637, 4
      %v643 = vshrl.u32 %v540, 16
      %v645 = vrot.slane %v643, 7
      %v646 = vshll.u32 %v540, 16
      %v648 = vor.u32 %v645, %v646
      %v649 = vsel %vm565, %v641, %v648
      %v650 = vrot.slane %v645, 4
      %v652 = vshrl.u32 %v541, 16
      %v654 = vrot.slane %v652, 7
      %v655 = vshll.u32 %v541, 16
      %v657 = vor.u32 %v654, %v655
      %v658 = vrot.slane %v654, 4
      %v660 = vshrl.u32 %v542, 16
      %v662 = vrot.slane %v660, 7
      %v663 = vshll.u32 %v542, 16
      %v665 = vor.u32 %v662, %v663
      %v666 = vsel %vm565, %v658, %v665
      %v667 = vrot.slane %v662, 4
      %v669 = vshrl.u32 %v543, 16
      %v671 = vrot.slane %v669, 7
      %v672 = vshll.u32 %v543, 16
      %v674 = vor.u32 %v671, %v672
      %v675 = vrot.slane %v671, 4
      %v677 = vshrl.u32 %v544, 16
      %v679 = vrot.slane %v677, 7
      %v680 = vshll.u32 %v544, 16
      %v682 = vor.u32 %v679, %v680
      %v683 = vsel %vm565, %v675, %v682
      %v684 = vrot.slane %v679, 4
      %v686 = vshrl.u32 %v545, 16
      %v688 = vrot.slane %v686, 7
      %v689 = vshll.u32 %v545, 16
      %v691 = vor.u32 %v688, %v689
      %v692 = vrot.slane %v688, 4
      %v694 = vshrl.u32 %v546, 16
      %v696 = vrot.slane %v694, 7
      %v697 = vshll.u32 %v546, 16
      %v699 = vor.u32 %v696, %v697
      %v700 = vsel %vm565, %v692, %v699
      %v701 = vrot.slane %v696, 4
      %v703 = vshrl.u32 %v547, 16
      %v705 = vrot.slane %v703, 7
      %v706 = vshll.u32 %v547, 16
      %v708 = vor.u32 %v705, %v706
      %v709 = vrot.slane %v705, 4
      %v711 = vshrl.u32 %v548, 16
      %v713 = vrot.slane %v711, 7
      %v714 = vshll.u32 %v548, 16
      %v716 = vor.u32 %v713, %v714
      %v717 = vsel %vm565, %v709, %v716
      %v718 = vrot.slane %v713, 4
      %v720 = vshrl.u32 %v549, 16
      %v722 = vrot.slane %v720, 7
      %v723 = vshll.u32 %v549, 16
      %v725 = vor.u32 %v722, %v723
      %v726 = vrot.slane %v722, 4
      %v728 = vshrl.u32 %v550, 16
      %v730 = vrot.slane %v728, 7
      %v731 = vshll.u32 %v550, 16
      %v733 = vor.u32 %v730, %v731
      %v734 = vsel %vm565, %v726, %v733
      %v735 = vrot.slane %v730, 4
      %v737 = vshrl.u32 %v551, 16
      %v739 = vrot.slane %v737, 7
      %v740 = vshll.u32 %v551, 16
      %v742 = vor.u32 %v739, %v740
      %v743 = vrot.slane %v739, 4
      %v745 = vshrl.u32 %v552, 16
      %v747 = vrot.slane %v745, 7
      %v748 = vshll.u32 %v552, 16
      %v750 = vor.u32 %v747, %v748
      %v751 = vsel %vm565, %v743, %v750
      %v752 = vrot.slane %v747, 4
      %v754 = vshrl.u32 %v553, 16
      %v756 = vrot.slane %v754, 7
      %v757 = vshll.u32 %v553, 16
      %v759 = vor.u32 %v756, %v757
      %v760 = vrot.slane %v756, 4
      %v762 = vshrl.u32 %v554, 16
      %v764 = vrot.slane %v762, 7
      %v765 = vshll.u32 %v554, 16
      %v767 = vor.u32 %v764, %v765
      %v768 = vsel %vm565, %v760, %v767
      %v769 = vrot.slane %v764, 4
      %v771 = vshrl.u32 %v555, 16
      %v773 = vrot.slane %v771, 7
      %v774 = vshll.u32 %v555, 16
      %v776 = vor.u32 %v773, %v774
      %v777 = vrot.slane %v773, 4
      %v779 = vshrl.u32 %v556, 16
      %v781 = vrot.slane %v779, 7
      %v782 = vshll.u32 %v556, 16
      %v784 = vor.u32 %v781, %v782
      %v785 = vsel %vm565, %v777, %v784
      %v786 = vrot.slane %v781, 4
      %v788 = vshrl.u32 %v557, 16
      %v790 = vrot.slane %v788, 7
      %v791 = vshll.u32 %v557, 16
      %v793 = vor.u32 %v790, %v791
      %v794 = vrot.slane %v790, 4
      %v796 = vshrl.u32 %v558, 16
      %v798 = vrot.slane %v796, 7
      %v799 = vshll.u32 %v558, 16
      %v801 = vor.u32 %v798, %v799
      %v802 = vsel %vm565, %v794, %v801
      %v803 = vrot.slane %v798, 4
      %v805 = vshrl.u32 %v559, 16
      %v807 = vrot.slane %v805, 7
      %v808 = vshll.u32 %v559, 16
      %v810 = vor.u32 %v807, %v808
      %v811 = vrot.slane %v807, 4
      %v813 = vshrl.u32 %v560, 16
      %v815 = vrot.slane %v813, 7
      %v816 = vshll.u32 %v560, 16
      %v818 = vor.u32 %v815, %v816
      %v819 = vsel %vm565, %v811, %v818
      %v820 = vrot.slane %v815, 4
      %v822 = vshrl.u32 %v561, 16
      %v824 = vrot.slane %v822, 7
      %v825 = vshll.u32 %v561, 16
      %v827 = vor.u32 %v824, %v825
      %v828 = vrot.slane %v824, 4
      %v830 = vshrl.u32 %v562, 16
      %v832 = vrot.slane %v830, 7
      %v833 = vshll.u32 %v562, 16
      %v835 = vor.u32 %v832, %v833
      %v836 = vsel %vm565, %v828, %v835
      %v837 = vrot.slane %v832, 4
      %s886 = scalar_lea.vmem [#allocation2], 12
      %vm887 = vcmask 519168
      %vm888 = vsmask.f32 7938
      %vm889 = vmand %vm887, %vm888
      %v890 = vld [vmem:[%s886] sm:$0xf]
      %v891 = vsel %vm889, %v572, %v890
      %892 = vst [vmem:[%s886] sm:$0xf] %v891
      %893 = vst.msk [vmem:[%s886 + $0x4] sm:$0xf] %vm411, %v581
      %vm894 = vcmask 516096
      %vm895 = vmand %vm894, %vm563
      %v896 = vld [vmem:[%s886 + $0x8] sm:$0x1]
      %v897 = vsel %vm895, %v582, %v896
      %898 = vst [vmem:[%s886 + $0x8] sm:$0x1] %v897
      %v899 = vld [vmem:[%s886 + $0xc] sm:$0xf]
      %v900 = vsel %vm889, %v589, %v899
      %901 = vst [vmem:[%s886 + $0xc] sm:$0xf] %v900
      %902 = vst.msk [vmem:[%s886 + $0x10] sm:$0xf] %vm411, %v598
      %v903 = vld [vmem:[%s886 + $0x14] sm:$0x1]
      %v904 = vsel %vm895, %v599, %v903
      %905 = vst [vmem:[%s886 + $0x14] sm:$0x1] %v904
      %v906 = vld [vmem:[%s886 + $0x18] sm:$0xf]
      %v907 = vsel %vm889, %v606, %v906
      %908 = vst [vmem:[%s886 + $0x18] sm:$0xf] %v907
      %909 = vst.msk [vmem:[%s886 + $0x1c] sm:$0xf] %vm411, %v615
      %v910 = vld [vmem:[%s886 + $0x20] sm:$0x1]
      %v911 = vsel %vm895, %v616, %v910
      %912 = vst [vmem:[%s886 + $0x20] sm:$0x1] %v911
      %v913 = vld [vmem:[%s886 + $0x24] sm:$0xf]
      %v914 = vsel %vm889, %v623, %v913
      %915 = vst [vmem:[%s886 + $0x24] sm:$0xf] %v914
      %916 = vst.msk [vmem:[%s886 + $0x28] sm:$0xf] %vm411, %v632
      %v917 = vld [vmem:[%s886 + $0x2c] sm:$0x1]
      %v918 = vsel %vm895, %v633, %v917
      %919 = vst [vmem:[%s886 + $0x2c] sm:$0x1] %v918
      %v920 = vld [vmem:[%s886 + $0x30] sm:$0xf]
      %v921 = vsel %vm889, %v640, %v920
      %922 = vst [vmem:[%s886 + $0x30] sm:$0xf] %v921
      %923 = vst.msk [vmem:[%s886 + $0x34] sm:$0xf] %vm411, %v649
      %v924 = vld [vmem:[%s886 + $0x38] sm:$0x1]
      %v925 = vsel %vm895, %v650, %v924
      %926 = vst [vmem:[%s886 + $0x38] sm:$0x1] %v925
      %v927 = vld [vmem:[%s886 + $0x3c] sm:$0xf]
      %v928 = vsel %vm889, %v657, %v927
      %929 = vst [vmem:[%s886 + $0x3c] sm:$0xf] %v928
      %930 = vst.msk [vmem:[%s886 + $0x40] sm:$0xf] %vm411, %v666
      %v931 = vld [vmem:[%s886 + $0x44] sm:$0x1]
      %v932 = vsel %vm895, %v667, %v931
      %933 = vst [vmem:[%s886 + $0x44] sm:$0x1] %v932
      %v934 = vld [vmem:[%s886 + $0x48] sm:$0xf]
      %v935 = vsel %vm889, %v674, %v934
      %936 = vst [vmem:[%s886 + $0x48] sm:$0xf] %v935
      %937 = vst.msk [vmem:[%s886 + $0x4c] sm:$0xf] %vm411, %v683
      %v938 = vld [vmem:[%s886 + $0x50] sm:$0x1]
      %v939 = vsel %vm895, %v684, %v938
      %940 = vst [vmem:[%s886 + $0x50] sm:$0x1] %v939
      %v941 = vld [vmem:[%s886 + $0x54] sm:$0xf]
      %v942 = vsel %vm889, %v691, %v941
      %943 = vst [vmem:[%s886 + $0x54] sm:$0xf] %v942
      %944 = vst.msk [vmem:[%s886 + $0x58] sm:$0xf] %vm411, %v700
      %v945 = vld [vmem:[%s886 + $0x5c] sm:$0x1]
      %v946 = vsel %vm895, %v701, %v945
      %947 = vst [vmem:[%s886 + $0x5c] sm:$0x1] %v946
      %v948 = vld [vmem:[%s886 + $0x60] sm:$0xf]
      %v949 = vsel %vm889, %v708, %v948
      %950 = vst [vmem:[%s886 + $0x60] sm:$0xf] %v949
      %951 = vst.msk [vmem:[%s886 + $0x64] sm:$0xf] %vm411, %v717
      %v952 = vld [vmem:[%s886 + $0x68] sm:$0x1]
      %v953 = vsel %vm895, %v718, %v952
      %954 = vst [vmem:[%s886 + $0x68] sm:$0x1] %v953
      %v955 = vld [vmem:[%s886 + $0x6c] sm:$0xf]
      %v956 = vsel %vm889, %v725, %v955
      %957 = vst [vmem:[%s886 + $0x6c] sm:$0xf] %v956
      %958 = vst.msk [vmem:[%s886 + $0x70] sm:$0xf] %vm411, %v734
      %v959 = vld [vmem:[%s886 + $0x74] sm:$0x1]
      %v960 = vsel %vm895, %v735, %v959
      %961 = vst [vmem:[%s886 + $0x74] sm:$0x1] %v960
      %v962 = vld [vmem:[%s886 + $0x78] sm:$0xf]
      %v963 = vsel %vm889, %v742, %v962
      %964 = vst [vmem:[%s886 + $0x78] sm:$0xf] %v963
      %965 = vst.msk [vmem:[%s886 + $0x7c] sm:$0xf] %vm411, %v751
      %v966 = vld [vmem:[%s886 + $0x80] sm:$0x1]
      %v967 = vsel %vm895, %v752, %v966
      %968 = vst [vmem:[%s886 + $0x80] sm:$0x1] %v967
      %v969 = vld [vmem:[%s886 + $0x84] sm:$0xf]
      %v970 = vsel %vm889, %v759, %v969
      %971 = vst [vmem:[%s886 + $0x84] sm:$0xf] %v970
      %972 = vst.msk [vmem:[%s886 + $0x88] sm:$0xf] %vm411, %v768
      %v973 = vld [vmem:[%s886 + $0x8c] sm:$0x1]
      %v974 = vsel %vm895, %v769, %v973
      %975 = vst [vmem:[%s886 + $0x8c] sm:$0x1] %v974
      %v976 = vld [vmem:[%s886 + $0x90] sm:$0xf]
      %v977 = vsel %vm889, %v776, %v976
      %978 = vst [vmem:[%s886 + $0x90] sm:$0xf] %v977
      %979 = vst.msk [vmem:[%s886 + $0x94] sm:$0xf] %vm411, %v785
      %v980 = vld [vmem:[%s886 + $0x98] sm:$0x1]
      %v981 = vsel %vm895, %v786, %v980
      %982 = vst [vmem:[%s886 + $0x98] sm:$0x1] %v981
      %v983 = vld [vmem:[%s886 + $0x9c] sm:$0xf]
      %v984 = vsel %vm889, %v793, %v983
      %985 = vst [vmem:[%s886 + $0x9c] sm:$0xf] %v984
      %986 = vst.msk [vmem:[%s886 + $0xa0] sm:$0xf] %vm411, %v802
      %v987 = vld [vmem:[%s886 + $0xa4] sm:$0x1]
      %v988 = vsel %vm895, %v803, %v987
      %989 = vst [vmem:[%s886 + $0xa4] sm:$0x1] %v988
      %v990 = vld [vmem:[%s886 + $0xa8] sm:$0xf]
      %v991 = vsel %vm889, %v810, %v990
      %992 = vst [vmem:[%s886 + $0xa8] sm:$0xf] %v991
      %993 = vst.msk [vmem:[%s886 + $0xac] sm:$0xf] %vm411, %v819
      %v994 = vld [vmem:[%s886 + $0xb0] sm:$0x1]
      %v995 = vsel %vm895, %v820, %v994
      %996 = vst [vmem:[%s886 + $0xb0] sm:$0x1] %v995
      %v997 = vld [vmem:[%s886 + $0xb4] sm:$0xf]
      %v998 = vsel %vm889, %v827, %v997
      %999 = vst [vmem:[%s886 + $0xb4] sm:$0xf] %v998
      %1000 = vst.msk [vmem:[%s886 + $0xb8] sm:$0xf] %vm411, %v836
      %v1001 = vld [vmem:[%s886 + $0xbc] sm:$0x1]
      %v1002 = vsel %vm895, %v837, %v1001
      %1003 = vst [vmem:[%s886 + $0xbc] sm:$0x1] %v1002
      %v1004 = vld [vmem:[#allocation2] sm:$0xf]
      %v1005 = vld [vmem:[#allocation2 + $0x4] sm:$0xf]
      %v1006 = vld [vmem:[#allocation2 + $0xc] sm:$0xf]
      %v1007 = vld [vmem:[#allocation2 + $0x10] sm:$0xf]
      %v1008 = vld [vmem:[#allocation2 + $0x18] sm:$0xf]
      %v1009 = vld [vmem:[#allocation2 + $0x1c] sm:$0xf]
      %v1010 = vld [vmem:[#allocation2 + $0x24] sm:$0xf]
      %v1011 = vld [vmem:[#allocation2 + $0x28] sm:$0xf]
      %v1012 = vld [vmem:[#allocation2 + $0x30] sm:$0xf]
      %v1013 = vld [vmem:[#allocation2 + $0x34] sm:$0xf]
      %v1014 = vld [vmem:[#allocation2 + $0x3c] sm:$0xf]
      %v1015 = vld [vmem:[#allocation2 + $0x40] sm:$0xf]
      %v1016 = vld [vmem:[#allocation2 + $0x48] sm:$0xf]
      %v1017 = vld [vmem:[#allocation2 + $0x4c] sm:$0xf]
      %v1018 = vld [vmem:[#allocation2 + $0x54] sm:$0xf]
      %v1019 = vld [vmem:[#allocation2 + $0x58] sm:$0xf]
      %v1020 = vld [vmem:[#allocation2 + $0x60] sm:$0xf]
      %v1021 = vld [vmem:[#allocation2 + $0x64] sm:$0xf]
      %v1022 = vld [vmem:[#allocation2 + $0x6c] sm:$0xf]
      %v1023 = vld [vmem:[#allocation2 + $0x70] sm:$0xf]
      %v1024 = vld [vmem:[#allocation2 + $0x78] sm:$0xf]
      %v1025 = vld [vmem:[#allocation2 + $0x7c] sm:$0xf]
      %v1026 = vld [vmem:[#allocation2 + $0x84] sm:$0xf]
      %v1027 = vld [vmem:[#allocation2 + $0x88] sm:$0xf]
      %v1028 = vld [vmem:[#allocation2 + $0x90] sm:$0xf]
      %v1029 = vld [vmem:[#allocation2 + $0x94] sm:$0xf]
      %v1030 = vld [vmem:[#allocation2 + $0x9c] sm:$0xf]
      %v1031 = vld [vmem:[#allocation2 + $0xa0] sm:$0xf]
      %v1032 = vld [vmem:[#allocation2 + $0xa8] sm:$0xf]
      %v1033 = vld [vmem:[#allocation2 + $0xac] sm:$0xf]
      %v1034 = vld [vmem:[#allocation2 + $0xb4] sm:$0xf]
      %v1035 = vld [vmem:[#allocation2 + $0xb8] sm:$0xf]
      %v1036 = vld [vmem:[%s3] sm:$0xf]
      %v1037 = vld [vmem:[%s3 + $0x4] sm:$0xf]
      %v1038 = vld [vmem:[%s3 + $0x8] sm:$0xf]
      %v1039 = vld [vmem:[%s3 + $0xc] sm:$0xf]
      %v1040 = vld [vmem:[%s3 + $0x10] sm:$0xf]
      %v1041 = vld [vmem:[%s3 + $0x14] sm:$0xf]
      %v1042 = vld [vmem:[%s3 + $0x18] sm:$0xf]
      %v1043 = vld [vmem:[%s3 + $0x1c] sm:$0xf]
      %v1044 = vld [vmem:[#allocation2 + $0x8] sm:$0x1]
      %v1045 = vld [vmem:[#allocation2 + $0x14] sm:$0x1]
      %v1046 = vld [vmem:[#allocation2 + $0x20] sm:$0x1]
      %v1047 = vld [vmem:[#allocation2 + $0x2c] sm:$0x1]
      %v1048 = vld [vmem:[#allocation2 + $0x38] sm:$0x1]
      %v1049 = vld [vmem:[#allocation2 + $0x44] sm:$0x1]
      %v1050 = vld [vmem:[#allocation2 + $0x50] sm:$0x1]
      %v1051 = vld [vmem:[#allocation2 + $0x5c] sm:$0x1]
      %v1052 = vld [vmem:[#allocation2 + $0x68] sm:$0x1]
      %v1053 = vld [vmem:[#allocation2 + $0x74] sm:$0x1]
      %v1054 = vld [vmem:[#allocation2 + $0x80] sm:$0x1]
      %v1055 = vld [vmem:[#allocation2 + $0x8c] sm:$0x1]
      %v1056 = vld [vmem:[#allocation2 + $0x98] sm:$0x1]
      %v1057 = vld [vmem:[#allocation2 + $0xa4] sm:$0x1]
      %v1058 = vld [vmem:[#allocation2 + $0xb0] sm:$0x1]
      %v1059 = vld [vmem:[#allocation2 + $0xbc] sm:$0x1]
      %vm1060 = vsmask.f32 3328
      %vm1061 = vsmask.f32 7440
      %vm1062 = vmor %vm1060, %vm1061
      %v1064 = vshrl.u32 %v1004, 16
      %v1066 = vrot.slane %v1064, 4
      %v1067 = vshll.u32 %v1004, 16
      %v1069 = vrot.slane %v1067, 5
      %v1070 = vor.u32 %v1066, %v1069
      %v1071 = vrot.slane %v1070, 4
      %v1073 = vshll.u32 %v1005, 16
      %v1075 = vrot.slane %v1073, 5
      %v1076 = vsel %vm1062, %v1071, %v1075
      %v1077 = vshrl.u32 %v1005, 16
      %v1079 = vrot.slane %v1077, 4
      %v1080 = vor.u32 %v1079, %v1075
      %v1081 = vrot.slane %v1080, 4
      %v1083 = vshll.u32 %v1044, 16
      %v1085 = vrot.slane %v1083, 5
      %v1086 = vsel %vm1062, %v1081, %v1085
      %v1088 = vshrl.u32 %v1006, 16
      %v1090 = vrot.slane %v1088, 4
      %v1091 = vshll.u32 %v1006, 16
      %v1093 = vrot.slane %v1091, 5
      %v1094 = vor.u32 %v1090, %v1093
      %v1095 = vrot.slane %v1094, 4
      %v1097 = vshll.u32 %v1007, 16
      %v1099 = vrot.slane %v1097, 5
      %v1100 = vsel %vm1062, %v1095, %v1099
      %v1101 = vshrl.u32 %v1007, 16
      %v1103 = vrot.slane %v1101, 4
      %v1104 = vor.u32 %v1103, %v1099
      %v1105 = vrot.slane %v1104, 4
      %v1107 = vshll.u32 %v1045, 16
      %v1109 = vrot.slane %v1107, 5
      %v1110 = vsel %vm1062, %v1105, %v1109
      %v1112 = vshrl.u32 %v1008, 16
      %v1114 = vrot.slane %v1112, 4
      %v1115 = vshll.u32 %v1008, 16
      %v1117 = vrot.slane %v1115, 5
      %v1118 = vor.u32 %v1114, %v1117
      %v1119 = vrot.slane %v1118, 4
      %v1121 = vshll.u32 %v1009, 16
      %v1123 = vrot.slane %v1121, 5
      %v1124 = vsel %vm1062, %v1119, %v1123
      %v1125 = vshrl.u32 %v1009, 16
      %v1127 = vrot.slane %v1125, 4
      %v1128 = vor.u32 %v1127, %v1123
      %v1129 = vrot.slane %v1128, 4
      %v1131 = vshll.u32 %v1046, 16
      %v1133 = vrot.slane %v1131, 5
      %v1134 = vsel %vm1062, %v1129, %v1133
      %v1136 = vshrl.u32 %v1010, 16
      %v1138 = vrot.slane %v1136, 4
      %v1139 = vshll.u32 %v1010, 16
      %v1141 = vrot.slane %v1139, 5
      %v1142 = vor.u32 %v1138, %v1141
      %v1143 = vrot.slane %v1142, 4
      %v1145 = vshll.u32 %v1011, 16
      %v1147 = vrot.slane %v1145, 5
      %v1148 = vsel %vm1062, %v1143, %v1147
      %v1149 = vshrl.u32 %v1011, 16
      %v1151 = vrot.slane %v1149, 4
      %v1152 = vor.u32 %v1151, %v1147
      %v1153 = vrot.slane %v1152, 4
      %v1155 = vshll.u32 %v1047, 16
      %v1157 = vrot.slane %v1155, 5
      %v1158 = vsel %vm1062, %v1153, %v1157
      %v1160 = vshrl.u32 %v1012, 16
      %v1162 = vrot.slane %v1160, 4
      %v1163 = vshll.u32 %v1012, 16
      %v1165 = vrot.slane %v1163, 5
      %v1166 = vor.u32 %v1162, %v1165
      %v1167 = vrot.slane %v1166, 4
      %v1169 = vshll.u32 %v1013, 16
      %v1171 = vrot.slane %v1169, 5
      %v1172 = vsel %vm1062, %v1167, %v1171
      %v1173 = vshrl.u32 %v1013, 16
      %v1175 = vrot.slane %v1173, 4
      %v1176 = vor.u32 %v1175, %v1171
      %v1177 = vrot.slane %v1176, 4
      %v1179 = vshll.u32 %v1048, 16
      %v1181 = vrot.slane %v1179, 5
      %v1182 = vsel %vm1062, %v1177, %v1181
      %v1184 = vshrl.u32 %v1014, 16
      %v1186 = vrot.slane %v1184, 4
      %v1187 = vshll.u32 %v1014, 16
      %v1189 = vrot.slane %v1187, 5
      %v1190 = vor.u32 %v1186, %v1189
      %v1191 = vrot.slane %v1190, 4
      %v1193 = vshll.u32 %v1015, 16
      %v1195 = vrot.slane %v1193, 5
      %v1196 = vsel %vm1062, %v1191, %v1195
      %v1197 = vshrl.u32 %v1015, 16
      %v1199 = vrot.slane %v1197, 4
      %v1200 = vor.u32 %v1199, %v1195
      %v1201 = vrot.slane %v1200, 4
      %v1203 = vshll.u32 %v1049, 16
      %v1205 = vrot.slane %v1203, 5
      %v1206 = vsel %vm1062, %v1201, %v1205
      %v1208 = vshrl.u32 %v1016, 16
      %v1210 = vrot.slane %v1208, 4
      %v1211 = vshll.u32 %v1016, 16
      %v1213 = vrot.slane %v1211, 5
      %v1214 = vor.u32 %v1210, %v1213
      %v1215 = vrot.slane %v1214, 4
      %v1217 = vshll.u32 %v1017, 16
      %v1219 = vrot.slane %v1217, 5
      %v1220 = vsel %vm1062, %v1215, %v1219
      %v1221 = vshrl.u32 %v1017, 16
      %v1223 = vrot.slane %v1221, 4
      %v1224 = vor.u32 %v1223, %v1219
      %v1225 = vrot.slane %v1224, 4
      %v1227 = vshll.u32 %v1050, 16
      %v1229 = vrot.slane %v1227, 5
      %v1230 = vsel %vm1062, %v1225, %v1229
      %v1232 = vshrl.u32 %v1018, 16
      %v1234 = vrot.slane %v1232, 4
      %v1235 = vshll.u32 %v1018, 16
      %v1237 = vrot.slane %v1235, 5
      %v1238 = vor.u32 %v1234, %v1237
      %v1239 = vrot.slane %v1238, 4
      %v1241 = vshll.u32 %v1019, 16
      %v1243 = vrot.slane %v1241, 5
      %v1244 = vsel %vm1062, %v1239, %v1243
      %v1245 = vshrl.u32 %v1019, 16
      %v1247 = vrot.slane %v1245, 4
      %v1248 = vor.u32 %v1247, %v1243
      %v1249 = vrot.slane %v1248, 4
      %v1251 = vshll.u32 %v1051, 16
      %v1253 = vrot.slane %v1251, 5
      %v1254 = vsel %vm1062, %v1249, %v1253
      %v1256 = vshrl.u32 %v1020, 16
      %v1258 = vrot.slane %v1256, 4
      %v1259 = vshll.u32 %v1020, 16
      %v1261 = vrot.slane %v1259, 5
      %v1262 = vor.u32 %v1258, %v1261
      %v1263 = vrot.slane %v1262, 4
      %v1265 = vshll.u32 %v1021, 16
      %v1267 = vrot.slane %v1265, 5
      %v1268 = vsel %vm1062, %v1263, %v1267
      %v1269 = vshrl.u32 %v1021, 16
      %v1271 = vrot.slane %v1269, 4
      %v1272 = vor.u32 %v1271, %v1267
      %v1273 = vrot.slane %v1272, 4
      %v1275 = vshll.u32 %v1052, 16
      %v1277 = vrot.slane %v1275, 5
      %v1278 = vsel %vm1062, %v1273, %v1277
      %v1280 = vshrl.u32 %v1022, 16
      %v1282 = vrot.slane %v1280, 4
      %v1283 = vshll.u32 %v1022, 16
      %v1285 = vrot.slane %v1283, 5
      %v1286 = vor.u32 %v1282, %v1285
      %v1287 = vrot.slane %v1286, 4
      %v1289 = vshll.u32 %v1023, 16
      %v1291 = vrot.slane %v1289, 5
      %v1292 = vsel %vm1062, %v1287, %v1291
      %v1293 = vshrl.u32 %v1023, 16
      %v1295 = vrot.slane %v1293, 4
      %v1296 = vor.u32 %v1295, %v1291
      %v1297 = vrot.slane %v1296, 4
      %v1299 = vshll.u32 %v1053, 16
      %v1301 = vrot.slane %v1299, 5
      %v1302 = vsel %vm1062, %v1297, %v1301
      %v1304 = vshrl.u32 %v1024, 16
      %v1306 = vrot.slane %v1304, 4
      %v1307 = vshll.u32 %v1024, 16
      %v1309 = vrot.slane %v1307, 5
      %v1310 = vor.u32 %v1306, %v1309
      %v1311 = vrot.slane %v1310, 4
      %v1313 = vshll.u32 %v1025, 16
      %v1315 = vrot.slane %v1313, 5
      %v1316 = vsel %vm1062, %v1311, %v1315
      %v1317 = vshrl.u32 %v1025, 16
      %v1319 = vrot.slane %v1317, 4
      %v1320 = vor.u32 %v1319, %v1315
      %v1321 = vrot.slane %v1320, 4
      %v1323 = vshll.u32 %v1054, 16
      %v1325 = vrot.slane %v1323, 5
      %v1326 = vsel %vm1062, %v1321, %v1325
      %v1328 = vshrl.u32 %v1026, 16
      %v1330 = vrot.slane %v1328, 4
      %v1331 = vshll.u32 %v1026, 16
      %v1333 = vrot.slane %v1331, 5
      %v1334 = vor.u32 %v1330, %v1333
      %v1335 = vrot.slane %v1334, 4
      %v1337 = vshll.u32 %v1027, 16
      %v1339 = vrot.slane %v1337, 5
      %v1340 = vsel %vm1062, %v1335, %v1339
      %v1341 = vshrl.u32 %v1027, 16
      %v1343 = vrot.slane %v1341, 4
      %v1344 = vor.u32 %v1343, %v1339
      %v1345 = vrot.slane %v1344, 4
      %v1347 = vshll.u32 %v1055, 16
      %v1349 = vrot.slane %v1347, 5
      %v1350 = vsel %vm1062, %v1345, %v1349
      %v1352 = vshrl.u32 %v1028, 16
      %v1354 = vrot.slane %v1352, 4
      %v1355 = vshll.u32 %v1028, 16
      %v1357 = vrot.slane %v1355, 5
      %v1358 = vor.u32 %v1354, %v1357
      %v1359 = vrot.slane %v1358, 4
      %v1361 = vshll.u32 %v1029, 16
      %v1363 = vrot.slane %v1361, 5
      %v1364 = vsel %vm1062, %v1359, %v1363
      %v1365 = vshrl.u32 %v1029, 16
      %v1367 = vrot.slane %v1365, 4
      %v1368 = vor.u32 %v1367, %v1363
      %v1369 = vrot.slane %v1368, 4
      %v1371 = vshll.u32 %v1056, 16
      %v1373 = vrot.slane %v1371, 5
      %v1374 = vsel %vm1062, %v1369, %v1373
      %v1376 = vshrl.u32 %v1030, 16
      %v1378 = vrot.slane %v1376, 4
      %v1379 = vshll.u32 %v1030, 16
      %v1381 = vrot.slane %v1379, 5
      %v1382 = vor.u32 %v1378, %v1381
      %v1383 = vrot.slane %v1382, 4
      %v1385 = vshll.u32 %v1031, 16
      %v1387 = vrot.slane %v1385, 5
      %v1388 = vsel %vm1062, %v1383, %v1387
      %v1389 = vshrl.u32 %v1031, 16
      %v1391 = vrot.slane %v1389, 4
      %v1392 = vor.u32 %v1391, %v1387
      %v1393 = vrot.slane %v1392, 4
      %v1395 = vshll.u32 %v1057, 16
      %v1397 = vrot.slane %v1395, 5
      %v1398 = vsel %vm1062, %v1393, %v1397
      %v1400 = vshrl.u32 %v1032, 16
      %v1402 = vrot.slane %v1400, 4
      %v1403 = vshll.u32 %v1032, 16
      %v1405 = vrot.slane %v1403, 5
      %v1406 = vor.u32 %v1402, %v1405
      %v1407 = vrot.slane %v1406, 4
      %v1409 = vshll.u32 %v1033, 16
      %v1411 = vrot.slane %v1409, 5
      %v1412 = vsel %vm1062, %v1407, %v1411
      %v1413 = vshrl.u32 %v1033, 16
      %v1415 = vrot.slane %v1413, 4
      %v1416 = vor.u32 %v1415, %v1411
      %v1417 = vrot.slane %v1416, 4
      %v1419 = vshll.u32 %v1058, 16
      %v1421 = vrot.slane %v1419, 5
      %v1422 = vsel %vm1062, %v1417, %v1421
      %v1424 = vshrl.u32 %v1034, 16
      %v1426 = vrot.slane %v1424, 4
      %v1427 = vshll.u32 %v1034, 16
      %v1429 = vrot.slane %v1427, 5
      %v1430 = vor.u32 %v1426, %v1429
      %v1431 = vrot.slane %v1430, 4
      %v1433 = vshll.u32 %v1035, 16
      %v1435 = vrot.slane %v1433, 5
      %v1436 = vsel %vm1062, %v1431, %v1435
      %v1437 = vshrl.u32 %v1035, 16
      %v1439 = vrot.slane %v1437, 4
      %v1440 = vor.u32 %v1439, %v1435
      %v1441 = vrot.slane %v1440, 4
      %v1443 = vshll.u32 %v1059, 16
      %v1445 = vrot.slane %v1443, 5
      %v1446 = vsel %vm1062, %v1441, %v1445
      %s1447 = scalar_lea.vmem %s3, 32
      %v1448 = vld [vmem:[%s1447] sm:$0xf]
      %v1449 = vld [vmem:[%s1447 + $0x4] sm:$0xf]
      %v1450 = vld [vmem:[%s1447 + $0x8] sm:$0xf]
      %v1451 = vld [vmem:[%s1447 + $0xc] sm:$0xf]
      %v1452 = vld [vmem:[%s1447 + $0x10] sm:$0xf]
      %v1453 = vld [vmem:[%s1447 + $0x14] sm:$0xf]
      %v1454 = vld [vmem:[%s1447 + $0x18] sm:$0xf]
      %v1455 = vld [vmem:[%s1447 + $0x1c] sm:$0xf]
      %v1456 = vunpack.c.l.b16 %v1076
      %v1457 = vunpack.c.l.b16 %v1086
      %v1458 = vunpack.c.l.b16 %v1100
      %v1459 = vunpack.c.l.b16 %v1110
      %v1460 = vunpack.c.l.b16 %v1124
      %v1461 = vunpack.c.l.b16 %v1134
      %v1462 = vunpack.c.l.b16 %v1148
      %v1463 = vunpack.c.l.b16 %v1158
      %v1464 = vunpack.c.l.b16 %v1172
      %v1465 = vunpack.c.l.b16 %v1182
      %v1466 = vunpack.c.l.b16 %v1196
      %v1467 = vunpack.c.l.b16 %v1206
      %v1468 = vunpack.c.l.b16 %v1220
      %v1469 = vunpack.c.l.b16 %v1230
      %v1470 = vunpack.c.l.b16 %v1244
      %v1471 = vunpack.c.l.b16 %v1254
      %v1472 = vunpack.c.l.b16 %v1268
      %v1473 = vunpack.c.l.b16 %v1278
      %v1474 = vunpack.c.l.b16 %v1292
      %v1475 = vunpack.c.l.b16 %v1302
      %v1476 = vunpack.c.l.b16 %v1316
      %v1477 = vunpack.c.l.b16 %v1326
      %v1478 = vunpack.c.l.b16 %v1340
      %v1479 = vunpack.c.l.b16 %v1350
      %v1480 = vunpack.c.l.b16 %v1364
      %v1481 = vunpack.c.l.b16 %v1374
      %v1482 = vunpack.c.l.b16 %v1388
      %v1483 = vunpack.c.l.b16 %v1398
      %v1484 = vunpack.c.l.b16 %v1412
      %v1485 = vunpack.c.l.b16 %v1422
      %v1486 = vunpack.c.l.b16 %v1436
      %v1487 = vunpack.c.l.b16 %v1446
      %v1488 = vpack.c.b16 %v1457, %v1456
      %v1489 = vpack.c.b16 %v1459, %v1458
      %v1490 = vpack.c.b16 %v1461, %v1460
      %v1491 = vpack.c.b16 %v1463, %v1462
      %v1492 = vpack.c.b16 %v1465, %v1464
      %v1493 = vpack.c.b16 %v1467, %v1466
      %v1494 = vpack.c.b16 %v1469, %v1468
      %v1495 = vpack.c.b16 %v1471, %v1470
      %v1496 = vpack.c.b16 %v1473, %v1472
      %v1497 = vpack.c.b16 %v1475, %v1474
      %v1498 = vpack.c.b16 %v1477, %v1476
      %v1499 = vpack.c.b16 %v1479, %v1478
      %v1500 = vpack.c.b16 %v1481, %v1480
      %v1501 = vpack.c.b16 %v1483, %v1482
      %v1502 = vpack.c.b16 %v1485, %v1484
      %v1503 = vpack.c.b16 %v1487, %v1486
      %v1512 = vunpack.c.l.b16 %v1448
      %v1513 = vunpack.c.l.b16 %v1449
      %v1514 = vunpack.c.l.b16 %v1450
      %v1515 = vunpack.c.l.b16 %v1451
      %v1516 = vunpack.c.l.b16 %v1452
      %v1517 = vunpack.c.l.b16 %v1453
      %v1518 = vunpack.c.l.b16 %v1454
      %v1519 = vunpack.c.l.b16 %v1455
      %v1520 = vpack.c.b16 %v1513, %v1512
      %v1521 = vpack.c.b16 %v1515, %v1514
      %v1522 = vpack.c.b16 %v1517, %v1516
      %v1523 = vpack.c.b16 %v1519, %v1518
      %vm1528 = vcmask 523264
      %v1530 = vsel %vm1528, %v1488, 0
      %v1533 = vsel %vm1528, %v1489, 0
      %v1536 = vsel %vm1528, %v1490, 0
      %v1539 = vsel %vm1528, %v1491, 0
      %v1542 = vsel %vm1528, %v1492, 0
      %v1545 = vsel %vm1528, %v1493, 0
      %v1548 = vsel %vm1528, %v1494, 0
      %v1551 = vsel %vm1528, %v1495, 0
      %v1554 = vsel %vm1528, %v1496, 0
      %v1557 = vsel %vm1528, %v1497, 0
      %v1560 = vsel %vm1528, %v1498, 0
      %v1563 = vsel %vm1528, %v1499, 0
      %v1566 = vsel %vm1528, %v1500, 0
      %v1569 = vsel %vm1528, %v1501, 0
      %v1572 = vsel %vm1528, %v1502, 0
      %v1575 = vsel %vm1528, %v1503, 0
      %1577 = vmatprep.subr.bf16.mxu0 0
      %1578 = vmatpush1.bf16.msra.mxu0 %v1520
      %1579 = vmatprep.subr.bf16.mxu0 0
      %1580 = vmatpush1.bf16.msra.mxu0 %v1521
      %1581 = vmatprep.subr.bf16.mxu0 0
      %1582 = vmatpush1.bf16.msra.mxu0 %v1522
      %1583 = vmatprep.subr.bf16.mxu0 0
      %1584 = vmatpush1.bf16.msra.mxu0 %v1523
      %1585 = vmatprep.subr.bf16.mxu0 0
      %1586 = vmatpush1.bf16.msra.mxu0 0
      %1587 = vmatprep.subr.bf16.mxu0 0
      %1588 = vmatpush1.bf16.msra.mxu0 0
      %1589 = vmatprep.subr.bf16.mxu0 0
      %1590 = vmatpush1.bf16.msra.mxu0 0
      %1591 = vmatprep.subr.bf16.mxu0 0
      %1592 = vmatpush1.bf16.msra.mxu0 0
      %1593 = vmatprep.subr.bf16.mxu0 0
      %1594 = vmatpush1.bf16.msra.mxu0 0
      %1595 = vmatprep.subr.bf16.mxu0 0
      %1596 = vmatpush1.bf16.msra.mxu0 0
      %1597 = vmatprep.subr.bf16.mxu0 0
      %1598 = vmatpush1.bf16.msra.mxu0 0
      %1599 = vmatprep.subr.bf16.mxu0 0
      %1600 = vmatpush1.bf16.msra.mxu0 0
      %1601 = vmatprep.subr.bf16.mxu0 0
      %1602 = vmatpush1.bf16.msra.mxu0 0
      %1603 = vmatprep.subr.bf16.mxu0 0
      %1604 = vmatpush1.bf16.msra.mxu0 0
      %1605 = vmatprep.subr.bf16.mxu0 0
      %1606 = vmatpush1.bf16.msra.mxu0 0
      %1607 = vmatprep.subr.bf16.mxu0 0
      %1608 = vmatpush1.bf16.msra.mxu0 0
      %1609 = vmatprep.mubr.bf16.mxu0 0
      %1610 = vmatmul.mubr.bf16.gmra.mrb[0].mxu0 %v1530
      %v1611 = vpop.f32.mrb[0].mxu0
      %v1612 = vadd.f32 0.0, %v1611
      %v1613 = vpop.f32.mrb[0].mxu0
      %v1614 = vpop.f32.mrb[0].mxu0
      %v1615 = vadd.f32 0.0, %v1614
      %v1616 = vpop.f32.mrb[0].mxu0
      %1617 = vmatprep.mubr.bf16.mxu0 0
      %1618 = vmatmul.mubr.bf16.gmra.mrb[0].mxu0 %v1533
      %v1619 = vpop.f32.mrb[0].mxu0
      %v1620 = vadd.f32 0.0, %v1619
      %v1621 = vpop.f32.mrb[0].mxu0
      %v1622 = vpop.f32.mrb[0].mxu0
      %v1623 = vadd.f32 0.0, %v1622
      %v1624 = vpop.f32.mrb[0].mxu0
      %1625 = vmatprep.mubr.bf16.mxu0 0
      %1626 = vmatmul.mubr.bf16.gmra.mrb[0].mxu0 %v1536
      %v1627 = vpop.f32.mrb[0].mxu0
      %v1628 = vadd.f32 0.0, %v1627
      %v1629 = vpop.f32.mrb[0].mxu0
      %v1630 = vpop.f32.mrb[0].mxu0
      %v1631 = vadd.f32 0.0, %v1630
      %v1632 = vpop.f32.mrb[0].mxu0
      %1633 = vmatprep.mubr.bf16.mxu0 0
      %1634 = vmatmul.mubr.bf16.gmra.mrb[0].mxu0 %v1539
      %v1635 = vpop.f32.mrb[0].mxu0
      %v1636 = vadd.f32 0.0, %v1635
      %v1637 = vpop.f32.mrb[0].mxu0
      %v1638 = vpop.f32.mrb[0].mxu0
      %v1639 = vadd.f32 0.0, %v1638
      %v1640 = vpop.f32.mrb[0].mxu0
      %1641 = vmatprep.mubr.bf16.mxu0 0
      %1642 = vmatmul.mubr.bf16.gmra.mrb[0].mxu0 %v1542
      %v1643 = vpop.f32.mrb[0].mxu0
      %v1644 = vadd.f32 0.0, %v1643
      %v1645 = vpop.f32.mrb[0].mxu0
      %v1646 = vpop.f32.mrb[0].mxu0
      %v1647 = vadd.f32 0.0, %v1646
      %v1648 = vpop.f32.mrb[0].mxu0
      %1649 = vmatprep.mubr.bf16.mxu0 0
      %1650 = vmatmul.mubr.bf16.gmra.mrb[0].mxu0 %v1545
      %v1651 = vpop.f32.mrb[0].mxu0
      %v1652 = vadd.f32 0.0, %v1651
      %v1653 = vpop.f32.mrb[0].mxu0
      %v1654 = vpop.f32.mrb[0].mxu0
      %v1655 = vadd.f32 0.0, %v1654
      %v1656 = vpop.f32.mrb[0].mxu0
      %1657 = vmatprep.mubr.bf16.mxu0 0
      %1658 = vmatmul.mubr.bf16.gmra.mrb[0].mxu0 %v1548
      %v1659 = vpop.f32.mrb[0].mxu0
      %v1660 = vadd.f32 0.0, %v1659
      %v1661 = vpop.f32.mrb[0].mxu0
      %v1662 = vpop.f32.mrb[0].mxu0
      %v1663 = vadd.f32 0.0, %v1662
      %v1664 = vpop.f32.mrb[0].mxu0
      %1665 = vmatprep.mubr.bf16.mxu0 0
      %1666 = vmatmul.mubr.bf16.gmra.mrb[0].mxu0 %v1551
      %v1667 = vpop.f32.mrb[0].mxu0
      %v1668 = vadd.f32 0.0, %v1667
      %v1669 = vpop.f32.mrb[0].mxu0
      %v1670 = vpop.f32.mrb[0].mxu0
      %v1671 = vadd.f32 0.0, %v1670
      %v1672 = vpop.f32.mrb[0].mxu0
      %1673 = vmatprep.mubr.bf16.mxu0 0
      %1674 = vmatmul.mubr.bf16.gmra.mrb[0].mxu0 %v1554
      %v1675 = vpop.f32.mrb[0].mxu0
      %v1676 = vadd.f32 0.0, %v1675
      %v1677 = vpop.f32.mrb[0].mxu0
      %v1678 = vpop.f32.mrb[0].mxu0
      %v1679 = vadd.f32 0.0, %v1678
      %v1680 = vpop.f32.mrb[0].mxu0
      %1681 = vmatprep.mubr.bf16.mxu0 0
      %1682 = vmatmul.mubr.bf16.gmra.mrb[0].mxu0 %v1557
      %v1683 = vpop.f32.mrb[0].mxu0
      %v1684 = vadd.f32 0.0, %v1683
      %v1685 = vpop.f32.mrb[0].mxu0
      %v1686 = vpop.f32.mrb[0].mxu0
      %v1687 = vadd.f32 0.0, %v1686
      %v1688 = vpop.f32.mrb[0].mxu0
      %1689 = vmatprep.mubr.bf16.mxu0 0
      %1690 = vmatmul.mubr.bf16.gmra.mrb[0].mxu0 %v1560
      %v1691 = vpop.f32.mrb[0].mxu0
      %v1692 = vadd.f32 0.0, %v1691
      %v1693 = vpop.f32.mrb[0].mxu0
      %v1694 = vpop.f32.mrb[0].mxu0
      %v1695 = vadd.f32 0.0, %v1694
      %v1696 = vpop.f32.mrb[0].mxu0
      %1697 = vmatprep.mubr.bf16.mxu0 0
      %1698 = vmatmul.mubr.bf16.gmra.mrb[0].mxu0 %v1563
      %v1699 = vpop.f32.mrb[0].mxu0
      %v1700 = vadd.f32 0.0, %v1699
      %v1701 = vpop.f32.mrb[0].mxu0
      %v1702 = vpop.f32.mrb[0].mxu0
      %v1703 = vadd.f32 0.0, %v1702
      %v1704 = vpop.f32.mrb[0].mxu0
      %1705 = vmatprep.mubr.bf16.mxu0 0
      %1706 = vmatmul.mubr.bf16.gmra.mrb[0].mxu0 %v1566
      %v1707 = vpop.f32.mrb[0].mxu0
      %v1708 = vadd.f32 0.0, %v1707
      %v1709 = vpop.f32.mrb[0].mxu0
      %v1710 = vpop.f32.mrb[0].mxu0
      %v1711 = vadd.f32 0.0, %v1710
      %v1712 = vpop.f32.mrb[0].mxu0
      %1713 = vmatprep.mubr.bf16.mxu0 0
      %1714 = vmatmul.mubr.bf16.gmra.mrb[0].mxu0 %v1569
      %v1715 = vpop.f32.mrb[0].mxu0
      %v1716 = vadd.f32 0.0, %v1715
      %v1717 = vpop.f32.mrb[0].mxu0
      %v1718 = vpop.f32.mrb[0].mxu0
      %v1719 = vadd.f32 0.0, %v1718
      %v1720 = vpop.f32.mrb[0].mxu0
      %1721 = vmatprep.mubr.bf16.mxu0 0
      %1722 = vmatmul.mubr.bf16.gmra.mrb[0].mxu0 %v1572
      %v1723 = vpop.f32.mrb[0].mxu0
      %v1724 = vadd.f32 0.0, %v1723
      %v1725 = vpop.f32.mrb[0].mxu0
      %v1726 = vpop.f32.mrb[0].mxu0
      %v1727 = vadd.f32 0.0, %v1726
      %v1728 = vpop.f32.mrb[0].mxu0
      %1729 = vmatprep.mubr.bf16.mxu0 0
      %1730 = vmatmul.mubr.bf16.gmra.mrb[0].mxu0 %v1575
      %v1731 = vpop.f32.mrb[0].mxu0
      %v1732 = vadd.f32 0.0, %v1731
      %v1733 = vpop.f32.mrb[0].mxu0
      %v1734 = vpop.f32.mrb[0].mxu0
      %v1735 = vadd.f32 0.0, %v1734
      %v1736 = vpop.f32.mrb[0].mxu0
      %1737 = vdwg.mxu0
      %v1770 = vunpack.c.l.b16 %v1004
      %v1771 = vunpack.c.l.b16 %v1005
      %v1772 = vunpack.c.l.b16 %v1006
      %v1773 = vunpack.c.l.b16 %v1007
      %v1774 = vunpack.c.l.b16 %v1008
      %v1775 = vunpack.c.l.b16 %v1009
      %v1776 = vunpack.c.l.b16 %v1010
      %v1777 = vunpack.c.l.b16 %v1011
      %v1778 = vunpack.c.l.b16 %v1012
      %v1779 = vunpack.c.l.b16 %v1013
      %v1780 = vunpack.c.l.b16 %v1014
      %v1781 = vunpack.c.l.b16 %v1015
      %v1782 = vunpack.c.l.b16 %v1016
      %v1783 = vunpack.c.l.b16 %v1017
      %v1784 = vunpack.c.l.b16 %v1018
      %v1785 = vunpack.c.l.b16 %v1019
      %v1786 = vunpack.c.l.b16 %v1020
      %v1787 = vunpack.c.l.b16 %v1021
      %v1788 = vunpack.c.l.b16 %v1022
      %v1789 = vunpack.c.l.b16 %v1023
      %v1790 = vunpack.c.l.b16 %v1024
      %v1791 = vunpack.c.l.b16 %v1025
      %v1792 = vunpack.c.l.b16 %v1026
      %v1793 = vunpack.c.l.b16 %v1027
      %v1794 = vunpack.c.l.b16 %v1028
      %v1795 = vunpack.c.l.b16 %v1029
      %v1796 = vunpack.c.l.b16 %v1030
      %v1797 = vunpack.c.l.b16 %v1031
      %v1798 = vunpack.c.l.b16 %v1032
      %v1799 = vunpack.c.l.b16 %v1033
      %v1800 = vunpack.c.l.b16 %v1034
      %v1801 = vunpack.c.l.b16 %v1035
      %v1802 = vpack.c.b16 %v1771, %v1770
      %v1803 = vpack.c.b16 %v1773, %v1772
      %v1804 = vpack.c.b16 %v1775, %v1774
      %v1805 = vpack.c.b16 %v1777, %v1776
      %v1806 = vpack.c.b16 %v1779, %v1778
      %v1807 = vpack.c.b16 %v1781, %v1780
      %v1808 = vpack.c.b16 %v1783, %v1782
      %v1809 = vpack.c.b16 %v1785, %v1784
      %v1810 = vpack.c.b16 %v1787, %v1786
      %v1811 = vpack.c.b16 %v1789, %v1788
      %v1812 = vpack.c.b16 %v1791, %v1790
      %v1813 = vpack.c.b16 %v1793, %v1792
      %v1814 = vpack.c.b16 %v1795, %v1794
      %v1815 = vpack.c.b16 %v1797, %v1796
      %v1816 = vpack.c.b16 %v1799, %v1798
      %v1817 = vpack.c.b16 %v1801, %v1800
      %v1826 = vunpack.c.l.b16 %v1036
      %v1827 = vunpack.c.l.b16 %v1037
      %v1828 = vunpack.c.l.b16 %v1038
      %v1829 = vunpack.c.l.b16 %v1039
      %v1830 = vunpack.c.l.b16 %v1040
      %v1831 = vunpack.c.l.b16 %v1041
      %v1832 = vunpack.c.l.b16 %v1042
      %v1833 = vunpack.c.l.b16 %v1043
      %v1834 = vpack.c.b16 %v1827, %v1826
      %v1835 = vpack.c.b16 %v1829, %v1828
      %v1836 = vpack.c.b16 %v1831, %v1830
      %v1837 = vpack.c.b16 %v1833, %v1832
      %v1843 = vsel %vm1528, %v1802, 0
      %v1846 = vsel %vm1528, %v1803, 0
      %v1849 = vsel %vm1528, %v1804, 0
      %v1852 = vsel %vm1528, %v1805, 0
      %v1855 = vsel %vm1528, %v1806, 0
      %v1858 = vsel %vm1528, %v1807, 0
      %v1861 = vsel %vm1528, %v1808, 0
      %v1864 = vsel %vm1528, %v1809, 0
      %v1867 = vsel %vm1528, %v1810, 0
      %v1870 = vsel %vm1528, %v1811, 0
      %v1873 = vsel %vm1528, %v1812, 0
      %v1876 = vsel %vm1528, %v1813, 0
      %v1879 = vsel %vm1528, %v1814, 0
      %v1882 = vsel %vm1528, %v1815, 0
      %v1885 = vsel %vm1528, %v1816, 0
      %v1888 = vsel %vm1528, %v1817, 0
      %1890 = vmatprep.subr.bf16.mxu0 0
      %1891 = vmatpush1.bf16.msra.mxu0 %v1834
      %1892 = vmatprep.subr.bf16.mxu0 0
      %1893 = vmatpush1.bf16.msra.mxu0 %v1835
      %1894 = vmatprep.subr.bf16.mxu0 0
      %1895 = vmatpush1.bf16.msra.mxu0 %v1836
      %1896 = vmatprep.subr.bf16.mxu0 0
      %1897 = vmatpush1.bf16.msra.mxu0 %v1837
      %1898 = vmatprep.subr.bf16.mxu0 0
      %1899 = vmatpush1.bf16.msra.mxu0 0
      %1900 = vmatprep.subr.bf16.mxu0 0
      %1901 = vmatpush1.bf16.msra.mxu0 0
      %1902 = vmatprep.subr.bf16.mxu0 0
      %1903 = vmatpush1.bf16.msra.mxu0 0
      %1904 = vmatprep.subr.bf16.mxu0 0
      %1905 = vmatpush1.bf16.msra.mxu0 0
      %1906 = vmatprep.subr.bf16.mxu0 0
      %1907 = vmatpush1.bf16.msra.mxu0 0
      %1908 = vmatprep.subr.bf16.mxu0 0
      %1909 = vmatpush1.bf16.msra.mxu0 0
      %1910 = vmatprep.subr.bf16.mxu0 0
      %1911 = vmatpush1.bf16.msra.mxu0 0
      %1912 = vmatprep.subr.bf16.mxu0 0
      %1913 = vmatpush1.bf16.msra.mxu0 0
      %1914 = vmatprep.subr.bf16.mxu0 0
      %1915 = vmatpush1.bf16.msra.mxu0 0
      %1916 = vmatprep.subr.bf16.mxu0 0
      %1917 = vmatpush1.bf16.msra.mxu0 0
      %1918 = vmatprep.subr.bf16.mxu0 0
      %1919 = vmatpush1.bf16.msra.mxu0 0
      %1920 = vmatprep.subr.bf16.mxu0 0
      %1921 = vmatpush1.bf16.msra.mxu0 0
      %1922 = vmatprep.mubr.bf16.mxu0 0
      %1923 = vmatmul.mubr.bf16.gmra.mrb[0].mxu0 %v1843
      %v1924 = vpop.f32.mrb[0].mxu0
      %v1925 = vadd.f32 %v1612, %v1924
      %v1926 = vpop.f32.mrb[0].mxu0
      %v1927 = vpop.f32.mrb[0].mxu0
      %v1928 = vadd.f32 %v1615, %v1927
      %v1929 = vpop.f32.mrb[0].mxu0
      %1930 = vmatprep.mubr.bf16.mxu0 0
      %1931 = vmatmul.mubr.bf16.gmra.mrb[0].mxu0 %v1846
      %v1932 = vpop.f32.mrb[0].mxu0
      %v1933 = vadd.f32 %v1620, %v1932
      %v1934 = vpop.f32.mrb[0].mxu0
      %v1935 = vpop.f32.mrb[0].mxu0
      %v1936 = vadd.f32 %v1623, %v1935
      %v1937 = vpop.f32.mrb[0].mxu0
      %1938 = vmatprep.mubr.bf16.mxu0 0
      %1939 = vmatmul.mubr.bf16.gmra.mrb[0].mxu0 %v1849
      %v1940 = vpop.f32.mrb[0].mxu0
      %v1941 = vadd.f32 %v1628, %v1940
      %v1942 = vpop.f32.mrb[0].mxu0
      %v1943 = vpop.f32.mrb[0].mxu0
      %v1944 = vadd.f32 %v1631, %v1943
      %v1945 = vpop.f32.mrb[0].mxu0
      %1946 = vmatprep.mubr.bf16.mxu0 0
      %1947 = vmatmul.mubr.bf16.gmra.mrb[0].mxu0 %v1852
      %v1948 = vpop.f32.mrb[0].mxu0
      %v1949 = vadd.f32 %v1636, %v1948
      %v1950 = vpop.f32.mrb[0].mxu0
      %v1951 = vpop.f32.mrb[0].mxu0
      %v1952 = vadd.f32 %v1639, %v1951
      %v1953 = vpop.f32.mrb[0].mxu0
      %1954 = vmatprep.mubr.bf16.mxu0 0
      %1955 = vmatmul.mubr.bf16.gmra.mrb[0].mxu0 %v1855
      %v1956 = vpop.f32.mrb[0].mxu0
      %v1957 = vadd.f32 %v1644, %v1956
      %v1958 = vpop.f32.mrb[0].mxu0
      %v1959 = vpop.f32.mrb[0].mxu0
      %v1960 = vadd.f32 %v1647, %v1959
      %v1961 = vpop.f32.mrb[0].mxu0
      %1962 = vmatprep.mubr.bf16.mxu0 0
      %1963 = vmatmul.mubr.bf16.gmra.mrb[0].mxu0 %v1858
      %v1964 = vpop.f32.mrb[0].mxu0
      %v1965 = vadd.f32 %v1652, %v1964
      %v1966 = vpop.f32.mrb[0].mxu0
      %v1967 = vpop.f32.mrb[0].mxu0
      %v1968 = vadd.f32 %v1655, %v1967
      %v1969 = vpop.f32.mrb[0].mxu0
      %1970 = vmatprep.mubr.bf16.mxu0 0
      %1971 = vmatmul.mubr.bf16.gmra.mrb[0].mxu0 %v1861
      %v1972 = vpop.f32.mrb[0].mxu0
      %v1973 = vadd.f32 %v1660, %v1972
      %v1974 = vpop.f32.mrb[0].mxu0
      %v1975 = vpop.f32.mrb[0].mxu0
      %v1976 = vadd.f32 %v1663, %v1975
      %v1977 = vpop.f32.mrb[0].mxu0
      %1978 = vmatprep.mubr.bf16.mxu0 0
      %1979 = vmatmul.mubr.bf16.gmra.mrb[0].mxu0 %v1864
      %v1980 = vpop.f32.mrb[0].mxu0
      %v1981 = vadd.f32 %v1668, %v1980
      %v1982 = vpop.f32.mrb[0].mxu0
      %v1983 = vpop.f32.mrb[0].mxu0
      %v1984 = vadd.f32 %v1671, %v1983
      %v1985 = vpop.f32.mrb[0].mxu0
      %1986 = vmatprep.mubr.bf16.mxu0 0
      %1987 = vmatmul.mubr.bf16.gmra.mrb[0].mxu0 %v1867
      %v1988 = vpop.f32.mrb[0].mxu0
      %v1989 = vadd.f32 %v1676, %v1988
      %v1990 = vpop.f32.mrb[0].mxu0
      %v1991 = vpop.f32.mrb[0].mxu0
      %v1992 = vadd.f32 %v1679, %v1991
      %v1993 = vpop.f32.mrb[0].mxu0
      %1994 = vmatprep.mubr.bf16.mxu0 0
      %1995 = vmatmul.mubr.bf16.gmra.mrb[0].mxu0 %v1870
      %v1996 = vpop.f32.mrb[0].mxu0
      %v1997 = vadd.f32 %v1684, %v1996
      %v1998 = vpop.f32.mrb[0].mxu0
      %v1999 = vpop.f32.mrb[0].mxu0
      %v2000 = vadd.f32 %v1687, %v1999
      %v2001 = vpop.f32.mrb[0].mxu0
      %2002 = vmatprep.mubr.bf16.mxu0 0
      %2003 = vmatmul.mubr.bf16.gmra.mrb[0].mxu0 %v1873
      %v2004 = vpop.f32.mrb[0].mxu0
      %v2005 = vadd.f32 %v1692, %v2004
      %v2006 = vpop.f32.mrb[0].mxu0
      %v2007 = vpop.f32.mrb[0].mxu0
      %v2008 = vadd.f32 %v1695, %v2007
      %v2009 = vpop.f32.mrb[0].mxu0
      %2010 = vmatprep.mubr.bf16.mxu0 0
      %2011 = vmatmul.mubr.bf16.gmra.mrb[0].mxu0 %v1876
      %v2012 = vpop.f32.mrb[0].mxu0
      %v2013 = vadd.f32 %v1700, %v2012
      %v2014 = vpop.f32.mrb[0].mxu0
      %v2015 = vpop.f32.mrb[0].mxu0
      %v2016 = vadd.f32 %v1703, %v2015
      %v2017 = vpop.f32.mrb[0].mxu0
      %2018 = vmatprep.mubr.bf16.mxu0 0
      %2019 = vmatmul.mubr.bf16.gmra.mrb[0].mxu0 %v1879
      %v2020 = vpop.f32.mrb[0].mxu0
      %v2021 = vadd.f32 %v1708, %v2020
      %v2022 = vpop.f32.mrb[0].mxu0
      %v2023 = vpop.f32.mrb[0].mxu0
      %v2024 = vadd.f32 %v1711, %v2023
      %v2025 = vpop.f32.mrb[0].mxu0
      %2026 = vmatprep.mubr.bf16.mxu0 0
      %2027 = vmatmul.mubr.bf16.gmra.mrb[0].mxu0 %v1882
      %v2028 = vpop.f32.mrb[0].mxu0
      %v2029 = vadd.f32 %v1716, %v2028
      %v2030 = vpop.f32.mrb[0].mxu0
      %v2031 = vpop.f32.mrb[0].mxu0
      %v2032 = vadd.f32 %v1719, %v2031
      %v2033 = vpop.f32.mrb[0].mxu0
      %2034 = vmatprep.mubr.bf16.mxu0 0
      %2035 = vmatmul.mubr.bf16.gmra.mrb[0].mxu0 %v1885
      %v2036 = vpop.f32.mrb[0].mxu0
      %v2037 = vadd.f32 %v1724, %v2036
      %v2038 = vpop.f32.mrb[0].mxu0
      %v2039 = vpop.f32.mrb[0].mxu0
      %v2040 = vadd.f32 %v1727, %v2039
      %v2041 = vpop.f32.mrb[0].mxu0
      %2042 = vmatprep.mubr.bf16.mxu0 0
      %2043 = vmatmul.mubr.bf16.gmra.mrb[0].mxu0 %v1888
      %v2044 = vpop.f32.mrb[0].mxu0
      %v2045 = vadd.f32 %v1732, %v2044
      %v2046 = vpop.f32.mrb[0].mxu0
      %v2047 = vpop.f32.mrb[0].mxu0
      %v2048 = vadd.f32 %v1735, %v2047
      %v2049 = vpop.f32.mrb[0].mxu0
      %2050 = vdwg.mxu0
      %v2051 = vld [vmem:[#allocation2] sm:$0xe]
      %v2052 = vld [vmem:[#allocation2 + $0xc] sm:$0xe]
      %v2053 = vld [vmem:[#allocation2 + $0x18] sm:$0xe]
      %v2054 = vld [vmem:[#allocation2 + $0x24] sm:$0xe]
      %v2055 = vld [vmem:[#allocation2 + $0x30] sm:$0xe]
      %v2056 = vld [vmem:[#allocation2 + $0x3c] sm:$0xe]
      %v2057 = vld [vmem:[#allocation2 + $0x48] sm:$0xe]
      %v2058 = vld [vmem:[#allocation2 + $0x54] sm:$0xe]
      %v2059 = vld [vmem:[#allocation2 + $0x60] sm:$0xe]
      %v2060 = vld [vmem:[#allocation2 + $0x6c] sm:$0xe]
      %v2061 = vld [vmem:[#allocation2 + $0x78] sm:$0xe]
      %v2062 = vld [vmem:[#allocation2 + $0x84] sm:$0xe]
      %v2063 = vld [vmem:[#allocation2 + $0x90] sm:$0xe]
      %v2064 = vld [vmem:[#allocation2 + $0x9c] sm:$0xe]
      %v2065 = vld [vmem:[#allocation2 + $0xa8] sm:$0xe]
      %v2066 = vld [vmem:[#allocation2 + $0xb4] sm:$0xe]
      %vm2099 = vcmask 1042432
      %vm2100 = vcmask 1046532
      %vm2101 = vmor %vm2099, %vm2100
      %v2102 = vrot.slane %v2051, 5
      %v2103 = vrot.slane %v2102, 4
      %v2104 = vrot.slane %v1005, 5
      %v2105 = vsel %vm2101, %v2103, %v2104
      %v2106 = vrot.slane %v2104, 4
      %v2107 = vrot.slane %v1044, 5
      %v2108 = vsel %vm2101, %v2106, %v2107
      %v2109 = vrot.slane %v2052, 5
      %v2110 = vrot.slane %v2109, 4
      %v2111 = vrot.slane %v1007, 5
      %v2112 = vsel %vm2101, %v2110, %v2111
      %v2113 = vrot.slane %v2111, 4
      %v2114 = vrot.slane %v1045, 5
      %v2115 = vsel %vm2101, %v2113, %v2114
      %v2116 = vrot.slane %v2053, 5
      %v2117 = vrot.slane %v2116, 4
      %v2118 = vrot.slane %v1009, 5
      %v2119 = vsel %vm2101, %v2117, %v2118
      %v2120 = vrot.slane %v2118, 4
      %v2121 = vrot.slane %v1046, 5
      %v2122 = vsel %vm2101, %v2120, %v2121
      %v2123 = vrot.slane %v2054, 5
      %v2124 = vrot.slane %v2123, 4
      %v2125 = vrot.slane %v1011, 5
      %v2126 = vsel %vm2101, %v2124, %v2125
      %v2127 = vrot.slane %v2125, 4
      %v2128 = vrot.slane %v1047, 5
      %v2129 = vsel %vm2101, %v2127, %v2128
      %v2130 = vrot.slane %v2055, 5
      %v2131 = vrot.slane %v2130, 4
      %v2132 = vrot.slane %v1013, 5
      %v2133 = vsel %vm2101, %v2131, %v2132
      %v2134 = vrot.slane %v2132, 4
      %v2135 = vrot.slane %v1048, 5
      %v2136 = vsel %vm2101, %v2134, %v2135
      %v2137 = vrot.slane %v2056, 5
      %v2138 = vrot.slane %v2137, 4
      %v2139 = vrot.slane %v1015, 5
      %v2140 = vsel %vm2101, %v2138, %v2139
      %v2141 = vrot.slane %v2139, 4
      %v2142 = vrot.slane %v1049, 5
      %v2143 = vsel %vm2101, %v2141, %v2142
      %v2144 = vrot.slane %v2057, 5
      %v2145 = vrot.slane %v2144, 4
      %v2146 = vrot.slane %v1017, 5
      %v2147 = vsel %vm2101, %v2145, %v2146
      %v2148 = vrot.slane %v2146, 4
      %v2149 = vrot.slane %v1050, 5
      %v2150 = vsel %vm2101, %v2148, %v2149
      %v2151 = vrot.slane %v2058, 5
      %v2152 = vrot.slane %v2151, 4
      %v2153 = vrot.slane %v1019, 5
      %v2154 = vsel %vm2101, %v2152, %v2153
      %v2155 = vrot.slane %v2153, 4
      %v2156 = vrot.slane %v1051, 5
      %v2157 = vsel %vm2101, %v2155, %v2156
      %v2158 = vrot.slane %v2059, 5
      %v2159 = vrot.slane %v2158, 4
      %v2160 = vrot.slane %v1021, 5
      %v2161 = vsel %vm2101, %v2159, %v2160
      %v2162 = vrot.slane %v2160, 4
      %v2163 = vrot.slane %v1052, 5
      %v2164 = vsel %vm2101, %v2162, %v2163
      %v2165 = vrot.slane %v2060, 5
      %v2166 = vrot.slane %v2165, 4
      %v2167 = vrot.slane %v1023, 5
      %v2168 = vsel %vm2101, %v2166, %v2167
      %v2169 = vrot.slane %v2167, 4
      %v2170 = vrot.slane %v1053, 5
      %v2171 = vsel %vm2101, %v2169, %v2170
      %v2172 = vrot.slane %v2061, 5
      %v2173 = vrot.slane %v2172, 4
      %v2174 = vrot.slane %v1025, 5
      %v2175 = vsel %vm2101, %v2173, %v2174
      %v2176 = vrot.slane %v2174, 4
      %v2177 = vrot.slane %v1054, 5
      %v2178 = vsel %vm2101, %v2176, %v2177
      %v2179 = vrot.slane %v2062, 5
      %v2180 = vrot.slane %v2179, 4
      %v2181 = vrot.slane %v1027, 5
      %v2182 = vsel %vm2101, %v2180, %v2181
      %v2183 = vrot.slane %v2181, 4
      %v2184 = vrot.slane %v1055, 5
      %v2185 = vsel %vm2101, %v2183, %v2184
      %v2186 = vrot.slane %v2063, 5
      %v2187 = vrot.slane %v2186, 4
      %v2188 = vrot.slane %v1029, 5
      %v2189 = vsel %vm2101, %v2187, %v2188
      %v2190 = vrot.slane %v2188, 4
      %v2191 = vrot.slane %v1056, 5
      %v2192 = vsel %vm2101, %v2190, %v2191
      %v2193 = vrot.slane %v2064, 5
      %v2194 = vrot.slane %v2193, 4
      %v2195 = vrot.slane %v1031, 5
      %v2196 = vsel %vm2101, %v2194, %v2195
      %v2197 = vrot.slane %v2195, 4
      %v2198 = vrot.slane %v1057, 5
      %v2199 = vsel %vm2101, %v2197, %v2198
      %v2200 = vrot.slane %v2065, 5
      %v2201 = vrot.slane %v2200, 4
      %v2202 = vrot.slane %v1033, 5
      %v2203 = vsel %vm2101, %v2201, %v2202
      %v2204 = vrot.slane %v2202, 4
      %v2205 = vrot.slane %v1058, 5
      %v2206 = vsel %vm2101, %v2204, %v2205
      %v2207 = vrot.slane %v2066, 5
      %v2208 = vrot.slane %v2207, 4
      %v2209 = vrot.slane %v1035, 5
      %v2210 = vsel %vm2101, %v2208, %v2209
      %v2211 = vrot.slane %v2209, 4
      %v2212 = vrot.slane %v1059, 5
      %v2213 = vsel %vm2101, %v2211, %v2212
      %s2214 = scalar_lea.vmem %s3, 64
      %v2215 = vld [vmem:[%s2214] sm:$0xf]
      %v2216 = vld [vmem:[%s2214 + $0x4] sm:$0xf]
      %v2217 = vld [vmem:[%s2214 + $0x8] sm:$0xf]
      %v2218 = vld [vmem:[%s2214 + $0xc] sm:$0xf]
      %v2219 = vld [vmem:[%s2214 + $0x10] sm:$0xf]
      %v2220 = vld [vmem:[%s2214 + $0x14] sm:$0xf]
      %v2221 = vld [vmem:[%s2214 + $0x18] sm:$0xf]
      %v2222 = vld [vmem:[%s2214 + $0x1c] sm:$0xf]
      %v2223 = vunpack.c.l.b16 %v2105
      %v2224 = vunpack.c.l.b16 %v2108
      %v2225 = vunpack.c.l.b16 %v2112
      %v2226 = vunpack.c.l.b16 %v2115
      %v2227 = vunpack.c.l.b16 %v2119
      %v2228 = vunpack.c.l.b16 %v2122
      %v2229 = vunpack.c.l.b16 %v2126
      %v2230 = vunpack.c.l.b16 %v2129
      %v2231 = vunpack.c.l.b16 %v2133
      %v2232 = vunpack.c.l.b16 %v2136
      %v2233 = vunpack.c.l.b16 %v2140
      %v2234 = vunpack.c.l.b16 %v2143
      %v2235 = vunpack.c.l.b16 %v2147
      %v2236 = vunpack.c.l.b16 %v2150
      %v2237 = vunpack.c.l.b16 %v2154
      %v2238 = vunpack.c.l.b16 %v2157
      %v2239 = vunpack.c.l.b16 %v2161
      %v2240 = vunpack.c.l.b16 %v2164
      %v2241 = vunpack.c.l.b16 %v2168
      %v2242 = vunpack.c.l.b16 %v2171
      %v2243 = vunpack.c.l.b16 %v2175
      %v2244 = vunpack.c.l.b16 %v2178
      %v2245 = vunpack.c.l.b16 %v2182
      %v2246 = vunpack.c.l.b16 %v2185
      %v2247 = vunpack.c.l.b16 %v2189
      %v2248 = vunpack.c.l.b16 %v2192
      %v2249 = vunpack.c.l.b16 %v2196
      %v2250 = vunpack.c.l.b16 %v2199
      %v2251 = vunpack.c.l.b16 %v2203
      %v2252 = vunpack.c.l.b16 %v2206
      %v2253 = vunpack.c.l.b16 %v2210
      %v2254 = vunpack.c.l.b16 %v2213
      %v2255 = vpack.c.b16 %v2224, %v2223
      %v2256 = vpack.c.b16 %v2226, %v2225
      %v2257 = vpack.c.b16 %v2228, %v2227
      %v2258 = vpack.c.b16 %v2230, %v2229
      %v2259 = vpack.c.b16 %v2232, %v2231
      %v2260 = vpack.c.b16 %v2234, %v2233
      %v2261 = vpack.c.b16 %v2236, %v2235
      %v2262 = vpack.c.b16 %v2238, %v2237
      %v2263 = vpack.c.b16 %v2240, %v2239
      %v2264 = vpack.c.b16 %v2242, %v2241
      %v2265 = vpack.c.b16 %v2244, %v2243
      %v2266 = vpack.c.b16 %v2246, %v2245
      %v2267 = vpack.c.b16 %v2248, %v2247
      %v2268 = vpack.c.b16 %v2250, %v2249
      %v2269 = vpack.c.b16 %v2252, %v2251
      %v2270 = vpack.c.b16 %v2254, %v2253
      %v2279 = vunpack.c.l.b16 %v2215
      %v2280 = vunpack.c.l.b16 %v2216
      %v2281 = vunpack.c.l.b16 %v2217
      %v2282 = vunpack.c.l.b16 %v2218
      %v2283 = vunpack.c.l.b16 %v2219
      %v2284 = vunpack.c.l.b16 %v2220
      %v2285 = vunpack.c.l.b16 %v2221
      %v2286 = vunpack.c.l.b16 %v2222
      %v2287 = vpack.c.b16 %v2280, %v2279
      %v2288 = vpack.c.b16 %v2282, %v2281
      %v2289 = vpack.c.b16 %v2284, %v2283
      %v2290 = vpack.c.b16 %v2286, %v2285
      %v2296 = vsel %vm1528, %v2255, 0
      %v2299 = vsel %vm1528, %v2256, 0
      %v2302 = vsel %vm1528, %v2257, 0
      %v2305 = vsel %vm1528, %v2258, 0
      %v2308 = vsel %vm1528, %v2259, 0
      %v2311 = vsel %vm1528, %v2260, 0
      %v2314 = vsel %vm1528, %v2261, 0
      %v2317 = vsel %vm1528, %v2262, 0
      %v2320 = vsel %vm1528, %v2263, 0
      %v2323 = vsel %vm1528, %v2264, 0
      %v2326 = vsel %vm1528, %v2265, 0
      %v2329 = vsel %vm1528, %v2266, 0
      %v2332 = vsel %vm1528, %v2267, 0
      %v2335 = vsel %vm1528, %v2268, 0
      %v2338 = vsel %vm1528, %v2269, 0
      %v2341 = vsel %vm1528, %v2270, 0
      %2343 = vmatprep.subr.bf16.mxu0 0
      %2344 = vmatpush1.bf16.msra.mxu0 %v2287
      %2345 = vmatprep.subr.bf16.mxu0 0
      %2346 = vmatpush1.bf16.msra.mxu0 %v2288
      %2347 = vmatprep.subr.bf16.mxu0 0
      %2348 = vmatpush1.bf16.msra.mxu0 %v2289
      %2349 = vmatprep.subr.bf16.mxu0 0
      %2350 = vmatpush1.bf16.msra.mxu0 %v2290
      %2351 = vmatprep.subr.bf16.mxu0 0
      %2352 = vmatpush1.bf16.msra.mxu0 0
      %2353 = vmatprep.subr.bf16.mxu0 0
      %2354 = vmatpush1.bf16.msra.mxu0 0
      %2355 = vmatprep.subr.bf16.mxu0 0
      %2356 = vmatpush1.bf16.msra.mxu0 0
      %2357 = vmatprep.subr.bf16.mxu0 0
      %2358 = vmatpush1.bf16.msra.mxu0 0
      %2359 = vmatprep.subr.bf16.mxu0 0
      %2360 = vmatpush1.bf16.msra.mxu0 0
      %2361 = vmatprep.subr.bf16.mxu0 0
      %2362 = vmatpush1.bf16.msra.mxu0 0
      %2363 = vmatprep.subr.bf16.mxu0 0
      %2364 = vmatpush1.bf16.msra.mxu0 0
      %2365 = vmatprep.subr.bf16.mxu0 0
      %2366 = vmatpush1.bf16.msra.mxu0 0
      %2367 = vmatprep.subr.bf16.mxu0 0
      %2368 = vmatpush1.bf16.msra.mxu0 0
      %2369 = vmatprep.subr.bf16.mxu0 0
      %2370 = vmatpush1.bf16.msra.mxu0 0
      %2371 = vmatprep.subr.bf16.mxu0 0
      %2372 = vmatpush1.bf16.msra.mxu0 0
      %2373 = vmatprep.subr.bf16.mxu0 0
      %2374 = vmatpush1.bf16.msra.mxu0 0
      %2375 = vmatprep.mubr.bf16.mxu0 0
      %2376 = vmatmul.mubr.bf16.gmra.mrb[0].mxu0 %v2296
      %v2377 = vpop.f32.mrb[0].mxu0
      %v2378 = vadd.f32 0.0, %v2377
      %v2379 = vpop.f32.mrb[0].mxu0
      %v2380 = vpop.f32.mrb[0].mxu0
      %v2381 = vadd.f32 0.0, %v2380
      %v2382 = vpop.f32.mrb[0].mxu0
      %2383 = vmatprep.mubr.bf16.mxu0 0
      %2384 = vmatmul.mubr.bf16.gmra.mrb[0].mxu0 %v2299
      %v2385 = vpop.f32.mrb[0].mxu0
      %v2386 = vadd.f32 0.0, %v2385
      %v2387 = vpop.f32.mrb[0].mxu0
      %v2388 = vpop.f32.mrb[0].mxu0
      %v2389 = vadd.f32 0.0, %v2388
      %v2390 = vpop.f32.mrb[0].mxu0
      %2391 = vmatprep.mubr.bf16.mxu0 0
      %2392 = vmatmul.mubr.bf16.gmra.mrb[0].mxu0 %v2302
      %v2393 = vpop.f32.mrb[0].mxu0
      %v2394 = vadd.f32 0.0, %v2393
      %v2395 = vpop.f32.mrb[0].mxu0
      %v2396 = vpop.f32.mrb[0].mxu0
      %v2397 = vadd.f32 0.0, %v2396
      %v2398 = vpop.f32.mrb[0].mxu0
      %2399 = vmatprep.mubr.bf16.mxu0 0
      %2400 = vmatmul.mubr.bf16.gmra.mrb[0].mxu0 %v2305
      %v2401 = vpop.f32.mrb[0].mxu0
      %v2402 = vadd.f32 0.0, %v2401
      %v2403 = vpop.f32.mrb[0].mxu0
      %v2404 = vpop.f32.mrb[0].mxu0
      %v2405 = vadd.f32 0.0, %v2404
      %v2406 = vpop.f32.mrb[0].mxu0
      %2407 = vmatprep.mubr.bf16.mxu0 0
      %2408 = vmatmul.mubr.bf16.gmra.mrb[0].mxu0 %v2308
      %v2409 = vpop.f32.mrb[0].mxu0
      %v2410 = vadd.f32 0.0, %v2409
      %v2411 = vpop.f32.mrb[0].mxu0
      %v2412 = vpop.f32.mrb[0].mxu0
      %v2413 = vadd.f32 0.0, %v2412
      %v2414 = vpop.f32.mrb[0].mxu0
      %2415 = vmatprep.mubr.bf16.mxu0 0
      %2416 = vmatmul.mubr.bf16.gmra.mrb[0].mxu0 %v2311
      %v2417 = vpop.f32.mrb[0].mxu0
      %v2418 = vadd.f32 0.0, %v2417
      %v2419 = vpop.f32.mrb[0].mxu0
      %v2420 = vpop.f32.mrb[0].mxu0
      %v2421 = vadd.f32 0.0, %v2420
      %v2422 = vpop.f32.mrb[0].mxu0
      %2423 = vmatprep.mubr.bf16.mxu0 0
      %2424 = vmatmul.mubr.bf16.gmra.mrb[0].mxu0 %v2314
      %v2425 = vpop.f32.mrb[0].mxu0
      %v2426 = vadd.f32 0.0, %v2425
      %v2427 = vpop.f32.mrb[0].mxu0
      %v2428 = vpop.f32.mrb[0].mxu0
      %v2429 = vadd.f32 0.0, %v2428
      %v2430 = vpop.f32.mrb[0].mxu0
      %2431 = vmatprep.mubr.bf16.mxu0 0
      %2432 = vmatmul.mubr.bf16.gmra.mrb[0].mxu0 %v2317
      %v2433 = vpop.f32.mrb[0].mxu0
      %v2434 = vadd.f32 0.0, %v2433
      %v2435 = vpop.f32.mrb[0].mxu0
      %v2436 = vpop.f32.mrb[0].mxu0
      %v2437 = vadd.f32 0.0, %v2436
      %v2438 = vpop.f32.mrb[0].mxu0
      %2439 = vmatprep.mubr.bf16.mxu0 0
      %2440 = vmatmul.mubr.bf16.gmra.mrb[0].mxu0 %v2320
      %v2441 = vpop.f32.mrb[0].mxu0
      %v2442 = vadd.f32 0.0, %v2441
      %v2443 = vpop.f32.mrb[0].mxu0
      %v2444 = vpop.f32.mrb[0].mxu0
      %v2445 = vadd.f32 0.0, %v2444
      %v2446 = vpop.f32.mrb[0].mxu0
      %2447 = vmatprep.mubr.bf16.mxu0 0
      %2448 = vmatmul.mubr.bf16.gmra.mrb[0].mxu0 %v2323
      %v2449 = vpop.f32.mrb[0].mxu0
      %v2450 = vadd.f32 0.0, %v2449
      %v2451 = vpop.f32.mrb[0].mxu0
      %v2452 = vpop.f32.mrb[0].mxu0
      %v2453 = vadd.f32 0.0, %v2452
      %v2454 = vpop.f32.mrb[0].mxu0
      %2455 = vmatprep.mubr.bf16.mxu0 0
      %2456 = vmatmul.mubr.bf16.gmra.mrb[0].mxu0 %v2326
      %v2457 = vpop.f32.mrb[0].mxu0
      %v2458 = vadd.f32 0.0, %v2457
      %v2459 = vpop.f32.mrb[0].mxu0
      %v2460 = vpop.f32.mrb[0].mxu0
      %v2461 = vadd.f32 0.0, %v2460
      %v2462 = vpop.f32.mrb[0].mxu0
      %2463 = vmatprep.mubr.bf16.mxu0 0
      %2464 = vmatmul.mubr.bf16.gmra.mrb[0].mxu0 %v2329
      %v2465 = vpop.f32.mrb[0].mxu0
      %v2466 = vadd.f32 0.0, %v2465
      %v2467 = vpop.f32.mrb[0].mxu0
      %v2468 = vpop.f32.mrb[0].mxu0
      %v2469 = vadd.f32 0.0, %v2468
      %v2470 = vpop.f32.mrb[0].mxu0
      %2471 = vmatprep.mubr.bf16.mxu0 0
      %2472 = vmatmul.mubr.bf16.gmra.mrb[0].mxu0 %v2332
      %v2473 = vpop.f32.mrb[0].mxu0
      %v2474 = vadd.f32 0.0, %v2473
      %v2475 = vpop.f32.mrb[0].mxu0
      %v2476 = vpop.f32.mrb[0].mxu0
      %v2477 = vadd.f32 0.0, %v2476
      %v2478 = vpop.f32.mrb[0].mxu0
      %2479 = vmatprep.mubr.bf16.mxu0 0
      %2480 = vmatmul.mubr.bf16.gmra.mrb[0].mxu0 %v2335
      %v2481 = vpop.f32.mrb[0].mxu0
      %v2482 = vadd.f32 0.0, %v2481
      %v2483 = vpop.f32.mrb[0].mxu0
      %v2484 = vpop.f32.mrb[0].mxu0
      %v2485 = vadd.f32 0.0, %v2484
      %v2486 = vpop.f32.mrb[0].mxu0
      %2487 = vmatprep.mubr.bf16.mxu0 0
      %2488 = vmatmul.mubr.bf16.gmra.mrb[0].mxu0 %v2338
      %v2489 = vpop.f32.mrb[0].mxu0
      %v2490 = vadd.f32 0.0, %v2489
      %v2491 = vpop.f32.mrb[0].mxu0
      %v2492 = vpop.f32.mrb[0].mxu0
      %v2493 = vadd.f32 0.0, %v2492
      %v2494 = vpop.f32.mrb[0].mxu0
      %2495 = vmatprep.mubr.bf16.mxu0 0
      %2496 = vmatmul.mubr.bf16.gmra.mrb[0].mxu0 %v2341
      %v2497 = vpop.f32.mrb[0].mxu0
      %v2498 = vadd.f32 0.0, %v2497
      %v2499 = vpop.f32.mrb[0].mxu0
      %v2500 = vpop.f32.mrb[0].mxu0
      %v2501 = vadd.f32 0.0, %v2500
      %v2502 = vpop.f32.mrb[0].mxu0
      %2503 = vdwg.mxu0
      %v2504 = vadd.f32 %v1925, %v2378
      %v2505 = vadd.f32 %v1928, %v2381
      %v2506 = vadd.f32 %v1933, %v2386
      %v2507 = vadd.f32 %v1936, %v2389
      %v2508 = vadd.f32 %v1941, %v2394
      %v2509 = vadd.f32 %v1944, %v2397
      %v2510 = vadd.f32 %v1949, %v2402
      %v2511 = vadd.f32 %v1952, %v2405
      %v2512 = vadd.f32 %v1957, %v2410
      %v2513 = vadd.f32 %v1960, %v2413
      %v2514 = vadd.f32 %v1965, %v2418
      %v2515 = vadd.f32 %v1968, %v2421
      %v2516 = vadd.f32 %v1973, %v2426
      %v2517 = vadd.f32 %v1976, %v2429
      %v2518 = vadd.f32 %v1981, %v2434
      %v2519 = vadd.f32 %v1984, %v2437
      %v2520 = vadd.f32 %v1989, %v2442
      %v2521 = vadd.f32 %v1992, %v2445
      %v2522 = vadd.f32 %v1997, %v2450
      %v2523 = vadd.f32 %v2000, %v2453
      %v2524 = vadd.f32 %v2005, %v2458
      %v2525 = vadd.f32 %v2008, %v2461
      %v2526 = vadd.f32 %v2013, %v2466
      %v2527 = vadd.f32 %v2016, %v2469
      %v2528 = vadd.f32 %v2021, %v2474
      %v2529 = vadd.f32 %v2024, %v2477
      %v2530 = vadd.f32 %v2029, %v2482
      %v2531 = vadd.f32 %v2032, %v2485
      %v2532 = vadd.f32 %v2037, %v2490
      %v2533 = vadd.f32 %v2040, %v2493
      %v2534 = vadd.f32 %v2045, %v2498
      %v2535 = vadd.f32 %v2048, %v2501
      %v2536 = vld [vmem:[%s886] sm:$0xf]
      %v2537 = vld [vmem:[%s886 + $0x4] sm:$0xf]
      %v2538 = vld [vmem:[%s886 + $0xc] sm:$0xf]
      %v2539 = vld [vmem:[%s886 + $0x10] sm:$0xf]
      %v2540 = vld [vmem:[%s886 + $0x18] sm:$0xf]
      %v2541 = vld [vmem:[%s886 + $0x1c] sm:$0xf]
      %v2542 = vld [vmem:[%s886 + $0x24] sm:$0xf]
      %v2543 = vld [vmem:[%s886 + $0x28] sm:$0xf]
      %v2544 = vld [vmem:[%s886 + $0x30] sm:$0xf]
      %v2545 = vld [vmem:[%s886 + $0x34] sm:$0xf]
      %v2546 = vld [vmem:[%s886 + $0x3c] sm:$0xf]
      %v2547 = vld [vmem:[%s886 + $0x40] sm:$0xf]
      %v2548 = vld [vmem:[%s886 + $0x48] sm:$0xf]
      %v2549 = vld [vmem:[%s886 + $0x4c] sm:$0xf]
      %v2550 = vld [vmem:[%s886 + $0x54] sm:$0xf]
      %v2551 = vld [vmem:[%s886 + $0x58] sm:$0xf]
      %v2552 = vld [vmem:[%s886 + $0x60] sm:$0xf]
      %v2553 = vld [vmem:[%s886 + $0x64] sm:$0xf]
      %v2554 = vld [vmem:[%s886 + $0x6c] sm:$0xf]
      %v2555 = vld [vmem:[%s886 + $0x70] sm:$0xf]
      %v2556 = vld [vmem:[%s886 + $0x78] sm:$0xf]
      %v2557 = vld [vmem:[%s886 + $0x7c] sm:$0xf]
      %v2558 = vld [vmem:[%s886 + $0x84] sm:$0xf]
      %v2559 = vld [vmem:[%s886 + $0x88] sm:$0xf]
      %v2560 = vld [vmem:[%s886 + $0x90] sm:$0xf]
      %v2561 = vld [vmem:[%s886 + $0x94] sm:$0xf]
      %v2562 = vld [vmem:[%s886 + $0x9c] sm:$0xf]
      %v2563 = vld [vmem:[%s886 + $0xa0] sm:$0xf]
      %v2564 = vld [vmem:[%s886 + $0xa8] sm:$0xf]
      %v2565 = vld [vmem:[%s886 + $0xac] sm:$0xf]
      %v2566 = vld [vmem:[%s886 + $0xb4] sm:$0xf]
      %v2567 = vld [vmem:[%s886 + $0xb8] sm:$0xf]
      %s2568 = scalar_lea.vmem %s3, 96
      %v2569 = vld [vmem:[%s2568] sm:$0xf]
      %v2570 = vld [vmem:[%s2568 + $0x4] sm:$0xf]
      %v2571 = vld [vmem:[%s2568 + $0x8] sm:$0xf]
      %v2572 = vld [vmem:[%s2568 + $0xc] sm:$0xf]
      %v2573 = vld [vmem:[%s2568 + $0x10] sm:$0xf]
      %v2574 = vld [vmem:[%s2568 + $0x14] sm:$0xf]
      %v2575 = vld [vmem:[%s2568 + $0x18] sm:$0xf]
      %v2576 = vld [vmem:[%s2568 + $0x1c] sm:$0xf]
      %v2609 = vunpack.c.l.b16 %v2536
      %v2610 = vunpack.c.l.b16 %v2537
      %v2611 = vunpack.c.l.b16 %v2538
      %v2612 = vunpack.c.l.b16 %v2539
      %v2613 = vunpack.c.l.b16 %v2540
      %v2614 = vunpack.c.l.b16 %v2541
      %v2615 = vunpack.c.l.b16 %v2542
      %v2616 = vunpack.c.l.b16 %v2543
      %v2617 = vunpack.c.l.b16 %v2544
      %v2618 = vunpack.c.l.b16 %v2545
      %v2619 = vunpack.c.l.b16 %v2546
      %v2620 = vunpack.c.l.b16 %v2547
      %v2621 = vunpack.c.l.b16 %v2548
      %v2622 = vunpack.c.l.b16 %v2549
      %v2623 = vunpack.c.l.b16 %v2550
      %v2624 = vunpack.c.l.b16 %v2551
      %v2625 = vunpack.c.l.b16 %v2552
      %v2626 = vunpack.c.l.b16 %v2553
      %v2627 = vunpack.c.l.b16 %v2554
      %v2628 = vunpack.c.l.b16 %v2555
      %v2629 = vunpack.c.l.b16 %v2556
      %v2630 = vunpack.c.l.b16 %v2557
      %v2631 = vunpack.c.l.b16 %v2558
      %v2632 = vunpack.c.l.b16 %v2559
      %v2633 = vunpack.c.l.b16 %v2560
      %v2634 = vunpack.c.l.b16 %v2561
      %v2635 = vunpack.c.l.b16 %v2562
      %v2636 = vunpack.c.l.b16 %v2563
      %v2637 = vunpack.c.l.b16 %v2564
      %v2638 = vunpack.c.l.b16 %v2565
      %v2639 = vunpack.c.l.b16 %v2566
      %v2640 = vunpack.c.l.b16 %v2567
      %v2641 = vpack.c.b16 %v2610, %v2609
      %v2642 = vpack.c.b16 %v2612, %v2611
      %v2643 = vpack.c.b16 %v2614, %v2613
      %v2644 = vpack.c.b16 %v2616, %v2615
      %v2645 = vpack.c.b16 %v2618, %v2617
      %v2646 = vpack.c.b16 %v2620, %v2619
      %v2647 = vpack.c.b16 %v2622, %v2621
      %v2648 = vpack.c.b16 %v2624, %v2623
      %v2649 = vpack.c.b16 %v2626, %v2625
      %v2650 = vpack.c.b16 %v2628, %v2627
      %v2651 = vpack.c.b16 %v2630, %v2629
      %v2652 = vpack.c.b16 %v2632, %v2631
      %v2653 = vpack.c.b16 %v2634, %v2633
      %v2654 = vpack.c.b16 %v2636, %v2635
      %v2655 = vpack.c.b16 %v2638, %v2637
      %v2656 = vpack.c.b16 %v2640, %v2639
      %v2665 = vunpack.c.l.b16 %v2569
      %v2666 = vunpack.c.l.b16 %v2570
      %v2667 = vunpack.c.l.b16 %v2571
      %v2668 = vunpack.c.l.b16 %v2572
      %v2669 = vunpack.c.l.b16 %v2573
      %v2670 = vunpack.c.l.b16 %v2574
      %v2671 = vunpack.c.l.b16 %v2575
      %v2672 = vunpack.c.l.b16 %v2576
      %v2673 = vpack.c.b16 %v2666, %v2665
      %v2674 = vpack.c.b16 %v2668, %v2667
      %v2675 = vpack.c.b16 %v2670, %v2669
      %v2676 = vpack.c.b16 %v2672, %v2671
      %v2682 = vsel %vm1528, %v2641, 0
      %v2685 = vsel %vm1528, %v2642, 0
      %v2688 = vsel %vm1528, %v2643, 0
      %v2691 = vsel %vm1528, %v2644, 0
      %v2694 = vsel %vm1528, %v2645, 0
      %v2697 = vsel %vm1528, %v2646, 0
      %v2700 = vsel %vm1528, %v2647, 0
      %v2703 = vsel %vm1528, %v2648, 0
      %v2706 = vsel %vm1528, %v2649, 0
      %v2709 = vsel %vm1528, %v2650, 0
      %v2712 = vsel %vm1528, %v2651, 0
      %v2715 = vsel %vm1528, %v2652, 0
      %v2718 = vsel %vm1528, %v2653, 0
      %v2721 = vsel %vm1528, %v2654, 0
      %v2724 = vsel %vm1528, %v2655, 0
      %v2727 = vsel %vm1528, %v2656, 0
      %2729 = vmatprep.subr.bf16.mxu0 0
      %2730 = vmatpush1.bf16.msra.mxu0 %v2673
      %2731 = vmatprep.subr.bf16.mxu0 0
      %2732 = vmatpush1.bf16.msra.mxu0 %v2674
      %2733 = vmatprep.subr.bf16.mxu0 0
      %2734 = vmatpush1.bf16.msra.mxu0 %v2675
      %2735 = vmatprep.subr.bf16.mxu0 0
      %2736 = vmatpush1.bf16.msra.mxu0 %v2676
      %2737 = vmatprep.subr.bf16.mxu0 0
      %2738 = vmatpush1.bf16.msra.mxu0 0
      %2739 = vmatprep.subr.bf16.mxu0 0
      %2740 = vmatpush1.bf16.msra.mxu0 0
      %2741 = vmatprep.subr.bf16.mxu0 0
      %2742 = vmatpush1.bf16.msra.mxu0 0
      %2743 = vmatprep.subr.bf16.mxu0 0
      %2744 = vmatpush1.bf16.msra.mxu0 0
      %2745 = vmatprep.subr.bf16.mxu0 0
      %2746 = vmatpush1.bf16.msra.mxu0 0
      %2747 = vmatprep.subr.bf16.mxu0 0
      %2748 = vmatpush1.bf16.msra.mxu0 0
      %2749 = vmatprep.subr.bf16.mxu0 0
      %2750 = vmatpush1.bf16.msra.mxu0 0
      %2751 = vmatprep.subr.bf16.mxu0 0
      %2752 = vmatpush1.bf16.msra.mxu0 0
      %2753 = vmatprep.subr.bf16.mxu0 0
      %2754 = vmatpush1.bf16.msra.mxu0 0
      %2755 = vmatprep.subr.bf16.mxu0 0
      %2756 = vmatpush1.bf16.msra.mxu0 0
      %2757 = vmatprep.subr.bf16.mxu0 0
      %2758 = vmatpush1.bf16.msra.mxu0 0
      %2759 = vmatprep.subr.bf16.mxu0 0
      %2760 = vmatpush1.bf16.msra.mxu0 0
      %2761 = vmatprep.mubr.bf16.mxu0 0
      %2762 = vmatmul.mubr.bf16.gmra.mrb[0].mxu0 %v2682
      %v2763 = vpop.f32.mrb[0].mxu0
      %v2764 = vadd.f32 0.0, %v2763
      %v2765 = vpop.f32.mrb[0].mxu0
      %v2766 = vpop.f32.mrb[0].mxu0
      %v2767 = vadd.f32 0.0, %v2766
      %v2768 = vpop.f32.mrb[0].mxu0
      %2769 = vmatprep.mubr.bf16.mxu0 0
      %2770 = vmatmul.mubr.bf16.gmra.mrb[0].mxu0 %v2685
      %v2771 = vpop.f32.mrb[0].mxu0
      %v2772 = vadd.f32 0.0, %v2771
      %v2773 = vpop.f32.mrb[0].mxu0
      %v2774 = vpop.f32.mrb[0].mxu0
      %v2775 = vadd.f32 0.0, %v2774
      %v2776 = vpop.f32.mrb[0].mxu0
      %2777 = vmatprep.mubr.bf16.mxu0 0
      %2778 = vmatmul.mubr.bf16.gmra.mrb[0].mxu0 %v2688
      %v2779 = vpop.f32.mrb[0].mxu0
      %v2780 = vadd.f32 0.0, %v2779
      %v2781 = vpop.f32.mrb[0].mxu0
      %v2782 = vpop.f32.mrb[0].mxu0
      %v2783 = vadd.f32 0.0, %v2782
      %v2784 = vpop.f32.mrb[0].mxu0
      %2785 = vmatprep.mubr.bf16.mxu0 0
      %2786 = vmatmul.mubr.bf16.gmra.mrb[0].mxu0 %v2691
      %v2787 = vpop.f32.mrb[0].mxu0
      %v2788 = vadd.f32 0.0, %v2787
      %v2789 = vpop.f32.mrb[0].mxu0
      %v2790 = vpop.f32.mrb[0].mxu0
      %v2791 = vadd.f32 0.0, %v2790
      %v2792 = vpop.f32.mrb[0].mxu0
      %2793 = vmatprep.mubr.bf16.mxu0 0
      %2794 = vmatmul.mubr.bf16.gmra.mrb[0].mxu0 %v2694
      %v2795 = vpop.f32.mrb[0].mxu0
      %v2796 = vadd.f32 0.0, %v2795
      %v2797 = vpop.f32.mrb[0].mxu0
      %v2798 = vpop.f32.mrb[0].mxu0
      %v2799 = vadd.f32 0.0, %v2798
      %v2800 = vpop.f32.mrb[0].mxu0
      %2801 = vmatprep.mubr.bf16.mxu0 0
      %2802 = vmatmul.mubr.bf16.gmra.mrb[0].mxu0 %v2697
      %v2803 = vpop.f32.mrb[0].mxu0
      %v2804 = vadd.f32 0.0, %v2803
      %v2805 = vpop.f32.mrb[0].mxu0
      %v2806 = vpop.f32.mrb[0].mxu0
      %v2807 = vadd.f32 0.0, %v2806
      %v2808 = vpop.f32.mrb[0].mxu0
      %2809 = vmatprep.mubr.bf16.mxu0 0
      %2810 = vmatmul.mubr.bf16.gmra.mrb[0].mxu0 %v2700
      %v2811 = vpop.f32.mrb[0].mxu0
      %v2812 = vadd.f32 0.0, %v2811
      %v2813 = vpop.f32.mrb[0].mxu0
      %v2814 = vpop.f32.mrb[0].mxu0
      %v2815 = vadd.f32 0.0, %v2814
      %v2816 = vpop.f32.mrb[0].mxu0
      %2817 = vmatprep.mubr.bf16.mxu0 0
      %2818 = vmatmul.mubr.bf16.gmra.mrb[0].mxu0 %v2703
      %v2819 = vpop.f32.mrb[0].mxu0
      %v2820 = vadd.f32 0.0, %v2819
      %v2821 = vpop.f32.mrb[0].mxu0
      %v2822 = vpop.f32.mrb[0].mxu0
      %v2823 = vadd.f32 0.0, %v2822
      %v2824 = vpop.f32.mrb[0].mxu0
      %2825 = vmatprep.mubr.bf16.mxu0 0
      %2826 = vmatmul.mubr.bf16.gmra.mrb[0].mxu0 %v2706
      %v2827 = vpop.f32.mrb[0].mxu0
      %v2828 = vadd.f32 0.0, %v2827
      %v2829 = vpop.f32.mrb[0].mxu0
      %v2830 = vpop.f32.mrb[0].mxu0
      %v2831 = vadd.f32 0.0, %v2830
      %v2832 = vpop.f32.mrb[0].mxu0
      %2833 = vmatprep.mubr.bf16.mxu0 0
      %2834 = vmatmul.mubr.bf16.gmra.mrb[0].mxu0 %v2709
      %v2835 = vpop.f32.mrb[0].mxu0
      %v2836 = vadd.f32 0.0, %v2835
      %v2837 = vpop.f32.mrb[0].mxu0
      %v2838 = vpop.f32.mrb[0].mxu0
      %v2839 = vadd.f32 0.0, %v2838
      %v2840 = vpop.f32.mrb[0].mxu0
      %2841 = vmatprep.mubr.bf16.mxu0 0
      %2842 = vmatmul.mubr.bf16.gmra.mrb[0].mxu0 %v2712
      %v2843 = vpop.f32.mrb[0].mxu0
      %v2844 = vadd.f32 0.0, %v2843
      %v2845 = vpop.f32.mrb[0].mxu0
      %v2846 = vpop.f32.mrb[0].mxu0
      %v2847 = vadd.f32 0.0, %v2846
      %v2848 = vpop.f32.mrb[0].mxu0
      %2849 = vmatprep.mubr.bf16.mxu0 0
      %2850 = vmatmul.mubr.bf16.gmra.mrb[0].mxu0 %v2715
      %v2851 = vpop.f32.mrb[0].mxu0
      %v2852 = vadd.f32 0.0, %v2851
      %v2853 = vpop.f32.mrb[0].mxu0
      %v2854 = vpop.f32.mrb[0].mxu0
      %v2855 = vadd.f32 0.0, %v2854
      %v2856 = vpop.f32.mrb[0].mxu0
      %2857 = vmatprep.mubr.bf16.mxu0 0
      %2858 = vmatmul.mubr.bf16.gmra.mrb[0].mxu0 %v2718
      %v2859 = vpop.f32.mrb[0].mxu0
      %v2860 = vadd.f32 0.0, %v2859
      %v2861 = vpop.f32.mrb[0].mxu0
      %v2862 = vpop.f32.mrb[0].mxu0
      %v2863 = vadd.f32 0.0, %v2862
      %v2864 = vpop.f32.mrb[0].mxu0
      %2865 = vmatprep.mubr.bf16.mxu0 0
      %2866 = vmatmul.mubr.bf16.gmra.mrb[0].mxu0 %v2721
      %v2867 = vpop.f32.mrb[0].mxu0
      %v2868 = vadd.f32 0.0, %v2867
      %v2869 = vpop.f32.mrb[0].mxu0
      %v2870 = vpop.f32.mrb[0].mxu0
      %v2871 = vadd.f32 0.0, %v2870
      %v2872 = vpop.f32.mrb[0].mxu0
      %2873 = vmatprep.mubr.bf16.mxu0 0
      %2874 = vmatmul.mubr.bf16.gmra.mrb[0].mxu0 %v2724
      %v2875 = vpop.f32.mrb[0].mxu0
      %v2876 = vadd.f32 0.0, %v2875
      %v2877 = vpop.f32.mrb[0].mxu0
      %v2878 = vpop.f32.mrb[0].mxu0
      %v2879 = vadd.f32 0.0, %v2878
      %v2880 = vpop.f32.mrb[0].mxu0
      %2881 = vmatprep.mubr.bf16.mxu0 0
      %2882 = vmatmul.mubr.bf16.gmra.mrb[0].mxu0 %v2727
      %v2883 = vpop.f32.mrb[0].mxu0
      %v2884 = vadd.f32 0.0, %v2883
      %v2885 = vpop.f32.mrb[0].mxu0
      %v2886 = vpop.f32.mrb[0].mxu0
      %v2887 = vadd.f32 0.0, %v2886
      %v2888 = vpop.f32.mrb[0].mxu0
      %2889 = vdwg.mxu0
      %v2890 = vadd.f32 %v2504, %v2764
      %v2891 = vadd.f32 %v2505, %v2767
      %v2892 = vadd.f32 %v2506, %v2772
      %v2893 = vadd.f32 %v2507, %v2775
      %v2894 = vadd.f32 %v2508, %v2780
      %v2895 = vadd.f32 %v2509, %v2783
      %v2896 = vadd.f32 %v2510, %v2788
      %v2897 = vadd.f32 %v2511, %v2791
      %v2898 = vadd.f32 %v2512, %v2796
      %v2899 = vadd.f32 %v2513, %v2799
      %v2900 = vadd.f32 %v2514, %v2804
      %v2901 = vadd.f32 %v2515, %v2807
      %v2902 = vadd.f32 %v2516, %v2812
      %v2903 = vadd.f32 %v2517, %v2815
      %v2904 = vadd.f32 %v2518, %v2820
      %v2905 = vadd.f32 %v2519, %v2823
      %v2906 = vadd.f32 %v2520, %v2828
      %v2907 = vadd.f32 %v2521, %v2831
      %v2908 = vadd.f32 %v2522, %v2836
      %v2909 = vadd.f32 %v2523, %v2839
      %v2910 = vadd.f32 %v2524, %v2844
      %v2911 = vadd.f32 %v2525, %v2847
      %v2912 = vadd.f32 %v2526, %v2852
      %v2913 = vadd.f32 %v2527, %v2855
      %v2914 = vadd.f32 %v2528, %v2860
      %v2915 = vadd.f32 %v2529, %v2863
      %v2916 = vadd.f32 %v2530, %v2868
      %v2917 = vadd.f32 %v2531, %v2871
      %v2918 = vadd.f32 %v2532, %v2876
      %v2919 = vadd.f32 %v2533, %v2879
      %v2920 = vadd.f32 %v2534, %v2884
      %v2921 = vadd.f32 %v2535, %v2887
      %v2922 = vld [vmem:[%s886] sm:$0xf]
      %v2923 = vld [vmem:[%s886 + $0x4] sm:$0xf]
      %v2924 = vld [vmem:[%s886 + $0x8] sm:$0x1]
      %v2925 = vld [vmem:[%s886 + $0xc] sm:$0xf]
      %v2926 = vld [vmem:[%s886 + $0x10] sm:$0xf]
      %v2927 = vld [vmem:[%s886 + $0x14] sm:$0x1]
      %v2928 = vld [vmem:[%s886 + $0x18] sm:$0xf]
      %v2929 = vld [vmem:[%s886 + $0x1c] sm:$0xf]
      %v2930 = vld [vmem:[%s886 + $0x20] sm:$0x1]
      %v2931 = vld [vmem:[%s886 + $0x24] sm:$0xf]
      %v2932 = vld [vmem:[%s886 + $0x28] sm:$0xf]
      %v2933 = vld [vmem:[%s886 + $0x2c] sm:$0x1]
      %v2934 = vld [vmem:[%s886 + $0x30] sm:$0xf]
      %v2935 = vld [vmem:[%s886 + $0x34] sm:$0xf]
      %v2936 = vld [vmem:[%s886 + $0x38] sm:$0x1]
      %v2937 = vld [vmem:[%s886 + $0x3c] sm:$0xf]
      %v2938 = vld [vmem:[%s886 + $0x40] sm:$0xf]
      %v2939 = vld [vmem:[%s886 + $0x44] sm:$0x1]
      %v2940 = vld [vmem:[%s886 + $0x48] sm:$0xf]
      %v2941 = vld [vmem:[%s886 + $0x4c] sm:$0xf]
      %v2942 = vld [vmem:[%s886 + $0x50] sm:$0x1]
      %v2943 = vld [vmem:[%s886 + $0x54] sm:$0xf]
      %v2944 = vld [vmem:[%s886 + $0x58] sm:$0xf]
      %v2945 = vld [vmem:[%s886 + $0x5c] sm:$0x1]
      %v2946 = vld [vmem:[%s886 + $0x60] sm:$0xf]
      %v2947 = vld [vmem:[%s886 + $0x64] sm:$0xf]
      %v2948 = vld [vmem:[%s886 + $0x68] sm:$0x1]
      %v2949 = vld [vmem:[%s886 + $0x6c] sm:$0xf]
      %v2950 = vld [vmem:[%s886 + $0x70] sm:$0xf]
      %v2951 = vld [vmem:[%s886 + $0x74] sm:$0x1]
      %v2952 = vld [vmem:[%s886 + $0x78] sm:$0xf]
      %v2953 = vld [vmem:[%s886 + $0x7c] sm:$0xf]
      %v2954 = vld [vmem:[%s886 + $0x80] sm:$0x1]
      %v2955 = vld [vmem:[%s886 + $0x84] sm:$0xf]
      %v2956 = vld [vmem:[%s886 + $0x88] sm:$0xf]
      %v2957 = vld [vmem:[%s886 + $0x8c] sm:$0x1]
      %v2958 = vld [vmem:[%s886 + $0x90] sm:$0xf]
      %v2959 = vld [vmem:[%s886 + $0x94] sm:$0xf]
      %v2960 = vld [vmem:[%s886 + $0x98] sm:$0x1]
      %v2961 = vld [vmem:[%s886 + $0x9c] sm:$0xf]
      %v2962 = vld [vmem:[%s886 + $0xa0] sm:$0xf]
      %v2963 = vld [vmem:[%s886 + $0xa4] sm:$0x1]
      %v2964 = vld [vmem:[%s886 + $0xa8] sm:$0xf]
      %v2965 = vld [vmem:[%s886 + $0xac] sm:$0xf]
      %v2966 = vld [vmem:[%s886 + $0xb0] sm:$0x1]
      %v2967 = vld [vmem:[%s886 + $0xb4] sm:$0xf]
      %v2968 = vld [vmem:[%s886 + $0xb8] sm:$0xf]
      %v2969 = vld [vmem:[%s886 + $0xbc] sm:$0x1]
      %v2971 = vshrl.u32 %v2922, 16
      %v2973 = vrot.slane %v2971, 4
      %v2974 = vshll.u32 %v2922, 16
      %v2976 = vrot.slane %v2974, 5
      %v2977 = vor.u32 %v2973, %v2976
      %v2978 = vrot.slane %v2977, 4
      %v2980 = vshll.u32 %v2923, 16
      %v2982 = vrot.slane %v2980, 5
      %v2983 = vsel %vm1062, %v2978, %v2982
      %v2984 = vshrl.u32 %v2923, 16
      %v2986 = vrot.slane %v2984, 4
      %v2987 = vor.u32 %v2986, %v2982
      %v2988 = vrot.slane %v2987, 4
      %v2990 = vshll.u32 %v2924, 16
      %v2992 = vrot.slane %v2990, 5
      %v2993 = vsel %vm1062, %v2988, %v2992
      %v2995 = vshrl.u32 %v2925, 16
      %v2997 = vrot.slane %v2995, 4
      %v2998 = vshll.u32 %v2925, 16
      %v3000 = vrot.slane %v2998, 5
      %v3001 = vor.u32 %v2997, %v3000
      %v3002 = vrot.slane %v3001, 4
      %v3004 = vshll.u32 %v2926, 16
      %v3006 = vrot.slane %v3004, 5
      %v3007 = vsel %vm1062, %v3002, %v3006
      %v3008 = vshrl.u32 %v2926, 16
      %v3010 = vrot.slane %v3008, 4
      %v3011 = vor.u32 %v3010, %v3006
      %v3012 = vrot.slane %v3011, 4
      %v3014 = vshll.u32 %v2927, 16
      %v3016 = vrot.slane %v3014, 5
      %v3017 = vsel %vm1062, %v3012, %v3016
      %v3019 = vshrl.u32 %v2928, 16
      %v3021 = vrot.slane %v3019, 4
      %v3022 = vshll.u32 %v2928, 16
      %v3024 = vrot.slane %v3022, 5
      %v3025 = vor.u32 %v3021, %v3024
      %v3026 = vrot.slane %v3025, 4
      %v3028 = vshll.u32 %v2929, 16
      %v3030 = vrot.slane %v3028, 5
      %v3031 = vsel %vm1062, %v3026, %v3030
      %v3032 = vshrl.u32 %v2929, 16
      %v3034 = vrot.slane %v3032, 4
      %v3035 = vor.u32 %v3034, %v3030
      %v3036 = vrot.slane %v3035, 4
      %v3038 = vshll.u32 %v2930, 16
      %v3040 = vrot.slane %v3038, 5
      %v3041 = vsel %vm1062, %v3036, %v3040
      %v3043 = vshrl.u32 %v2931, 16
      %v3045 = vrot.slane %v3043, 4
      %v3046 = vshll.u32 %v2931, 16
      %v3048 = vrot.slane %v3046, 5
      %v3049 = vor.u32 %v3045, %v3048
      %v3050 = vrot.slane %v3049, 4
      %v3052 = vshll.u32 %v2932, 16
      %v3054 = vrot.slane %v3052, 5
      %v3055 = vsel %vm1062, %v3050, %v3054
      %v3056 = vshrl.u32 %v2932, 16
      %v3058 = vrot.slane %v3056, 4
      %v3059 = vor.u32 %v3058, %v3054
      %v3060 = vrot.slane %v3059, 4
      %v3062 = vshll.u32 %v2933, 16
      %v3064 = vrot.slane %v3062, 5
      %v3065 = vsel %vm1062, %v3060, %v3064
      %v3067 = vshrl.u32 %v2934, 16
      %v3069 = vrot.slane %v3067, 4
      %v3070 = vshll.u32 %v2934, 16
      %v3072 = vrot.slane %v3070, 5
      %v3073 = vor.u32 %v3069, %v3072
      %v3074 = vrot.slane %v3073, 4
      %v3076 = vshll.u32 %v2935, 16
      %v3078 = vrot.slane %v3076, 5
      %v3079 = vsel %vm1062, %v3074, %v3078
      %v3080 = vshrl.u32 %v2935, 16
      %v3082 = vrot.slane %v3080, 4
      %v3083 = vor.u32 %v3082, %v3078
      %v3084 = vrot.slane %v3083, 4
      %v3086 = vshll.u32 %v2936, 16
      %v3088 = vrot.slane %v3086, 5
      %v3089 = vsel %vm1062, %v3084, %v3088
      %v3091 = vshrl.u32 %v2937, 16
      %v3093 = vrot.slane %v3091, 4
      %v3094 = vshll.u32 %v2937, 16
      %v3096 = vrot.slane %v3094, 5
      %v3097 = vor.u32 %v3093, %v3096
      %v3098 = vrot.slane %v3097, 4
      %v3100 = vshll.u32 %v2938, 16
      %v3102 = vrot.slane %v3100, 5
      %v3103 = vsel %vm1062, %v3098, %v3102
      %v3104 = vshrl.u32 %v2938, 16
      %v3106 = vrot.slane %v3104, 4
      %v3107 = vor.u32 %v3106, %v3102
      %v3108 = vrot.slane %v3107, 4
      %v3110 = vshll.u32 %v2939, 16
      %v3112 = vrot.slane %v3110, 5
      %v3113 = vsel %vm1062, %v3108, %v3112
      %v3115 = vshrl.u32 %v2940, 16
      %v3117 = vrot.slane %v3115, 4
      %v3118 = vshll.u32 %v2940, 16
      %v3120 = vrot.slane %v3118, 5
      %v3121 = vor.u32 %v3117, %v3120
      %v3122 = vrot.slane %v3121, 4
      %v3124 = vshll.u32 %v2941, 16
      %v3126 = vrot.slane %v3124, 5
      %v3127 = vsel %vm1062, %v3122, %v3126
      %v3128 = vshrl.u32 %v2941, 16
      %v3130 = vrot.slane %v3128, 4
      %v3131 = vor.u32 %v3130, %v3126
      %v3132 = vrot.slane %v3131, 4
      %v3134 = vshll.u32 %v2942, 16
      %v3136 = vrot.slane %v3134, 5
      %v3137 = vsel %vm1062, %v3132, %v3136
      %v3139 = vshrl.u32 %v2943, 16
      %v3141 = vrot.slane %v3139, 4
      %v3142 = vshll.u32 %v2943, 16
      %v3144 = vrot.slane %v3142, 5
      %v3145 = vor.u32 %v3141, %v3144
      %v3146 = vrot.slane %v3145, 4
      %v3148 = vshll.u32 %v2944, 16
      %v3150 = vrot.slane %v3148, 5
      %v3151 = vsel %vm1062, %v3146, %v3150
      %v3152 = vshrl.u32 %v2944, 16
      %v3154 = vrot.slane %v3152, 4
      %v3155 = vor.u32 %v3154, %v3150
      %v3156 = vrot.slane %v3155, 4
      %v3158 = vshll.u32 %v2945, 16
      %v3160 = vrot.slane %v3158, 5
      %v3161 = vsel %vm1062, %v3156, %v3160
      %v3163 = vshrl.u32 %v2946, 16
      %v3165 = vrot.slane %v3163, 4
      %v3166 = vshll.u32 %v2946, 16
      %v3168 = vrot.slane %v3166, 5
      %v3169 = vor.u32 %v3165, %v3168
      %v3170 = vrot.slane %v3169, 4
      %v3172 = vshll.u32 %v2947, 16
      %v3174 = vrot.slane %v3172, 5
      %v3175 = vsel %vm1062, %v3170, %v3174
      %v3176 = vshrl.u32 %v2947, 16
      %v3178 = vrot.slane %v3176, 4
      %v3179 = vor.u32 %v3178, %v3174
      %v3180 = vrot.slane %v3179, 4
      %v3182 = vshll.u32 %v2948, 16
      %v3184 = vrot.slane %v3182, 5
      %v3185 = vsel %vm1062, %v3180, %v3184
      %v3187 = vshrl.u32 %v2949, 16
      %v3189 = vrot.slane %v3187, 4
      %v3190 = vshll.u32 %v2949, 16
      %v3192 = vrot.slane %v3190, 5
      %v3193 = vor.u32 %v3189, %v3192
      %v3194 = vrot.slane %v3193, 4
      %v3196 = vshll.u32 %v2950, 16
      %v3198 = vrot.slane %v3196, 5
      %v3199 = vsel %vm1062, %v3194, %v3198
      %v3200 = vshrl.u32 %v2950, 16
      %v3202 = vrot.slane %v3200, 4
      %v3203 = vor.u32 %v3202, %v3198
      %v3204 = vrot.slane %v3203, 4
      %v3206 = vshll.u32 %v2951, 16
      %v3208 = vrot.slane %v3206, 5
      %v3209 = vsel %vm1062, %v3204, %v3208
      %v3211 = vshrl.u32 %v2952, 16
      %v3213 = vrot.slane %v3211, 4
      %v3214 = vshll.u32 %v2952, 16
      %v3216 = vrot.slane %v3214, 5
      %v3217 = vor.u32 %v3213, %v3216
      %v3218 = vrot.slane %v3217, 4
      %v3220 = vshll.u32 %v2953, 16
      %v3222 = vrot.slane %v3220, 5
      %v3223 = vsel %vm1062, %v3218, %v3222
      %v3224 = vshrl.u32 %v2953, 16
      %v3226 = vrot.slane %v3224, 4
      %v3227 = vor.u32 %v3226, %v3222
      %v3228 = vrot.slane %v3227, 4
      %v3230 = vshll.u32 %v2954, 16
      %v3232 = vrot.slane %v3230, 5
      %v3233 = vsel %vm1062, %v3228, %v3232
      %v3235 = vshrl.u32 %v2955, 16
      %v3237 = vrot.slane %v3235, 4
      %v3238 = vshll.u32 %v2955, 16
      %v3240 = vrot.slane %v3238, 5
      %v3241 = vor.u32 %v3237, %v3240
      %v3242 = vrot.slane %v3241, 4
      %v3244 = vshll.u32 %v2956, 16
      %v3246 = vrot.slane %v3244, 5
      %v3247 = vsel %vm1062, %v3242, %v3246
      %v3248 = vshrl.u32 %v2956, 16
      %v3250 = vrot.slane %v3248, 4
      %v3251 = vor.u32 %v3250, %v3246
      %v3252 = vrot.slane %v3251, 4
      %v3254 = vshll.u32 %v2957, 16
      %v3256 = vrot.slane %v3254, 5
      %v3257 = vsel %vm1062, %v3252, %v3256
      %v3259 = vshrl.u32 %v2958, 16
      %v3261 = vrot.slane %v3259, 4
      %v3262 = vshll.u32 %v2958, 16
      %v3264 = vrot.slane %v3262, 5
      %v3265 = vor.u32 %v3261, %v3264
      %v3266 = vrot.slane %v3265, 4
      %v3268 = vshll.u32 %v2959, 16
      %v3270 = vrot.slane %v3268, 5
      %v3271 = vsel %vm1062, %v3266, %v3270
      %v3272 = vshrl.u32 %v2959, 16
      %v3274 = vrot.slane %v3272, 4
      %v3275 = vor.u32 %v3274, %v3270
      %v3276 = vrot.slane %v3275, 4
      %v3278 = vshll.u32 %v2960, 16
      %v3280 = vrot.slane %v3278, 5
      %v3281 = vsel %vm1062, %v3276, %v3280
      %v3283 = vshrl.u32 %v2961, 16
      %v3285 = vrot.slane %v3283, 4
      %v3286 = vshll.u32 %v2961, 16
      %v3288 = vrot.slane %v3286, 5
      %v3289 = vor.u32 %v3285, %v3288
      %v3290 = vrot.slane %v3289, 4
      %v3292 = vshll.u32 %v2962, 16
      %v3294 = vrot.slane %v3292, 5
      %v3295 = vsel %vm1062, %v3290, %v3294
      %v3296 = vshrl.u32 %v2962, 16
      %v3298 = vrot.slane %v3296, 4
      %v3299 = vor.u32 %v3298, %v3294
      %v3300 = vrot.slane %v3299, 4
      %v3302 = vshll.u32 %v2963, 16
      %v3304 = vrot.slane %v3302, 5
      %v3305 = vsel %vm1062, %v3300, %v3304
      %v3307 = vshrl.u32 %v2964, 16
      %v3309 = vrot.slane %v3307, 4
      %v3310 = vshll.u32 %v2964, 16
      %v3312 = vrot.slane %v3310, 5
      %v3313 = vor.u32 %v3309, %v3312
      %v3314 = vrot.slane %v3313, 4
      %v3316 = vshll.u32 %v2965, 16
      %v3318 = vrot.slane %v3316, 5
      %v3319 = vsel %vm1062, %v3314, %v3318
      %v3320 = vshrl.u32 %v2965, 16
      %v3322 = vrot.slane %v3320, 4
      %v3323 = vor.u32 %v3322, %v3318
      %v3324 = vrot.slane %v3323, 4
      %v3326 = vshll.u32 %v2966, 16
      %v3328 = vrot.slane %v3326, 5
      %v3329 = vsel %vm1062, %v3324, %v3328
      %v3331 = vshrl.u32 %v2967, 16
      %v3333 = vrot.slane %v3331, 4
      %v3334 = vshll.u32 %v2967, 16
      %v3336 = vrot.slane %v3334, 5
      %v3337 = vor.u32 %v3333, %v3336
      %v3338 = vrot.slane %v3337, 4
      %v3340 = vshll.u32 %v2968, 16
      %v3342 = vrot.slane %v3340, 5
      %v3343 = vsel %vm1062, %v3338, %v3342
      %v3344 = vshrl.u32 %v2968, 16
      %v3346 = vrot.slane %v3344, 4
      %v3347 = vor.u32 %v3346, %v3342
      %v3348 = vrot.slane %v3347, 4
      %v3350 = vshll.u32 %v2969, 16
      %v3352 = vrot.slane %v3350, 5
      %v3353 = vsel %vm1062, %v3348, %v3352
      %s3354 = scalar_lea.vmem %s3, 128
      %v3355 = vld [vmem:[%s3354] sm:$0xf]
      %v3356 = vld [vmem:[%s3354 + $0x4] sm:$0xf]
      %v3357 = vld [vmem:[%s3354 + $0x8] sm:$0xf]
      %v3358 = vld [vmem:[%s3354 + $0xc] sm:$0xf]
      %v3359 = vld [vmem:[%s3354 + $0x10] sm:$0xf]
      %v3360 = vld [vmem:[%s3354 + $0x14] sm:$0xf]
      %v3361 = vld [vmem:[%s3354 + $0x18] sm:$0xf]
      %v3362 = vld [vmem:[%s3354 + $0x1c] sm:$0xf]
      %v3363 = vunpack.c.l.b16 %v2983
      %v3364 = vunpack.c.l.b16 %v2993
      %v3365 = vunpack.c.l.b16 %v3007
      %v3366 = vunpack.c.l.b16 %v3017
      %v3367 = vunpack.c.l.b16 %v3031
      %v3368 = vunpack.c.l.b16 %v3041
      %v3369 = vunpack.c.l.b16 %v3055
      %v3370 = vunpack.c.l.b16 %v3065
      %v3371 = vunpack.c.l.b16 %v3079
      %v3372 = vunpack.c.l.b16 %v3089
      %v3373 = vunpack.c.l.b16 %v3103
      %v3374 = vunpack.c.l.b16 %v3113
      %v3375 = vunpack.c.l.b16 %v3127
      %v3376 = vunpack.c.l.b16 %v3137
      %v3377 = vunpack.c.l.b16 %v3151
      %v3378 = vunpack.c.l.b16 %v3161
      %v3379 = vunpack.c.l.b16 %v3175
      %v3380 = vunpack.c.l.b16 %v3185
      %v3381 = vunpack.c.l.b16 %v3199
      %v3382 = vunpack.c.l.b16 %v3209
      %v3383 = vunpack.c.l.b16 %v3223
      %v3384 = vunpack.c.l.b16 %v3233
      %v3385 = vunpack.c.l.b16 %v3247
      %v3386 = vunpack.c.l.b16 %v3257
      %v3387 = vunpack.c.l.b16 %v3271
      %v3388 = vunpack.c.l.b16 %v3281
      %v3389 = vunpack.c.l.b16 %v3295
      %v3390 = vunpack.c.l.b16 %v3305
      %v3391 = vunpack.c.l.b16 %v3319
      %v3392 = vunpack.c.l.b16 %v3329
      %v3393 = vunpack.c.l.b16 %v3343
      %v3394 = vunpack.c.l.b16 %v3353
      %v3395 = vpack.c.b16 %v3364, %v3363
      %v3396 = vpack.c.b16 %v3366, %v3365
      %v3397 = vpack.c.b16 %v3368, %v3367
      %v3398 = vpack.c.b16 %v3370, %v3369
      %v3399 = vpack.c.b16 %v3372, %v3371
      %v3400 = vpack.c.b16 %v3374, %v3373
      %v3401 = vpack.c.b16 %v3376, %v3375
      %v3402 = vpack.c.b16 %v3378, %v3377
      %v3403 = vpack.c.b16 %v3380, %v3379
      %v3404 = vpack.c.b16 %v3382, %v3381
      %v3405 = vpack.c.b16 %v3384, %v3383
      %v3406 = vpack.c.b16 %v3386, %v3385
      %v3407 = vpack.c.b16 %v3388, %v3387
      %v3408 = vpack.c.b16 %v3390, %v3389
      %v3409 = vpack.c.b16 %v3392, %v3391
      %v3410 = vpack.c.b16 %v3394, %v3393
      %v3419 = vunpack.c.l.b16 %v3355
      %v3420 = vunpack.c.l.b16 %v3356
      %v3421 = vunpack.c.l.b16 %v3357
      %v3422 = vunpack.c.l.b16 %v3358
      %v3423 = vunpack.c.l.b16 %v3359
      %v3424 = vunpack.c.l.b16 %v3360
      %v3425 = vunpack.c.l.b16 %v3361
      %v3426 = vunpack.c.l.b16 %v3362
      %v3427 = vpack.c.b16 %v3420, %v3419
      %v3428 = vpack.c.b16 %v3422, %v3421
      %v3429 = vpack.c.b16 %v3424, %v3423
      %v3430 = vpack.c.b16 %v3426, %v3425
      %v3436 = vsel %vm1528, %v3395, 0
      %v3439 = vsel %vm1528, %v3396, 0
      %v3442 = vsel %vm1528, %v3397, 0
      %v3445 = vsel %vm1528, %v3398, 0
      %v3448 = vsel %vm1528, %v3399, 0
      %v3451 = vsel %vm1528, %v3400, 0
      %v3454 = vsel %vm1528, %v3401, 0
      %v3457 = vsel %vm1528, %v3402, 0
      %v3460 = vsel %vm1528, %v3403, 0
      %v3463 = vsel %vm1528, %v3404, 0
      %v3466 = vsel %vm1528, %v3405, 0
      %v3469 = vsel %vm1528, %v3406, 0
      %v3472 = vsel %vm1528, %v3407, 0
      %v3475 = vsel %vm1528, %v3408, 0
      %v3478 = vsel %vm1528, %v3409, 0
      %v3481 = vsel %vm1528, %v3410, 0
      %3483 = vmatprep.subr.bf16.mxu0 0
      %3484 = vmatpush1.bf16.msra.mxu0 %v3427
      %3485 = vmatprep.subr.bf16.mxu0 0
      %3486 = vmatpush1.bf16.msra.mxu0 %v3428
      %3487 = vmatprep.subr.bf16.mxu0 0
      %3488 = vmatpush1.bf16.msra.mxu0 %v3429
      %3489 = vmatprep.subr.bf16.mxu0 0
      %3490 = vmatpush1.bf16.msra.mxu0 %v3430
      %3491 = vmatprep.subr.bf16.mxu0 0
      %3492 = vmatpush1.bf16.msra.mxu0 0
      %3493 = vmatprep.subr.bf16.mxu0 0
      %3494 = vmatpush1.bf16.msra.mxu0 0
      %3495 = vmatprep.subr.bf16.mxu0 0
      %3496 = vmatpush1.bf16.msra.mxu0 0
      %3497 = vmatprep.subr.bf16.mxu0 0
      %3498 = vmatpush1.bf16.msra.mxu0 0
      %3499 = vmatprep.subr.bf16.mxu0 0
      %3500 = vmatpush1.bf16.msra.mxu0 0
      %3501 = vmatprep.subr.bf16.mxu0 0
      %3502 = vmatpush1.bf16.msra.mxu0 0
      %3503 = vmatprep.subr.bf16.mxu0 0
      %3504 = vmatpush1.bf16.msra.mxu0 0
      %3505 = vmatprep.subr.bf16.mxu0 0
      %3506 = vmatpush1.bf16.msra.mxu0 0
      %3507 = vmatprep.subr.bf16.mxu0 0
      %3508 = vmatpush1.bf16.msra.mxu0 0
      %3509 = vmatprep.subr.bf16.mxu0 0
      %3510 = vmatpush1.bf16.msra.mxu0 0
      %3511 = vmatprep.subr.bf16.mxu0 0
      %3512 = vmatpush1.bf16.msra.mxu0 0
      %3513 = vmatprep.subr.bf16.mxu0 0
      %3514 = vmatpush1.bf16.msra.mxu0 0
      %3515 = vmatprep.mubr.bf16.mxu0 0
      %3516 = vmatmul.mubr.bf16.gmra.mrb[0].mxu0 %v3436
      %v3517 = vpop.f32.mrb[0].mxu0
      %v3518 = vadd.f32 0.0, %v3517
      %v3519 = vpop.f32.mrb[0].mxu0
      %v3520 = vpop.f32.mrb[0].mxu0
      %v3521 = vadd.f32 0.0, %v3520
      %v3522 = vpop.f32.mrb[0].mxu0
      %3523 = vmatprep.mubr.bf16.mxu0 0
      %3524 = vmatmul.mubr.bf16.gmra.mrb[0].mxu0 %v3439
      %v3525 = vpop.f32.mrb[0].mxu0
      %v3526 = vadd.f32 0.0, %v3525
      %v3527 = vpop.f32.mrb[0].mxu0
      %v3528 = vpop.f32.mrb[0].mxu0
      %v3529 = vadd.f32 0.0, %v3528
      %v3530 = vpop.f32.mrb[0].mxu0
      %3531 = vmatprep.mubr.bf16.mxu0 0
      %3532 = vmatmul.mubr.bf16.gmra.mrb[0].mxu0 %v3442
      %v3533 = vpop.f32.mrb[0].mxu0
      %v3534 = vadd.f32 0.0, %v3533
      %v3535 = vpop.f32.mrb[0].mxu0
      %v3536 = vpop.f32.mrb[0].mxu0
      %v3537 = vadd.f32 0.0, %v3536
      %v3538 = vpop.f32.mrb[0].mxu0
      %3539 = vmatprep.mubr.bf16.mxu0 0
      %3540 = vmatmul.mubr.bf16.gmra.mrb[0].mxu0 %v3445
      %v3541 = vpop.f32.mrb[0].mxu0
      %v3542 = vadd.f32 0.0, %v3541
      %v3543 = vpop.f32.mrb[0].mxu0
      %v3544 = vpop.f32.mrb[0].mxu0
      %v3545 = vadd.f32 0.0, %v3544
      %v3546 = vpop.f32.mrb[0].mxu0
      %3547 = vmatprep.mubr.bf16.mxu0 0
      %3548 = vmatmul.mubr.bf16.gmra.mrb[0].mxu0 %v3448
      %v3549 = vpop.f32.mrb[0].mxu0
      %v3550 = vadd.f32 0.0, %v3549
      %v3551 = vpop.f32.mrb[0].mxu0
      %v3552 = vpop.f32.mrb[0].mxu0
      %v3553 = vadd.f32 0.0, %v3552
      %v3554 = vpop.f32.mrb[0].mxu0
      %3555 = vmatprep.mubr.bf16.mxu0 0
      %3556 = vmatmul.mubr.bf16.gmra.mrb[0].mxu0 %v3451
      %v3557 = vpop.f32.mrb[0].mxu0
      %v3558 = vadd.f32 0.0, %v3557
      %v3559 = vpop.f32.mrb[0].mxu0
      %v3560 = vpop.f32.mrb[0].mxu0
      %v3561 = vadd.f32 0.0, %v3560
      %v3562 = vpop.f32.mrb[0].mxu0
      %3563 = vmatprep.mubr.bf16.mxu0 0
      %3564 = vmatmul.mubr.bf16.gmra.mrb[0].mxu0 %v3454
      %v3565 = vpop.f32.mrb[0].mxu0
      %v3566 = vadd.f32 0.0, %v3565
      %v3567 = vpop.f32.mrb[0].mxu0
      %v3568 = vpop.f32.mrb[0].mxu0
      %v3569 = vadd.f32 0.0, %v3568
      %v3570 = vpop.f32.mrb[0].mxu0
      %3571 = vmatprep.mubr.bf16.mxu0 0
      %3572 = vmatmul.mubr.bf16.gmra.mrb[0].mxu0 %v3457
      %v3573 = vpop.f32.mrb[0].mxu0
      %v3574 = vadd.f32 0.0, %v3573
      %v3575 = vpop.f32.mrb[0].mxu0
      %v3576 = vpop.f32.mrb[0].mxu0
      %v3577 = vadd.f32 0.0, %v3576
      %v3578 = vpop.f32.mrb[0].mxu0
      %3579 = vmatprep.mubr.bf16.mxu0 0
      %3580 = vmatmul.mubr.bf16.gmra.mrb[0].mxu0 %v3460
      %v3581 = vpop.f32.mrb[0].mxu0
      %v3582 = vadd.f32 0.0, %v3581
      %v3583 = vpop.f32.mrb[0].mxu0
      %v3584 = vpop.f32.mrb[0].mxu0
      %v3585 = vadd.f32 0.0, %v3584
      %v3586 = vpop.f32.mrb[0].mxu0
      %3587 = vmatprep.mubr.bf16.mxu0 0
      %3588 = vmatmul.mubr.bf16.gmra.mrb[0].mxu0 %v3463
      %v3589 = vpop.f32.mrb[0].mxu0
      %v3590 = vadd.f32 0.0, %v3589
      %v3591 = vpop.f32.mrb[0].mxu0
      %v3592 = vpop.f32.mrb[0].mxu0
      %v3593 = vadd.f32 0.0, %v3592
      %v3594 = vpop.f32.mrb[0].mxu0
      %3595 = vmatprep.mubr.bf16.mxu0 0
      %3596 = vmatmul.mubr.bf16.gmra.mrb[0].mxu0 %v3466
      %v3597 = vpop.f32.mrb[0].mxu0
      %v3598 = vadd.f32 0.0, %v3597
      %v3599 = vpop.f32.mrb[0].mxu0
      %v3600 = vpop.f32.mrb[0].mxu0
      %v3601 = vadd.f32 0.0, %v3600
      %v3602 = vpop.f32.mrb[0].mxu0
      %3603 = vmatprep.mubr.bf16.mxu0 0
      %3604 = vmatmul.mubr.bf16.gmra.mrb[0].mxu0 %v3469
      %v3605 = vpop.f32.mrb[0].mxu0
      %v3606 = vadd.f32 0.0, %v3605
      %v3607 = vpop.f32.mrb[0].mxu0
      %v3608 = vpop.f32.mrb[0].mxu0
      %v3609 = vadd.f32 0.0, %v3608
      %v3610 = vpop.f32.mrb[0].mxu0
      %3611 = vmatprep.mubr.bf16.mxu0 0
      %3612 = vmatmul.mubr.bf16.gmra.mrb[0].mxu0 %v3472
      %v3613 = vpop.f32.mrb[0].mxu0
      %v3614 = vadd.f32 0.0, %v3613
      %v3615 = vpop.f32.mrb[0].mxu0
      %v3616 = vpop.f32.mrb[0].mxu0
      %v3617 = vadd.f32 0.0, %v3616
      %v3618 = vpop.f32.mrb[0].mxu0
      %3619 = vmatprep.mubr.bf16.mxu0 0
      %3620 = vmatmul.mubr.bf16.gmra.mrb[0].mxu0 %v3475
      %v3621 = vpop.f32.mrb[0].mxu0
      %v3622 = vadd.f32 0.0, %v3621
      %v3623 = vpop.f32.mrb[0].mxu0
      %v3624 = vpop.f32.mrb[0].mxu0
      %v3625 = vadd.f32 0.0, %v3624
      %v3626 = vpop.f32.mrb[0].mxu0
      %3627 = vmatprep.mubr.bf16.mxu0 0
      %3628 = vmatmul.mubr.bf16.gmra.mrb[0].mxu0 %v3478
      %v3629 = vpop.f32.mrb[0].mxu0
      %v3630 = vadd.f32 0.0, %v3629
      %v3631 = vpop.f32.mrb[0].mxu0
      %v3632 = vpop.f32.mrb[0].mxu0
      %v3633 = vadd.f32 0.0, %v3632
      %v3634 = vpop.f32.mrb[0].mxu0
      %3635 = vmatprep.mubr.bf16.mxu0 0
      %3636 = vmatmul.mubr.bf16.gmra.mrb[0].mxu0 %v3481
      %v3637 = vpop.f32.mrb[0].mxu0
      %v3638 = vadd.f32 0.0, %v3637
      %v3639 = vpop.f32.mrb[0].mxu0
      %v3640 = vpop.f32.mrb[0].mxu0
      %v3641 = vadd.f32 0.0, %v3640
      %v3642 = vpop.f32.mrb[0].mxu0
      %3643 = vdwg.mxu0
      %v3644 = vadd.f32 %v2890, %v3518
      %v3645 = vadd.f32 %v2891, %v3521
      %v3646 = vadd.f32 %v2892, %v3526
      %v3647 = vadd.f32 %v2893, %v3529
      %v3648 = vadd.f32 %v2894, %v3534
      %v3649 = vadd.f32 %v2895, %v3537
      %v3650 = vadd.f32 %v2896, %v3542
      %v3651 = vadd.f32 %v2897, %v3545
      %v3652 = vadd.f32 %v2898, %v3550
      %v3653 = vadd.f32 %v2899, %v3553
      %v3654 = vadd.f32 %v2900, %v3558
      %v3655 = vadd.f32 %v2901, %v3561
      %v3656 = vadd.f32 %v2902, %v3566
      %v3657 = vadd.f32 %v2903, %v3569
      %v3658 = vadd.f32 %v2904, %v3574
      %v3659 = vadd.f32 %v2905, %v3577
      %v3660 = vadd.f32 %v2906, %v3582
      %v3661 = vadd.f32 %v2907, %v3585
      %v3662 = vadd.f32 %v2908, %v3590
      %v3663 = vadd.f32 %v2909, %v3593
      %v3664 = vadd.f32 %v2910, %v3598
      %v3665 = vadd.f32 %v2911, %v3601
      %v3666 = vadd.f32 %v2912, %v3606
      %v3667 = vadd.f32 %v2913, %v3609
      %v3668 = vadd.f32 %v2914, %v3614
      %v3669 = vadd.f32 %v2915, %v3617
      %v3670 = vadd.f32 %v2916, %v3622
      %v3671 = vadd.f32 %v2917, %v3625
      %v3672 = vadd.f32 %v2918, %v3630
      %v3673 = vadd.f32 %v2919, %v3633
      %v3674 = vadd.f32 %v2920, %v3638
      %v3675 = vadd.f32 %v2921, %v3641
      %v3676 = vld [vmem:[%s886] sm:$0xe]
      %v3677 = vld [vmem:[%s886 + $0xc] sm:$0xe]
      %v3678 = vld [vmem:[%s886 + $0x18] sm:$0xe]
      %v3679 = vld [vmem:[%s886 + $0x24] sm:$0xe]
      %v3680 = vld [vmem:[%s886 + $0x30] sm:$0xe]
      %v3681 = vld [vmem:[%s886 + $0x3c] sm:$0xe]
      %v3682 = vld [vmem:[%s886 + $0x48] sm:$0xe]
      %v3683 = vld [vmem:[%s886 + $0x54] sm:$0xe]
      %v3684 = vld [vmem:[%s886 + $0x60] sm:$0xe]
      %v3685 = vld [vmem:[%s886 + $0x6c] sm:$0xe]
      %v3686 = vld [vmem:[%s886 + $0x78] sm:$0xe]
      %v3687 = vld [vmem:[%s886 + $0x84] sm:$0xe]
      %v3688 = vld [vmem:[%s886 + $0x90] sm:$0xe]
      %v3689 = vld [vmem:[%s886 + $0x9c] sm:$0xe]
      %v3690 = vld [vmem:[%s886 + $0xa8] sm:$0xe]
      %v3691 = vld [vmem:[%s886 + $0xb4] sm:$0xe]
      %v3740 = vrot.slane %v3676, 5
      %v3741 = vrot.slane %v3740, 4
      %v3742 = vrot.slane %v2923, 5
      %v3743 = vsel %vm2101, %v3741, %v3742
      %v3744 = vrot.slane %v3742, 4
      %v3745 = vrot.slane %v2924, 5
      %v3746 = vsel %vm2101, %v3744, %v3745
      %v3747 = vrot.slane %v3677, 5
      %v3748 = vrot.slane %v3747, 4
      %v3749 = vrot.slane %v2926, 5
      %v3750 = vsel %vm2101, %v3748, %v3749
      %v3751 = vrot.slane %v3749, 4
      %v3752 = vrot.slane %v2927, 5
      %v3753 = vsel %vm2101, %v3751, %v3752
      %v3754 = vrot.slane %v3678, 5
      %v3755 = vrot.slane %v3754, 4
      %v3756 = vrot.slane %v2929, 5
      %v3757 = vsel %vm2101, %v3755, %v3756
      %v3758 = vrot.slane %v3756, 4
      %v3759 = vrot.slane %v2930, 5
      %v3760 = vsel %vm2101, %v3758, %v3759
      %v3761 = vrot.slane %v3679, 5
      %v3762 = vrot.slane %v3761, 4
      %v3763 = vrot.slane %v2932, 5
      %v3764 = vsel %vm2101, %v3762, %v3763
      %v3765 = vrot.slane %v3763, 4
      %v3766 = vrot.slane %v2933, 5
      %v3767 = vsel %vm2101, %v3765, %v3766
      %v3768 = vrot.slane %v3680, 5
      %v3769 = vrot.slane %v3768, 4
      %v3770 = vrot.slane %v2935, 5
      %v3771 = vsel %vm2101, %v3769, %v3770
      %v3772 = vrot.slane %v3770, 4
      %v3773 = vrot.slane %v2936, 5
      %v3774 = vsel %vm2101, %v3772, %v3773
      %v3775 = vrot.slane %v3681, 5
      %v3776 = vrot.slane %v3775, 4
      %v3777 = vrot.slane %v2938, 5
      %v3778 = vsel %vm2101, %v3776, %v3777
      %v3779 = vrot.slane %v3777, 4
      %v3780 = vrot.slane %v2939, 5
      %v3781 = vsel %vm2101, %v3779, %v3780
      %v3782 = vrot.slane %v3682, 5
      %v3783 = vrot.slane %v3782, 4
      %v3784 = vrot.slane %v2941, 5
      %v3785 = vsel %vm2101, %v3783, %v3784
      %v3786 = vrot.slane %v3784, 4
      %v3787 = vrot.slane %v2942, 5
      %v3788 = vsel %vm2101, %v3786, %v3787
      %v3789 = vrot.slane %v3683, 5
      %v3790 = vrot.slane %v3789, 4
      %v3791 = vrot.slane %v2944, 5
      %v3792 = vsel %vm2101, %v3790, %v3791
      %v3793 = vrot.slane %v3791, 4
      %v3794 = vrot.slane %v2945, 5
      %v3795 = vsel %vm2101, %v3793, %v3794
      %v3796 = vrot.slane %v3684, 5
      %v3797 = vrot.slane %v3796, 4
      %v3798 = vrot.slane %v2947, 5
      %v3799 = vsel %vm2101, %v3797, %v3798
      %v3800 = vrot.slane %v3798, 4
      %v3801 = vrot.slane %v2948, 5
      %v3802 = vsel %vm2101, %v3800, %v3801
      %v3803 = vrot.slane %v3685, 5
      %v3804 = vrot.slane %v3803, 4
      %v3805 = vrot.slane %v2950, 5
      %v3806 = vsel %vm2101, %v3804, %v3805
      %v3807 = vrot.slane %v3805, 4
      %v3808 = vrot.slane %v2951, 5
      %v3809 = vsel %vm2101, %v3807, %v3808
      %v3810 = vrot.slane %v3686, 5
      %v3811 = vrot.slane %v3810, 4
      %v3812 = vrot.slane %v2953, 5
      %v3813 = vsel %vm2101, %v3811, %v3812
      %v3814 = vrot.slane %v3812, 4
      %v3815 = vrot.slane %v2954, 5
      %v3816 = vsel %vm2101, %v3814, %v3815
      %v3817 = vrot.slane %v3687, 5
      %v3818 = vrot.slane %v3817, 4
      %v3819 = vrot.slane %v2956, 5
      %v3820 = vsel %vm2101, %v3818, %v3819
      %v3821 = vrot.slane %v3819, 4
      %v3822 = vrot.slane %v2957, 5
      %v3823 = vsel %vm2101, %v3821, %v3822
      %v3824 = vrot.slane %v3688, 5
      %v3825 = vrot.slane %v3824, 4
      %v3826 = vrot.slane %v2959, 5
      %v3827 = vsel %vm2101, %v3825, %v3826
      %v3828 = vrot.slane %v3826, 4
      %v3829 = vrot.slane %v2960, 5
      %v3830 = vsel %vm2101, %v3828, %v3829
      %v3831 = vrot.slane %v3689, 5
      %v3832 = vrot.slane %v3831, 4
      %v3833 = vrot.slane %v2962, 5
      %v3834 = vsel %vm2101, %v3832, %v3833
      %v3835 = vrot.slane %v3833, 4
      %v3836 = vrot.slane %v2963, 5
      %v3837 = vsel %vm2101, %v3835, %v3836
      %v3838 = vrot.slane %v3690, 5
      %v3839 = vrot.slane %v3838, 4
      %v3840 = vrot.slane %v2965, 5
      %v3841 = vsel %vm2101, %v3839, %v3840
      %v3842 = vrot.slane %v3840, 4
      %v3843 = vrot.slane %v2966, 5
      %v3844 = vsel %vm2101, %v3842, %v3843
      %v3845 = vrot.slane %v3691, 5
      %v3846 = vrot.slane %v3845, 4
      %v3847 = vrot.slane %v2968, 5
      %v3848 = vsel %vm2101, %v3846, %v3847
      %v3849 = vrot.slane %v3847, 4
      %v3850 = vrot.slane %v2969, 5
      %v3851 = vsel %vm2101, %v3849, %v3850
      %s3852 = scalar_lea.vmem %s3, 160
      %v3853 = vld [vmem:[%s3852] sm:$0xf]
      %v3854 = vld [vmem:[%s3852 + $0x4] sm:$0xf]
      %v3855 = vld [vmem:[%s3852 + $0x8] sm:$0xf]
      %v3856 = vld [vmem:[%s3852 + $0xc] sm:$0xf]
      %v3857 = vld [vmem:[%s3852 + $0x10] sm:$0xf]
      %v3858 = vld [vmem:[%s3852 + $0x14] sm:$0xf]
      %v3859 = vld [vmem:[%s3852 + $0x18] sm:$0xf]
      %v3860 = vld [vmem:[%s3852 + $0x1c] sm:$0xf]
      %v3861 = vunpack.c.l.b16 %v3743
      %v3862 = vunpack.c.l.b16 %v3746
      %v3863 = vunpack.c.l.b16 %v3750
      %v3864 = vunpack.c.l.b16 %v3753
      %v3865 = vunpack.c.l.b16 %v3757
      %v3866 = vunpack.c.l.b16 %v3760
      %v3867 = vunpack.c.l.b16 %v3764
      %v3868 = vunpack.c.l.b16 %v3767
      %v3869 = vunpack.c.l.b16 %v3771
      %v3870 = vunpack.c.l.b16 %v3774
      %v3871 = vunpack.c.l.b16 %v3778
      %v3872 = vunpack.c.l.b16 %v3781
      %v3873 = vunpack.c.l.b16 %v3785
      %v3874 = vunpack.c.l.b16 %v3788
      %v3875 = vunpack.c.l.b16 %v3792
      %v3876 = vunpack.c.l.b16 %v3795
      %v3877 = vunpack.c.l.b16 %v3799
      %v3878 = vunpack.c.l.b16 %v3802
      %v3879 = vunpack.c.l.b16 %v3806
      %v3880 = vunpack.c.l.b16 %v3809
      %v3881 = vunpack.c.l.b16 %v3813
      %v3882 = vunpack.c.l.b16 %v3816
      %v3883 = vunpack.c.l.b16 %v3820
      %v3884 = vunpack.c.l.b16 %v3823
      %v3885 = vunpack.c.l.b16 %v3827
      %v3886 = vunpack.c.l.b16 %v3830
      %v3887 = vunpack.c.l.b16 %v3834
      %v3888 = vunpack.c.l.b16 %v3837
      %v3889 = vunpack.c.l.b16 %v3841
      %v3890 = vunpack.c.l.b16 %v3844
      %v3891 = vunpack.c.l.b16 %v3848
      %v3892 = vunpack.c.l.b16 %v3851
      %v3893 = vpack.c.b16 %v3862, %v3861
      %v3894 = vpack.c.b16 %v3864, %v3863
      %v3895 = vpack.c.b16 %v3866, %v3865
      %v3896 = vpack.c.b16 %v3868, %v3867
      %v3897 = vpack.c.b16 %v3870, %v3869
      %v3898 = vpack.c.b16 %v3872, %v3871
      %v3899 = vpack.c.b16 %v3874, %v3873
      %v3900 = vpack.c.b16 %v3876, %v3875
      %v3901 = vpack.c.b16 %v3878, %v3877
      %v3902 = vpack.c.b16 %v3880, %v3879
      %v3903 = vpack.c.b16 %v3882, %v3881
      %v3904 = vpack.c.b16 %v3884, %v3883
      %v3905 = vpack.c.b16 %v3886, %v3885
      %v3906 = vpack.c.b16 %v3888, %v3887
      %v3907 = vpack.c.b16 %v3890, %v3889
      %v3908 = vpack.c.b16 %v3892, %v3891
      %v3917 = vunpack.c.l.b16 %v3853
      %v3918 = vunpack.c.l.b16 %v3854
      %v3919 = vunpack.c.l.b16 %v3855
      %v3920 = vunpack.c.l.b16 %v3856
      %v3921 = vunpack.c.l.b16 %v3857
      %v3922 = vunpack.c.l.b16 %v3858
      %v3923 = vunpack.c.l.b16 %v3859
      %v3924 = vunpack.c.l.b16 %v3860
      %v3925 = vpack.c.b16 %v3918, %v3917
      %v3926 = vpack.c.b16 %v3920, %v3919
      %v3927 = vpack.c.b16 %v3922, %v3921
      %v3928 = vpack.c.b16 %v3924, %v3923
      %v3934 = vsel %vm1528, %v3893, 0
      %v3937 = vsel %vm1528, %v3894, 0
      %v3940 = vsel %vm1528, %v3895, 0
      %v3943 = vsel %vm1528, %v3896, 0
      %v3946 = vsel %vm1528, %v3897, 0
      %v3949 = vsel %vm1528, %v3898, 0
      %v3952 = vsel %vm1528, %v3899, 0
      %v3955 = vsel %vm1528, %v3900, 0
      %v3958 = vsel %vm1528, %v3901, 0
      %v3961 = vsel %vm1528, %v3902, 0
      %v3964 = vsel %vm1528, %v3903, 0
      %v3967 = vsel %vm1528, %v3904, 0
      %v3970 = vsel %vm1528, %v3905, 0
      %v3973 = vsel %vm1528, %v3906, 0
      %v3976 = vsel %vm1528, %v3907, 0
      %v3979 = vsel %vm1528, %v3908, 0
      %3981 = vmatprep.subr.bf16.mxu0 0
      %3982 = vmatpush1.bf16.msra.mxu0 %v3925
      %3983 = vmatprep.subr.bf16.mxu0 0
      %3984 = vmatpush1.bf16.msra.mxu0 %v3926
      %3985 = vmatprep.subr.bf16.mxu0 0
      %3986 = vmatpush1.bf16.msra.mxu0 %v3927
      %3987 = vmatprep.subr.bf16.mxu0 0
      %3988 = vmatpush1.bf16.msra.mxu0 %v3928
      %3989 = vmatprep.subr.bf16.mxu0 0
      %3990 = vmatpush1.bf16.msra.mxu0 0
      %3991 = vmatprep.subr.bf16.mxu0 0
      %3992 = vmatpush1.bf16.msra.mxu0 0
      %3993 = vmatprep.subr.bf16.mxu0 0
      %3994 = vmatpush1.bf16.msra.mxu0 0
      %3995 = vmatprep.subr.bf16.mxu0 0
      %3996 = vmatpush1.bf16.msra.mxu0 0
      %3997 = vmatprep.subr.bf16.mxu0 0
      %3998 = vmatpush1.bf16.msra.mxu0 0
      %3999 = vmatprep.subr.bf16.mxu0 0
      %4000 = vmatpush1.bf16.msra.mxu0 0
      %4001 = vmatprep.subr.bf16.mxu0 0
      %4002 = vmatpush1.bf16.msra.mxu0 0
      %4003 = vmatprep.subr.bf16.mxu0 0
      %4004 = vmatpush1.bf16.msra.mxu0 0
      %4005 = vmatprep.subr.bf16.mxu0 0
      %4006 = vmatpush1.bf16.msra.mxu0 0
      %4007 = vmatprep.subr.bf16.mxu0 0
      %4008 = vmatpush1.bf16.msra.mxu0 0
      %4009 = vmatprep.subr.bf16.mxu0 0
      %4010 = vmatpush1.bf16.msra.mxu0 0
      %4011 = vmatprep.subr.bf16.mxu0 0
      %4012 = vmatpush1.bf16.msra.mxu0 0
      %4013 = vmatprep.mubr.bf16.mxu0 0
      %4014 = vmatmul.mubr.bf16.gmra.mrb[0].mxu0 %v3934
      %v4015 = vpop.f32.mrb[0].mxu0
      %v4016 = vadd.f32 0.0, %v4015
      %v4017 = vpop.f32.mrb[0].mxu0
      %v4018 = vpop.f32.mrb[0].mxu0
      %v4019 = vadd.f32 0.0, %v4018
      %v4020 = vpop.f32.mrb[0].mxu0
      %4021 = vmatprep.mubr.bf16.mxu0 0
      %4022 = vmatmul.mubr.bf16.gmra.mrb[0].mxu0 %v3937
      %v4023 = vpop.f32.mrb[0].mxu0
      %v4024 = vadd.f32 0.0, %v4023
      %v4025 = vpop.f32.mrb[0].mxu0
      %v4026 = vpop.f32.mrb[0].mxu0
      %v4027 = vadd.f32 0.0, %v4026
      %v4028 = vpop.f32.mrb[0].mxu0
      %4029 = vmatprep.mubr.bf16.mxu0 0
      %4030 = vmatmul.mubr.bf16.gmra.mrb[0].mxu0 %v3940
      %v4031 = vpop.f32.mrb[0].mxu0
      %v4032 = vadd.f32 0.0, %v4031
      %v4033 = vpop.f32.mrb[0].mxu0
      %v4034 = vpop.f32.mrb[0].mxu0
      %v4035 = vadd.f32 0.0, %v4034
      %v4036 = vpop.f32.mrb[0].mxu0
      %4037 = vmatprep.mubr.bf16.mxu0 0
      %4038 = vmatmul.mubr.bf16.gmra.mrb[0].mxu0 %v3943
      %v4039 = vpop.f32.mrb[0].mxu0
      %v4040 = vadd.f32 0.0, %v4039
      %v4041 = vpop.f32.mrb[0].mxu0
      %v4042 = vpop.f32.mrb[0].mxu0
      %v4043 = vadd.f32 0.0, %v4042
      %v4044 = vpop.f32.mrb[0].mxu0
      %4045 = vmatprep.mubr.bf16.mxu0 0
      %4046 = vmatmul.mubr.bf16.gmra.mrb[0].mxu0 %v3946
      %v4047 = vpop.f32.mrb[0].mxu0
      %v4048 = vadd.f32 0.0, %v4047
      %v4049 = vpop.f32.mrb[0].mxu0
      %v4050 = vpop.f32.mrb[0].mxu0
      %v4051 = vadd.f32 0.0, %v4050
      %v4052 = vpop.f32.mrb[0].mxu0
      %4053 = vmatprep.mubr.bf16.mxu0 0
      %4054 = vmatmul.mubr.bf16.gmra.mrb[0].mxu0 %v3949
      %v4055 = vpop.f32.mrb[0].mxu0
      %v4056 = vadd.f32 0.0, %v4055
      %v4057 = vpop.f32.mrb[0].mxu0
      %v4058 = vpop.f32.mrb[0].mxu0
      %v4059 = vadd.f32 0.0, %v4058
      %v4060 = vpop.f32.mrb[0].mxu0
      %4061 = vmatprep.mubr.bf16.mxu0 0
      %4062 = vmatmul.mubr.bf16.gmra.mrb[0].mxu0 %v3952
      %v4063 = vpop.f32.mrb[0].mxu0
      %v4064 = vadd.f32 0.0, %v4063
      %v4065 = vpop.f32.mrb[0].mxu0
      %v4066 = vpop.f32.mrb[0].mxu0
      %v4067 = vadd.f32 0.0, %v4066
      %v4068 = vpop.f32.mrb[0].mxu0
      %4069 = vmatprep.mubr.bf16.mxu0 0
      %4070 = vmatmul.mubr.bf16.gmra.mrb[0].mxu0 %v3955
      %v4071 = vpop.f32.mrb[0].mxu0
      %v4072 = vadd.f32 0.0, %v4071
      %v4073 = vpop.f32.mrb[0].mxu0
      %v4074 = vpop.f32.mrb[0].mxu0
      %v4075 = vadd.f32 0.0, %v4074
      %v4076 = vpop.f32.mrb[0].mxu0
      %4077 = vmatprep.mubr.bf16.mxu0 0
      %4078 = vmatmul.mubr.bf16.gmra.mrb[0].mxu0 %v3958
      %v4079 = vpop.f32.mrb[0].mxu0
      %v4080 = vadd.f32 0.0, %v4079
      %v4081 = vpop.f32.mrb[0].mxu0
      %v4082 = vpop.f32.mrb[0].mxu0
      %v4083 = vadd.f32 0.0, %v4082
      %v4084 = vpop.f32.mrb[0].mxu0
      %4085 = vmatprep.mubr.bf16.mxu0 0
      %4086 = vmatmul.mubr.bf16.gmra.mrb[0].mxu0 %v3961
      %v4087 = vpop.f32.mrb[0].mxu0
      %v4088 = vadd.f32 0.0, %v4087
      %v4089 = vpop.f32.mrb[0].mxu0
      %v4090 = vpop.f32.mrb[0].mxu0
      %v4091 = vadd.f32 0.0, %v4090
      %v4092 = vpop.f32.mrb[0].mxu0
      %4093 = vmatprep.mubr.bf16.mxu0 0
      %4094 = vmatmul.mubr.bf16.gmra.mrb[0].mxu0 %v3964
      %v4095 = vpop.f32.mrb[0].mxu0
      %v4096 = vadd.f32 0.0, %v4095
      %v4097 = vpop.f32.mrb[0].mxu0
      %v4098 = vpop.f32.mrb[0].mxu0
      %v4099 = vadd.f32 0.0, %v4098
      %v4100 = vpop.f32.mrb[0].mxu0
      %4101 = vmatprep.mubr.bf16.mxu0 0
      %4102 = vmatmul.mubr.bf16.gmra.mrb[0].mxu0 %v3967
      %v4103 = vpop.f32.mrb[0].mxu0
      %v4104 = vadd.f32 0.0, %v4103
      %v4105 = vpop.f32.mrb[0].mxu0
      %v4106 = vpop.f32.mrb[0].mxu0
      %v4107 = vadd.f32 0.0, %v4106
      %v4108 = vpop.f32.mrb[0].mxu0
      %4109 = vmatprep.mubr.bf16.mxu0 0
      %4110 = vmatmul.mubr.bf16.gmra.mrb[0].mxu0 %v3970
      %v4111 = vpop.f32.mrb[0].mxu0
      %v4112 = vadd.f32 0.0, %v4111
      %v4113 = vpop.f32.mrb[0].mxu0
      %v4114 = vpop.f32.mrb[0].mxu0
      %v4115 = vadd.f32 0.0, %v4114
      %v4116 = vpop.f32.mrb[0].mxu0
      %4117 = vmatprep.mubr.bf16.mxu0 0
      %4118 = vmatmul.mubr.bf16.gmra.mrb[0].mxu0 %v3973
      %v4119 = vpop.f32.mrb[0].mxu0
      %v4120 = vadd.f32 0.0, %v4119
      %v4121 = vpop.f32.mrb[0].mxu0
      %v4122 = vpop.f32.mrb[0].mxu0
      %v4123 = vadd.f32 0.0, %v4122
      %v4124 = vpop.f32.mrb[0].mxu0
      %4125 = vmatprep.mubr.bf16.mxu0 0
      %4126 = vmatmul.mubr.bf16.gmra.mrb[0].mxu0 %v3976
      %v4127 = vpop.f32.mrb[0].mxu0
      %v4128 = vadd.f32 0.0, %v4127
      %v4129 = vpop.f32.mrb[0].mxu0
      %v4130 = vpop.f32.mrb[0].mxu0
      %v4131 = vadd.f32 0.0, %v4130
      %v4132 = vpop.f32.mrb[0].mxu0
      %4133 = vmatprep.mubr.bf16.mxu0 0
      %4134 = vmatmul.mubr.bf16.gmra.mrb[0].mxu0 %v3979
      %v4135 = vpop.f32.mrb[0].mxu0
      %v4136 = vadd.f32 0.0, %v4135
      %v4137 = vpop.f32.mrb[0].mxu0
      %v4138 = vpop.f32.mrb[0].mxu0
      %v4139 = vadd.f32 0.0, %v4138
      %v4140 = vpop.f32.mrb[0].mxu0
      %4141 = vdwg.mxu0
      %v4142 = vadd.f32 %v3644, %v4016
      %v4143 = vadd.f32 %v3645, %v4019
      %v4144 = vadd.f32 %v3646, %v4024
      %v4145 = vadd.f32 %v3647, %v4027
      %v4146 = vadd.f32 %v3648, %v4032
      %v4147 = vadd.f32 %v3649, %v4035
      %v4148 = vadd.f32 %v3650, %v4040
      %v4149 = vadd.f32 %v3651, %v4043
      %v4150 = vadd.f32 %v3652, %v4048
      %v4151 = vadd.f32 %v3653, %v4051
      %v4152 = vadd.f32 %v3654, %v4056
      %v4153 = vadd.f32 %v3655, %v4059
      %v4154 = vadd.f32 %v3656, %v4064
      %v4155 = vadd.f32 %v3657, %v4067
      %v4156 = vadd.f32 %v3658, %v4072
      %v4157 = vadd.f32 %v3659, %v4075
      %v4158 = vadd.f32 %v3660, %v4080
      %v4159 = vadd.f32 %v3661, %v4083
      %v4160 = vadd.f32 %v3662, %v4088
      %v4161 = vadd.f32 %v3663, %v4091
      %v4162 = vadd.f32 %v3664, %v4096
      %v4163 = vadd.f32 %v3665, %v4099
      %v4164 = vadd.f32 %v3666, %v4104
      %v4165 = vadd.f32 %v3667, %v4107
      %v4166 = vadd.f32 %v3668, %v4112
      %v4167 = vadd.f32 %v3669, %v4115
      %v4168 = vadd.f32 %v3670, %v4120
      %v4169 = vadd.f32 %v3671, %v4123
      %v4170 = vadd.f32 %v3672, %v4128
      %v4171 = vadd.f32 %v3673, %v4131
      %v4172 = vadd.f32 %v3674, %v4136
      %v4173 = vadd.f32 %v3675, %v4139
      %s4174 = scalar_lea.vmem [#allocation2], 24
      %v4175 = vld [vmem:[%s4174] sm:$0xf]
      %v4176 = vld [vmem:[%s4174 + $0x4] sm:$0xf]
      %v4177 = vld [vmem:[%s4174 + $0xc] sm:$0xf]
      %v4178 = vld [vmem:[%s4174 + $0x10] sm:$0xf]
      %v4179 = vld [vmem:[%s4174 + $0x18] sm:$0xf]
      %v4180 = vld [vmem:[%s4174 + $0x1c] sm:$0xf]
      %v4181 = vld [vmem:[%s4174 + $0x24] sm:$0xf]
      %v4182 = vld [vmem:[%s4174 + $0x28] sm:$0xf]
      %v4183 = vld [vmem:[%s4174 + $0x30] sm:$0xf]
      %v4184 = vld [vmem:[%s4174 + $0x34] sm:$0xf]
      %v4185 = vld [vmem:[%s4174 + $0x3c] sm:$0xf]
      %v4186 = vld [vmem:[%s4174 + $0x40] sm:$0xf]
      %v4187 = vld [vmem:[%s4174 + $0x48] sm:$0xf]
      %v4188 = vld [vmem:[%s4174 + $0x4c] sm:$0xf]
      %v4189 = vld [vmem:[%s4174 + $0x54] sm:$0xf]
      %v4190 = vld [vmem:[%s4174 + $0x58] sm:$0xf]
      %v4191 = vld [vmem:[%s4174 + $0x60] sm:$0xf]
      %v4192 = vld [vmem:[%s4174 + $0x64] sm:$0xf]
      %v4193 = vld [vmem:[%s4174 + $0x6c] sm:$0xf]
      %v4194 = vld [vmem:[%s4174 + $0x70] sm:$0xf]
      %v4195 = vld [vmem:[%s4174 + $0x78] sm:$0xf]
      %v4196 = vld [vmem:[%s4174 + $0x7c] sm:$0xf]
      %v4197 = vld [vmem:[%s4174 + $0x84] sm:$0xf]
      %v4198 = vld [vmem:[%s4174 + $0x88] sm:$0xf]
      %v4199 = vld [vmem:[%s4174 + $0x90] sm:$0xf]
      %v4200 = vld [vmem:[%s4174 + $0x94] sm:$0xf]
      %v4201 = vld [vmem:[%s4174 + $0x9c] sm:$0xf]
      %v4202 = vld [vmem:[%s4174 + $0xa0] sm:$0xf]
      %v4203 = vld [vmem:[%s4174 + $0xa8] sm:$0xf]
      %v4204 = vld [vmem:[%s4174 + $0xac] sm:$0xf]
      %v4205 = vld [vmem:[%s4174 + $0xb4] sm:$0xf]
      %v4206 = vld [vmem:[%s4174 + $0xb8] sm:$0xf]
      %s4207 = scalar_lea.vmem %s3, 192
      %v4208 = vld [vmem:[%s4207] sm:$0xf]
      %v4209 = vld [vmem:[%s4207 + $0x4] sm:$0xf]
      %v4210 = vld [vmem:[%s4207 + $0x8] sm:$0xf]
      %v4211 = vld [vmem:[%s4207 + $0xc] sm:$0xf]
      %v4212 = vld [vmem:[%s4207 + $0x10] sm:$0xf]
      %v4213 = vld [vmem:[%s4207 + $0x14] sm:$0xf]
      %v4214 = vld [vmem:[%s4207 + $0x18] sm:$0xf]
      %v4215 = vld [vmem:[%s4207 + $0x1c] sm:$0xf]
      %v4248 = vunpack.c.l.b16 %v4175
      %v4249 = vunpack.c.l.b16 %v4176
      %v4250 = vunpack.c.l.b16 %v4177
      %v4251 = vunpack.c.l.b16 %v4178
      %v4252 = vunpack.c.l.b16 %v4179
      %v4253 = vunpack.c.l.b16 %v4180
      %v4254 = vunpack.c.l.b16 %v4181
      %v4255 = vunpack.c.l.b16 %v4182
      %v4256 = vunpack.c.l.b16 %v4183
      %v4257 = vunpack.c.l.b16 %v4184
      %v4258 = vunpack.c.l.b16 %v4185
      %v4259 = vunpack.c.l.b16 %v4186
      %v4260 = vunpack.c.l.b16 %v4187
      %v4261 = vunpack.c.l.b16 %v4188
      %v4262 = vunpack.c.l.b16 %v4189
      %v4263 = vunpack.c.l.b16 %v4190
      %v4264 = vunpack.c.l.b16 %v4191
      %v4265 = vunpack.c.l.b16 %v4192
      %v4266 = vunpack.c.l.b16 %v4193
      %v4267 = vunpack.c.l.b16 %v4194
      %v4268 = vunpack.c.l.b16 %v4195
      %v4269 = vunpack.c.l.b16 %v4196
      %v4270 = vunpack.c.l.b16 %v4197
      %v4271 = vunpack.c.l.b16 %v4198
      %v4272 = vunpack.c.l.b16 %v4199
      %v4273 = vunpack.c.l.b16 %v4200
      %v4274 = vunpack.c.l.b16 %v4201
      %v4275 = vunpack.c.l.b16 %v4202
      %v4276 = vunpack.c.l.b16 %v4203
      %v4277 = vunpack.c.l.b16 %v4204
      %v4278 = vunpack.c.l.b16 %v4205
      %v4279 = vunpack.c.l.b16 %v4206
      %v4280 = vpack.c.b16 %v4249, %v4248
      %v4281 = vpack.c.b16 %v4251, %v4250
      %v4282 = vpack.c.b16 %v4253, %v4252
      %v4283 = vpack.c.b16 %v4255, %v4254
      %v4284 = vpack.c.b16 %v4257, %v4256
      %v4285 = vpack.c.b16 %v4259, %v4258
      %v4286 = vpack.c.b16 %v4261, %v4260
      %v4287 = vpack.c.b16 %v4263, %v4262
      %v4288 = vpack.c.b16 %v4265, %v4264
      %v4289 = vpack.c.b16 %v4267, %v4266
      %v4290 = vpack.c.b16 %v4269, %v4268
      %v4291 = vpack.c.b16 %v4271, %v4270
      %v4292 = vpack.c.b16 %v4273, %v4272
      %v4293 = vpack.c.b16 %v4275, %v4274
      %v4294 = vpack.c.b16 %v4277, %v4276
      %v4295 = vpack.c.b16 %v4279, %v4278
      %v4304 = vunpack.c.l.b16 %v4208
      %v4305 = vunpack.c.l.b16 %v4209
      %v4306 = vunpack.c.l.b16 %v4210
      %v4307 = vunpack.c.l.b16 %v4211
      %v4308 = vunpack.c.l.b16 %v4212
      %v4309 = vunpack.c.l.b16 %v4213
      %v4310 = vunpack.c.l.b16 %v4214
      %v4311 = vunpack.c.l.b16 %v4215
      %v4312 = vpack.c.b16 %v4305, %v4304
      %v4313 = vpack.c.b16 %v4307, %v4306
      %v4314 = vpack.c.b16 %v4309, %v4308
      %v4315 = vpack.c.b16 %v4311, %v4310
      %v4321 = vsel %vm1528, %v4280, 0
      %v4324 = vsel %vm1528, %v4281, 0
      %v4327 = vsel %vm1528, %v4282, 0
      %v4330 = vsel %vm1528, %v4283, 0
      %v4333 = vsel %vm1528, %v4284, 0
      %v4336 = vsel %vm1528, %v4285, 0
      %v4339 = vsel %vm1528, %v4286, 0
      %v4342 = vsel %vm1528, %v4287, 0
      %v4345 = vsel %vm1528, %v4288, 0
      %v4348 = vsel %vm1528, %v4289, 0
      %v4351 = vsel %vm1528, %v4290, 0
      %v4354 = vsel %vm1528, %v4291, 0
      %v4357 = vsel %vm1528, %v4292, 0
      %v4360 = vsel %vm1528, %v4293, 0
      %v4363 = vsel %vm1528, %v4294, 0
      %v4366 = vsel %vm1528, %v4295, 0
      %4368 = vmatprep.subr.bf16.mxu0 0
      %4369 = vmatpush1.bf16.msra.mxu0 %v4312
      %4370 = vmatprep.subr.bf16.mxu0 0
      %4371 = vmatpush1.bf16.msra.mxu0 %v4313
      %4372 = vmatprep.subr.bf16.mxu0 0
      %4373 = vmatpush1.bf16.msra.mxu0 %v4314
      %4374 = vmatprep.subr.bf16.mxu0 0
      %4375 = vmatpush1.bf16.msra.mxu0 %v4315
      %4376 = vmatprep.subr.bf16.mxu0 0
      %4377 = vmatpush1.bf16.msra.mxu0 0
      %4378 = vmatprep.subr.bf16.mxu0 0
      %4379 = vmatpush1.bf16.msra.mxu0 0
      %4380 = vmatprep.subr.bf16.mxu0 0
      %4381 = vmatpush1.bf16.msra.mxu0 0
      %4382 = vmatprep.subr.bf16.mxu0 0
      %4383 = vmatpush1.bf16.msra.mxu0 0
      %4384 = vmatprep.subr.bf16.mxu0 0
      %4385 = vmatpush1.bf16.msra.mxu0 0
      %4386 = vmatprep.subr.bf16.mxu0 0
      %4387 = vmatpush1.bf16.msra.mxu0 0
      %4388 = vmatprep.subr.bf16.mxu0 0
      %4389 = vmatpush1.bf16.msra.mxu0 0
      %4390 = vmatprep.subr.bf16.mxu0 0
      %4391 = vmatpush1.bf16.msra.mxu0 0
      %4392 = vmatprep.subr.bf16.mxu0 0
      %4393 = vmatpush1.bf16.msra.mxu0 0
      %4394 = vmatprep.subr.bf16.mxu0 0
      %4395 = vmatpush1.bf16.msra.mxu0 0
      %4396 = vmatprep.subr.bf16.mxu0 0
      %4397 = vmatpush1.bf16.msra.mxu0 0
      %4398 = vmatprep.subr.bf16.mxu0 0
      %4399 = vmatpush1.bf16.msra.mxu0 0
      %4400 = vmatprep.mubr.bf16.mxu0 0
      %4401 = vmatmul.mubr.bf16.gmra.mrb[0].mxu0 %v4321
      %v4402 = vpop.f32.mrb[0].mxu0
      %v4403 = vadd.f32 0.0, %v4402
      %v4404 = vpop.f32.mrb[0].mxu0
      %v4405 = vpop.f32.mrb[0].mxu0
      %v4406 = vadd.f32 0.0, %v4405
      %v4407 = vpop.f32.mrb[0].mxu0
      %4408 = vmatprep.mubr.bf16.mxu0 0
      %4409 = vmatmul.mubr.bf16.gmra.mrb[0].mxu0 %v4324
      %v4410 = vpop.f32.mrb[0].mxu0
      %v4411 = vadd.f32 0.0, %v4410
      %v4412 = vpop.f32.mrb[0].mxu0
      %v4413 = vpop.f32.mrb[0].mxu0
      %v4414 = vadd.f32 0.0, %v4413
      %v4415 = vpop.f32.mrb[0].mxu0
      %4416 = vmatprep.mubr.bf16.mxu0 0
      %4417 = vmatmul.mubr.bf16.gmra.mrb[0].mxu0 %v4327
      %v4418 = vpop.f32.mrb[0].mxu0
      %v4419 = vadd.f32 0.0, %v4418
      %v4420 = vpop.f32.mrb[0].mxu0
      %v4421 = vpop.f32.mrb[0].mxu0
      %v4422 = vadd.f32 0.0, %v4421
      %v4423 = vpop.f32.mrb[0].mxu0
      %4424 = vmatprep.mubr.bf16.mxu0 0
      %4425 = vmatmul.mubr.bf16.gmra.mrb[0].mxu0 %v4330
      %v4426 = vpop.f32.mrb[0].mxu0
      %v4427 = vadd.f32 0.0, %v4426
      %v4428 = vpop.f32.mrb[0].mxu0
      %v4429 = vpop.f32.mrb[0].mxu0
      %v4430 = vadd.f32 0.0, %v4429
      %v4431 = vpop.f32.mrb[0].mxu0
      %4432 = vmatprep.mubr.bf16.mxu0 0
      %4433 = vmatmul.mubr.bf16.gmra.mrb[0].mxu0 %v4333
      %v4434 = vpop.f32.mrb[0].mxu0
      %v4435 = vadd.f32 0.0, %v4434
      %v4436 = vpop.f32.mrb[0].mxu0
      %v4437 = vpop.f32.mrb[0].mxu0
      %v4438 = vadd.f32 0.0, %v4437
      %v4439 = vpop.f32.mrb[0].mxu0
      %4440 = vmatprep.mubr.bf16.mxu0 0
      %4441 = vmatmul.mubr.bf16.gmra.mrb[0].mxu0 %v4336
      %v4442 = vpop.f32.mrb[0].mxu0
      %v4443 = vadd.f32 0.0, %v4442
      %v4444 = vpop.f32.mrb[0].mxu0
      %v4445 = vpop.f32.mrb[0].mxu0
      %v4446 = vadd.f32 0.0, %v4445
      %v4447 = vpop.f32.mrb[0].mxu0
      %4448 = vmatprep.mubr.bf16.mxu0 0
      %4449 = vmatmul.mubr.bf16.gmra.mrb[0].mxu0 %v4339
      %v4450 = vpop.f32.mrb[0].mxu0
      %v4451 = vadd.f32 0.0, %v4450
      %v4452 = vpop.f32.mrb[0].mxu0
      %v4453 = vpop.f32.mrb[0].mxu0
      %v4454 = vadd.f32 0.0, %v4453
      %v4455 = vpop.f32.mrb[0].mxu0
      %4456 = vmatprep.mubr.bf16.mxu0 0
      %4457 = vmatmul.mubr.bf16.gmra.mrb[0].mxu0 %v4342
      %v4458 = vpop.f32.mrb[0].mxu0
      %v4459 = vadd.f32 0.0, %v4458
      %v4460 = vpop.f32.mrb[0].mxu0
      %v4461 = vpop.f32.mrb[0].mxu0
      %v4462 = vadd.f32 0.0, %v4461
      %v4463 = vpop.f32.mrb[0].mxu0
      %4464 = vmatprep.mubr.bf16.mxu0 0
      %4465 = vmatmul.mubr.bf16.gmra.mrb[0].mxu0 %v4345
      %v4466 = vpop.f32.mrb[0].mxu0
      %v4467 = vadd.f32 0.0, %v4466
      %v4468 = vpop.f32.mrb[0].mxu0
      %v4469 = vpop.f32.mrb[0].mxu0
      %v4470 = vadd.f32 0.0, %v4469
      %v4471 = vpop.f32.mrb[0].mxu0
      %4472 = vmatprep.mubr.bf16.mxu0 0
      %4473 = vmatmul.mubr.bf16.gmra.mrb[0].mxu0 %v4348
      %v4474 = vpop.f32.mrb[0].mxu0
      %v4475 = vadd.f32 0.0, %v4474
      %v4476 = vpop.f32.mrb[0].mxu0
      %v4477 = vpop.f32.mrb[0].mxu0
      %v4478 = vadd.f32 0.0, %v4477
      %v4479 = vpop.f32.mrb[0].mxu0
      %4480 = vmatprep.mubr.bf16.mxu0 0
      %4481 = vmatmul.mubr.bf16.gmra.mrb[0].mxu0 %v4351
      %v4482 = vpop.f32.mrb[0].mxu0
      %v4483 = vadd.f32 0.0, %v4482
      %v4484 = vpop.f32.mrb[0].mxu0
      %v4485 = vpop.f32.mrb[0].mxu0
      %v4486 = vadd.f32 0.0, %v4485
      %v4487 = vpop.f32.mrb[0].mxu0
      %4488 = vmatprep.mubr.bf16.mxu0 0
      %4489 = vmatmul.mubr.bf16.gmra.mrb[0].mxu0 %v4354
      %v4490 = vpop.f32.mrb[0].mxu0
      %v4491 = vadd.f32 0.0, %v4490
      %v4492 = vpop.f32.mrb[0].mxu0
      %v4493 = vpop.f32.mrb[0].mxu0
      %v4494 = vadd.f32 0.0, %v4493
      %v4495 = vpop.f32.mrb[0].mxu0
      %4496 = vmatprep.mubr.bf16.mxu0 0
      %4497 = vmatmul.mubr.bf16.gmra.mrb[0].mxu0 %v4357
      %v4498 = vpop.f32.mrb[0].mxu0
      %v4499 = vadd.f32 0.0, %v4498
      %v4500 = vpop.f32.mrb[0].mxu0
      %v4501 = vpop.f32.mrb[0].mxu0
      %v4502 = vadd.f32 0.0, %v4501
      %v4503 = vpop.f32.mrb[0].mxu0
      %4504 = vmatprep.mubr.bf16.mxu0 0
      %4505 = vmatmul.mubr.bf16.gmra.mrb[0].mxu0 %v4360
      %v4506 = vpop.f32.mrb[0].mxu0
      %v4507 = vadd.f32 0.0, %v4506
      %v4508 = vpop.f32.mrb[0].mxu0
      %v4509 = vpop.f32.mrb[0].mxu0
      %v4510 = vadd.f32 0.0, %v4509
      %v4511 = vpop.f32.mrb[0].mxu0
      %4512 = vmatprep.mubr.bf16.mxu0 0
      %4513 = vmatmul.mubr.bf16.gmra.mrb[0].mxu0 %v4363
      %v4514 = vpop.f32.mrb[0].mxu0
      %v4515 = vadd.f32 0.0, %v4514
      %v4516 = vpop.f32.mrb[0].mxu0
      %v4517 = vpop.f32.mrb[0].mxu0
      %v4518 = vadd.f32 0.0, %v4517
      %v4519 = vpop.f32.mrb[0].mxu0
      %4520 = vmatprep.mubr.bf16.mxu0 0
      %4521 = vmatmul.mubr.bf16.gmra.mrb[0].mxu0 %v4366
      %v4522 = vpop.f32.mrb[0].mxu0
      %v4523 = vadd.f32 0.0, %v4522
      %v4524 = vpop.f32.mrb[0].mxu0
      %v4525 = vpop.f32.mrb[0].mxu0
      %v4526 = vadd.f32 0.0, %v4525
      %v4527 = vpop.f32.mrb[0].mxu0
      %4528 = vdwg.mxu0
      %v4529 = vadd.f32 %v4142, %v4403
      %v4530 = vadd.f32 %v4143, %v4406
      %v4531 = vadd.f32 %v4144, %v4411
      %v4532 = vadd.f32 %v4145, %v4414
      %v4533 = vadd.f32 %v4146, %v4419
      %v4534 = vadd.f32 %v4147, %v4422
      %v4535 = vadd.f32 %v4148, %v4427
      %v4536 = vadd.f32 %v4149, %v4430
      %v4537 = vadd.f32 %v4150, %v4435
      %v4538 = vadd.f32 %v4151, %v4438
      %v4539 = vadd.f32 %v4152, %v4443
      %v4540 = vadd.f32 %v4153, %v4446
      %v4541 = vadd.f32 %v4154, %v4451
      %v4542 = vadd.f32 %v4155, %v4454
      %v4543 = vadd.f32 %v4156, %v4459
      %v4544 = vadd.f32 %v4157, %v4462
      %v4545 = vadd.f32 %v4158, %v4467
      %v4546 = vadd.f32 %v4159, %v4470
      %v4547 = vadd.f32 %v4160, %v4475
      %v4548 = vadd.f32 %v4161, %v4478
      %v4549 = vadd.f32 %v4162, %v4483
      %v4550 = vadd.f32 %v4163, %v4486
      %v4551 = vadd.f32 %v4164, %v4491
      %v4552 = vadd.f32 %v4165, %v4494
      %v4553 = vadd.f32 %v4166, %v4499
      %v4554 = vadd.f32 %v4167, %v4502
      %v4555 = vadd.f32 %v4168, %v4507
      %v4556 = vadd.f32 %v4169, %v4510
      %v4557 = vadd.f32 %v4170, %v4515
      %v4558 = vadd.f32 %v4171, %v4518
      %v4559 = vadd.f32 %v4172, %v4523
      %v4560 = vadd.f32 %v4173, %v4526
      %v4561 = vld [vmem:[%s4174] sm:$0xf]
      %v4562 = vld [vmem:[%s4174 + $0x4] sm:$0xf]
      %v4563 = vld [vmem:[%s4174 + $0x8] sm:$0x1]
      %v4564 = vld [vmem:[%s4174 + $0xc] sm:$0xf]
      %v4565 = vld [vmem:[%s4174 + $0x10] sm:$0xf]
      %v4566 = vld [vmem:[%s4174 + $0x14] sm:$0x1]
      %v4567 = vld [vmem:[%s4174 + $0x18] sm:$0xf]
      %v4568 = vld [vmem:[%s4174 + $0x1c] sm:$0xf]
      %v4569 = vld [vmem:[%s4174 + $0x20] sm:$0x1]
      %v4570 = vld [vmem:[%s4174 + $0x24] sm:$0xf]
      %v4571 = vld [vmem:[%s4174 + $0x28] sm:$0xf]
      %v4572 = vld [vmem:[%s4174 + $0x2c] sm:$0x1]
      %v4573 = vld [vmem:[%s4174 + $0x30] sm:$0xf]
      %v4574 = vld [vmem:[%s4174 + $0x34] sm:$0xf]
      %v4575 = vld [vmem:[%s4174 + $0x38] sm:$0x1]
      %v4576 = vld [vmem:[%s4174 + $0x3c] sm:$0xf]
      %v4577 = vld [vmem:[%s4174 + $0x40] sm:$0xf]
      %v4578 = vld [vmem:[%s4174 + $0x44] sm:$0x1]
      %v4579 = vld [vmem:[%s4174 + $0x48] sm:$0xf]
      %v4580 = vld [vmem:[%s4174 + $0x4c] sm:$0xf]
      %v4581 = vld [vmem:[%s4174 + $0x50] sm:$0x1]
      %v4582 = vld [vmem:[%s4174 + $0x54] sm:$0xf]
      %v4583 = vld [vmem:[%s4174 + $0x58] sm:$0xf]
      %v4584 = vld [vmem:[%s4174 + $0x5c] sm:$0x1]
      %v4585 = vld [vmem:[%s4174 + $0x60] sm:$0xf]
      %v4586 = vld [vmem:[%s4174 + $0x64] sm:$0xf]
      %v4587 = vld [vmem:[%s4174 + $0x68] sm:$0x1]
      %v4588 = vld [vmem:[%s4174 + $0x6c] sm:$0xf]
      %v4589 = vld [vmem:[%s4174 + $0x70] sm:$0xf]
      %v4590 = vld [vmem:[%s4174 + $0x74] sm:$0x1]
      %v4591 = vld [vmem:[%s4174 + $0x78] sm:$0xf]
      %v4592 = vld [vmem:[%s4174 + $0x7c] sm:$0xf]
      %v4593 = vld [vmem:[%s4174 + $0x80] sm:$0x1]
      %v4594 = vld [vmem:[%s4174 + $0x84] sm:$0xf]
      %v4595 = vld [vmem:[%s4174 + $0x88] sm:$0xf]
      %v4596 = vld [vmem:[%s4174 + $0x8c] sm:$0x1]
      %v4597 = vld [vmem:[%s4174 + $0x90] sm:$0xf]
      %v4598 = vld [vmem:[%s4174 + $0x94] sm:$0xf]
      %v4599 = vld [vmem:[%s4174 + $0x98] sm:$0x1]
      %v4600 = vld [vmem:[%s4174 + $0x9c] sm:$0xf]
      %v4601 = vld [vmem:[%s4174 + $0xa0] sm:$0xf]
      %v4602 = vld [vmem:[%s4174 + $0xa4] sm:$0x1]
      %v4603 = vld [vmem:[%s4174 + $0xa8] sm:$0xf]
      %v4604 = vld [vmem:[%s4174 + $0xac] sm:$0xf]
      %v4605 = vld [vmem:[%s4174 + $0xb0] sm:$0x1]
      %v4606 = vld [vmem:[%s4174 + $0xb4] sm:$0xf]
      %v4607 = vld [vmem:[%s4174 + $0xb8] sm:$0xf]
      %v4608 = vld [vmem:[%s4174 + $0xbc] sm:$0x1]
      %v4610 = vshrl.u32 %v4561, 16
      %v4612 = vrot.slane %v4610, 4
      %v4613 = vshll.u32 %v4561, 16
      %v4615 = vrot.slane %v4613, 5
      %v4616 = vor.u32 %v4612, %v4615
      %v4617 = vrot.slane %v4616, 4
      %v4619 = vshll.u32 %v4562, 16
      %v4621 = vrot.slane %v4619, 5
      %v4622 = vsel %vm1062, %v4617, %v4621
      %v4623 = vshrl.u32 %v4562, 16
      %v4625 = vrot.slane %v4623, 4
      %v4626 = vor.u32 %v4625, %v4621
      %v4627 = vrot.slane %v4626, 4
      %v4629 = vshll.u32 %v4563, 16
      %v4631 = vrot.slane %v4629, 5
      %v4632 = vsel %vm1062, %v4627, %v4631
      %v4634 = vshrl.u32 %v4564, 16
      %v4636 = vrot.slane %v4634, 4
      %v4637 = vshll.u32 %v4564, 16
      %v4639 = vrot.slane %v4637, 5
      %v4640 = vor.u32 %v4636, %v4639
      %v4641 = vrot.slane %v4640, 4
      %v4643 = vshll.u32 %v4565, 16
      %v4645 = vrot.slane %v4643, 5
      %v4646 = vsel %vm1062, %v4641, %v4645
      %v4647 = vshrl.u32 %v4565, 16
      %v4649 = vrot.slane %v4647, 4
      %v4650 = vor.u32 %v4649, %v4645
      %v4651 = vrot.slane %v4650, 4
      %v4653 = vshll.u32 %v4566, 16
      %v4655 = vrot.slane %v4653, 5
      %v4656 = vsel %vm1062, %v4651, %v4655
      %v4658 = vshrl.u32 %v4567, 16
      %v4660 = vrot.slane %v4658, 4
      %v4661 = vshll.u32 %v4567, 16
      %v4663 = vrot.slane %v4661, 5
      %v4664 = vor.u32 %v4660, %v4663
      %v4665 = vrot.slane %v4664, 4
      %v4667 = vshll.u32 %v4568, 16
      %v4669 = vrot.slane %v4667, 5
      %v4670 = vsel %vm1062, %v4665, %v4669
      %v4671 = vshrl.u32 %v4568, 16
      %v4673 = vrot.slane %v4671, 4
      %v4674 = vor.u32 %v4673, %v4669
      %v4675 = vrot.slane %v4674, 4
      %v4677 = vshll.u32 %v4569, 16
      %v4679 = vrot.slane %v4677, 5
      %v4680 = vsel %vm1062, %v4675, %v4679
      %v4682 = vshrl.u32 %v4570, 16
      %v4684 = vrot.slane %v4682, 4
      %v4685 = vshll.u32 %v4570, 16
      %v4687 = vrot.slane %v4685, 5
      %v4688 = vor.u32 %v4684, %v4687
      %v4689 = vrot.slane %v4688, 4
      %v4691 = vshll.u32 %v4571, 16
      %v4693 = vrot.slane %v4691, 5
      %v4694 = vsel %vm1062, %v4689, %v4693
      %v4695 = vshrl.u32 %v4571, 16
      %v4697 = vrot.slane %v4695, 4
      %v4698 = vor.u32 %v4697, %v4693
      %v4699 = vrot.slane %v4698, 4
      %v4701 = vshll.u32 %v4572, 16
      %v4703 = vrot.slane %v4701, 5
      %v4704 = vsel %vm1062, %v4699, %v4703
      %v4706 = vshrl.u32 %v4573, 16
      %v4708 = vrot.slane %v4706, 4
      %v4709 = vshll.u32 %v4573, 16
      %v4711 = vrot.slane %v4709, 5
      %v4712 = vor.u32 %v4708, %v4711
      %v4713 = vrot.slane %v4712, 4
      %v4715 = vshll.u32 %v4574, 16
      %v4717 = vrot.slane %v4715, 5
      %v4718 = vsel %vm1062, %v4713, %v4717
      %v4719 = vshrl.u32 %v4574, 16
      %v4721 = vrot.slane %v4719, 4
      %v4722 = vor.u32 %v4721, %v4717
      %v4723 = vrot.slane %v4722, 4
      %v4725 = vshll.u32 %v4575, 16
      %v4727 = vrot.slane %v4725, 5
      %v4728 = vsel %vm1062, %v4723, %v4727
      %v4730 = vshrl.u32 %v4576, 16
      %v4732 = vrot.slane %v4730, 4
      %v4733 = vshll.u32 %v4576, 16
      %v4735 = vrot.slane %v4733, 5
      %v4736 = vor.u32 %v4732, %v4735
      %v4737 = vrot.slane %v4736, 4
      %v4739 = vshll.u32 %v4577, 16
      %v4741 = vrot.slane %v4739, 5
      %v4742 = vsel %vm1062, %v4737, %v4741
      %v4743 = vshrl.u32 %v4577, 16
      %v4745 = vrot.slane %v4743, 4
      %v4746 = vor.u32 %v4745, %v4741
      %v4747 = vrot.slane %v4746, 4
      %v4749 = vshll.u32 %v4578, 16
      %v4751 = vrot.slane %v4749, 5
      %v4752 = vsel %vm1062, %v4747, %v4751
      %v4754 = vshrl.u32 %v4579, 16
      %v4756 = vrot.slane %v4754, 4
      %v4757 = vshll.u32 %v4579, 16
      %v4759 = vrot.slane %v4757, 5
      %v4760 = vor.u32 %v4756, %v4759
      %v4761 = vrot.slane %v4760, 4
      %v4763 = vshll.u32 %v4580, 16
      %v4765 = vrot.slane %v4763, 5
      %v4766 = vsel %vm1062, %v4761, %v4765
      %v4767 = vshrl.u32 %v4580, 16
      %v4769 = vrot.slane %v4767, 4
      %v4770 = vor.u32 %v4769, %v4765
      %v4771 = vrot.slane %v4770, 4
      %v4773 = vshll.u32 %v4581, 16
      %v4775 = vrot.slane %v4773, 5
      %v4776 = vsel %vm1062, %v4771, %v4775
      %v4778 = vshrl.u32 %v4582, 16
      %v4780 = vrot.slane %v4778, 4
      %v4781 = vshll.u32 %v4582, 16
      %v4783 = vrot.slane %v4781, 5
      %v4784 = vor.u32 %v4780, %v4783
      %v4785 = vrot.slane %v4784, 4
      %v4787 = vshll.u32 %v4583, 16
      %v4789 = vrot.slane %v4787, 5
      %v4790 = vsel %vm1062, %v4785, %v4789
      %v4791 = vshrl.u32 %v4583, 16
      %v4793 = vrot.slane %v4791, 4
      %v4794 = vor.u32 %v4793, %v4789
      %v4795 = vrot.slane %v4794, 4
      %v4797 = vshll.u32 %v4584, 16
      %v4799 = vrot.slane %v4797, 5
      %v4800 = vsel %vm1062, %v4795, %v4799
      %v4802 = vshrl.u32 %v4585, 16
      %v4804 = vrot.slane %v4802, 4
      %v4805 = vshll.u32 %v4585, 16
      %v4807 = vrot.slane %v4805, 5
      %v4808 = vor.u32 %v4804, %v4807
      %v4809 = vrot.slane %v4808, 4
      %v4811 = vshll.u32 %v4586, 16
      %v4813 = vrot.slane %v4811, 5
      %v4814 = vsel %vm1062, %v4809, %v4813
      %v4815 = vshrl.u32 %v4586, 16
      %v4817 = vrot.slane %v4815, 4
      %v4818 = vor.u32 %v4817, %v4813
      %v4819 = vrot.slane %v4818, 4
      %v4821 = vshll.u32 %v4587, 16
      %v4823 = vrot.slane %v4821, 5
      %v4824 = vsel %vm1062, %v4819, %v4823
      %v4826 = vshrl.u32 %v4588, 16
      %v4828 = vrot.slane %v4826, 4
      %v4829 = vshll.u32 %v4588, 16
      %v4831 = vrot.slane %v4829, 5
      %v4832 = vor.u32 %v4828, %v4831
      %v4833 = vrot.slane %v4832, 4
      %v4835 = vshll.u32 %v4589, 16
      %v4837 = vrot.slane %v4835, 5
      %v4838 = vsel %vm1062, %v4833, %v4837
      %v4839 = vshrl.u32 %v4589, 16
      %v4841 = vrot.slane %v4839, 4
      %v4842 = vor.u32 %v4841, %v4837
      %v4843 = vrot.slane %v4842, 4
      %v4845 = vshll.u32 %v4590, 16
      %v4847 = vrot.slane %v4845, 5
      %v4848 = vsel %vm1062, %v4843, %v4847
      %v4850 = vshrl.u32 %v4591, 16
      %v4852 = vrot.slane %v4850, 4
      %v4853 = vshll.u32 %v4591, 16
      %v4855 = vrot.slane %v4853, 5
      %v4856 = vor.u32 %v4852, %v4855
      %v4857 = vrot.slane %v4856, 4
      %v4859 = vshll.u32 %v4592, 16
      %v4861 = vrot.slane %v4859, 5
      %v4862 = vsel %vm1062, %v4857, %v4861
      %v4863 = vshrl.u32 %v4592, 16
      %v4865 = vrot.slane %v4863, 4
      %v4866 = vor.u32 %v4865, %v4861
      %v4867 = vrot.slane %v4866, 4
      %v4869 = vshll.u32 %v4593, 16
      %v4871 = vrot.slane %v4869, 5
      %v4872 = vsel %vm1062, %v4867, %v4871
      %v4874 = vshrl.u32 %v4594, 16
      %v4876 = vrot.slane %v4874, 4
      %v4877 = vshll.u32 %v4594, 16
      %v4879 = vrot.slane %v4877, 5
      %v4880 = vor.u32 %v4876, %v4879
      %v4881 = vrot.slane %v4880, 4
      %v4883 = vshll.u32 %v4595, 16
      %v4885 = vrot.slane %v4883, 5
      %v4886 = vsel %vm1062, %v4881, %v4885
      %v4887 = vshrl.u32 %v4595, 16
      %v4889 = vrot.slane %v4887, 4
      %v4890 = vor.u32 %v4889, %v4885
      %v4891 = vrot.slane %v4890, 4
      %v4893 = vshll.u32 %v4596, 16
      %v4895 = vrot.slane %v4893, 5
      %v4896 = vsel %vm1062, %v4891, %v4895
      %v4898 = vshrl.u32 %v4597, 16
      %v4900 = vrot.slane %v4898, 4
      %v4901 = vshll.u32 %v4597, 16
      %v4903 = vrot.slane %v4901, 5
      %v4904 = vor.u32 %v4900, %v4903
      %v4905 = vrot.slane %v4904, 4
      %v4907 = vshll.u32 %v4598, 16
      %v4909 = vrot.slane %v4907, 5
      %v4910 = vsel %vm1062, %v4905, %v4909
      %v4911 = vshrl.u32 %v4598, 16
      %v4913 = vrot.slane %v4911, 4
      %v4914 = vor.u32 %v4913, %v4909
      %v4915 = vrot.slane %v4914, 4
      %v4917 = vshll.u32 %v4599, 16
      %v4919 = vrot.slane %v4917, 5
      %v4920 = vsel %vm1062, %v4915, %v4919
      %v4922 = vshrl.u32 %v4600, 16
      %v4924 = vrot.slane %v4922, 4
      %v4925 = vshll.u32 %v4600, 16
      %v4927 = vrot.slane %v4925, 5
      %v4928 = vor.u32 %v4924, %v4927
      %v4929 = vrot.slane %v4928, 4
      %v4931 = vshll.u32 %v4601, 16
      %v4933 = vrot.slane %v4931, 5
      %v4934 = vsel %vm1062, %v4929, %v4933
      %v4935 = vshrl.u32 %v4601, 16
      %v4937 = vrot.slane %v4935, 4
      %v4938 = vor.u32 %v4937, %v4933
      %v4939 = vrot.slane %v4938, 4
      %v4941 = vshll.u32 %v4602, 16
      %v4943 = vrot.slane %v4941, 5
      %v4944 = vsel %vm1062, %v4939, %v4943
      %v4946 = vshrl.u32 %v4603, 16
      %v4948 = vrot.slane %v4946, 4
      %v4949 = vshll.u32 %v4603, 16
      %v4951 = vrot.slane %v4949, 5
      %v4952 = vor.u32 %v4948, %v4951
      %v4953 = vrot.slane %v4952, 4
      %v4955 = vshll.u32 %v4604, 16
      %v4957 = vrot.slane %v4955, 5
      %v4958 = vsel %vm1062, %v4953, %v4957
      %v4959 = vshrl.u32 %v4604, 16
      %v4961 = vrot.slane %v4959, 4
      %v4962 = vor.u32 %v4961, %v4957
      %v4963 = vrot.slane %v4962, 4
      %v4965 = vshll.u32 %v4605, 16
      %v4967 = vrot.slane %v4965, 5
      %v4968 = vsel %vm1062, %v4963, %v4967
      %v4970 = vshrl.u32 %v4606, 16
      %v4972 = vrot.slane %v4970, 4
      %v4973 = vshll.u32 %v4606, 16
      %v4975 = vrot.slane %v4973, 5
      %v4976 = vor.u32 %v4972, %v4975
      %v4977 = vrot.slane %v4976, 4
      %v4979 = vshll.u32 %v4607, 16
      %v4981 = vrot.slane %v4979, 5
      %v4982 = vsel %vm1062, %v4977, %v4981
      %v4983 = vshrl.u32 %v4607, 16
      %v4985 = vrot.slane %v4983, 4
      %v4986 = vor.u32 %v4985, %v4981
      %v4987 = vrot.slane %v4986, 4
      %v4989 = vshll.u32 %v4608, 16
      %v4991 = vrot.slane %v4989, 5
      %v4992 = vsel %vm1062, %v4987, %v4991
      %s4993 = scalar_lea.vmem %s3, 224
      %v4994 = vld [vmem:[%s4993] sm:$0xf]
      %v4995 = vld [vmem:[%s4993 + $0x4] sm:$0xf]
      %v4996 = vld [vmem:[%s4993 + $0x8] sm:$0xf]
      %v4997 = vld [vmem:[%s4993 + $0xc] sm:$0xf]
      %v4998 = vld [vmem:[%s4993 + $0x10] sm:$0xf]
      %v4999 = vld [vmem:[%s4993 + $0x14] sm:$0xf]
      %v5000 = vld [vmem:[%s4993 + $0x18] sm:$0xf]
      %v5001 = vld [vmem:[%s4993 + $0x1c] sm:$0xf]
      %v5002 = vunpack.c.l.b16 %v4622
      %v5003 = vunpack.c.l.b16 %v4632
      %v5004 = vunpack.c.l.b16 %v4646
      %v5005 = vunpack.c.l.b16 %v4656
      %v5006 = vunpack.c.l.b16 %v4670
      %v5007 = vunpack.c.l.b16 %v4680
      %v5008 = vunpack.c.l.b16 %v4694
      %v5009 = vunpack.c.l.b16 %v4704
      %v5010 = vunpack.c.l.b16 %v4718
      %v5011 = vunpack.c.l.b16 %v4728
      %v5012 = vunpack.c.l.b16 %v4742
      %v5013 = vunpack.c.l.b16 %v4752
      %v5014 = vunpack.c.l.b16 %v4766
      %v5015 = vunpack.c.l.b16 %v4776
      %v5016 = vunpack.c.l.b16 %v4790
      %v5017 = vunpack.c.l.b16 %v4800
      %v5018 = vunpack.c.l.b16 %v4814
      %v5019 = vunpack.c.l.b16 %v4824
      %v5020 = vunpack.c.l.b16 %v4838
      %v5021 = vunpack.c.l.b16 %v4848
      %v5022 = vunpack.c.l.b16 %v4862
      %v5023 = vunpack.c.l.b16 %v4872
      %v5024 = vunpack.c.l.b16 %v4886
      %v5025 = vunpack.c.l.b16 %v4896
      %v5026 = vunpack.c.l.b16 %v4910
      %v5027 = vunpack.c.l.b16 %v4920
      %v5028 = vunpack.c.l.b16 %v4934
      %v5029 = vunpack.c.l.b16 %v4944
      %v5030 = vunpack.c.l.b16 %v4958
      %v5031 = vunpack.c.l.b16 %v4968
      %v5032 = vunpack.c.l.b16 %v4982
      %v5033 = vunpack.c.l.b16 %v4992
      %v5034 = vpack.c.b16 %v5003, %v5002
      %v5035 = vpack.c.b16 %v5005, %v5004
      %v5036 = vpack.c.b16 %v5007, %v5006
      %v5037 = vpack.c.b16 %v5009, %v5008
      %v5038 = vpack.c.b16 %v5011, %v5010
      %v5039 = vpack.c.b16 %v5013, %v5012
      %v5040 = vpack.c.b16 %v5015, %v5014
      %v5041 = vpack.c.b16 %v5017, %v5016
      %v5042 = vpack.c.b16 %v5019, %v5018
      %v5043 = vpack.c.b16 %v5021, %v5020
      %v5044 = vpack.c.b16 %v5023, %v5022
      %v5045 = vpack.c.b16 %v5025, %v5024
      %v5046 = vpack.c.b16 %v5027, %v5026
      %v5047 = vpack.c.b16 %v5029, %v5028
      %v5048 = vpack.c.b16 %v5031, %v5030
      %v5049 = vpack.c.b16 %v5033, %v5032
      %v5058 = vunpack.c.l.b16 %v4994
      %v5059 = vunpack.c.l.b16 %v4995
      %v5060 = vunpack.c.l.b16 %v4996
      %v5061 = vunpack.c.l.b16 %v4997
      %v5062 = vunpack.c.l.b16 %v4998
      %v5063 = vunpack.c.l.b16 %v4999
      %v5064 = vunpack.c.l.b16 %v5000
      %v5065 = vunpack.c.l.b16 %v5001
      %v5066 = vpack.c.b16 %v5059, %v5058
      %v5067 = vpack.c.b16 %v5061, %v5060
      %v5068 = vpack.c.b16 %v5063, %v5062
      %v5069 = vpack.c.b16 %v5065, %v5064
      %v5075 = vsel %vm1528, %v5034, 0
      %v5078 = vsel %vm1528, %v5035, 0
      %v5081 = vsel %vm1528, %v5036, 0
      %v5084 = vsel %vm1528, %v5037, 0
      %v5087 = vsel %vm1528, %v5038, 0
      %v5090 = vsel %vm1528, %v5039, 0
      %v5093 = vsel %vm1528, %v5040, 0
      %v5096 = vsel %vm1528, %v5041, 0
      %v5099 = vsel %vm1528, %v5042, 0
      %v5102 = vsel %vm1528, %v5043, 0
      %v5105 = vsel %vm1528, %v5044, 0
      %v5108 = vsel %vm1528, %v5045, 0
      %v5111 = vsel %vm1528, %v5046, 0
      %v5114 = vsel %vm1528, %v5047, 0
      %v5117 = vsel %vm1528, %v5048, 0
      %v5120 = vsel %vm1528, %v5049, 0
      %5122 = vmatprep.subr.bf16.mxu0 0
      %5123 = vmatpush1.bf16.msra.mxu0 %v5066
      %5124 = vmatprep.subr.bf16.mxu0 0
      %5125 = vmatpush1.bf16.msra.mxu0 %v5067
      %5126 = vmatprep.subr.bf16.mxu0 0
      %5127 = vmatpush1.bf16.msra.mxu0 %v5068
      %5128 = vmatprep.subr.bf16.mxu0 0
      %5129 = vmatpush1.bf16.msra.mxu0 %v5069
      %5130 = vmatprep.subr.bf16.mxu0 0
      %5131 = vmatpush1.bf16.msra.mxu0 0
      %5132 = vmatprep.subr.bf16.mxu0 0
      %5133 = vmatpush1.bf16.msra.mxu0 0
      %5134 = vmatprep.subr.bf16.mxu0 0
      %5135 = vmatpush1.bf16.msra.mxu0 0
      %5136 = vmatprep.subr.bf16.mxu0 0
      %5137 = vmatpush1.bf16.msra.mxu0 0
      %5138 = vmatprep.subr.bf16.mxu0 0
      %5139 = vmatpush1.bf16.msra.mxu0 0
      %5140 = vmatprep.subr.bf16.mxu0 0
      %5141 = vmatpush1.bf16.msra.mxu0 0
      %5142 = vmatprep.subr.bf16.mxu0 0
      %5143 = vmatpush1.bf16.msra.mxu0 0
      %5144 = vmatprep.subr.bf16.mxu0 0
      %5145 = vmatpush1.bf16.msra.mxu0 0
      %5146 = vmatprep.subr.bf16.mxu0 0
      %5147 = vmatpush1.bf16.msra.mxu0 0
      %5148 = vmatprep.subr.bf16.mxu0 0
      %5149 = vmatpush1.bf16.msra.mxu0 0
      %5150 = vmatprep.subr.bf16.mxu0 0
      %5151 = vmatpush1.bf16.msra.mxu0 0
      %5152 = vmatprep.subr.bf16.mxu0 0
      %5153 = vmatpush1.bf16.msra.mxu0 0
      %5154 = vmatprep.mubr.bf16.mxu0 0
      %5155 = vmatmul.mubr.bf16.gmra.mrb[0].mxu0 %v5075
      %v5156 = vpop.f32.mrb[0].mxu0
      %v5157 = vadd.f32 0.0, %v5156
      %v5158 = vpop.f32.mrb[0].mxu0
      %v5159 = vpop.f32.mrb[0].mxu0
      %v5160 = vadd.f32 0.0, %v5159
      %v5161 = vpop.f32.mrb[0].mxu0
      %5162 = vmatprep.mubr.bf16.mxu0 0
      %5163 = vmatmul.mubr.bf16.gmra.mrb[0].mxu0 %v5078
      %v5164 = vpop.f32.mrb[0].mxu0
      %v5165 = vadd.f32 0.0, %v5164
      %v5166 = vpop.f32.mrb[0].mxu0
      %v5167 = vpop.f32.mrb[0].mxu0
      %v5168 = vadd.f32 0.0, %v5167
      %v5169 = vpop.f32.mrb[0].mxu0
      %5170 = vmatprep.mubr.bf16.mxu0 0
      %5171 = vmatmul.mubr.bf16.gmra.mrb[0].mxu0 %v5081
      %v5172 = vpop.f32.mrb[0].mxu0
      %v5173 = vadd.f32 0.0, %v5172
      %v5174 = vpop.f32.mrb[0].mxu0
      %v5175 = vpop.f32.mrb[0].mxu0
      %v5176 = vadd.f32 0.0, %v5175
      %v5177 = vpop.f32.mrb[0].mxu0
      %5178 = vmatprep.mubr.bf16.mxu0 0
      %5179 = vmatmul.mubr.bf16.gmra.mrb[0].mxu0 %v5084
      %v5180 = vpop.f32.mrb[0].mxu0
      %v5181 = vadd.f32 0.0, %v5180
      %v5182 = vpop.f32.mrb[0].mxu0
      %v5183 = vpop.f32.mrb[0].mxu0
      %v5184 = vadd.f32 0.0, %v5183
      %v5185 = vpop.f32.mrb[0].mxu0
      %5186 = vmatprep.mubr.bf16.mxu0 0
      %5187 = vmatmul.mubr.bf16.gmra.mrb[0].mxu0 %v5087
      %v5188 = vpop.f32.mrb[0].mxu0
      %v5189 = vadd.f32 0.0, %v5188
      %v5190 = vpop.f32.mrb[0].mxu0
      %v5191 = vpop.f32.mrb[0].mxu0
      %v5192 = vadd.f32 0.0, %v5191
      %v5193 = vpop.f32.mrb[0].mxu0
      %5194 = vmatprep.mubr.bf16.mxu0 0
      %5195 = vmatmul.mubr.bf16.gmra.mrb[0].mxu0 %v5090
      %v5196 = vpop.f32.mrb[0].mxu0
      %v5197 = vadd.f32 0.0, %v5196
      %v5198 = vpop.f32.mrb[0].mxu0
      %v5199 = vpop.f32.mrb[0].mxu0
      %v5200 = vadd.f32 0.0, %v5199
      %v5201 = vpop.f32.mrb[0].mxu0
      %5202 = vmatprep.mubr.bf16.mxu0 0
      %5203 = vmatmul.mubr.bf16.gmra.mrb[0].mxu0 %v5093
      %v5204 = vpop.f32.mrb[0].mxu0
      %v5205 = vadd.f32 0.0, %v5204
      %v5206 = vpop.f32.mrb[0].mxu0
      %v5207 = vpop.f32.mrb[0].mxu0
      %v5208 = vadd.f32 0.0, %v5207
      %v5209 = vpop.f32.mrb[0].mxu0
      %5210 = vmatprep.mubr.bf16.mxu0 0
      %5211 = vmatmul.mubr.bf16.gmra.mrb[0].mxu0 %v5096
      %v5212 = vpop.f32.mrb[0].mxu0
      %v5213 = vadd.f32 0.0, %v5212
      %v5214 = vpop.f32.mrb[0].mxu0
      %v5215 = vpop.f32.mrb[0].mxu0
      %v5216 = vadd.f32 0.0, %v5215
      %v5217 = vpop.f32.mrb[0].mxu0
      %5218 = vmatprep.mubr.bf16.mxu0 0
      %5219 = vmatmul.mubr.bf16.gmra.mrb[0].mxu0 %v5099
      %v5220 = vpop.f32.mrb[0].mxu0
      %v5221 = vadd.f32 0.0, %v5220
      %v5222 = vpop.f32.mrb[0].mxu0
      %v5223 = vpop.f32.mrb[0].mxu0
      %v5224 = vadd.f32 0.0, %v5223
      %v5225 = vpop.f32.mrb[0].mxu0
      %5226 = vmatprep.mubr.bf16.mxu0 0
      %5227 = vmatmul.mubr.bf16.gmra.mrb[0].mxu0 %v5102
      %v5228 = vpop.f32.mrb[0].mxu0
      %v5229 = vadd.f32 0.0, %v5228
      %v5230 = vpop.f32.mrb[0].mxu0
      %v5231 = vpop.f32.mrb[0].mxu0
      %v5232 = vadd.f32 0.0, %v5231
      %v5233 = vpop.f32.mrb[0].mxu0
      %5234 = vmatprep.mubr.bf16.mxu0 0
      %5235 = vmatmul.mubr.bf16.gmra.mrb[0].mxu0 %v5105
      %v5236 = vpop.f32.mrb[0].mxu0
      %v5237 = vadd.f32 0.0, %v5236
      %v5238 = vpop.f32.mrb[0].mxu0
      %v5239 = vpop.f32.mrb[0].mxu0
      %v5240 = vadd.f32 0.0, %v5239
      %v5241 = vpop.f32.mrb[0].mxu0
      %5242 = vmatprep.mubr.bf16.mxu0 0
      %5243 = vmatmul.mubr.bf16.gmra.mrb[0].mxu0 %v5108
      %v5244 = vpop.f32.mrb[0].mxu0
      %v5245 = vadd.f32 0.0, %v5244
      %v5246 = vpop.f32.mrb[0].mxu0
      %v5247 = vpop.f32.mrb[0].mxu0
      %v5248 = vadd.f32 0.0, %v5247
      %v5249 = vpop.f32.mrb[0].mxu0
      %5250 = vmatprep.mubr.bf16.mxu0 0
      %5251 = vmatmul.mubr.bf16.gmra.mrb[0].mxu0 %v5111
      %v5252 = vpop.f32.mrb[0].mxu0
      %v5253 = vadd.f32 0.0, %v5252
      %v5254 = vpop.f32.mrb[0].mxu0
      %v5255 = vpop.f32.mrb[0].mxu0
      %v5256 = vadd.f32 0.0, %v5255
      %v5257 = vpop.f32.mrb[0].mxu0
      %5258 = vmatprep.mubr.bf16.mxu0 0
      %5259 = vmatmul.mubr.bf16.gmra.mrb[0].mxu0 %v5114
      %v5260 = vpop.f32.mrb[0].mxu0
      %v5261 = vadd.f32 0.0, %v5260
      %v5262 = vpop.f32.mrb[0].mxu0
      %v5263 = vpop.f32.mrb[0].mxu0
      %v5264 = vadd.f32 0.0, %v5263
      %v5265 = vpop.f32.mrb[0].mxu0
      %5266 = vmatprep.mubr.bf16.mxu0 0
      %5267 = vmatmul.mubr.bf16.gmra.mrb[0].mxu0 %v5117
      %v5268 = vpop.f32.mrb[0].mxu0
      %v5269 = vadd.f32 0.0, %v5268
      %v5270 = vpop.f32.mrb[0].mxu0
      %v5271 = vpop.f32.mrb[0].mxu0
      %v5272 = vadd.f32 0.0, %v5271
      %v5273 = vpop.f32.mrb[0].mxu0
      %5274 = vmatprep.mubr.bf16.mxu0 0
      %5275 = vmatmul.mubr.bf16.gmra.mrb[0].mxu0 %v5120
      %v5276 = vpop.f32.mrb[0].mxu0
      %v5277 = vadd.f32 0.0, %v5276
      %v5278 = vpop.f32.mrb[0].mxu0
      %v5279 = vpop.f32.mrb[0].mxu0
      %v5280 = vadd.f32 0.0, %v5279
      %v5281 = vpop.f32.mrb[0].mxu0
      %5282 = vdwg.mxu0
      %v5283 = vadd.f32 %v4529, %v5157
      %v5284 = vadd.f32 %v4530, %v5160
      %v5285 = vadd.f32 %v4531, %v5165
      %v5286 = vadd.f32 %v4532, %v5168
      %v5287 = vadd.f32 %v4533, %v5173
      %v5288 = vadd.f32 %v4534, %v5176
      %v5289 = vadd.f32 %v4535, %v5181
      %v5290 = vadd.f32 %v4536, %v5184
      %v5291 = vadd.f32 %v4537, %v5189
      %v5292 = vadd.f32 %v4538, %v5192
      %v5293 = vadd.f32 %v4539, %v5197
      %v5294 = vadd.f32 %v4540, %v5200
      %v5295 = vadd.f32 %v4541, %v5205
      %v5296 = vadd.f32 %v4542, %v5208
      %v5297 = vadd.f32 %v4543, %v5213
      %v5298 = vadd.f32 %v4544, %v5216
      %v5299 = vadd.f32 %v4545, %v5221
      %v5300 = vadd.f32 %v4546, %v5224
      %v5301 = vadd.f32 %v4547, %v5229
      %v5302 = vadd.f32 %v4548, %v5232
      %v5303 = vadd.f32 %v4549, %v5237
      %v5304 = vadd.f32 %v4550, %v5240
      %v5305 = vadd.f32 %v4551, %v5245
      %v5306 = vadd.f32 %v4552, %v5248
      %v5307 = vadd.f32 %v4553, %v5253
      %v5308 = vadd.f32 %v4554, %v5256
      %v5309 = vadd.f32 %v4555, %v5261
      %v5310 = vadd.f32 %v4556, %v5264
      %v5311 = vadd.f32 %v4557, %v5269
      %v5312 = vadd.f32 %v4558, %v5272
      %v5313 = vadd.f32 %v4559, %v5277
      %v5314 = vadd.f32 %v4560, %v5280
      %v5315 = vld [vmem:[%s4174] sm:$0xe]
      %v5316 = vld [vmem:[%s4174 + $0xc] sm:$0xe]
      %v5317 = vld [vmem:[%s4174 + $0x18] sm:$0xe]
      %v5318 = vld [vmem:[%s4174 + $0x24] sm:$0xe]
      %v5319 = vld [vmem:[%s4174 + $0x30] sm:$0xe]
      %v5320 = vld [vmem:[%s4174 + $0x3c] sm:$0xe]
      %v5321 = vld [vmem:[%s4174 + $0x48] sm:$0xe]
      %v5322 = vld [vmem:[%s4174 + $0x54] sm:$0xe]
      %v5323 = vld [vmem:[%s4174 + $0x60] sm:$0xe]
      %v5324 = vld [vmem:[%s4174 + $0x6c] sm:$0xe]
      %v5325 = vld [vmem:[%s4174 + $0x78] sm:$0xe]
      %v5326 = vld [vmem:[%s4174 + $0x84] sm:$0xe]
      %v5327 = vld [vmem:[%s4174 + $0x90] sm:$0xe]
      %v5328 = vld [vmem:[%s4174 + $0x9c] sm:$0xe]
      %v5329 = vld [vmem:[%s4174 + $0xa8] sm:$0xe]
      %v5330 = vld [vmem:[%s4174 + $0xb4] sm:$0xe]
      %v5379 = vrot.slane %v5315, 5
      %v5380 = vrot.slane %v5379, 4
      %v5381 = vrot.slane %v4562, 5
      %v5382 = vsel %vm2101, %v5380, %v5381
      %v5383 = vrot.slane %v5381, 4
      %v5384 = vrot.slane %v4563, 5
      %v5385 = vsel %vm2101, %v5383, %v5384
      %v5386 = vrot.slane %v5316, 5
      %v5387 = vrot.slane %v5386, 4
      %v5388 = vrot.slane %v4565, 5
      %v5389 = vsel %vm2101, %v5387, %v5388
      %v5390 = vrot.slane %v5388, 4
      %v5391 = vrot.slane %v4566, 5
      %v5392 = vsel %vm2101, %v5390, %v5391
      %v5393 = vrot.slane %v5317, 5
      %v5394 = vrot.slane %v5393, 4
      %v5395 = vrot.slane %v4568, 5
      %v5396 = vsel %vm2101, %v5394, %v5395
      %v5397 = vrot.slane %v5395, 4
      %v5398 = vrot.slane %v4569, 5
      %v5399 = vsel %vm2101, %v5397, %v5398
      %v5400 = vrot.slane %v5318, 5
      %v5401 = vrot.slane %v5400, 4
      %v5402 = vrot.slane %v4571, 5
      %v5403 = vsel %vm2101, %v5401, %v5402
      %v5404 = vrot.slane %v5402, 4
      %v5405 = vrot.slane %v4572, 5
      %v5406 = vsel %vm2101, %v5404, %v5405
      %v5407 = vrot.slane %v5319, 5
      %v5408 = vrot.slane %v5407, 4
      %v5409 = vrot.slane %v4574, 5
      %v5410 = vsel %vm2101, %v5408, %v5409
      %v5411 = vrot.slane %v5409, 4
      %v5412 = vrot.slane %v4575, 5
      %v5413 = vsel %vm2101, %v5411, %v5412
      %v5414 = vrot.slane %v5320, 5
      %v5415 = vrot.slane %v5414, 4
      %v5416 = vrot.slane %v4577, 5
      %v5417 = vsel %vm2101, %v5415, %v5416
      %v5418 = vrot.slane %v5416, 4
      %v5419 = vrot.slane %v4578, 5
      %v5420 = vsel %vm2101, %v5418, %v5419
      %v5421 = vrot.slane %v5321, 5
      %v5422 = vrot.slane %v5421, 4
      %v5423 = vrot.slane %v4580, 5
      %v5424 = vsel %vm2101, %v5422, %v5423
      %v5425 = vrot.slane %v5423, 4
      %v5426 = vrot.slane %v4581, 5
      %v5427 = vsel %vm2101, %v5425, %v5426
      %v5428 = vrot.slane %v5322, 5
      %v5429 = vrot.slane %v5428, 4
      %v5430 = vrot.slane %v4583, 5
      %v5431 = vsel %vm2101, %v5429, %v5430
      %v5432 = vrot.slane %v5430, 4
      %v5433 = vrot.slane %v4584, 5
      %v5434 = vsel %vm2101, %v5432, %v5433
      %v5435 = vrot.slane %v5323, 5
      %v5436 = vrot.slane %v5435, 4
      %v5437 = vrot.slane %v4586, 5
      %v5438 = vsel %vm2101, %v5436, %v5437
      %v5439 = vrot.slane %v5437, 4
      %v5440 = vrot.slane %v4587, 5
      %v5441 = vsel %vm2101, %v5439, %v5440
      %v5442 = vrot.slane %v5324, 5
      %v5443 = vrot.slane %v5442, 4
      %v5444 = vrot.slane %v4589, 5
      %v5445 = vsel %vm2101, %v5443, %v5444
      %v5446 = vrot.slane %v5444, 4
      %v5447 = vrot.slane %v4590, 5
      %v5448 = vsel %vm2101, %v5446, %v5447
      %v5449 = vrot.slane %v5325, 5
      %v5450 = vrot.slane %v5449, 4
      %v5451 = vrot.slane %v4592, 5
      %v5452 = vsel %vm2101, %v5450, %v5451
      %v5453 = vrot.slane %v5451, 4
      %v5454 = vrot.slane %v4593, 5
      %v5455 = vsel %vm2101, %v5453, %v5454
      %v5456 = vrot.slane %v5326, 5
      %v5457 = vrot.slane %v5456, 4
      %v5458 = vrot.slane %v4595, 5
      %v5459 = vsel %vm2101, %v5457, %v5458
      %v5460 = vrot.slane %v5458, 4
      %v5461 = vrot.slane %v4596, 5
      %v5462 = vsel %vm2101, %v5460, %v5461
      %v5463 = vrot.slane %v5327, 5
      %v5464 = vrot.slane %v5463, 4
      %v5465 = vrot.slane %v4598, 5
      %v5466 = vsel %vm2101, %v5464, %v5465
      %v5467 = vrot.slane %v5465, 4
      %v5468 = vrot.slane %v4599, 5
      %v5469 = vsel %vm2101, %v5467, %v5468
      %v5470 = vrot.slane %v5328, 5
      %v5471 = vrot.slane %v5470, 4
      %v5472 = vrot.slane %v4601, 5
      %v5473 = vsel %vm2101, %v5471, %v5472
      %v5474 = vrot.slane %v5472, 4
      %v5475 = vrot.slane %v4602, 5
      %v5476 = vsel %vm2101, %v5474, %v5475
      %v5477 = vrot.slane %v5329, 5
      %v5478 = vrot.slane %v5477, 4
      %v5479 = vrot.slane %v4604, 5
      %v5480 = vsel %vm2101, %v5478, %v5479
      %v5481 = vrot.slane %v5479, 4
      %v5482 = vrot.slane %v4605, 5
      %v5483 = vsel %vm2101, %v5481, %v5482
      %v5484 = vrot.slane %v5330, 5
      %v5485 = vrot.slane %v5484, 4
      %v5486 = vrot.slane %v4607, 5
      %v5487 = vsel %vm2101, %v5485, %v5486
      %v5488 = vrot.slane %v5486, 4
      %v5489 = vrot.slane %v4608, 5
      %v5490 = vsel %vm2101, %v5488, %v5489
      %s5491 = scalar_lea.vmem %s3, 256
      %v5492 = vld [vmem:[%s5491] sm:$0xf]
      %v5493 = vld [vmem:[%s5491 + $0x4] sm:$0xf]
      %v5494 = vld [vmem:[%s5491 + $0x8] sm:$0xf]
      %v5495 = vld [vmem:[%s5491 + $0xc] sm:$0xf]
      %v5496 = vld [vmem:[%s5491 + $0x10] sm:$0xf]
      %v5497 = vld [vmem:[%s5491 + $0x14] sm:$0xf]
      %v5498 = vld [vmem:[%s5491 + $0x18] sm:$0xf]
      %v5499 = vld [vmem:[%s5491 + $0x1c] sm:$0xf]
      %v5500 = vunpack.c.l.b16 %v5382
      %v5501 = vunpack.c.l.b16 %v5385
      %v5502 = vunpack.c.l.b16 %v5389
      %v5503 = vunpack.c.l.b16 %v5392
      %v5504 = vunpack.c.l.b16 %v5396
      %v5505 = vunpack.c.l.b16 %v5399
      %v5506 = vunpack.c.l.b16 %v5403
      %v5507 = vunpack.c.l.b16 %v5406
      %v5508 = vunpack.c.l.b16 %v5410
      %v5509 = vunpack.c.l.b16 %v5413
      %v5510 = vunpack.c.l.b16 %v5417
      %v5511 = vunpack.c.l.b16 %v5420
      %v5512 = vunpack.c.l.b16 %v5424
      %v5513 = vunpack.c.l.b16 %v5427
      %v5514 = vunpack.c.l.b16 %v5431
      %v5515 = vunpack.c.l.b16 %v5434
      %v5516 = vunpack.c.l.b16 %v5438
      %v5517 = vunpack.c.l.b16 %v5441
      %v5518 = vunpack.c.l.b16 %v5445
      %v5519 = vunpack.c.l.b16 %v5448
      %v5520 = vunpack.c.l.b16 %v5452
      %v5521 = vunpack.c.l.b16 %v5455
      %v5522 = vunpack.c.l.b16 %v5459
      %v5523 = vunpack.c.l.b16 %v5462
      %v5524 = vunpack.c.l.b16 %v5466
      %v5525 = vunpack.c.l.b16 %v5469
      %v5526 = vunpack.c.l.b16 %v5473
      %v5527 = vunpack.c.l.b16 %v5476
      %v5528 = vunpack.c.l.b16 %v5480
      %v5529 = vunpack.c.l.b16 %v5483
      %v5530 = vunpack.c.l.b16 %v5487
      %v5531 = vunpack.c.l.b16 %v5490
      %v5532 = vpack.c.b16 %v5501, %v5500
      %v5533 = vpack.c.b16 %v5503, %v5502
      %v5534 = vpack.c.b16 %v5505, %v5504
      %v5535 = vpack.c.b16 %v5507, %v5506
      %v5536 = vpack.c.b16 %v5509, %v5508
      %v5537 = vpack.c.b16 %v5511, %v5510
      %v5538 = vpack.c.b16 %v5513, %v5512
      %v5539 = vpack.c.b16 %v5515, %v5514
      %v5540 = vpack.c.b16 %v5517, %v5516
      %v5541 = vpack.c.b16 %v5519, %v5518
      %v5542 = vpack.c.b16 %v5521, %v5520
      %v5543 = vpack.c.b16 %v5523, %v5522
      %v5544 = vpack.c.b16 %v5525, %v5524
      %v5545 = vpack.c.b16 %v5527, %v5526
      %v5546 = vpack.c.b16 %v5529, %v5528
      %v5547 = vpack.c.b16 %v5531, %v5530
      %v5556 = vunpack.c.l.b16 %v5492
      %v5557 = vunpack.c.l.b16 %v5493
      %v5558 = vunpack.c.l.b16 %v5494
      %v5559 = vunpack.c.l.b16 %v5495
      %v5560 = vunpack.c.l.b16 %v5496
      %v5561 = vunpack.c.l.b16 %v5497
      %v5562 = vunpack.c.l.b16 %v5498
      %v5563 = vunpack.c.l.b16 %v5499
      %v5564 = vpack.c.b16 %v5557, %v5556
      %v5565 = vpack.c.b16 %v5559, %v5558
      %v5566 = vpack.c.b16 %v5561, %v5560
      %v5567 = vpack.c.b16 %v5563, %v5562
      %v5573 = vsel %vm1528, %v5532, 0
      %v5576 = vsel %vm1528, %v5533, 0
      %v5579 = vsel %vm1528, %v5534, 0
      %v5582 = vsel %vm1528, %v5535, 0
      %v5585 = vsel %vm1528, %v5536, 0
      %v5588 = vsel %vm1528, %v5537, 0
      %v5591 = vsel %vm1528, %v5538, 0
      %v5594 = vsel %vm1528, %v5539, 0
      %v5597 = vsel %vm1528, %v5540, 0
      %v5600 = vsel %vm1528, %v5541, 0
      %v5603 = vsel %vm1528, %v5542, 0
      %v5606 = vsel %vm1528, %v5543, 0
      %v5609 = vsel %vm1528, %v5544, 0
      %v5612 = vsel %vm1528, %v5545, 0
      %v5615 = vsel %vm1528, %v5546, 0
      %v5618 = vsel %vm1528, %v5547, 0
      %5620 = vmatprep.subr.bf16.mxu0 0
      %5621 = vmatpush1.bf16.msra.mxu0 %v5564
      %5622 = vmatprep.subr.bf16.mxu0 0
      %5623 = vmatpush1.bf16.msra.mxu0 %v5565
      %5624 = vmatprep.subr.bf16.mxu0 0
      %5625 = vmatpush1.bf16.msra.mxu0 %v5566
      %5626 = vmatprep.subr.bf16.mxu0 0
      %5627 = vmatpush1.bf16.msra.mxu0 %v5567
      %5628 = vmatprep.subr.bf16.mxu0 0
      %5629 = vmatpush1.bf16.msra.mxu0 0
      %5630 = vmatprep.subr.bf16.mxu0 0
      %5631 = vmatpush1.bf16.msra.mxu0 0
      %5632 = vmatprep.subr.bf16.mxu0 0
      %5633 = vmatpush1.bf16.msra.mxu0 0
      %5634 = vmatprep.subr.bf16.mxu0 0
      %5635 = vmatpush1.bf16.msra.mxu0 0
      %5636 = vmatprep.subr.bf16.mxu0 0
      %5637 = vmatpush1.bf16.msra.mxu0 0
      %5638 = vmatprep.subr.bf16.mxu0 0
      %5639 = vmatpush1.bf16.msra.mxu0 0
      %5640 = vmatprep.subr.bf16.mxu0 0
      %5641 = vmatpush1.bf16.msra.mxu0 0
      %5642 = vmatprep.subr.bf16.mxu0 0
      %5643 = vmatpush1.bf16.msra.mxu0 0
      %5644 = vmatprep.subr.bf16.mxu0 0
      %5645 = vmatpush1.bf16.msra.mxu0 0
      %5646 = vmatprep.subr.bf16.mxu0 0
      %5647 = vmatpush1.bf16.msra.mxu0 0
      %5648 = vmatprep.subr.bf16.mxu0 0
      %5649 = vmatpush1.bf16.msra.mxu0 0
      %5650 = vmatprep.subr.bf16.mxu0 0
      %5651 = vmatpush1.bf16.msra.mxu0 0
      %5652 = vmatprep.mubr.bf16.mxu0 0
      %5653 = vmatmul.mubr.bf16.gmra.mrb[0].mxu0 %v5573
      %v5654 = vpop.f32.mrb[0].mxu0
      %v5655 = vadd.f32 0.0, %v5654
      %v5656 = vpop.f32.mrb[0].mxu0
      %v5657 = vpop.f32.mrb[0].mxu0
      %v5658 = vadd.f32 0.0, %v5657
      %v5659 = vpop.f32.mrb[0].mxu0
      %5660 = vmatprep.mubr.bf16.mxu0 0
      %5661 = vmatmul.mubr.bf16.gmra.mrb[0].mxu0 %v5576
      %v5662 = vpop.f32.mrb[0].mxu0
      %v5663 = vadd.f32 0.0, %v5662
      %v5664 = vpop.f32.mrb[0].mxu0
      %v5665 = vpop.f32.mrb[0].mxu0
      %v5666 = vadd.f32 0.0, %v5665
      %v5667 = vpop.f32.mrb[0].mxu0
      %5668 = vmatprep.mubr.bf16.mxu0 0
      %5669 = vmatmul.mubr.bf16.gmra.mrb[0].mxu0 %v5579
      %v5670 = vpop.f32.mrb[0].mxu0
      %v5671 = vadd.f32 0.0, %v5670
      %v5672 = vpop.f32.mrb[0].mxu0
      %v5673 = vpop.f32.mrb[0].mxu0
      %v5674 = vadd.f32 0.0, %v5673
      %v5675 = vpop.f32.mrb[0].mxu0
      %5676 = vmatprep.mubr.bf16.mxu0 0
      %5677 = vmatmul.mubr.bf16.gmra.mrb[0].mxu0 %v5582
      %v5678 = vpop.f32.mrb[0].mxu0
      %v5679 = vadd.f32 0.0, %v5678
      %v5680 = vpop.f32.mrb[0].mxu0
      %v5681 = vpop.f32.mrb[0].mxu0
      %v5682 = vadd.f32 0.0, %v5681
      %v5683 = vpop.f32.mrb[0].mxu0
      %5684 = vmatprep.mubr.bf16.mxu0 0
      %5685 = vmatmul.mubr.bf16.gmra.mrb[0].mxu0 %v5585
      %v5686 = vpop.f32.mrb[0].mxu0
      %v5687 = vadd.f32 0.0, %v5686
      %v5688 = vpop.f32.mrb[0].mxu0
      %v5689 = vpop.f32.mrb[0].mxu0
      %v5690 = vadd.f32 0.0, %v5689
      %v5691 = vpop.f32.mrb[0].mxu0
      %5692 = vmatprep.mubr.bf16.mxu0 0
      %5693 = vmatmul.mubr.bf16.gmra.mrb[0].mxu0 %v5588
      %v5694 = vpop.f32.mrb[0].mxu0
      %v5695 = vadd.f32 0.0, %v5694
      %v5696 = vpop.f32.mrb[0].mxu0
      %v5697 = vpop.f32.mrb[0].mxu0
      %v5698 = vadd.f32 0.0, %v5697
      %v5699 = vpop.f32.mrb[0].mxu0
      %5700 = vmatprep.mubr.bf16.mxu0 0
      %5701 = vmatmul.mubr.bf16.gmra.mrb[0].mxu0 %v5591
      %v5702 = vpop.f32.mrb[0].mxu0
      %v5703 = vadd.f32 0.0, %v5702
      %v5704 = vpop.f32.mrb[0].mxu0
      %v5705 = vpop.f32.mrb[0].mxu0
      %v5706 = vadd.f32 0.0, %v5705
      %v5707 = vpop.f32.mrb[0].mxu0
      %5708 = vmatprep.mubr.bf16.mxu0 0
      %5709 = vmatmul.mubr.bf16.gmra.mrb[0].mxu0 %v5594
      %v5710 = vpop.f32.mrb[0].mxu0
      %v5711 = vadd.f32 0.0, %v5710
      %v5712 = vpop.f32.mrb[0].mxu0
      %v5713 = vpop.f32.mrb[0].mxu0
      %v5714 = vadd.f32 0.0, %v5713
      %v5715 = vpop.f32.mrb[0].mxu0
      %5716 = vmatprep.mubr.bf16.mxu0 0
      %5717 = vmatmul.mubr.bf16.gmra.mrb[0].mxu0 %v5597
      %v5718 = vpop.f32.mrb[0].mxu0
      %v5719 = vadd.f32 0.0, %v5718
      %v5720 = vpop.f32.mrb[0].mxu0
      %v5721 = vpop.f32.mrb[0].mxu0
      %v5722 = vadd.f32 0.0, %v5721
      %v5723 = vpop.f32.mrb[0].mxu0
      %5724 = vmatprep.mubr.bf16.mxu0 0
      %5725 = vmatmul.mubr.bf16.gmra.mrb[0].mxu0 %v5600
      %v5726 = vpop.f32.mrb[0].mxu0
      %v5727 = vadd.f32 0.0, %v5726
      %v5728 = vpop.f32.mrb[0].mxu0
      %v5729 = vpop.f32.mrb[0].mxu0
      %v5730 = vadd.f32 0.0, %v5729
      %v5731 = vpop.f32.mrb[0].mxu0
      %5732 = vmatprep.mubr.bf16.mxu0 0
      %5733 = vmatmul.mubr.bf16.gmra.mrb[0].mxu0 %v5603
      %v5734 = vpop.f32.mrb[0].mxu0
      %v5735 = vadd.f32 0.0, %v5734
      %v5736 = vpop.f32.mrb[0].mxu0
      %v5737 = vpop.f32.mrb[0].mxu0
      %v5738 = vadd.f32 0.0, %v5737
      %v5739 = vpop.f32.mrb[0].mxu0
      %5740 = vmatprep.mubr.bf16.mxu0 0
      %5741 = vmatmul.mubr.bf16.gmra.mrb[0].mxu0 %v5606
      %v5742 = vpop.f32.mrb[0].mxu0
      %v5743 = vadd.f32 0.0, %v5742
      %v5744 = vpop.f32.mrb[0].mxu0
      %v5745 = vpop.f32.mrb[0].mxu0
      %v5746 = vadd.f32 0.0, %v5745
      %v5747 = vpop.f32.mrb[0].mxu0
      %5748 = vmatprep.mubr.bf16.mxu0 0
      %5749 = vmatmul.mubr.bf16.gmra.mrb[0].mxu0 %v5609
      %v5750 = vpop.f32.mrb[0].mxu0
      %v5751 = vadd.f32 0.0, %v5750
      %v5752 = vpop.f32.mrb[0].mxu0
      %v5753 = vpop.f32.mrb[0].mxu0
      %v5754 = vadd.f32 0.0, %v5753
      %v5755 = vpop.f32.mrb[0].mxu0
      %5756 = vmatprep.mubr.bf16.mxu0 0
      %5757 = vmatmul.mubr.bf16.gmra.mrb[0].mxu0 %v5612
      %v5758 = vpop.f32.mrb[0].mxu0
      %v5759 = vadd.f32 0.0, %v5758
      %v5760 = vpop.f32.mrb[0].mxu0
      %v5761 = vpop.f32.mrb[0].mxu0
      %v5762 = vadd.f32 0.0, %v5761
      %v5763 = vpop.f32.mrb[0].mxu0
      %5764 = vmatprep.mubr.bf16.mxu0 0
      %5765 = vmatmul.mubr.bf16.gmra.mrb[0].mxu0 %v5615
      %v5766 = vpop.f32.mrb[0].mxu0
      %v5767 = vadd.f32 0.0, %v5766
      %v5768 = vpop.f32.mrb[0].mxu0
      %v5769 = vpop.f32.mrb[0].mxu0
      %v5770 = vadd.f32 0.0, %v5769
      %v5771 = vpop.f32.mrb[0].mxu0
      %5772 = vmatprep.mubr.bf16.mxu0 0
      %5773 = vmatmul.mubr.bf16.gmra.mrb[0].mxu0 %v5618
      %v5774 = vpop.f32.mrb[0].mxu0
      %v5775 = vadd.f32 0.0, %v5774
      %v5776 = vpop.f32.mrb[0].mxu0
      %v5777 = vpop.f32.mrb[0].mxu0
      %v5778 = vadd.f32 0.0, %v5777
      %v5779 = vpop.f32.mrb[0].mxu0
      %5780 = vdwg.mxu0
      %v5781 = vadd.f32 %v5283, %v5655
      %v5782 = vadd.f32 %v5284, %v5658
      %v5783 = vadd.f32 %v5285, %v5663
      %v5784 = vadd.f32 %v5286, %v5666
      %v5785 = vadd.f32 %v5287, %v5671
      %v5786 = vadd.f32 %v5288, %v5674
      %v5787 = vadd.f32 %v5289, %v5679
      %v5788 = vadd.f32 %v5290, %v5682
      %v5789 = vadd.f32 %v5291, %v5687
      %v5790 = vadd.f32 %v5292, %v5690
      %v5791 = vadd.f32 %v5293, %v5695
      %v5792 = vadd.f32 %v5294, %v5698
      %v5793 = vadd.f32 %v5295, %v5703
      %v5794 = vadd.f32 %v5296, %v5706
      %v5795 = vadd.f32 %v5297, %v5711
      %v5796 = vadd.f32 %v5298, %v5714
      %v5797 = vadd.f32 %v5299, %v5719
      %v5798 = vadd.f32 %v5300, %v5722
      %v5799 = vadd.f32 %v5301, %v5727
      %v5800 = vadd.f32 %v5302, %v5730
      %v5801 = vadd.f32 %v5303, %v5735
      %v5802 = vadd.f32 %v5304, %v5738
      %v5803 = vadd.f32 %v5305, %v5743
      %v5804 = vadd.f32 %v5306, %v5746
      %v5805 = vadd.f32 %v5307, %v5751
      %v5806 = vadd.f32 %v5308, %v5754
      %v5807 = vadd.f32 %v5309, %v5759
      %v5808 = vadd.f32 %v5310, %v5762
      %v5809 = vadd.f32 %v5311, %v5767
      %v5810 = vadd.f32 %v5312, %v5770
      %v5811 = vadd.f32 %v5313, %v5775
      %v5812 = vadd.f32 %v5314, %v5778
      %v5813 = vpack.c.bf16 %v5782, %v5781
      %v5814 = vpack.c.bf16 %v5784, %v5783
      %v5815 = vpack.c.bf16 %v5786, %v5785
      %v5816 = vpack.c.bf16 %v5788, %v5787
      %v5817 = vpack.c.bf16 %v5790, %v5789
      %v5818 = vpack.c.bf16 %v5792, %v5791
      %v5819 = vpack.c.bf16 %v5794, %v5793
      %v5820 = vpack.c.bf16 %v5796, %v5795
      %v5821 = vpack.c.bf16 %v5798, %v5797
      %v5822 = vpack.c.bf16 %v5800, %v5799
      %v5823 = vpack.c.bf16 %v5802, %v5801
      %v5824 = vpack.c.bf16 %v5804, %v5803
      %v5825 = vpack.c.bf16 %v5806, %v5805
      %v5826 = vpack.c.bf16 %v5808, %v5807
      %v5827 = vpack.c.bf16 %v5810, %v5809
      %v5828 = vpack.c.bf16 %v5812, %v5811
      %v5845 = vunpack.c.l.b16 %v5813
      %v5846 = vunpack.c.h.b16 %v5813
      %v5847 = vunpack.c.l.b16 %v5814
      %v5848 = vunpack.c.h.b16 %v5814
      %v5849 = vunpack.c.l.b16 %v5815
      %v5850 = vunpack.c.h.b16 %v5815
      %v5851 = vunpack.c.l.b16 %v5816
      %v5852 = vunpack.c.h.b16 %v5816
      %v5853 = vunpack.c.l.b16 %v5817
      %v5854 = vunpack.c.h.b16 %v5817
      %v5855 = vunpack.c.l.b16 %v5818
      %v5856 = vunpack.c.h.b16 %v5818
      %v5857 = vunpack.c.l.b16 %v5819
      %v5858 = vunpack.c.h.b16 %v5819
      %v5859 = vunpack.c.l.b16 %v5820
      %v5860 = vunpack.c.h.b16 %v5820
      %v5861 = vunpack.c.l.b16 %v5821
      %v5862 = vunpack.c.h.b16 %v5821
      %v5863 = vunpack.c.l.b16 %v5822
      %v5864 = vunpack.c.h.b16 %v5822
      %v5865 = vunpack.c.l.b16 %v5823
      %v5866 = vunpack.c.h.b16 %v5823
      %v5867 = vunpack.c.l.b16 %v5824
      %v5868 = vunpack.c.h.b16 %v5824
      %v5869 = vunpack.c.l.b16 %v5825
      %v5870 = vunpack.c.h.b16 %v5825
      %v5871 = vunpack.c.l.b16 %v5826
      %v5872 = vunpack.c.h.b16 %v5826
      %v5873 = vunpack.c.l.b16 %v5827
      %v5874 = vunpack.c.h.b16 %v5827
      %v5875 = vunpack.c.l.b16 %v5828
      %v5876 = vunpack.c.h.b16 %v5828
      %v5877 = vpack.c.b16 %v5845, %v5845
      %v5878 = vpack.c.b16 %v5846, %v5846
      %v5879 = vpack.c.b16 %v5847, %v5847
      %v5880 = vpack.c.b16 %v5848, %v5848
      %v5881 = vpack.c.b16 %v5849, %v5849
      %v5882 = vpack.c.b16 %v5850, %v5850
      %v5883 = vpack.c.b16 %v5851, %v5851
      %v5884 = vpack.c.b16 %v5852, %v5852
      %v5885 = vpack.c.b16 %v5853, %v5853
      %v5886 = vpack.c.b16 %v5854, %v5854
      %v5887 = vpack.c.b16 %v5855, %v5855
      %v5888 = vpack.c.b16 %v5856, %v5856
      %v5889 = vpack.c.b16 %v5857, %v5857
      %v5890 = vpack.c.b16 %v5858, %v5858
      %v5891 = vpack.c.b16 %v5859, %v5859
      %v5892 = vpack.c.b16 %v5860, %v5860
      %v5893 = vpack.c.b16 %v5861, %v5861
      %v5894 = vpack.c.b16 %v5862, %v5862
      %v5895 = vpack.c.b16 %v5863, %v5863
      %v5896 = vpack.c.b16 %v5864, %v5864
      %v5897 = vpack.c.b16 %v5865, %v5865
      %v5898 = vpack.c.b16 %v5866, %v5866
      %v5899 = vpack.c.b16 %v5867, %v5867
      %v5900 = vpack.c.b16 %v5868, %v5868
      %v5901 = vpack.c.b16 %v5869, %v5869
      %v5902 = vpack.c.b16 %v5870, %v5870
      %v5903 = vpack.c.b16 %v5871, %v5871
      %v5904 = vpack.c.b16 %v5872, %v5872
      %v5905 = vpack.c.b16 %v5873, %v5873
      %v5906 = vpack.c.b16 %v5874, %v5874
      %v5907 = vpack.c.b16 %v5875, %v5875
      %v5908 = vpack.c.b16 %v5876, %v5876
      %5941 = vst.msk [vmem:[%s231] sm:$0xf] %vm411, %v5877
      %5942 = vst.msk [vmem:[%s231 + $0x4] sm:$0xf] %vm411, %v5878
      %5943 = vst.msk [vmem:[%s231 + $0x8] sm:$0xf] %vm411, %v5879
      %5944 = vst.msk [vmem:[%s231 + $0xc] sm:$0xf] %vm411, %v5880
      %5945 = vst.msk [vmem:[%s231 + $0x10] sm:$0xf] %vm411, %v5881
      %5946 = vst.msk [vmem:[%s231 + $0x14] sm:$0xf] %vm411, %v5882
      %5947 = vst.msk [vmem:[%s231 + $0x18] sm:$0xf] %vm411, %v5883
      %5948 = vst.msk [vmem:[%s231 + $0x1c] sm:$0xf] %vm411, %v5884
      %5949 = vst.msk [vmem:[%s231 + $0x20] sm:$0xf] %vm411, %v5885
      %5950 = vst.msk [vmem:[%s231 + $0x24] sm:$0xf] %vm411, %v5886
      %5951 = vst.msk [vmem:[%s231 + $0x28] sm:$0xf] %vm411, %v5887
      %5952 = vst.msk [vmem:[%s231 + $0x2c] sm:$0xf] %vm411, %v5888
      %5953 = vst.msk [vmem:[%s231 + $0x30] sm:$0xf] %vm411, %v5889
      %5954 = vst.msk [vmem:[%s231 + $0x34] sm:$0xf] %vm411, %v5890
      %5955 = vst.msk [vmem:[%s231 + $0x38] sm:$0xf] %vm411, %v5891
      %5956 = vst.msk [vmem:[%s231 + $0x3c] sm:$0xf] %vm411, %v5892
      %5957 = vst.msk [vmem:[%s231 + $0x40] sm:$0xf] %vm411, %v5893
      %5958 = vst.msk [vmem:[%s231 + $0x44] sm:$0xf] %vm411, %v5894
      %5959 = vst.msk [vmem:[%s231 + $0x48] sm:$0xf] %vm411, %v5895
      %5960 = vst.msk [vmem:[%s231 + $0x4c] sm:$0xf] %vm411, %v5896
      %5961 = vst.msk [vmem:[%s231 + $0x50] sm:$0xf] %vm411, %v5897
      %5962 = vst.msk [vmem:[%s231 + $0x54] sm:$0xf] %vm411, %v5898
      %5963 = vst.msk [vmem:[%s231 + $0x58] sm:$0xf] %vm411, %v5899
      %5964 = vst.msk [vmem:[%s231 + $0x5c] sm:$0xf] %vm411, %v5900
      %5965 = vst.msk [vmem:[%s231 + $0x60] sm:$0xf] %vm411, %v5901
      %5966 = vst.msk [vmem:[%s231 + $0x64] sm:$0xf] %vm411, %v5902
      %5967 = vst.msk [vmem:[%s231 + $0x68] sm:$0xf] %vm411, %v5903
      %5968 = vst.msk [vmem:[%s231 + $0x6c] sm:$0xf] %vm411, %v5904
      %5969 = vst.msk [vmem:[%s231 + $0x70] sm:$0xf] %vm411, %v5905
      %5970 = vst.msk [vmem:[%s231 + $0x74] sm:$0xf] %vm411, %v5906
      %5971 = vst.msk [vmem:[%s231 + $0x78] sm:$0xf] %vm411, %v5907
      %5972 = vst.msk [vmem:[%s231 + $0x7c] sm:$0xf] %vm411, %v5908
      %v5973 = vsel %vm1528, %v5781, 0.0
      %v5974 = vsel %vm1528, %v5782, 0.0
      %v5975 = vadd.f32 %v5973, %v5974
      %v5976 = vsel %vm1528, %v5783, 0.0
      %v5977 = vadd.f32 %v5975, %v5976
      %v5978 = vsel %vm1528, %v5784, 0.0
      %v5979 = vadd.f32 %v5977, %v5978
      %v5980 = vsel %vm1528, %v5785, 0.0
      %v5981 = vadd.f32 %v5979, %v5980
      %v5982 = vsel %vm1528, %v5786, 0.0
      %v5983 = vadd.f32 %v5981, %v5982
      %v5984 = vsel %vm1528, %v5787, 0.0
      %v5985 = vadd.f32 %v5983, %v5984
      %v5986 = vsel %vm1528, %v5788, 0.0
      %v5987 = vadd.f32 %v5985, %v5986
      %v5988 = vsel %vm1528, %v5789, 0.0
      %v5989 = vadd.f32 %v5987, %v5988
      %v5990 = vsel %vm1528, %v5790, 0.0
      %v5991 = vadd.f32 %v5989, %v5990
      %v5992 = vsel %vm1528, %v5791, 0.0
      %v5993 = vadd.f32 %v5991, %v5992
      %v5994 = vsel %vm1528, %v5792, 0.0
      %v5995 = vadd.f32 %v5993, %v5994
      %v5996 = vsel %vm1528, %v5793, 0.0
      %v5997 = vadd.f32 %v5995, %v5996
      %v5998 = vsel %vm1528, %v5794, 0.0
      %v5999 = vadd.f32 %v5997, %v5998
      %v6000 = vsel %vm1528, %v5795, 0.0
      %v6001 = vadd.f32 %v5999, %v6000
      %v6002 = vsel %vm1528, %v5796, 0.0
      %v6003 = vadd.f32 %v6001, %v6002
      %v6004 = vsel %vm1528, %v5797, 0.0
      %v6005 = vadd.f32 %v6003, %v6004
      %v6006 = vsel %vm1528, %v5798, 0.0
      %v6007 = vadd.f32 %v6005, %v6006
      %v6008 = vsel %vm1528, %v5799, 0.0
      %v6009 = vadd.f32 %v6007, %v6008
      %v6010 = vsel %vm1528, %v5800, 0.0
      %v6011 = vadd.f32 %v6009, %v6010
      %v6012 = vsel %vm1528, %v5801, 0.0
      %v6013 = vadd.f32 %v6011, %v6012
      %v6014 = vsel %vm1528, %v5802, 0.0
      %v6015 = vadd.f32 %v6013, %v6014
      %v6016 = vsel %vm1528, %v5803, 0.0
      %v6017 = vadd.f32 %v6015, %v6016
      %v6018 = vsel %vm1528, %v5804, 0.0
      %v6019 = vadd.f32 %v6017, %v6018
      %v6020 = vsel %vm1528, %v5805, 0.0
      %v6021 = vadd.f32 %v6019, %v6020
      %v6022 = vsel %vm1528, %v5806, 0.0
      %v6023 = vadd.f32 %v6021, %v6022
      %v6024 = vsel %vm1528, %v5807, 0.0
      %v6025 = vadd.f32 %v6023, %v6024
      %v6026 = vsel %vm1528, %v5808, 0.0
      %v6027 = vadd.f32 %v6025, %v6026
      %v6028 = vsel %vm1528, %v5809, 0.0
      %v6029 = vadd.f32 %v6027, %v6028
      %v6030 = vsel %vm1528, %v5810, 0.0
      %v6031 = vadd.f32 %v6029, %v6030
      %v6032 = vsel %vm1528, %v5811, 0.0
      %v6033 = vadd.f32 %v6031, %v6032
      %v6034 = vsel %vm1528, %v5812, 0.0
      %v6035 = vadd.f32 %v6033, %v6034
      %v6036 = vrot.slane %v6035, 4
      %v6037 = vadd.f32 %v6035, %v6036
      %v6038 = vrot.slane %v6037, 2
      %v6039 = vadd.f32 %v6037, %v6038
      %v6040 = vrot.slane %v6039, 1
      %v6041 = vadd.f32 %v6039, %v6040
      %v6042 = vmul.f32 %v5781, %v5781
      %v6043 = vmul.f32 %v5782, %v5782
      %v6044 = vmul.f32 %v5783, %v5783
      %v6045 = vmul.f32 %v5784, %v5784
      %v6046 = vmul.f32 %v5785, %v5785
      %v6047 = vmul.f32 %v5786, %v5786
      %v6048 = vmul.f32 %v5787, %v5787
      %v6049 = vmul.f32 %v5788, %v5788
      %v6050 = vmul.f32 %v5789, %v5789
      %v6051 = vmul.f32 %v5790, %v5790
      %v6052 = vmul.f32 %v5791, %v5791
      %v6053 = vmul.f32 %v5792, %v5792
      %v6054 = vmul.f32 %v5793, %v5793
      %v6055 = vmul.f32 %v5794, %v5794
      %v6056 = vmul.f32 %v5795, %v5795
      %v6057 = vmul.f32 %v5796, %v5796
      %v6058 = vmul.f32 %v5797, %v5797
      %v6059 = vmul.f32 %v5798, %v5798
      %v6060 = vmul.f32 %v5799, %v5799
      %v6061 = vmul.f32 %v5800, %v5800
      %v6062 = vmul.f32 %v5801, %v5801
      %v6063 = vmul.f32 %v5802, %v5802
      %v6064 = vmul.f32 %v5803, %v5803
      %v6065 = vmul.f32 %v5804, %v5804
      %v6066 = vmul.f32 %v5805, %v5805
      %v6067 = vmul.f32 %v5806, %v5806
      %v6068 = vmul.f32 %v5807, %v5807
      %v6069 = vmul.f32 %v5808, %v5808
      %v6070 = vmul.f32 %v5809, %v5809
      %v6071 = vmul.f32 %v5810, %v5810
      %v6072 = vmul.f32 %v5811, %v5811
      %v6073 = vmul.f32 %v5812, %v5812
      %v6074 = vsel %vm1528, %v6042, 0.0
      %v6075 = vsel %vm1528, %v6043, 0.0
      %v6076 = vadd.f32 %v6074, %v6075
      %v6077 = vsel %vm1528, %v6044, 0.0
      %v6078 = vadd.f32 %v6076, %v6077
      %v6079 = vsel %vm1528, %v6045, 0.0
      %v6080 = vadd.f32 %v6078, %v6079
      %v6081 = vsel %vm1528, %v6046, 0.0
      %v6082 = vadd.f32 %v6080, %v6081
      %v6083 = vsel %vm1528, %v6047, 0.0
      %v6084 = vadd.f32 %v6082, %v6083
      %v6085 = vsel %vm1528, %v6048, 0.0
      %v6086 = vadd.f32 %v6084, %v6085
      %v6087 = vsel %vm1528, %v6049, 0.0
      %v6088 = vadd.f32 %v6086, %v6087
      %v6089 = vsel %vm1528, %v6050, 0.0
      %v6090 = vadd.f32 %v6088, %v6089
      %v6091 = vsel %vm1528, %v6051, 0.0
      %v6092 = vadd.f32 %v6090, %v6091
      %v6093 = vsel %vm1528, %v6052, 0.0
      %v6094 = vadd.f32 %v6092, %v6093
      %v6095 = vsel %vm1528, %v6053, 0.0
      %v6096 = vadd.f32 %v6094, %v6095
      %v6097 = vsel %vm1528, %v6054, 0.0
      %v6098 = vadd.f32 %v6096, %v6097
      %v6099 = vsel %vm1528, %v6055, 0.0
      %v6100 = vadd.f32 %v6098, %v6099
      %v6101 = vsel %vm1528, %v6056, 0.0
      %v6102 = vadd.f32 %v6100, %v6101
      %v6103 = vsel %vm1528, %v6057, 0.0
      %v6104 = vadd.f32 %v6102, %v6103
      %v6105 = vsel %vm1528, %v6058, 0.0
      %v6106 = vadd.f32 %v6104, %v6105
      %v6107 = vsel %vm1528, %v6059, 0.0
      %v6108 = vadd.f32 %v6106, %v6107
      %v6109 = vsel %vm1528, %v6060, 0.0
      %v6110 = vadd.f32 %v6108, %v6109
      %v6111 = vsel %vm1528, %v6061, 0.0
      %v6112 = vadd.f32 %v6110, %v6111
      %v6113 = vsel %vm1528, %v6062, 0.0
      %v6114 = vadd.f32 %v6112, %v6113
      %v6115 = vsel %vm1528, %v6063, 0.0
      %v6116 = vadd.f32 %v6114, %v6115
      %v6117 = vsel %vm1528, %v6064, 0.0
      %v6118 = vadd.f32 %v6116, %v6117
      %v6119 = vsel %vm1528, %v6065, 0.0
      %v6120 = vadd.f32 %v6118, %v6119
      %v6121 = vsel %vm1528, %v6066, 0.0
      %v6122 = vadd.f32 %v6120, %v6121
      %v6123 = vsel %vm1528, %v6067, 0.0
      %v6124 = vadd.f32 %v6122, %v6123
      %v6125 = vsel %vm1528, %v6068, 0.0
      %v6126 = vadd.f32 %v6124, %v6125
      %v6127 = vsel %vm1528, %v6069, 0.0
      %v6128 = vadd.f32 %v6126, %v6127
      %v6129 = vsel %vm1528, %v6070, 0.0
      %v6130 = vadd.f32 %v6128, %v6129
      %v6131 = vsel %vm1528, %v6071, 0.0
      %v6132 = vadd.f32 %v6130, %v6131
      %v6133 = vsel %vm1528, %v6072, 0.0
      %v6134 = vadd.f32 %v6132, %v6133
      %v6135 = vsel %vm1528, %v6073, 0.0
      %v6136 = vadd.f32 %v6134, %v6135
      %v6137 = vrot.slane %v6136, 4
      %v6138 = vadd.f32 %v6136, %v6137
      %v6139 = vrot.slane %v6138, 2
      %v6140 = vadd.f32 %v6138, %v6139
      %v6141 = vrot.slane %v6140, 1
      %v6142 = vadd.f32 %v6140, %v6141
      %vm6143 = vcmask 1040384
      %v6144 = vsel %vm6143, %v6041, %v6142
      %vm6145 = vcmask 517120
      %6146 = vst.msk [vmem:[%s235] sm:$0x3] %vm6145, %v6144
      %p6147 = scmp.lt.s32.totalorder %s17, 1
      %s6148 = scalar_select %p6147, %s17, 1
      %s6149 = smul.addr %s6148, 32
      %s6150 = smul.addr %s6149, 4
      %s6151 = scalar_lea.vmem %s4, %s6150
      %p6152 = scmp.lt.s32.totalorder %s17, 1
      %s6153 = scalar_select %p6152, %s17, 1
      %s6154 = smul.addr %s6153, 2
      %s6155 = scalar_lea.vmem %s5, %s6154
      // Predicated region
      $region37: #{bottleneck_forward.5} parent=35 // pred_check
        %p6156 = pneg %p124
      $region38: #{bottleneck_forward.5} parent=35 // pred_check_branch
        %6158 = sbr.rel (%p6156) target = $region40
      $region39: #{bottleneck_forward.5} parent=35 // pred_region
        _
      $region40: #{bottleneck_forward.5} parent=35 // pred_fallthru
        _
      // Predicated region
      $region41: #{bottleneck_forward.5} parent=35 // pred_check
        %p6159 = pneg %p150
      $region42: #{bottleneck_forward.5} parent=35 // pred_check_branch
        %6161 = sbr.rel (%p6159) target = $region44
      $region43: #{bottleneck_forward.5} parent=35 // pred_region
        _
      $region44: #{bottleneck_forward.5} parent=35 // pred_fallthru
        _
    $region36: #{bottleneck_forward.5} parent=5 // pred_fallthru
      _
    %p6162 = scmp.le.s32.totalorder 2, %s12
    // Predicated region
    $region45: #{bottleneck_forward.5} parent=5 // pred_check
      %p6163 = pneg %p6162
    $region46: #{bottleneck_forward.5} parent=5 // pred_check_branch
      %6165 = sbr.rel (%p6163) target = $region48
    $region47: #{bottleneck_forward.5} parent=5 // pred_region
      %s6166 = ssub.s32 %s12, 2
      // Predicated region
      $region49: #{bottleneck_forward.5} parent=47 // pred_check
        %p6167 = pneg %p130
      $region50: #{bottleneck_forward.5} parent=47 // pred_check_branch
        %6169 = sbr.rel (%p6167) target = $region52
      $region51: #{bottleneck_forward.5} parent=47 // pred_region
        %p6170 = scmp.lt.s32.totalorder %s18, 1
        %s6171 = scalar_select %p6170, %s18, 1
        %s6172 = smul.addr %s6171, 32
        %s6173 = smul.addr %s6172, 4
        %s6174 = scalar_lea.vmem %s4, %s6173
      $region52: #{bottleneck_forward.5} parent=47 // pred_fallthru
        _
      // Predicated region
      $region53: #{bottleneck_forward.5} parent=47 // pred_check
        %p6175 = pneg %p156
      $region54: #{bottleneck_forward.5} parent=47 // pred_check_branch
        %6177 = sbr.rel (%p6175) target = $region56
      $region55: #{bottleneck_forward.5} parent=47 // pred_region
        %p6178 = scmp.lt.s32.totalorder %s18, 1
        %s6179 = scalar_select %p6178, %s18, 1
        %s6180 = smul.addr %s6179, 2
        %s6181 = scalar_lea.vmem %s5, %s6180
      $region56: #{bottleneck_forward.5} parent=47 // pred_fallthru
        _
    $region48: #{bottleneck_forward.5} parent=5 // pred_fallthru
      _
  $region6: #{bottleneck_forward.5} parent=0 // loop_footer
    %s16 = sadd.s32 1, %s12
  $region7: #{bottleneck_forward.5} parent=0 // loop_footer_branch
    %11 = sbr.rel target = $region3
  $region8: #{bottleneck_forward.5} parent=0 // loop_exit
    _

</llo_original>
